<compile_context>
chip_gen: v5e
topology: v5e:2x2
jax: 0.10.0
libtpu: 0.0.40
codegen_flags: <defaults>
</compile_context>

<pallas_src>
import jax
import jax.numpy as jnp
from jax import lax
from jax.experimental import pallas as pl
from jax.experimental.pallas import tpu as pltpu


def _bilstm_kernel(len_ref, x_ref, wih_ref, b_ref, whhf_ref, whhb_ref,
                   wfc_ref, bfc_ref, out_ref, xgf_ref, xgb_ref):
    T, Bb, D = x_ref.shape
    H = whhf_ref.shape[0]          # W_hh passed pre-transposed: (H, 4H)
    G4 = 4 * H

    # ---- hoisted input projection: one big MXU matmul over all timesteps ----
    # x is time-major (T, Bb, D); Bb is a multiple of 8 so this reshape is a
    # tile-aligned no-op.
    x2d = x_ref[...].reshape(T * Bb, D)
    xg = jnp.dot(x2d, wih_ref[...], preferred_element_type=jnp.float32) + b_ref[...]
    xg = xg.reshape(T, Bb, 2 * G4)
    xgf_ref[...] = xg[:, :, :G4]   # forward-direction gate pre-activations
    xgb_ref[...] = xg[:, :, G4:]   # backward-direction gate pre-activations

    lengths = len_ref[...]         # (Bb, 1) int32 -- read once, outside the loop
    whh_f = whhf_ref[...]
    whh_b = whhb_ref[...]

    def cell(gx, h, c, whh):
        # PyTorch LSTM gate order: i, f, g, o.  H is a multiple of 128 so every
        # slice below is a lane-aligned full-vreg slice.
        gates = gx + jnp.dot(h, whh, preferred_element_type=jnp.float32)
        i = jax.nn.sigmoid(gates[:, 0:H])
        f = jax.nn.sigmoid(gates[:, H:2 * H])
        g = jnp.tanh(gates[:, 2 * H:3 * H])
        o = jax.nn.sigmoid(gates[:, 3 * H:4 * H])
        c_new = f * c + i * g
        return o * jnp.tanh(c_new), c_new

    zeros = jnp.zeros((Bb, H), jnp.float32)

    def step(s, carry):
        hf, cf, hb, cb = carry
        tb = T - 1 - s
        # Two independent directions per iteration: the MXU push of one hides
        # the EUP/VPU latency of the other.
        hf_n, cf_n = cell(xgf_ref[s], hf, cf, whh_f)
        hb_n, cb_n = cell(xgb_ref[tb], hb, cb, whh_b)
        # pack_padded_sequence masking: only update while inside the sequence.
        mf = lengths > s
        mb = lengths > tb
        return (jnp.where(mf, hf_n, hf), jnp.where(mf, cf_n, cf),
                jnp.where(mb, hb_n, hb), jnp.where(mb, cb_n, cb))

    hf, _, hb, _ = lax.fori_loop(0, T, step, (zeros, zeros, zeros, zeros),
                                 unroll=True)

    # hidden = cat(h_fwd, h_bwd) @ W_fc^T + b_fc  (W_fc padded to 128 lanes,
    # so the output store is lane-dense).
    hidden = jnp.concatenate([hf, hb], axis=1)                       # (Bb, 2H)
    out_ref[...] = (jnp.dot(hidden, wfc_ref[...],
                            preferred_element_type=jnp.float32)
                    + bfc_ref[...]).astype(out_ref.dtype)


def bilstm_classifier(x, lengths, params, *, b_block=8):
    """x: (B, T, D) float32, lengths: (B,) int -> logits (B, num_classes)."""
    B, T, D = x.shape
    H = params["w_hh_f"].shape[1]
    C = params["w_fc"].shape[0]
    G4, G8 = 4 * H, 8 * H
    C_PAD = 128   # lane-dense output block; sliced back to C below

    # Pad batch to a multiple of the sublane tile / batch block.
    B_pad = ((B + b_block - 1) // b_block) * b_block
    x_p = jnp.zeros((B_pad, T, D), jnp.float32).at[:B].set(x.astype(jnp.float32))
    len_p = jnp.zeros((B_pad, 1), jnp.int32).at[:B, 0].set(lengths.astype(jnp.int32))

    # Time-major layout so per-timestep reads are leading-axis dynamic slices.
    # TODO(synk): for large T*B*D, stream x over time chunks (or accept a
    # time-major input) instead of this extra transpose pass.
    x_tm = jnp.transpose(x_p, (1, 0, 2))                              # (T, B_pad, D)

    # Fused input-projection weight [W_ih_f^T | W_ih_b^T] : (D, 8H); both
    # directions' (b_ih + b_hh) biases folded into the hoisted projection.
    w_ih_cat = jnp.concatenate([params["w_ih_f"].T, params["w_ih_b"].T], axis=1)
    b_cat = jnp.concatenate([params["b_ih_f"] + params["b_hh_f"],
                             params["b_ih_b"] + params["b_hh_b"]]).reshape(1, G8)
    w_hh_f = params["w_hh_f"].T                                       # (H, 4H)
    w_hh_b = params["w_hh_b"].T
    w_fc = jnp.zeros((2 * H, C_PAD), jnp.float32).at[:, :C].set(params["w_fc"].T)
    b_fc = jnp.zeros((1, C_PAD), jnp.float32).at[0, :C].set(params["b_fc"])

    n_blk = B_pad // b_block
    grid_spec = pltpu.PrefetchScalarGridSpec(
        num_scalar_prefetch=0,
        grid=(n_blk,),                                                # batch blocks
        in_specs=[
            pl.BlockSpec((b_block, 1), lambda i: (i, 0)),             # lengths
            pl.BlockSpec((T, b_block, D), lambda i: (0, i, 0)),       # x (time-major)
            pl.BlockSpec((D, G8), lambda i: (0, 0)),                  # W_ih (both dirs)
            pl.BlockSpec((1, G8), lambda i: (0, 0)),                  # folded biases
            pl.BlockSpec((H, G4), lambda i: (0, 0)),                  # W_hh fwd
            pl.BlockSpec((H, G4), lambda i: (0, 0)),                  # W_hh bwd
            pl.BlockSpec((2 * H, C_PAD), lambda i: (0, 0)),           # W_fc (padded)
            pl.BlockSpec((1, C_PAD), lambda i: (0, 0)),               # b_fc (padded)
        ],
        out_specs=pl.BlockSpec((b_block, C_PAD), lambda i: (i, 0)),
        scratch_shapes=[pltpu.VMEM((T, b_block, G4), jnp.float32),    # fwd pre-acts
                        pltpu.VMEM((T, b_block, G4), jnp.float32)],   # bwd pre-acts
    )

    out = pl.pallas_call(
        _bilstm_kernel,
        out_shape=jax.ShapeDtypeStruct((B_pad, C_PAD), jnp.float32),
        grid_spec=grid_spec,
        compiler_params=pltpu.CompilerParams(
            dimension_semantics=("parallel",),        # batch blocks -> megacore on v7x
            vmem_limit_bytes=32 * 1024 * 1024),
    )(len_p, x_tm, w_ih_cat, b_cat, w_hh_f, w_hh_b, w_fc, b_fc)

    return out[:B, :C]


def _reference(x, lengths, params):
    """Pure-JAX reference mirroring packed BiLSTM semantics (f32-accurate dots)."""
    B, T, D = x.shape
    H = params["w_hh_f"].shape[1]
    hi = jax.lax.Precision.HIGHEST

    def cell(x_t, h, c, wih, whh, b):
        gates = (jnp.dot(x_t, wih.T, precision=hi)
                 + jnp.dot(h, whh.T, precision=hi) + b)
        i = jax.nn.sigmoid(gates[:, 0:H])
        f = jax.nn.sigmoid(gates[:, H:2 * H])
        g = jnp.tanh(gates[:, 2 * H:3 * H])
        o = jax.nn.sigmoid(gates[:, 3 * H:4 * H])
        c_new = f * c + i * g
        return o * jnp.tanh(c_new), c_new

    h = jnp.zeros((B, H)); c = jnp.zeros((B, H))
    for t in range(T):
        h_n, c_n = cell(x[:, t], h, c, params["w_ih_f"], params["w_hh_f"],
                        params["b_ih_f"] + params["b_hh_f"])
        m = (lengths > t)[:, None]
        h = jnp.where(m, h_n, h); c = jnp.where(m, c_n, c)
    h_fwd = h

    h = jnp.zeros((B, H)); c = jnp.zeros((B, H))
    for t in range(T - 1, -1, -1):
        h_n, c_n = cell(x[:, t], h, c, params["w_ih_b"], params["w_hh_b"],
                        params["b_ih_b"] + params["b_hh_b"])
        m = (lengths > t)[:, None]
        h = jnp.where(m, h_n, h); c = jnp.where(m, c_n, c)
    h_bwd = h

    hidden = jnp.concatenate([h_fwd, h_bwd], axis=1)
    return jnp.dot(hidden, params["w_fc"].T, precision=hi) + params["b_fc"]


def init_params(key, input_size, hidden_size, num_classes):
    """Deterministic init matching the PyTorch parameter shapes."""
    ks = jax.random.split(key, 10)
    k_lstm = 1.0 / jnp.sqrt(hidden_size)
    k_fc = 1.0 / jnp.sqrt(2 * hidden_size)
    u = lambda k, shape, scale: jax.random.uniform(k, shape, jnp.float32, -scale, scale)
    return {
        "w_ih_f": u(ks[0], (4 * hidden_size, input_size), k_lstm),
        "w_hh_f": u(ks[1], (4 * hidden_size, hidden_size), k_lstm),
        "b_ih_f": u(ks[2], (4 * hidden_size,), k_lstm),
        "b_hh_f": u(ks[3], (4 * hidden_size,), k_lstm),
        "w_ih_b": u(ks[4], (4 * hidden_size, input_size), k_lstm),
        "w_hh_b": u(ks[5], (4 * hidden_size, hidden_size), k_lstm),
        "b_ih_b": u(ks[6], (4 * hidden_size,), k_lstm),
        "b_hh_b": u(ks[7], (4 * hidden_size,), k_lstm),
        "w_fc": u(ks[8], (num_classes, 2 * hidden_size), k_fc),
        "b_fc": u(ks[9], (num_classes,), k_fc),
    }


if __name__ == "__main__":
    # Module feature sizes (input_size=768, hidden_size=128, num_classes=3)
    # with a small batch / sequence length for the demo.
    B, T, D, H, C = 4, 8, 768, 128, 3

    key = jax.random.PRNGKey(0)
    k_x, k_p = jax.random.split(key)
    x = jax.random.normal(k_x, (B, T, D), jnp.float32)
    lengths = jnp.array([8, 5, 3, 6], dtype=jnp.int32)   # unsorted, like enforce_sorted=False
    params = init_params(k_p, D, H, C)

    out = jax.block_until_ready(jax.jit(bilstm_classifier)(x, lengths, params))

    ref = _reference(x, lengths, params)
    assert out.shape == (B, C)
    assert jnp.allclose(out, ref, rtol=5e-3, atol=5e-3), (
        float(jnp.max(jnp.abs(out - ref))), out, ref)

    print("KERNEL_OK")
</pallas_src>

<mosaic_0001>
module attributes {stable_mosaic.version = 11 : i64} {
  func.func @_bilstm_kernel(%arg0: i32, %arg1: memref<8x1xi32, #tpu.memory_space<vmem>>, %arg2: memref<8x8x768xf32, #tpu.memory_space<vmem>>, %arg3: memref<768x1024xf32, #tpu.memory_space<vmem>>, %arg4: memref<1x1024xf32, #tpu.memory_space<vmem>>, %arg5: memref<128x512xf32, #tpu.memory_space<vmem>>, %arg6: memref<128x512xf32, #tpu.memory_space<vmem>>, %arg7: memref<256x128xf32, #tpu.memory_space<vmem>>, %arg8: memref<1x128xf32, #tpu.memory_space<vmem>>, %arg9: memref<8x128xf32, #tpu.memory_space<vmem>>, %arg10: memref<8x8x512xf32, #tpu.memory_space<vmem>>, %arg11: memref<8x8x512xf32, #tpu.memory_space<vmem>>) attributes {dimension_semantics = [#tpu.dimension_semantics<parallel>], iteration_bounds = array<i64: 1>, scalar_prefetch = 0 : i64, scratch_operands = 2 : i64, tpu.core_type = #tpu.core_type<tc>, window_params = [{transform_indices = @transform_0, window_bounds = array<i64: 8, 1>}, {transform_indices = @transform_1, window_bounds = array<i64: 8, 8, 768>}, {pipeline_mode = #tpu.pipeline_mode<synchronous>, transform_indices = @transform_2, window_bounds = array<i64: 768, 1024>}, {pipeline_mode = #tpu.pipeline_mode<synchronous>, transform_indices = @transform_3, window_bounds = array<i64: 1, 1024>}, {pipeline_mode = #tpu.pipeline_mode<synchronous>, transform_indices = @transform_4, window_bounds = array<i64: 128, 512>}, {pipeline_mode = #tpu.pipeline_mode<synchronous>, transform_indices = @transform_5, window_bounds = array<i64: 128, 512>}, {pipeline_mode = #tpu.pipeline_mode<synchronous>, transform_indices = @transform_6, window_bounds = array<i64: 256, 128>}, {pipeline_mode = #tpu.pipeline_mode<synchronous>, transform_indices = @transform_7, window_bounds = array<i64: 1, 128>}, {transform_indices = @transform_8, window_bounds = array<i64: 8, 128>}]} {
    %c0 = arith.constant 0 : index
    %c0_0 = arith.constant 0 : index
    %c0_1 = arith.constant 0 : index
    %0 = vector.load %arg2[%c0, %c0_0, %c0_1] : memref<8x8x768xf32, #tpu.memory_space<vmem>>, vector<8x8x768xf32>
    %1 = vector.shape_cast %0 : vector<8x8x768xf32> to vector<64x768xf32>
    %c0_2 = arith.constant 0 : index
    %c0_3 = arith.constant 0 : index
    %2 = vector.load %arg3[%c0_2, %c0_3] : memref<768x1024xf32, #tpu.memory_space<vmem>>, vector<768x1024xf32>
    %cst = arith.constant dense<0.000000e+00> : vector<64x1024xf32>
    %3 = tpu.matmul %1, %2, %cst {dimension_numbers = #tpu.dot_dimension_numbers<[1], [0], [0], [1], [0, 0, 1, 1], [], []>} : vector<64x768xf32>, vector<768x1024xf32>, vector<64x1024xf32> -> vector<64x1024xf32>
    %c0_4 = arith.constant 0 : index
    %c0_5 = arith.constant 0 : index
    %4 = vector.load %arg4[%c0_4, %c0_5] : memref<1x1024xf32, #tpu.memory_space<vmem>>, vector<1x1024xf32>
    %5 = vector.broadcast %4 : vector<1x1024xf32> to vector<64x1024xf32>
    %6 = arith.addf %3, %5 : vector<64x1024xf32>
    %7 = vector.shape_cast %6 : vector<64x1024xf32> to vector<8x8x1024xf32>
    %8 = vector.extract_strided_slice %7 {offsets = [0, 0, 0], sizes = [8, 8, 512], strides = [1, 1, 1]} : vector<8x8x1024xf32> to vector<8x8x512xf32>
    %c0_6 = arith.constant 0 : index
    %c0_7 = arith.constant 0 : index
    %c0_8 = arith.constant 0 : index
    %9 = vector.load %arg10[%c0_6, %c0_7, %c0_8] : memref<8x8x512xf32, #tpu.memory_space<vmem>>, vector<8x8x512xf32>
    tpu.vector_store %arg10[%c0_6, %c0_7, %c0_8], %8 {strides = array<i32>} : memref<8x8x512xf32, #tpu.memory_space<vmem>>, vector<8x8x512xf32>,
    %10 = vector.extract_strided_slice %7 {offsets = [0, 0, 512], sizes = [8, 8, 512], strides = [1, 1, 1]} : vector<8x8x1024xf32> to vector<8x8x512xf32>
    %c0_9 = arith.constant 0 : index
    %c0_10 = arith.constant 0 : index
    %c0_11 = arith.constant 0 : index
    %11 = vector.load %arg11[%c0_9, %c0_10, %c0_11] : memref<8x8x512xf32, #tpu.memory_space<vmem>>, vector<8x8x512xf32>
    tpu.vector_store %arg11[%c0_9, %c0_10, %c0_11], %10 {strides = array<i32>} : memref<8x8x512xf32, #tpu.memory_space<vmem>>, vector<8x8x512xf32>,
    %c0_12 = arith.constant 0 : index
    %c0_13 = arith.constant 0 : index
    %12 = vector.load %arg1[%c0_12, %c0_13] : memref<8x1xi32, #tpu.memory_space<vmem>>, vector<8x1xi32>
    %c0_14 = arith.constant 0 : index
    %c0_15 = arith.constant 0 : index
    %13 = vector.load %arg5[%c0_14, %c0_15] : memref<128x512xf32, #tpu.memory_space<vmem>>, vector<128x512xf32>
    %c0_16 = arith.constant 0 : index
    %c0_17 = arith.constant 0 : index
    %14 = vector.load %arg6[%c0_16, %c0_17] : memref<128x512xf32, #tpu.memory_space<vmem>>, vector<128x512xf32>
    %cst_18 = arith.constant 0.000000e+00 : f32
    %15 = vector.broadcast %cst_18 : f32 to vector<8x128xf32>
    %c0_i32 = arith.constant 0 : i32
    %c7_i32 = arith.constant 7 : i32
    %16 = arith.subi %c7_i32, %c0_i32 : i32
    %17 = arith.index_cast %c0_i32 : i32 to index
    %c0_19 = arith.constant 0 : index
    %c0_20 = arith.constant 0 : index
    %18 = vector.load %arg10[%17, %c0_19, %c0_20] : memref<8x8x512xf32, #tpu.memory_space<vmem>>, vector<1x8x512xf32>
    %19 = vector.shape_cast %18 : vector<1x8x512xf32> to vector<8x512xf32>
    %cst_21 = arith.constant dense<0.000000e+00> : vector<8x512xf32>
    %20 = tpu.matmul %15, %13, %cst_21 {dimension_numbers = #tpu.dot_dimension_numbers<[1], [0], [0], [1], [0, 0, 1, 1], [], []>} : vector<8x128xf32>, vector<128x512xf32>, vector<8x512xf32> -> vector<8x512xf32>
    %21 = arith.addf %19, %20 : vector<8x512xf32>
    %22 = vector.extract_strided_slice %21 {offsets = [0, 0], sizes = [8, 128], strides = [1, 1]} : vector<8x512xf32> to vector<8x128xf32>
    %23 = arith.negf %22 : vector<8x128xf32>
    %24 = math.exp %23 : vector<8x128xf32>
    %cst_22 = arith.constant 1.000000e+00 : f32
    %25 = vector.broadcast %cst_22 : f32 to vector<8x128xf32>
    %26 = arith.addf %25, %24 : vector<8x128xf32>
    %27 = arith.divf %25, %26 : vector<8x128xf32>
    %28 = vector.extract_strided_slice %21 {offsets = [0, 128], sizes = [8, 128], strides = [1, 1]} : vector<8x512xf32> to vector<8x128xf32>
    %29 = arith.negf %28 : vector<8x128xf32>
    %30 = math.exp %29 : vector<8x128xf32>
    %cst_23 = arith.constant 1.000000e+00 : f32
    %31 = vector.broadcast %cst_23 : f32 to vector<8x128xf32>
    %32 = arith.addf %31, %30 : vector<8x128xf32>
    %33 = arith.divf %31, %32 : vector<8x128xf32>
    %34 = vector.extract_strided_slice %21 {offsets = [0, 256], sizes = [8, 128], strides = [1, 1]} : vector<8x512xf32> to vector<8x128xf32>
    %35 = math.tanh %34 : vector<8x128xf32>
    %36 = vector.extract_strided_slice %21 {offsets = [0, 384], sizes = [8, 128], strides = [1, 1]} : vector<8x512xf32> to vector<8x128xf32>
    %37 = arith.negf %36 : vector<8x128xf32>
    %38 = math.exp %37 : vector<8x128xf32>
    %cst_24 = arith.constant 1.000000e+00 : f32
    %39 = vector.broadcast %cst_24 : f32 to vector<8x128xf32>
    %40 = arith.addf %39, %38 : vector<8x128xf32>
    %41 = arith.divf %39, %40 : vector<8x128xf32>
    %42 = arith.mulf %33, %15 : vector<8x128xf32>
    %43 = arith.mulf %27, %35 : vector<8x128xf32>
    %44 = arith.addf %42, %43 : vector<8x128xf32>
    %45 = math.tanh %44 : vector<8x128xf32>
    %46 = arith.mulf %41, %45 : vector<8x128xf32>
    %47 = arith.index_cast %16 : i32 to index
    %c0_25 = arith.constant 0 : index
    %c0_26 = arith.constant 0 : index
    %48 = vector.load %arg11[%47, %c0_25, %c0_26] : memref<8x8x512xf32, #tpu.memory_space<vmem>>, vector<1x8x512xf32>
    %49 = vector.shape_cast %48 : vector<1x8x512xf32> to vector<8x512xf32>
    %cst_27 = arith.constant dense<0.000000e+00> : vector<8x512xf32>
    %50 = tpu.matmul %15, %14, %cst_27 {dimension_numbers = #tpu.dot_dimension_numbers<[1], [0], [0], [1], [0, 0, 1, 1], [], []>} : vector<8x128xf32>, vector<128x512xf32>, vector<8x512xf32> -> vector<8x512xf32>
    %51 = arith.addf %49, %50 : vector<8x512xf32>
    %52 = vector.extract_strided_slice %51 {offsets = [0, 0], sizes = [8, 128], strides = [1, 1]} : vector<8x512xf32> to vector<8x128xf32>
    %53 = arith.negf %52 : vector<8x128xf32>
    %54 = math.exp %53 : vector<8x128xf32>
    %cst_28 = arith.constant 1.000000e+00 : f32
    %55 = vector.broadcast %cst_28 : f32 to vector<8x128xf32>
    %56 = arith.addf %55, %54 : vector<8x128xf32>
    %57 = arith.divf %55, %56 : vector<8x128xf32>
    %58 = vector.extract_strided_slice %51 {offsets = [0, 128], sizes = [8, 128], strides = [1, 1]} : vector<8x512xf32> to vector<8x128xf32>
    %59 = arith.negf %58 : vector<8x128xf32>
    %60 = math.exp %59 : vector<8x128xf32>
    %cst_29 = arith.constant 1.000000e+00 : f32
    %61 = vector.broadcast %cst_29 : f32 to vector<8x128xf32>
    %62 = arith.addf %61, %60 : vector<8x128xf32>
    %63 = arith.divf %61, %62 : vector<8x128xf32>
    %64 = vector.extract_strided_slice %51 {offsets = [0, 256], sizes = [8, 128], strides = [1, 1]} : vector<8x512xf32> to vector<8x128xf32>
    %65 = math.tanh %64 : vector<8x128xf32>
    %66 = vector.extract_strided_slice %51 {offsets = [0, 384], sizes = [8, 128], strides = [1, 1]} : vector<8x512xf32> to vector<8x128xf32>
    %67 = arith.negf %66 : vector<8x128xf32>
    %68 = math.exp %67 : vector<8x128xf32>
    %cst_30 = arith.constant 1.000000e+00 : f32
    %69 = vector.broadcast %cst_30 : f32 to vector<8x128xf32>
    %70 = arith.addf %69, %68 : vector<8x128xf32>
    %71 = arith.divf %69, %70 : vector<8x128xf32>
    %72 = arith.mulf %63, %15 : vector<8x128xf32>
    %73 = arith.mulf %57, %65 : vector<8x128xf32>
    %74 = arith.addf %72, %73 : vector<8x128xf32>
    %75 = math.tanh %74 : vector<8x128xf32>
    %76 = arith.mulf %71, %75 : vector<8x128xf32>
    %77 = vector.broadcast %c0_i32 : i32 to vector<8x1xi32>
    %78 = arith.cmpi sgt, %12, %77 : vector<8x1xi32>
    %79 = vector.broadcast %16 : i32 to vector<8x1xi32>
    %80 = arith.cmpi sgt, %12, %79 : vector<8x1xi32>
    %81 = vector.shape_cast %78 : vector<8x1xi1> to vector<8x1xi1>
    %82 = vector.broadcast %81 : vector<8x1xi1> to vector<8x128xi1>
    %83 = arith.select %82, %46, %15 : vector<8x128xi1>, vector<8x128xf32>
    %84 = vector.shape_cast %78 : vector<8x1xi1> to vector<8x1xi1>
    %85 = vector.broadcast %84 : vector<8x1xi1> to vector<8x128xi1>
    %86 = arith.select %85, %44, %15 : vector<8x128xi1>, vector<8x128xf32>
    %87 = vector.shape_cast %80 : vector<8x1xi1> to vector<8x1xi1>
    %88 = vector.broadcast %87 : vector<8x1xi1> to vector<8x128xi1>
    %89 = arith.select %88, %76, %15 : vector<8x128xi1>, vector<8x128xf32>
    %90 = vector.shape_cast %80 : vector<8x1xi1> to vector<8x1xi1>
    %91 = vector.broadcast %90 : vector<8x1xi1> to vector<8x128xi1>
    %92 = arith.select %91, %74, %15 : vector<8x128xi1>, vector<8x128xf32>
    %c1_i32 = arith.constant 1 : i32
    %c7_i32_31 = arith.constant 7 : i32
    %93 = arith.subi %c7_i32_31, %c1_i32 : i32
    %94 = arith.index_cast %c1_i32 : i32 to index
    %c0_32 = arith.constant 0 : index
    %c0_33 = arith.constant 0 : index
    %95 = vector.load %arg10[%94, %c0_32, %c0_33] : memref<8x8x512xf32, #tpu.memory_space<vmem>>, vector<1x8x512xf32>
    %96 = vector.shape_cast %95 : vector<1x8x512xf32> to vector<8x512xf32>
    %cst_34 = arith.constant dense<0.000000e+00> : vector<8x512xf32>
    %97 = tpu.matmul %83, %13, %cst_34 {dimension_numbers = #tpu.dot_dimension_numbers<[1], [0], [0], [1], [0, 0, 1, 1], [], []>} : vector<8x128xf32>, vector<128x512xf32>, vector<8x512xf32> -> vector<8x512xf32>
    %98 = arith.addf %96, %97 : vector<8x512xf32>
    %99 = vector.extract_strided_slice %98 {offsets = [0, 0], sizes = [8, 128], strides = [1, 1]} : vector<8x512xf32> to vector<8x128xf32>
    %100 = arith.negf %99 : vector<8x128xf32>
    %101 = math.exp %100 : vector<8x128xf32>
    %cst_35 = arith.constant 1.000000e+00 : f32
    %102 = vector.broadcast %cst_35 : f32 to vector<8x128xf32>
    %103 = arith.addf %102, %101 : vector<8x128xf32>
    %104 = arith.divf %102, %103 : vector<8x128xf32>
    %105 = vector.extract_strided_slice %98 {offsets = [0, 128], sizes = [8, 128], strides = [1, 1]} : vector<8x512xf32> to vector<8x128xf32>
    %106 = arith.negf %105 : vector<8x128xf32>
    %107 = math.exp %106 : vector<8x128xf32>
    %cst_36 = arith.constant 1.000000e+00 : f32
    %108 = vector.broadcast %cst_36 : f32 to vector<8x128xf32>
    %109 = arith.addf %108, %107 : vector<8x128xf32>
    %110 = arith.divf %108, %109 : vector<8x128xf32>
    %111 = vector.extract_strided_slice %98 {offsets = [0, 256], sizes = [8, 128], strides = [1, 1]} : vector<8x512xf32> to vector<8x128xf32>
    %112 = math.tanh %111 : vector<8x128xf32>
    %113 = vector.extract_strided_slice %98 {offsets = [0, 384], sizes = [8, 128], strides = [1, 1]} : vector<8x512xf32> to vector<8x128xf32>
    %114 = arith.negf %113 : vector<8x128xf32>
    %115 = math.exp %114 : vector<8x128xf32>
    %cst_37 = arith.constant 1.000000e+00 : f32
    %116 = vector.broadcast %cst_37 : f32 to vector<8x128xf32>
    %117 = arith.addf %116, %115 : vector<8x128xf32>
    %118 = arith.divf %116, %117 : vector<8x128xf32>
    %119 = arith.mulf %110, %86 : vector<8x128xf32>
    %120 = arith.mulf %104, %112 : vector<8x128xf32>
    %121 = arith.addf %119, %120 : vector<8x128xf32>
    %122 = math.tanh %121 : vector<8x128xf32>
    %123 = arith.mulf %118, %122 : vector<8x128xf32>
    %124 = arith.index_cast %93 : i32 to index
    %c0_38 = arith.constant 0 : index
    %c0_39 = arith.constant 0 : index
    %125 = vector.load %arg11[%124, %c0_38, %c0_39] : memref<8x8x512xf32, #tpu.memory_space<vmem>>, vector<1x8x512xf32>
    %126 = vector.shape_cast %125 : vector<1x8x512xf32> to vector<8x512xf32>
    %cst_40 = arith.constant dense<0.000000e+00> : vector<8x512xf32>
    %127 = tpu.matmul %89, %14, %cst_40 {dimension_numbers = #tpu.dot_dimension_numbers<[1], [0], [0], [1], [0, 0, 1, 1], [], []>} : vector<8x128xf32>, vector<128x512xf32>, vector<8x512xf32> -> vector<8x512xf32>
    %128 = arith.addf %126, %127 : vector<8x512xf32>
    %129 = vector.extract_strided_slice %128 {offsets = [0, 0], sizes = [8, 128], strides = [1, 1]} : vector<8x512xf32> to vector<8x128xf32>
    %130 = arith.negf %129 : vector<8x128xf32>
    %131 = math.exp %130 : vector<8x128xf32>
    %cst_41 = arith.constant 1.000000e+00 : f32
    %132 = vector.broadcast %cst_41 : f32 to vector<8x128xf32>
    %133 = arith.addf %132, %131 : vector<8x128xf32>
    %134 = arith.divf %132, %133 : vector<8x128xf32>
    %135 = vector.extract_strided_slice %128 {offsets = [0, 128], sizes = [8, 128], strides = [1, 1]} : vector<8x512xf32> to vector<8x128xf32>
    %136 = arith.negf %135 : vector<8x128xf32>
    %137 = math.exp %136 : vector<8x128xf32>
    %cst_42 = arith.constant 1.000000e+00 : f32
    %138 = vector.broadcast %cst_42 : f32 to vector<8x128xf32>
    %139 = arith.addf %138, %137 : vector<8x128xf32>
    %140 = arith.divf %138, %139 : vector<8x128xf32>
    %141 = vector.extract_strided_slice %128 {offsets = [0, 256], sizes = [8, 128], strides = [1, 1]} : vector<8x512xf32> to vector<8x128xf32>
    %142 = math.tanh %141 : vector<8x128xf32>
    %143 = vector.extract_strided_slice %128 {offsets = [0, 384], sizes = [8, 128], strides = [1, 1]} : vector<8x512xf32> to vector<8x128xf32>
    %144 = arith.negf %143 : vector<8x128xf32>
    %145 = math.exp %144 : vector<8x128xf32>
    %cst_43 = arith.constant 1.000000e+00 : f32
    %146 = vector.broadcast %cst_43 : f32 to vector<8x128xf32>
    %147 = arith.addf %146, %145 : vector<8x128xf32>
    %148 = arith.divf %146, %147 : vector<8x128xf32>
    %149 = arith.mulf %140, %92 : vector<8x128xf32>
    %150 = arith.mulf %134, %142 : vector<8x128xf32>
    %151 = arith.addf %149, %150 : vector<8x128xf32>
    %152 = math.tanh %151 : vector<8x128xf32>
    %153 = arith.mulf %148, %152 : vector<8x128xf32>
    %154 = vector.broadcast %c1_i32 : i32 to vector<8x1xi32>
    %155 = arith.cmpi sgt, %12, %154 : vector<8x1xi32>
    %156 = vector.broadcast %93 : i32 to vector<8x1xi32>
    %157 = arith.cmpi sgt, %12, %156 : vector<8x1xi32>
    %158 = vector.shape_cast %155 : vector<8x1xi1> to vector<8x1xi1>
    %159 = vector.broadcast %158 : vector<8x1xi1> to vector<8x128xi1>
    %160 = arith.select %159, %123, %83 : vector<8x128xi1>, vector<8x128xf32>
    %161 = vector.shape_cast %155 : vector<8x1xi1> to vector<8x1xi1>
    %162 = vector.broadcast %161 : vector<8x1xi1> to vector<8x128xi1>
    %163 = arith.select %162, %121, %86 : vector<8x128xi1>, vector<8x128xf32>
    %164 = vector.shape_cast %157 : vector<8x1xi1> to vector<8x1xi1>
    %165 = vector.broadcast %164 : vector<8x1xi1> to vector<8x128xi1>
    %166 = arith.select %165, %153, %89 : vector<8x128xi1>, vector<8x128xf32>
    %167 = vector.shape_cast %157 : vector<8x1xi1> to vector<8x1xi1>
    %168 = vector.broadcast %167 : vector<8x1xi1> to vector<8x128xi1>
    %169 = arith.select %168, %151, %92 : vector<8x128xi1>, vector<8x128xf32>
    %c2_i32 = arith.constant 2 : i32
    %c7_i32_44 = arith.constant 7 : i32
    %170 = arith.subi %c7_i32_44, %c2_i32 : i32
    %171 = arith.index_cast %c2_i32 : i32 to index
    %c0_45 = arith.constant 0 : index
    %c0_46 = arith.constant 0 : index
    %172 = vector.load %arg10[%171, %c0_45, %c0_46] : memref<8x8x512xf32, #tpu.memory_space<vmem>>, vector<1x8x512xf32>
    %173 = vector.shape_cast %172 : vector<1x8x512xf32> to vector<8x512xf32>
    %cst_47 = arith.constant dense<0.000000e+00> : vector<8x512xf32>
    %174 = tpu.matmul %160, %13, %cst_47 {dimension_numbers = #tpu.dot_dimension_numbers<[1], [0], [0], [1], [0, 0, 1, 1], [], []>} : vector<8x128xf32>, vector<128x512xf32>, vector<8x512xf32> -> vector<8x512xf32>
    %175 = arith.addf %173, %174 : vector<8x512xf32>
    %176 = vector.extract_strided_slice %175 {offsets = [0, 0], sizes = [8, 128], strides = [1, 1]} : vector<8x512xf32> to vector<8x128xf32>
    %177 = arith.negf %176 : vector<8x128xf32>
    %178 = math.exp %177 : vector<8x128xf32>
    %cst_48 = arith.constant 1.000000e+00 : f32
    %179 = vector.broadcast %cst_48 : f32 to vector<8x128xf32>
    %180 = arith.addf %179, %178 : vector<8x128xf32>
    %181 = arith.divf %179, %180 : vector<8x128xf32>
    %182 = vector.extract_strided_slice %175 {offsets = [0, 128], sizes = [8, 128], strides = [1, 1]} : vector<8x512xf32> to vector<8x128xf32>
    %183 = arith.negf %182 : vector<8x128xf32>
    %184 = math.exp %183 : vector<8x128xf32>
    %cst_49 = arith.constant 1.000000e+00 : f32
    %185 = vector.broadcast %cst_49 : f32 to vector<8x128xf32>
    %186 = arith.addf %185, %184 : vector<8x128xf32>
    %187 = arith.divf %185, %186 : vector<8x128xf32>
    %188 = vector.extract_strided_slice %175 {offsets = [0, 256], sizes = [8, 128], strides = [1, 1]} : vector<8x512xf32> to vector<8x128xf32>
    %189 = math.tanh %188 : vector<8x128xf32>
    %190 = vector.extract_strided_slice %175 {offsets = [0, 384], sizes = [8, 128], strides = [1, 1]} : vector<8x512xf32> to vector<8x128xf32>
    %191 = arith.negf %190 : vector<8x128xf32>
    %192 = math.exp %191 : vector<8x128xf32>
    %cst_50 = arith.constant 1.000000e+00 : f32
    %193 = vector.broadcast %cst_50 : f32 to vector<8x128xf32>
    %194 = arith.addf %193, %192 : vector<8x128xf32>
    %195 = arith.divf %193, %194 : vector<8x128xf32>
    %196 = arith.mulf %187, %163 : vector<8x128xf32>
    %197 = arith.mulf %181, %189 : vector<8x128xf32>
    %198 = arith.addf %196, %197 : vector<8x128xf32>
    %199 = math.tanh %198 : vector<8x128xf32>
    %200 = arith.mulf %195, %199 : vector<8x128xf32>
    %201 = arith.index_cast %170 : i32 to index
    %c0_51 = arith.constant 0 : index
    %c0_52 = arith.constant 0 : index
    %202 = vector.load %arg11[%201, %c0_51, %c0_52] : memref<8x8x512xf32, #tpu.memory_space<vmem>>, vector<1x8x512xf32>
    %203 = vector.shape_cast %202 : vector<1x8x512xf32> to vector<8x512xf32>
    %cst_53 = arith.constant dense<0.000000e+00> : vector<8x512xf32>
    %204 = tpu.matmul %166, %14, %cst_53 {dimension_numbers = #tpu.dot_dimension_numbers<[1], [0], [0], [1], [0, 0, 1, 1], [], []>} : vector<8x128xf32>, vector<128x512xf32>, vector<8x512xf32> -> vector<8x512xf32>
    %205 = arith.addf %203, %204 : vector<8x512xf32>
    %206 = vector.extract_strided_slice %205 {offsets = [0, 0], sizes = [8, 128], strides = [1, 1]} : vector<8x512xf32> to vector<8x128xf32>
    %207 = arith.negf %206 : vector<8x128xf32>
    %208 = math.exp %207 : vector<8x128xf32>
    %cst_54 = arith.constant 1.000000e+00 : f32
    %209 = vector.broadcast %cst_54 : f32 to vector<8x128xf32>
    %210 = arith.addf %209, %208 : vector<8x128xf32>
    %211 = arith.divf %209, %210 : vector<8x128xf32>
    %212 = vector.extract_strided_slice %205 {offsets = [0, 128], sizes = [8, 128], strides = [1, 1]} : vector<8x512xf32> to vector<8x128xf32>
    %213 = arith.negf %212 : vector<8x128xf32>
    %214 = math.exp %213 : vector<8x128xf32>
    %cst_55 = arith.constant 1.000000e+00 : f32
    %215 = vector.broadcast %cst_55 : f32 to vector<8x128xf32>
    %216 = arith.addf %215, %214 : vector<8x128xf32>
    %217 = arith.divf %215, %216 : vector<8x128xf32>
    %218 = vector.extract_strided_slice %205 {offsets = [0, 256], sizes = [8, 128], strides = [1, 1]} : vector<8x512xf32> to vector<8x128xf32>
    %219 = math.tanh %218 : vector<8x128xf32>
    %220 = vector.extract_strided_slice %205 {offsets = [0, 384], sizes = [8, 128], strides = [1, 1]} : vector<8x512xf32> to vector<8x128xf32>
    %221 = arith.negf %220 : vector<8x128xf32>
    %222 = math.exp %221 : vector<8x128xf32>
    %cst_56 = arith.constant 1.000000e+00 : f32
    %223 = vector.broadcast %cst_56 : f32 to vector<8x128xf32>
    %224 = arith.addf %223, %222 : vector<8x128xf32>
    %225 = arith.divf %223, %224 : vector<8x128xf32>
    %226 = arith.mulf %217, %169 : vector<8x128xf32>
    %227 = arith.mulf %211, %219 : vector<8x128xf32>
    %228 = arith.addf %226, %227 : vector<8x128xf32>
    %229 = math.tanh %228 : vector<8x128xf32>
    %230 = arith.mulf %225, %229 : vector<8x128xf32>
    %231 = vector.broadcast %c2_i32 : i32 to vector<8x1xi32>
    %232 = arith.cmpi sgt, %12, %231 : vector<8x1xi32>
    %233 = vector.broadcast %170 : i32 to vector<8x1xi32>
    %234 = arith.cmpi sgt, %12, %233 : vector<8x1xi32>
    %235 = vector.shape_cast %232 : vector<8x1xi1> to vector<8x1xi1>
    %236 = vector.broadcast %235 : vector<8x1xi1> to vector<8x128xi1>
    %237 = arith.select %236, %200, %160 : vector<8x128xi1>, vector<8x128xf32>
    %238 = vector.shape_cast %232 : vector<8x1xi1> to vector<8x1xi1>
    %239 = vector.broadcast %238 : vector<8x1xi1> to vector<8x128xi1>
    %240 = arith.select %239, %198, %163 : vector<8x128xi1>, vector<8x128xf32>
    %241 = vector.shape_cast %234 : vector<8x1xi1> to vector<8x1xi1>
    %242 = vector.broadcast %241 : vector<8x1xi1> to vector<8x128xi1>
    %243 = arith.select %242, %230, %166 : vector<8x128xi1>, vector<8x128xf32>
    %244 = vector.shape_cast %234 : vector<8x1xi1> to vector<8x1xi1>
    %245 = vector.broadcast %244 : vector<8x1xi1> to vector<8x128xi1>
    %246 = arith.select %245, %228, %169 : vector<8x128xi1>, vector<8x128xf32>
    %c3_i32 = arith.constant 3 : i32
    %c7_i32_57 = arith.constant 7 : i32
    %247 = arith.subi %c7_i32_57, %c3_i32 : i32
    %248 = arith.index_cast %c3_i32 : i32 to index
    %c0_58 = arith.constant 0 : index
    %c0_59 = arith.constant 0 : index
    %249 = vector.load %arg10[%248, %c0_58, %c0_59] : memref<8x8x512xf32, #tpu.memory_space<vmem>>, vector<1x8x512xf32>
    %250 = vector.shape_cast %249 : vector<1x8x512xf32> to vector<8x512xf32>
    %cst_60 = arith.constant dense<0.000000e+00> : vector<8x512xf32>
    %251 = tpu.matmul %237, %13, %cst_60 {dimension_numbers = #tpu.dot_dimension_numbers<[1], [0], [0], [1], [0, 0, 1, 1], [], []>} : vector<8x128xf32>, vector<128x512xf32>, vector<8x512xf32> -> vector<8x512xf32>
    %252 = arith.addf %250, %251 : vector<8x512xf32>
    %253 = vector.extract_strided_slice %252 {offsets = [0, 0], sizes = [8, 128], strides = [1, 1]} : vector<8x512xf32> to vector<8x128xf32>
    %254 = arith.negf %253 : vector<8x128xf32>
    %255 = math.exp %254 : vector<8x128xf32>
    %cst_61 = arith.constant 1.000000e+00 : f32
    %256 = vector.broadcast %cst_61 : f32 to vector<8x128xf32>
    %257 = arith.addf %256, %255 : vector<8x128xf32>
    %258 = arith.divf %256, %257 : vector<8x128xf32>
    %259 = vector.extract_strided_slice %252 {offsets = [0, 128], sizes = [8, 128], strides = [1, 1]} : vector<8x512xf32> to vector<8x128xf32>
    %260 = arith.negf %259 : vector<8x128xf32>
    %261 = math.exp %260 : vector<8x128xf32>
    %cst_62 = arith.constant 1.000000e+00 : f32
    %262 = vector.broadcast %cst_62 : f32 to vector<8x128xf32>
    %263 = arith.addf %262, %261 : vector<8x128xf32>
    %264 = arith.divf %262, %263 : vector<8x128xf32>
    %265 = vector.extract_strided_slice %252 {offsets = [0, 256], sizes = [8, 128], strides = [1, 1]} : vector<8x512xf32> to vector<8x128xf32>
    %266 = math.tanh %265 : vector<8x128xf32>
    %267 = vector.extract_strided_slice %252 {offsets = [0, 384], sizes = [8, 128], strides = [1, 1]} : vector<8x512xf32> to vector<8x128xf32>
    %268 = arith.negf %267 : vector<8x128xf32>
    %269 = math.exp %268 : vector<8x128xf32>
    %cst_63 = arith.constant 1.000000e+00 : f32
    %270 = vector.broadcast %cst_63 : f32 to vector<8x128xf32>
    %271 = arith.addf %270, %269 : vector<8x128xf32>
    %272 = arith.divf %270, %271 : vector<8x128xf32>
    %273 = arith.mulf %264, %240 : vector<8x128xf32>
    %274 = arith.mulf %258, %266 : vector<8x128xf32>
    %275 = arith.addf %273, %274 : vector<8x128xf32>
    %276 = math.tanh %275 : vector<8x128xf32>
    %277 = arith.mulf %272, %276 : vector<8x128xf32>
    %278 = arith.index_cast %247 : i32 to index
    %c0_64 = arith.constant 0 : index
    %c0_65 = arith.constant 0 : index
    %279 = vector.load %arg11[%278, %c0_64, %c0_65] : memref<8x8x512xf32, #tpu.memory_space<vmem>>, vector<1x8x512xf32>
    %280 = vector.shape_cast %279 : vector<1x8x512xf32> to vector<8x512xf32>
    %cst_66 = arith.constant dense<0.000000e+00> : vector<8x512xf32>
    %281 = tpu.matmul %243, %14, %cst_66 {dimension_numbers = #tpu.dot_dimension_numbers<[1], [0], [0], [1], [0, 0, 1, 1], [], []>} : vector<8x128xf32>, vector<128x512xf32>, vector<8x512xf32> -> vector<8x512xf32>
    %282 = arith.addf %280, %281 : vector<8x512xf32>
    %283 = vector.extract_strided_slice %282 {offsets = [0, 0], sizes = [8, 128], strides = [1, 1]} : vector<8x512xf32> to vector<8x128xf32>
    %284 = arith.negf %283 : vector<8x128xf32>
    %285 = math.exp %284 : vector<8x128xf32>
    %cst_67 = arith.constant 1.000000e+00 : f32
    %286 = vector.broadcast %cst_67 : f32 to vector<8x128xf32>
    %287 = arith.addf %286, %285 : vector<8x128xf32>
    %288 = arith.divf %286, %287 : vector<8x128xf32>
    %289 = vector.extract_strided_slice %282 {offsets = [0, 128], sizes = [8, 128], strides = [1, 1]} : vector<8x512xf32> to vector<8x128xf32>
    %290 = arith.negf %289 : vector<8x128xf32>
    %291 = math.exp %290 : vector<8x128xf32>
    %cst_68 = arith.constant 1.000000e+00 : f32
    %292 = vector.broadcast %cst_68 : f32 to vector<8x128xf32>
    %293 = arith.addf %292, %291 : vector<8x128xf32>
    %294 = arith.divf %292, %293 : vector<8x128xf32>
    %295 = vector.extract_strided_slice %282 {offsets = [0, 256], sizes = [8, 128], strides = [1, 1]} : vector<8x512xf32> to vector<8x128xf32>
    %296 = math.tanh %295 : vector<8x128xf32>
    %297 = vector.extract_strided_slice %282 {offsets = [0, 384], sizes = [8, 128], strides = [1, 1]} : vector<8x512xf32> to vector<8x128xf32>
    %298 = arith.negf %297 : vector<8x128xf32>
    %299 = math.exp %298 : vector<8x128xf32>
    %cst_69 = arith.constant 1.000000e+00 : f32
    %300 = vector.broadcast %cst_69 : f32 to vector<8x128xf32>
    %301 = arith.addf %300, %299 : vector<8x128xf32>
    %302 = arith.divf %300, %301 : vector<8x128xf32>
    %303 = arith.mulf %294, %246 : vector<8x128xf32>
    %304 = arith.mulf %288, %296 : vector<8x128xf32>
    %305 = arith.addf %303, %304 : vector<8x128xf32>
    %306 = math.tanh %305 : vector<8x128xf32>
    %307 = arith.mulf %302, %306 : vector<8x128xf32>
    %308 = vector.broadcast %c3_i32 : i32 to vector<8x1xi32>
    %309 = arith.cmpi sgt, %12, %308 : vector<8x1xi32>
    %310 = vector.broadcast %247 : i32 to vector<8x1xi32>
    %311 = arith.cmpi sgt, %12, %310 : vector<8x1xi32>
    %312 = vector.shape_cast %309 : vector<8x1xi1> to vector<8x1xi1>
    %313 = vector.broadcast %312 : vector<8x1xi1> to vector<8x128xi1>
    %314 = arith.select %313, %277, %237 : vector<8x128xi1>, vector<8x128xf32>
    %315 = vector.shape_cast %309 : vector<8x1xi1> to vector<8x1xi1>
    %316 = vector.broadcast %315 : vector<8x1xi1> to vector<8x128xi1>
    %317 = arith.select %316, %275, %240 : vector<8x128xi1>, vector<8x128xf32>
    %318 = vector.shape_cast %311 : vector<8x1xi1> to vector<8x1xi1>
    %319 = vector.broadcast %318 : vector<8x1xi1> to vector<8x128xi1>
    %320 = arith.select %319, %307, %243 : vector<8x128xi1>, vector<8x128xf32>
    %321 = vector.shape_cast %311 : vector<8x1xi1> to vector<8x1xi1>
    %322 = vector.broadcast %321 : vector<8x1xi1> to vector<8x128xi1>
    %323 = arith.select %322, %305, %246 : vector<8x128xi1>, vector<8x128xf32>
    %c4_i32 = arith.constant 4 : i32
    %c7_i32_70 = arith.constant 7 : i32
    %324 = arith.subi %c7_i32_70, %c4_i32 : i32
    %325 = arith.index_cast %c4_i32 : i32 to index
    %c0_71 = arith.constant 0 : index
    %c0_72 = arith.constant 0 : index
    %326 = vector.load %arg10[%325, %c0_71, %c0_72] : memref<8x8x512xf32, #tpu.memory_space<vmem>>, vector<1x8x512xf32>
    %327 = vector.shape_cast %326 : vector<1x8x512xf32> to vector<8x512xf32>
    %cst_73 = arith.constant dense<0.000000e+00> : vector<8x512xf32>
    %328 = tpu.matmul %314, %13, %cst_73 {dimension_numbers = #tpu.dot_dimension_numbers<[1], [0], [0], [1], [0, 0, 1, 1], [], []>} : vector<8x128xf32>, vector<128x512xf32>, vector<8x512xf32> -> vector<8x512xf32>
    %329 = arith.addf %327, %328 : vector<8x512xf32>
    %330 = vector.extract_strided_slice %329 {offsets = [0, 0], sizes = [8, 128], strides = [1, 1]} : vector<8x512xf32> to vector<8x128xf32>
    %331 = arith.negf %330 : vector<8x128xf32>
    %332 = math.exp %331 : vector<8x128xf32>
    %cst_74 = arith.constant 1.000000e+00 : f32
    %333 = vector.broadcast %cst_74 : f32 to vector<8x128xf32>
    %334 = arith.addf %333, %332 : vector<8x128xf32>
    %335 = arith.divf %333, %334 : vector<8x128xf32>
    %336 = vector.extract_strided_slice %329 {offsets = [0, 128], sizes = [8, 128], strides = [1, 1]} : vector<8x512xf32> to vector<8x128xf32>
    %337 = arith.negf %336 : vector<8x128xf32>
    %338 = math.exp %337 : vector<8x128xf32>
    %cst_75 = arith.constant 1.000000e+00 : f32
    %339 = vector.broadcast %cst_75 : f32 to vector<8x128xf32>
    %340 = arith.addf %339, %338 : vector<8x128xf32>
    %341 = arith.divf %339, %340 : vector<8x128xf32>
    %342 = vector.extract_strided_slice %329 {offsets = [0, 256], sizes = [8, 128], strides = [1, 1]} : vector<8x512xf32> to vector<8x128xf32>
    %343 = math.tanh %342 : vector<8x128xf32>
    %344 = vector.extract_strided_slice %329 {offsets = [0, 384], sizes = [8, 128], strides = [1, 1]} : vector<8x512xf32> to vector<8x128xf32>
    %345 = arith.negf %344 : vector<8x128xf32>
    %346 = math.exp %345 : vector<8x128xf32>
    %cst_76 = arith.constant 1.000000e+00 : f32
    %347 = vector.broadcast %cst_76 : f32 to vector<8x128xf32>
    %348 = arith.addf %347, %346 : vector<8x128xf32>
    %349 = arith.divf %347, %348 : vector<8x128xf32>
    %350 = arith.mulf %341, %317 : vector<8x128xf32>
    %351 = arith.mulf %335, %343 : vector<8x128xf32>
    %352 = arith.addf %350, %351 : vector<8x128xf32>
    %353 = math.tanh %352 : vector<8x128xf32>
    %354 = arith.mulf %349, %353 : vector<8x128xf32>
    %355 = arith.index_cast %324 : i32 to index
    %c0_77 = arith.constant 0 : index
    %c0_78 = arith.constant 0 : index
    %356 = vector.load %arg11[%355, %c0_77, %c0_78] : memref<8x8x512xf32, #tpu.memory_space<vmem>>, vector<1x8x512xf32>
    %357 = vector.shape_cast %356 : vector<1x8x512xf32> to vector<8x512xf32>
    %cst_79 = arith.constant dense<0.000000e+00> : vector<8x512xf32>
    %358 = tpu.matmul %320, %14, %cst_79 {dimension_numbers = #tpu.dot_dimension_numbers<[1], [0], [0], [1], [0, 0, 1, 1], [], []>} : vector<8x128xf32>, vector<128x512xf32>, vector<8x512xf32> -> vector<8x512xf32>
    %359 = arith.addf %357, %358 : vector<8x512xf32>
    %360 = vector.extract_strided_slice %359 {offsets = [0, 0], sizes = [8, 128], strides = [1, 1]} : vector<8x512xf32> to vector<8x128xf32>
    %361 = arith.negf %360 : vector<8x128xf32>
    %362 = math.exp %361 : vector<8x128xf32>
    %cst_80 = arith.constant 1.000000e+00 : f32
    %363 = vector.broadcast %cst_80 : f32 to vector<8x128xf32>
    %364 = arith.addf %363, %362 : vector<8x128xf32>
    %365 = arith.divf %363, %364 : vector<8x128xf32>
    %366 = vector.extract_strided_slice %359 {offsets = [0, 128], sizes = [8, 128], strides = [1, 1]} : vector<8x512xf32> to vector<8x128xf32>
    %367 = arith.negf %366 : vector<8x128xf32>
    %368 = math.exp %367 : vector<8x128xf32>
    %cst_81 = arith.constant 1.000000e+00 : f32
    %369 = vector.broadcast %cst_81 : f32 to vector<8x128xf32>
    %370 = arith.addf %369, %368 : vector<8x128xf32>
    %371 = arith.divf %369, %370 : vector<8x128xf32>
    %372 = vector.extract_strided_slice %359 {offsets = [0, 256], sizes = [8, 128], strides = [1, 1]} : vector<8x512xf32> to vector<8x128xf32>
    %373 = math.tanh %372 : vector<8x128xf32>
    %374 = vector.extract_strided_slice %359 {offsets = [0, 384], sizes = [8, 128], strides = [1, 1]} : vector<8x512xf32> to vector<8x128xf32>
    %375 = arith.negf %374 : vector<8x128xf32>
    %376 = math.exp %375 : vector<8x128xf32>
    %cst_82 = arith.constant 1.000000e+00 : f32
    %377 = vector.broadcast %cst_82 : f32 to vector<8x128xf32>
    %378 = arith.addf %377, %376 : vector<8x128xf32>
    %379 = arith.divf %377, %378 : vector<8x128xf32>
    %380 = arith.mulf %371, %323 : vector<8x128xf32>
    %381 = arith.mulf %365, %373 : vector<8x128xf32>
    %382 = arith.addf %380, %381 : vector<8x128xf32>
    %383 = math.tanh %382 : vector<8x128xf32>
    %384 = arith.mulf %379, %383 : vector<8x128xf32>
    %385 = vector.broadcast %c4_i32 : i32 to vector<8x1xi32>
    %386 = arith.cmpi sgt, %12, %385 : vector<8x1xi32>
    %387 = vector.broadcast %324 : i32 to vector<8x1xi32>
    %388 = arith.cmpi sgt, %12, %387 : vector<8x1xi32>
    %389 = vector.shape_cast %386 : vector<8x1xi1> to vector<8x1xi1>
    %390 = vector.broadcast %389 : vector<8x1xi1> to vector<8x128xi1>
    %391 = arith.select %390, %354, %314 : vector<8x128xi1>, vector<8x128xf32>
    %392 = vector.shape_cast %386 : vector<8x1xi1> to vector<8x1xi1>
    %393 = vector.broadcast %392 : vector<8x1xi1> to vector<8x128xi1>
    %394 = arith.select %393, %352, %317 : vector<8x128xi1>, vector<8x128xf32>
    %395 = vector.shape_cast %388 : vector<8x1xi1> to vector<8x1xi1>
    %396 = vector.broadcast %395 : vector<8x1xi1> to vector<8x128xi1>
    %397 = arith.select %396, %384, %320 : vector<8x128xi1>, vector<8x128xf32>
    %398 = vector.shape_cast %388 : vector<8x1xi1> to vector<8x1xi1>
    %399 = vector.broadcast %398 : vector<8x1xi1> to vector<8x128xi1>
    %400 = arith.select %399, %382, %323 : vector<8x128xi1>, vector<8x128xf32>
    %c5_i32 = arith.constant 5 : i32
    %c7_i32_83 = arith.constant 7 : i32
    %401 = arith.subi %c7_i32_83, %c5_i32 : i32
    %402 = arith.index_cast %c5_i32 : i32 to index
    %c0_84 = arith.constant 0 : index
    %c0_85 = arith.constant 0 : index
    %403 = vector.load %arg10[%402, %c0_84, %c0_85] : memref<8x8x512xf32, #tpu.memory_space<vmem>>, vector<1x8x512xf32>
    %404 = vector.shape_cast %403 : vector<1x8x512xf32> to vector<8x512xf32>
    %cst_86 = arith.constant dense<0.000000e+00> : vector<8x512xf32>
    %405 = tpu.matmul %391, %13, %cst_86 {dimension_numbers = #tpu.dot_dimension_numbers<[1], [0], [0], [1], [0, 0, 1, 1], [], []>} : vector<8x128xf32>, vector<128x512xf32>, vector<8x512xf32> -> vector<8x512xf32>
    %406 = arith.addf %404, %405 : vector<8x512xf32>
    %407 = vector.extract_strided_slice %406 {offsets = [0, 0], sizes = [8, 128], strides = [1, 1]} : vector<8x512xf32> to vector<8x128xf32>
    %408 = arith.negf %407 : vector<8x128xf32>
    %409 = math.exp %408 : vector<8x128xf32>
    %cst_87 = arith.constant 1.000000e+00 : f32
    %410 = vector.broadcast %cst_87 : f32 to vector<8x128xf32>
    %411 = arith.addf %410, %409 : vector<8x128xf32>
    %412 = arith.divf %410, %411 : vector<8x128xf32>
    %413 = vector.extract_strided_slice %406 {offsets = [0, 128], sizes = [8, 128], strides = [1, 1]} : vector<8x512xf32> to vector<8x128xf32>
    %414 = arith.negf %413 : vector<8x128xf32>
    %415 = math.exp %414 : vector<8x128xf32>
    %cst_88 = arith.constant 1.000000e+00 : f32
    %416 = vector.broadcast %cst_88 : f32 to vector<8x128xf32>
    %417 = arith.addf %416, %415 : vector<8x128xf32>
    %418 = arith.divf %416, %417 : vector<8x128xf32>
    %419 = vector.extract_strided_slice %406 {offsets = [0, 256], sizes = [8, 128], strides = [1, 1]} : vector<8x512xf32> to vector<8x128xf32>
    %420 = math.tanh %419 : vector<8x128xf32>
    %421 = vector.extract_strided_slice %406 {offsets = [0, 384], sizes = [8, 128], strides = [1, 1]} : vector<8x512xf32> to vector<8x128xf32>
    %422 = arith.negf %421 : vector<8x128xf32>
    %423 = math.exp %422 : vector<8x128xf32>
    %cst_89 = arith.constant 1.000000e+00 : f32
    %424 = vector.broadcast %cst_89 : f32 to vector<8x128xf32>
    %425 = arith.addf %424, %423 : vector<8x128xf32>
    %426 = arith.divf %424, %425 : vector<8x128xf32>
    %427 = arith.mulf %418, %394 : vector<8x128xf32>
    %428 = arith.mulf %412, %420 : vector<8x128xf32>
    %429 = arith.addf %427, %428 : vector<8x128xf32>
    %430 = math.tanh %429 : vector<8x128xf32>
    %431 = arith.mulf %426, %430 : vector<8x128xf32>
    %432 = arith.index_cast %401 : i32 to index
    %c0_90 = arith.constant 0 : index
    %c0_91 = arith.constant 0 : index
    %433 = vector.load %arg11[%432, %c0_90, %c0_91] : memref<8x8x512xf32, #tpu.memory_space<vmem>>, vector<1x8x512xf32>
    %434 = vector.shape_cast %433 : vector<1x8x512xf32> to vector<8x512xf32>
    %cst_92 = arith.constant dense<0.000000e+00> : vector<8x512xf32>
    %435 = tpu.matmul %397, %14, %cst_92 {dimension_numbers = #tpu.dot_dimension_numbers<[1], [0], [0], [1], [0, 0, 1, 1], [], []>} : vector<8x128xf32>, vector<128x512xf32>, vector<8x512xf32> -> vector<8x512xf32>
    %436 = arith.addf %434, %435 : vector<8x512xf32>
    %437 = vector.extract_strided_slice %436 {offsets = [0, 0], sizes = [8, 128], strides = [1, 1]} : vector<8x512xf32> to vector<8x128xf32>
    %438 = arith.negf %437 : vector<8x128xf32>
    %439 = math.exp %438 : vector<8x128xf32>
    %cst_93 = arith.constant 1.000000e+00 : f32
    %440 = vector.broadcast %cst_93 : f32 to vector<8x128xf32>
    %441 = arith.addf %440, %439 : vector<8x128xf32>
    %442 = arith.divf %440, %441 : vector<8x128xf32>
    %443 = vector.extract_strided_slice %436 {offsets = [0, 128], sizes = [8, 128], strides = [1, 1]} : vector<8x512xf32> to vector<8x128xf32>
    %444 = arith.negf %443 : vector<8x128xf32>
    %445 = math.exp %444 : vector<8x128xf32>
    %cst_94 = arith.constant 1.000000e+00 : f32
    %446 = vector.broadcast %cst_94 : f32 to vector<8x128xf32>
    %447 = arith.addf %446, %445 : vector<8x128xf32>
    %448 = arith.divf %446, %447 : vector<8x128xf32>
    %449 = vector.extract_strided_slice %436 {offsets = [0, 256], sizes = [8, 128], strides = [1, 1]} : vector<8x512xf32> to vector<8x128xf32>
    %450 = math.tanh %449 : vector<8x128xf32>
    %451 = vector.extract_strided_slice %436 {offsets = [0, 384], sizes = [8, 128], strides = [1, 1]} : vector<8x512xf32> to vector<8x128xf32>
    %452 = arith.negf %451 : vector<8x128xf32>
    %453 = math.exp %452 : vector<8x128xf32>
    %cst_95 = arith.constant 1.000000e+00 : f32
    %454 = vector.broadcast %cst_95 : f32 to vector<8x128xf32>
    %455 = arith.addf %454, %453 : vector<8x128xf32>
    %456 = arith.divf %454, %455 : vector<8x128xf32>
    %457 = arith.mulf %448, %400 : vector<8x128xf32>
    %458 = arith.mulf %442, %450 : vector<8x128xf32>
    %459 = arith.addf %457, %458 : vector<8x128xf32>
    %460 = math.tanh %459 : vector<8x128xf32>
    %461 = arith.mulf %456, %460 : vector<8x128xf32>
    %462 = vector.broadcast %c5_i32 : i32 to vector<8x1xi32>
    %463 = arith.cmpi sgt, %12, %462 : vector<8x1xi32>
    %464 = vector.broadcast %401 : i32 to vector<8x1xi32>
    %465 = arith.cmpi sgt, %12, %464 : vector<8x1xi32>
    %466 = vector.shape_cast %463 : vector<8x1xi1> to vector<8x1xi1>
    %467 = vector.broadcast %466 : vector<8x1xi1> to vector<8x128xi1>
    %468 = arith.select %467, %431, %391 : vector<8x128xi1>, vector<8x128xf32>
    %469 = vector.shape_cast %463 : vector<8x1xi1> to vector<8x1xi1>
    %470 = vector.broadcast %469 : vector<8x1xi1> to vector<8x128xi1>
    %471 = arith.select %470, %429, %394 : vector<8x128xi1>, vector<8x128xf32>
    %472 = vector.shape_cast %465 : vector<8x1xi1> to vector<8x1xi1>
    %473 = vector.broadcast %472 : vector<8x1xi1> to vector<8x128xi1>
    %474 = arith.select %473, %461, %397 : vector<8x128xi1>, vector<8x128xf32>
    %475 = vector.shape_cast %465 : vector<8x1xi1> to vector<8x1xi1>
    %476 = vector.broadcast %475 : vector<8x1xi1> to vector<8x128xi1>
    %477 = arith.select %476, %459, %400 : vector<8x128xi1>, vector<8x128xf32>
    %c6_i32 = arith.constant 6 : i32
    %c7_i32_96 = arith.constant 7 : i32
    %478 = arith.subi %c7_i32_96, %c6_i32 : i32
    %479 = arith.index_cast %c6_i32 : i32 to index
    %c0_97 = arith.constant 0 : index
    %c0_98 = arith.constant 0 : index
    %480 = vector.load %arg10[%479, %c0_97, %c0_98] : memref<8x8x512xf32, #tpu.memory_space<vmem>>, vector<1x8x512xf32>
    %481 = vector.shape_cast %480 : vector<1x8x512xf32> to vector<8x512xf32>
    %cst_99 = arith.constant dense<0.000000e+00> : vector<8x512xf32>
    %482 = tpu.matmul %468, %13, %cst_99 {dimension_numbers = #tpu.dot_dimension_numbers<[1], [0], [0], [1], [0, 0, 1, 1], [], []>} : vector<8x128xf32>, vector<128x512xf32>, vector<8x512xf32> -> vector<8x512xf32>
    %483 = arith.addf %481, %482 : vector<8x512xf32>
    %484 = vector.extract_strided_slice %483 {offsets = [0, 0], sizes = [8, 128], strides = [1, 1]} : vector<8x512xf32> to vector<8x128xf32>
    %485 = arith.negf %484 : vector<8x128xf32>
    %486 = math.exp %485 : vector<8x128xf32>
    %cst_100 = arith.constant 1.000000e+00 : f32
    %487 = vector.broadcast %cst_100 : f32 to vector<8x128xf32>
    %488 = arith.addf %487, %486 : vector<8x128xf32>
    %489 = arith.divf %487, %488 : vector<8x128xf32>
    %490 = vector.extract_strided_slice %483 {offsets = [0, 128], sizes = [8, 128], strides = [1, 1]} : vector<8x512xf32> to vector<8x128xf32>
    %491 = arith.negf %490 : vector<8x128xf32>
    %492 = math.exp %491 : vector<8x128xf32>
    %cst_101 = arith.constant 1.000000e+00 : f32
    %493 = vector.broadcast %cst_101 : f32 to vector<8x128xf32>
    %494 = arith.addf %493, %492 : vector<8x128xf32>
    %495 = arith.divf %493, %494 : vector<8x128xf32>
    %496 = vector.extract_strided_slice %483 {offsets = [0, 256], sizes = [8, 128], strides = [1, 1]} : vector<8x512xf32> to vector<8x128xf32>
    %497 = math.tanh %496 : vector<8x128xf32>
    %498 = vector.extract_strided_slice %483 {offsets = [0, 384], sizes = [8, 128], strides = [1, 1]} : vector<8x512xf32> to vector<8x128xf32>
    %499 = arith.negf %498 : vector<8x128xf32>
    %500 = math.exp %499 : vector<8x128xf32>
    %cst_102 = arith.constant 1.000000e+00 : f32
    %501 = vector.broadcast %cst_102 : f32 to vector<8x128xf32>
    %502 = arith.addf %501, %500 : vector<8x128xf32>
    %503 = arith.divf %501, %502 : vector<8x128xf32>
    %504 = arith.mulf %495, %471 : vector<8x128xf32>
    %505 = arith.mulf %489, %497 : vector<8x128xf32>
    %506 = arith.addf %504, %505 : vector<8x128xf32>
    %507 = math.tanh %506 : vector<8x128xf32>
    %508 = arith.mulf %503, %507 : vector<8x128xf32>
    %509 = arith.index_cast %478 : i32 to index
    %c0_103 = arith.constant 0 : index
    %c0_104 = arith.constant 0 : index
    %510 = vector.load %arg11[%509, %c0_103, %c0_104] : memref<8x8x512xf32, #tpu.memory_space<vmem>>, vector<1x8x512xf32>
    %511 = vector.shape_cast %510 : vector<1x8x512xf32> to vector<8x512xf32>
    %cst_105 = arith.constant dense<0.000000e+00> : vector<8x512xf32>
    %512 = tpu.matmul %474, %14, %cst_105 {dimension_numbers = #tpu.dot_dimension_numbers<[1], [0], [0], [1], [0, 0, 1, 1], [], []>} : vector<8x128xf32>, vector<128x512xf32>, vector<8x512xf32> -> vector<8x512xf32>
    %513 = arith.addf %511, %512 : vector<8x512xf32>
    %514 = vector.extract_strided_slice %513 {offsets = [0, 0], sizes = [8, 128], strides = [1, 1]} : vector<8x512xf32> to vector<8x128xf32>
    %515 = arith.negf %514 : vector<8x128xf32>
    %516 = math.exp %515 : vector<8x128xf32>
    %cst_106 = arith.constant 1.000000e+00 : f32
    %517 = vector.broadcast %cst_106 : f32 to vector<8x128xf32>
    %518 = arith.addf %517, %516 : vector<8x128xf32>
    %519 = arith.divf %517, %518 : vector<8x128xf32>
    %520 = vector.extract_strided_slice %513 {offsets = [0, 128], sizes = [8, 128], strides = [1, 1]} : vector<8x512xf32> to vector<8x128xf32>
    %521 = arith.negf %520 : vector<8x128xf32>
    %522 = math.exp %521 : vector<8x128xf32>
    %cst_107 = arith.constant 1.000000e+00 : f32
    %523 = vector.broadcast %cst_107 : f32 to vector<8x128xf32>
    %524 = arith.addf %523, %522 : vector<8x128xf32>
    %525 = arith.divf %523, %524 : vector<8x128xf32>
    %526 = vector.extract_strided_slice %513 {offsets = [0, 256], sizes = [8, 128], strides = [1, 1]} : vector<8x512xf32> to vector<8x128xf32>
    %527 = math.tanh %526 : vector<8x128xf32>
    %528 = vector.extract_strided_slice %513 {offsets = [0, 384], sizes = [8, 128], strides = [1, 1]} : vector<8x512xf32> to vector<8x128xf32>
    %529 = arith.negf %528 : vector<8x128xf32>
    %530 = math.exp %529 : vector<8x128xf32>
    %cst_108 = arith.constant 1.000000e+00 : f32
    %531 = vector.broadcast %cst_108 : f32 to vector<8x128xf32>
    %532 = arith.addf %531, %530 : vector<8x128xf32>
    %533 = arith.divf %531, %532 : vector<8x128xf32>
    %534 = arith.mulf %525, %477 : vector<8x128xf32>
    %535 = arith.mulf %519, %527 : vector<8x128xf32>
    %536 = arith.addf %534, %535 : vector<8x128xf32>
    %537 = math.tanh %536 : vector<8x128xf32>
    %538 = arith.mulf %533, %537 : vector<8x128xf32>
    %539 = vector.broadcast %c6_i32 : i32 to vector<8x1xi32>
    %540 = arith.cmpi sgt, %12, %539 : vector<8x1xi32>
    %541 = vector.broadcast %478 : i32 to vector<8x1xi32>
    %542 = arith.cmpi sgt, %12, %541 : vector<8x1xi32>
    %543 = vector.shape_cast %540 : vector<8x1xi1> to vector<8x1xi1>
    %544 = vector.broadcast %543 : vector<8x1xi1> to vector<8x128xi1>
    %545 = arith.select %544, %508, %468 : vector<8x128xi1>, vector<8x128xf32>
    %546 = vector.shape_cast %540 : vector<8x1xi1> to vector<8x1xi1>
    %547 = vector.broadcast %546 : vector<8x1xi1> to vector<8x128xi1>
    %548 = arith.select %547, %506, %471 : vector<8x128xi1>, vector<8x128xf32>
    %549 = vector.shape_cast %542 : vector<8x1xi1> to vector<8x1xi1>
    %550 = vector.broadcast %549 : vector<8x1xi1> to vector<8x128xi1>
    %551 = arith.select %550, %538, %474 : vector<8x128xi1>, vector<8x128xf32>
    %552 = vector.shape_cast %542 : vector<8x1xi1> to vector<8x1xi1>
    %553 = vector.broadcast %552 : vector<8x1xi1> to vector<8x128xi1>
    %554 = arith.select %553, %536, %477 : vector<8x128xi1>, vector<8x128xf32>
    %c7_i32_109 = arith.constant 7 : i32
    %c7_i32_110 = arith.constant 7 : i32
    %555 = arith.subi %c7_i32_110, %c7_i32_109 : i32
    %556 = arith.index_cast %c7_i32_109 : i32 to index
    %c0_111 = arith.constant 0 : index
    %c0_112 = arith.constant 0 : index
    %557 = vector.load %arg10[%556, %c0_111, %c0_112] : memref<8x8x512xf32, #tpu.memory_space<vmem>>, vector<1x8x512xf32>
    %558 = vector.shape_cast %557 : vector<1x8x512xf32> to vector<8x512xf32>
    %cst_113 = arith.constant dense<0.000000e+00> : vector<8x512xf32>
    %559 = tpu.matmul %545, %13, %cst_113 {dimension_numbers = #tpu.dot_dimension_numbers<[1], [0], [0], [1], [0, 0, 1, 1], [], []>} : vector<8x128xf32>, vector<128x512xf32>, vector<8x512xf32> -> vector<8x512xf32>
    %560 = arith.addf %558, %559 : vector<8x512xf32>
    %561 = vector.extract_strided_slice %560 {offsets = [0, 0], sizes = [8, 128], strides = [1, 1]} : vector<8x512xf32> to vector<8x128xf32>
    %562 = arith.negf %561 : vector<8x128xf32>
    %563 = math.exp %562 : vector<8x128xf32>
    %cst_114 = arith.constant 1.000000e+00 : f32
    %564 = vector.broadcast %cst_114 : f32 to vector<8x128xf32>
    %565 = arith.addf %564, %563 : vector<8x128xf32>
    %566 = arith.divf %564, %565 : vector<8x128xf32>
    %567 = vector.extract_strided_slice %560 {offsets = [0, 128], sizes = [8, 128], strides = [1, 1]} : vector<8x512xf32> to vector<8x128xf32>
    %568 = arith.negf %567 : vector<8x128xf32>
    %569 = math.exp %568 : vector<8x128xf32>
    %cst_115 = arith.constant 1.000000e+00 : f32
    %570 = vector.broadcast %cst_115 : f32 to vector<8x128xf32>
    %571 = arith.addf %570, %569 : vector<8x128xf32>
    %572 = arith.divf %570, %571 : vector<8x128xf32>
    %573 = vector.extract_strided_slice %560 {offsets = [0, 256], sizes = [8, 128], strides = [1, 1]} : vector<8x512xf32> to vector<8x128xf32>
    %574 = math.tanh %573 : vector<8x128xf32>
    %575 = vector.extract_strided_slice %560 {offsets = [0, 384], sizes = [8, 128], strides = [1, 1]} : vector<8x512xf32> to vector<8x128xf32>
    %576 = arith.negf %575 : vector<8x128xf32>
    %577 = math.exp %576 : vector<8x128xf32>
    %cst_116 = arith.constant 1.000000e+00 : f32
    %578 = vector.broadcast %cst_116 : f32 to vector<8x128xf32>
    %579 = arith.addf %578, %577 : vector<8x128xf32>
    %580 = arith.divf %578, %579 : vector<8x128xf32>
    %581 = arith.mulf %572, %548 : vector<8x128xf32>
    %582 = arith.mulf %566, %574 : vector<8x128xf32>
    %583 = arith.addf %581, %582 : vector<8x128xf32>
    %584 = math.tanh %583 : vector<8x128xf32>
    %585 = arith.mulf %580, %584 : vector<8x128xf32>
    %586 = arith.index_cast %555 : i32 to index
    %c0_117 = arith.constant 0 : index
    %c0_118 = arith.constant 0 : index
    %587 = vector.load %arg11[%586, %c0_117, %c0_118] : memref<8x8x512xf32, #tpu.memory_space<vmem>>, vector<1x8x512xf32>
    %588 = vector.shape_cast %587 : vector<1x8x512xf32> to vector<8x512xf32>
    %cst_119 = arith.constant dense<0.000000e+00> : vector<8x512xf32>
    %589 = tpu.matmul %551, %14, %cst_119 {dimension_numbers = #tpu.dot_dimension_numbers<[1], [0], [0], [1], [0, 0, 1, 1], [], []>} : vector<8x128xf32>, vector<128x512xf32>, vector<8x512xf32> -> vector<8x512xf32>
    %590 = arith.addf %588, %589 : vector<8x512xf32>
    %591 = vector.extract_strided_slice %590 {offsets = [0, 0], sizes = [8, 128], strides = [1, 1]} : vector<8x512xf32> to vector<8x128xf32>
    %592 = arith.negf %591 : vector<8x128xf32>
    %593 = math.exp %592 : vector<8x128xf32>
    %cst_120 = arith.constant 1.000000e+00 : f32
    %594 = vector.broadcast %cst_120 : f32 to vector<8x128xf32>
    %595 = arith.addf %594, %593 : vector<8x128xf32>
    %596 = arith.divf %594, %595 : vector<8x128xf32>
    %597 = vector.extract_strided_slice %590 {offsets = [0, 128], sizes = [8, 128], strides = [1, 1]} : vector<8x512xf32> to vector<8x128xf32>
    %598 = arith.negf %597 : vector<8x128xf32>
    %599 = math.exp %598 : vector<8x128xf32>
    %cst_121 = arith.constant 1.000000e+00 : f32
    %600 = vector.broadcast %cst_121 : f32 to vector<8x128xf32>
    %601 = arith.addf %600, %599 : vector<8x128xf32>
    %602 = arith.divf %600, %601 : vector<8x128xf32>
    %603 = vector.extract_strided_slice %590 {offsets = [0, 256], sizes = [8, 128], strides = [1, 1]} : vector<8x512xf32> to vector<8x128xf32>
    %604 = math.tanh %603 : vector<8x128xf32>
    %605 = vector.extract_strided_slice %590 {offsets = [0, 384], sizes = [8, 128], strides = [1, 1]} : vector<8x512xf32> to vector<8x128xf32>
    %606 = arith.negf %605 : vector<8x128xf32>
    %607 = math.exp %606 : vector<8x128xf32>
    %cst_122 = arith.constant 1.000000e+00 : f32
    %608 = vector.broadcast %cst_122 : f32 to vector<8x128xf32>
    %609 = arith.addf %608, %607 : vector<8x128xf32>
    %610 = arith.divf %608, %609 : vector<8x128xf32>
    %611 = arith.mulf %602, %554 : vector<8x128xf32>
    %612 = arith.mulf %596, %604 : vector<8x128xf32>
    %613 = arith.addf %611, %612 : vector<8x128xf32>
    %614 = math.tanh %613 : vector<8x128xf32>
    %615 = arith.mulf %610, %614 : vector<8x128xf32>
    %616 = vector.broadcast %c7_i32_109 : i32 to vector<8x1xi32>
    %617 = arith.cmpi sgt, %12, %616 : vector<8x1xi32>
    %618 = vector.broadcast %555 : i32 to vector<8x1xi32>
    %619 = arith.cmpi sgt, %12, %618 : vector<8x1xi32>
    %620 = vector.shape_cast %617 : vector<8x1xi1> to vector<8x1xi1>
    %621 = vector.broadcast %620 : vector<8x1xi1> to vector<8x128xi1>
    %622 = arith.select %621, %585, %545 : vector<8x128xi1>, vector<8x128xf32>
    %623 = vector.shape_cast %617 : vector<8x1xi1> to vector<8x1xi1>
    %624 = vector.broadcast %623 : vector<8x1xi1> to vector<8x128xi1>
    %625 = arith.select %624, %583, %548 : vector<8x128xi1>, vector<8x128xf32>
    %626 = vector.shape_cast %619 : vector<8x1xi1> to vector<8x1xi1>
    %627 = vector.broadcast %626 : vector<8x1xi1> to vector<8x128xi1>
    %628 = arith.select %627, %615, %551 : vector<8x128xi1>, vector<8x128xf32>
    %629 = vector.shape_cast %619 : vector<8x1xi1> to vector<8x1xi1>
    %630 = vector.broadcast %629 : vector<8x1xi1> to vector<8x128xi1>
    %631 = arith.select %630, %613, %554 : vector<8x128xi1>, vector<8x128xf32>
    %c8_i32 = arith.constant 8 : i32
    %632 = tpu.concatenate %622, %628 in 1 : vector<8x128xf32>, vector<8x128xf32> -> vector<8x256xf32>
    %c0_123 = arith.constant 0 : index
    %c0_124 = arith.constant 0 : index
    %633 = vector.load %arg7[%c0_123, %c0_124] : memref<256x128xf32, #tpu.memory_space<vmem>>, vector<256x128xf32>
    %cst_125 = arith.constant dense<0.000000e+00> : vector<8x128xf32>
    %634 = tpu.matmul %632, %633, %cst_125 {dimension_numbers = #tpu.dot_dimension_numbers<[1], [0], [0], [1], [0, 0, 1, 1], [], []>} : vector<8x256xf32>, vector<256x128xf32>, vector<8x128xf32> -> vector<8x128xf32>
    %c0_126 = arith.constant 0 : index
    %c0_127 = arith.constant 0 : index
    %635 = vector.load %arg8[%c0_126, %c0_127] : memref<1x128xf32, #tpu.memory_space<vmem>>, vector<1x128xf32>
    %636 = vector.broadcast %635 : vector<1x128xf32> to vector<8x128xf32>
    %637 = arith.addf %634, %636 : vector<8x128xf32>
    %c0_128 = arith.constant 0 : index
    %c0_129 = arith.constant 0 : index
    %638 = vector.load %arg9[%c0_128, %c0_129] : memref<8x128xf32, #tpu.memory_space<vmem>>, vector<8x128xf32>
    tpu.vector_store %arg9[%c0_128, %c0_129], %637 {strides = array<i32>} : memref<8x128xf32, #tpu.memory_space<vmem>>, vector<8x128xf32>,
    return
  }
  func.func @transform_0(%arg0: i32) -> (i32, i32) {
    %c0_i32 = arith.constant 0 : i32
    %c0_i32_0 = arith.constant 0 : i32
    return %arg0, %c0_i32 : i32, i32
  }
  func.func @transform_1(%arg0: i32) -> (i32, i32, i32) {
    %c0_i32 = arith.constant 0 : i32
    %c0_i32_0 = arith.constant 0 : i32
    %c0_i32_1 = arith.constant 0 : i32
    return %c0_i32, %arg0, %c0_i32_0 : i32, i32, i32
  }
  func.func @transform_2(%arg0: i32) -> (i32, i32) {
    %c0_i32 = arith.constant 0 : i32
    %c0_i32_0 = arith.constant 0 : i32
    %c0_i32_1 = arith.constant 0 : i32
    return %c0_i32, %c0_i32_0 : i32, i32
  }
  func.func @transform_3(%arg0: i32) -> (i32, i32) {
    %c0_i32 = arith.constant 0 : i32
    %c0_i32_0 = arith.constant 0 : i32
    %c0_i32_1 = arith.constant 0 : i32
    return %c0_i32, %c0_i32_0 : i32, i32
  }
  func.func @transform_4(%arg0: i32) -> (i32, i32) {
    %c0_i32 = arith.constant 0 : i32
    %c0_i32_0 = arith.constant 0 : i32
    %c0_i32_1 = arith.constant 0 : i32
    return %c0_i32, %c0_i32_0 : i32, i32
  }
  func.func @transform_5(%arg0: i32) -> (i32, i32) {
    %c0_i32 = arith.constant 0 : i32
    %c0_i32_0 = arith.constant 0 : i32
    %c0_i32_1 = arith.constant 0 : i32
    return %c0_i32, %c0_i32_0 : i32, i32
  }
  func.func @transform_6(%arg0: i32) -> (i32, i32) {
    %c0_i32 = arith.constant 0 : i32
    %c0_i32_0 = arith.constant 0 : i32
    %c0_i32_1 = arith.constant 0 : i32
    return %c0_i32, %c0_i32_0 : i32, i32
  }
  func.func @transform_7(%arg0: i32) -> (i32, i32) {
    %c0_i32 = arith.constant 0 : i32
    %c0_i32_0 = arith.constant 0 : i32
    %c0_i32_1 = arith.constant 0 : i32
    return %c0_i32, %c0_i32_0 : i32, i32
  }
  func.func @transform_8(%arg0: i32) -> (i32, i32) {
    %c0_i32 = arith.constant 0 : i32
    %c0_i32_0 = arith.constant 0 : i32
    return %arg0, %c0_i32 : i32, i32
  }
}

</mosaic_0001>

<llo_original>
// kernel: bilstm_classifier.1
$region0: #{bilstm_classifier.1}
  #allocation0 [shape = 'u32[]', space=smem, size = 0x4, offset = 0x4, fixed_abs, tag = 'smem constant byte address 0x4 - core index']
  #allocation1 [shape = 'u32[72,128]{1,0:T(1,128)}', space=vmem, size = 0x9000, scoped, tag = 'internal scratch']
  #allocation2 [shape = 'f32[8,8,512]{2,1,0:T(8,128)}', space=vmem, size = 0x20000, scoped, tag = 'scratch operand']
  #allocation3 [shape = 'f32[8,8,512]{2,1,0:T(8,128)}', space=vmem, size = 0x20000, scoped, tag = 'scratch operand']
  %s0 = inlined_call_operand.vmem [shape: s32[8,1], index: 0, kind: input, shape index: {}]
  %s1 = inlined_call_operand.vmem [shape: f32[8,8,768], index: 1, kind: input, shape index: {}]
  %s2 = inlined_call_operand.vmem [shape: f32[768,1024], index: 2, kind: input, shape index: {}]
  %s3 = inlined_call_operand.vmem [shape: f32[1,1024], index: 3, kind: input, shape index: {}]
  %s4 = inlined_call_operand.vmem [shape: f32[128,512], index: 4, kind: input, shape index: {}]
  %s5 = inlined_call_operand.vmem [shape: f32[128,512], index: 5, kind: input, shape index: {}]
  %s6 = inlined_call_operand.vmem [shape: f32[256,128], index: 6, kind: input, shape index: {}]
  %s7 = inlined_call_operand.vmem [shape: f32[1,128], index: 7, kind: input, shape index: {}]
  %s8 = inlined_call_operand.vmem [shape: f32[8,128], index: 8, kind: output, shape index: {}]
  %s9 = sld [smem:[#allocation0]]
  $region42: #{bilstm_classifier.1} parent=0
    _
  %s11 = ssub.s32 1, %s9
  %s12 = scalar_select 0, %s11, %s9
  // Predicated region
  $region2: #{bilstm_classifier.1} parent=0 // pred_check
    _
  $region3: #{bilstm_classifier.1} parent=0 // pred_check_branch
    %14 = sbr.rel (0) target = $region5
  $region4: #{bilstm_classifier.1} parent=0 // pred_region
    _
  $region5: #{bilstm_classifier.1} parent=0 // pred_fallthru
    _
  // Predicated region
  $region6: #{bilstm_classifier.1} parent=0 // pred_check
    _
  $region7: #{bilstm_classifier.1} parent=0 // pred_check_branch
    %16 = sbr.rel (0) target = $region9
  $region8: #{bilstm_classifier.1} parent=0 // pred_region
    _
  $region9: #{bilstm_classifier.1} parent=0 // pred_fallthru
    _
  // Predicated region
  $region10: #{bilstm_classifier.1} parent=0 // pred_check
    _
  $region11: #{bilstm_classifier.1} parent=0 // pred_check_branch
    %18 = sbr.rel (0) target = $region13
  $region12: #{bilstm_classifier.1} parent=0 // pred_region
    _
  $region13: #{bilstm_classifier.1} parent=0 // pred_fallthru
    _
  // Predicated region
  $region14: #{bilstm_classifier.1} parent=0 // pred_check
    _
  $region15: #{bilstm_classifier.1} parent=0 // pred_check_branch
    %20 = sbr.rel (0) target = $region17
  $region16: #{bilstm_classifier.1} parent=0 // pred_region
    _
  $region17: #{bilstm_classifier.1} parent=0 // pred_fallthru
    _
  // Predicated region
  $region18: #{bilstm_classifier.1} parent=0 // pred_check
    _
  $region19: #{bilstm_classifier.1} parent=0 // pred_check_branch
    %22 = sbr.rel (0) target = $region21
  $region20: #{bilstm_classifier.1} parent=0 // pred_region
    _
  $region21: #{bilstm_classifier.1} parent=0 // pred_fallthru
    _
  // Predicated region
  $region22: #{bilstm_classifier.1} parent=0 // pred_check
    _
  $region23: #{bilstm_classifier.1} parent=0 // pred_check_branch
    %24 = sbr.rel (0) target = $region25
  $region24: #{bilstm_classifier.1} parent=0 // pred_region
    _
  $region25: #{bilstm_classifier.1} parent=0 // pred_fallthru
    _
  // Predicated region
  $region26: #{bilstm_classifier.1} parent=0 // pred_check
    _
  $region27: #{bilstm_classifier.1} parent=0 // pred_check_branch
    %26 = sbr.rel (0) target = $region29
  $region28: #{bilstm_classifier.1} parent=0 // pred_region
    _
  $region29: #{bilstm_classifier.1} parent=0 // pred_fallthru
    _
  // Predicated region
  $region30: #{bilstm_classifier.1} parent=0 // pred_check
    _
  $region31: #{bilstm_classifier.1} parent=0 // pred_check_branch
    %28 = sbr.rel (0) target = $region33
  $region32: #{bilstm_classifier.1} parent=0 // pred_region
    _
  $region33: #{bilstm_classifier.1} parent=0 // pred_fallthru
    _
  %v29 = vld [vmem:[%s1] sm:$0xff]
  %v30 = vld [vmem:[%s1 + $0x8] sm:$0xff]
  %v31 = vld [vmem:[%s1 + $0x10] sm:$0xff]
  %v32 = vld [vmem:[%s1 + $0x18] sm:$0xff]
  %v33 = vld [vmem:[%s1 + $0x20] sm:$0xff]
  %v34 = vld [vmem:[%s1 + $0x28] sm:$0xff]
  %v35 = vld [vmem:[%s1 + $0x30] sm:$0xff]
  %v36 = vld [vmem:[%s1 + $0x38] sm:$0xff]
  %v37 = vld [vmem:[%s1 + $0x40] sm:$0xff]
  %v38 = vld [vmem:[%s1 + $0x48] sm:$0xff]
  %v39 = vld [vmem:[%s1 + $0x50] sm:$0xff]
  %v40 = vld [vmem:[%s1 + $0x58] sm:$0xff]
  %v41 = vld [vmem:[%s1 + $0x60] sm:$0xff]
  %v42 = vld [vmem:[%s1 + $0x68] sm:$0xff]
  %v43 = vld [vmem:[%s1 + $0x70] sm:$0xff]
  %v44 = vld [vmem:[%s1 + $0x78] sm:$0xff]
  %v45 = vld [vmem:[%s1 + $0x80] sm:$0xff]
  %v46 = vld [vmem:[%s1 + $0x88] sm:$0xff]
  %v47 = vld [vmem:[%s1 + $0x90] sm:$0xff]
  %v48 = vld [vmem:[%s1 + $0x98] sm:$0xff]
  %v49 = vld [vmem:[%s1 + $0xa0] sm:$0xff]
  %v50 = vld [vmem:[%s1 + $0xa8] sm:$0xff]
  %v51 = vld [vmem:[%s1 + $0xb0] sm:$0xff]
  %v52 = vld [vmem:[%s1 + $0xb8] sm:$0xff]
  %v53 = vld [vmem:[%s1 + $0xc0] sm:$0xff]
  %v54 = vld [vmem:[%s1 + $0xc8] sm:$0xff]
  %v55 = vld [vmem:[%s1 + $0xd0] sm:$0xff]
  %v56 = vld [vmem:[%s1 + $0xd8] sm:$0xff]
  %v57 = vld [vmem:[%s1 + $0xe0] sm:$0xff]
  %v58 = vld [vmem:[%s1 + $0xe8] sm:$0xff]
  %v59 = vld [vmem:[%s1 + $0xf0] sm:$0xff]
  %v60 = vld [vmem:[%s1 + $0xf8] sm:$0xff]
  %v61 = vld [vmem:[%s1 + $0x100] sm:$0xff]
  %v62 = vld [vmem:[%s1 + $0x108] sm:$0xff]
  %v63 = vld [vmem:[%s1 + $0x110] sm:$0xff]
  %v64 = vld [vmem:[%s1 + $0x118] sm:$0xff]
  %v65 = vld [vmem:[%s1 + $0x120] sm:$0xff]
  %v66 = vld [vmem:[%s1 + $0x128] sm:$0xff]
  %v67 = vld [vmem:[%s1 + $0x130] sm:$0xff]
  %v68 = vld [vmem:[%s1 + $0x138] sm:$0xff]
  %v69 = vld [vmem:[%s1 + $0x140] sm:$0xff]
  %v70 = vld [vmem:[%s1 + $0x148] sm:$0xff]
  %v71 = vld [vmem:[%s1 + $0x150] sm:$0xff]
  %v72 = vld [vmem:[%s1 + $0x158] sm:$0xff]
  %v73 = vld [vmem:[%s1 + $0x160] sm:$0xff]
  %v74 = vld [vmem:[%s1 + $0x168] sm:$0xff]
  %v75 = vld [vmem:[%s1 + $0x170] sm:$0xff]
  %v76 = vld [vmem:[%s1 + $0x178] sm:$0xff]
  %v77 = vld [vmem:[%s2] sm:$0xff]
  %v78 = vld [vmem:[%s2 + $0x8] sm:$0xff]
  %v79 = vld [vmem:[%s2 + $0x10] sm:$0xff]
  %v80 = vld [vmem:[%s2 + $0x18] sm:$0xff]
  %v81 = vld [vmem:[%s2 + $0x20] sm:$0xff]
  %v82 = vld [vmem:[%s2 + $0x28] sm:$0xff]
  %v83 = vld [vmem:[%s2 + $0x30] sm:$0xff]
  %v84 = vld [vmem:[%s2 + $0x38] sm:$0xff]
  %v85 = vld [vmem:[%s2 + $0x40] sm:$0xff]
  %v86 = vld [vmem:[%s2 + $0x48] sm:$0xff]
  %v87 = vld [vmem:[%s2 + $0x50] sm:$0xff]
  %v88 = vld [vmem:[%s2 + $0x58] sm:$0xff]
  %v89 = vld [vmem:[%s2 + $0x60] sm:$0xff]
  %v90 = vld [vmem:[%s2 + $0x68] sm:$0xff]
  %v91 = vld [vmem:[%s2 + $0x70] sm:$0xff]
  %v92 = vld [vmem:[%s2 + $0x78] sm:$0xff]
  %v93 = vld [vmem:[%s2 + $0x80] sm:$0xff]
  %v94 = vld [vmem:[%s2 + $0x88] sm:$0xff]
  %v95 = vld [vmem:[%s2 + $0x90] sm:$0xff]
  %v96 = vld [vmem:[%s2 + $0x98] sm:$0xff]
  %v97 = vld [vmem:[%s2 + $0xa0] sm:$0xff]
  %v98 = vld [vmem:[%s2 + $0xa8] sm:$0xff]
  %v99 = vld [vmem:[%s2 + $0xb0] sm:$0xff]
  %v100 = vld [vmem:[%s2 + $0xb8] sm:$0xff]
  %v101 = vld [vmem:[%s2 + $0xc0] sm:$0xff]
  %v102 = vld [vmem:[%s2 + $0xc8] sm:$0xff]
  %v103 = vld [vmem:[%s2 + $0xd0] sm:$0xff]
  %v104 = vld [vmem:[%s2 + $0xd8] sm:$0xff]
  %v105 = vld [vmem:[%s2 + $0xe0] sm:$0xff]
  %v106 = vld [vmem:[%s2 + $0xe8] sm:$0xff]
  %v107 = vld [vmem:[%s2 + $0xf0] sm:$0xff]
  %v108 = vld [vmem:[%s2 + $0xf8] sm:$0xff]
  %v109 = vld [vmem:[%s2 + $0x100] sm:$0xff]
  %v110 = vld [vmem:[%s2 + $0x108] sm:$0xff]
  %v111 = vld [vmem:[%s2 + $0x110] sm:$0xff]
  %v112 = vld [vmem:[%s2 + $0x118] sm:$0xff]
  %v113 = vld [vmem:[%s2 + $0x120] sm:$0xff]
  %v114 = vld [vmem:[%s2 + $0x128] sm:$0xff]
  %v115 = vld [vmem:[%s2 + $0x130] sm:$0xff]
  %v116 = vld [vmem:[%s2 + $0x138] sm:$0xff]
  %v117 = vld [vmem:[%s2 + $0x140] sm:$0xff]
  %v118 = vld [vmem:[%s2 + $0x148] sm:$0xff]
  %v119 = vld [vmem:[%s2 + $0x150] sm:$0xff]
  %v120 = vld [vmem:[%s2 + $0x158] sm:$0xff]
  %v121 = vld [vmem:[%s2 + $0x160] sm:$0xff]
  %v122 = vld [vmem:[%s2 + $0x168] sm:$0xff]
  %v123 = vld [vmem:[%s2 + $0x170] sm:$0xff]
  %v124 = vld [vmem:[%s2 + $0x178] sm:$0xff]
  %v125 = vld [vmem:[%s2 + $0x180] sm:$0xff]
  %v126 = vld [vmem:[%s2 + $0x188] sm:$0xff]
  %v127 = vld [vmem:[%s2 + $0x190] sm:$0xff]
  %v128 = vld [vmem:[%s2 + $0x198] sm:$0xff]
  %v129 = vld [vmem:[%s2 + $0x1a0] sm:$0xff]
  %v130 = vld [vmem:[%s2 + $0x1a8] sm:$0xff]
  %v131 = vld [vmem:[%s2 + $0x1b0] sm:$0xff]
  %v132 = vld [vmem:[%s2 + $0x1b8] sm:$0xff]
  %v133 = vld [vmem:[%s2 + $0x1c0] sm:$0xff]
  %v134 = vld [vmem:[%s2 + $0x1c8] sm:$0xff]
  %v135 = vld [vmem:[%s2 + $0x1d0] sm:$0xff]
  %v136 = vld [vmem:[%s2 + $0x1d8] sm:$0xff]
  %v137 = vld [vmem:[%s2 + $0x1e0] sm:$0xff]
  %v138 = vld [vmem:[%s2 + $0x1e8] sm:$0xff]
  %v139 = vld [vmem:[%s2 + $0x1f0] sm:$0xff]
  %v140 = vld [vmem:[%s2 + $0x1f8] sm:$0xff]
  %v141 = vld [vmem:[%s2 + $0x200] sm:$0xff]
  %v142 = vld [vmem:[%s2 + $0x208] sm:$0xff]
  %v143 = vld [vmem:[%s2 + $0x210] sm:$0xff]
  %v144 = vld [vmem:[%s2 + $0x218] sm:$0xff]
  %v145 = vld [vmem:[%s2 + $0x220] sm:$0xff]
  %v146 = vld [vmem:[%s2 + $0x228] sm:$0xff]
  %v147 = vld [vmem:[%s2 + $0x230] sm:$0xff]
  %v148 = vld [vmem:[%s2 + $0x238] sm:$0xff]
  %v149 = vld [vmem:[%s2 + $0x240] sm:$0xff]
  %v150 = vld [vmem:[%s2 + $0x248] sm:$0xff]
  %v151 = vld [vmem:[%s2 + $0x250] sm:$0xff]
  %v152 = vld [vmem:[%s2 + $0x258] sm:$0xff]
  %v153 = vld [vmem:[%s2 + $0x260] sm:$0xff]
  %v154 = vld [vmem:[%s2 + $0x268] sm:$0xff]
  %v155 = vld [vmem:[%s2 + $0x270] sm:$0xff]
  %v156 = vld [vmem:[%s2 + $0x278] sm:$0xff]
  %v157 = vld [vmem:[%s2 + $0x280] sm:$0xff]
  %v158 = vld [vmem:[%s2 + $0x288] sm:$0xff]
  %v159 = vld [vmem:[%s2 + $0x290] sm:$0xff]
  %v160 = vld [vmem:[%s2 + $0x298] sm:$0xff]
  %v161 = vld [vmem:[%s2 + $0x2a0] sm:$0xff]
  %v162 = vld [vmem:[%s2 + $0x2a8] sm:$0xff]
  %v163 = vld [vmem:[%s2 + $0x2b0] sm:$0xff]
  %v164 = vld [vmem:[%s2 + $0x2b8] sm:$0xff]
  %v165 = vld [vmem:[%s2 + $0x2c0] sm:$0xff]
  %v166 = vld [vmem:[%s2 + $0x2c8] sm:$0xff]
  %v167 = vld [vmem:[%s2 + $0x2d0] sm:$0xff]
  %v168 = vld [vmem:[%s2 + $0x2d8] sm:$0xff]
  %v169 = vld [vmem:[%s2 + $0x2e0] sm:$0xff]
  %v170 = vld [vmem:[%s2 + $0x2e8] sm:$0xff]
  %v171 = vld [vmem:[%s2 + $0x2f0] sm:$0xff]
  %v172 = vld [vmem:[%s2 + $0x2f8] sm:$0xff]
  %v173 = vld [vmem:[%s2 + $0x300] sm:$0xff]
  %v174 = vld [vmem:[%s2 + $0x308] sm:$0xff]
  %v175 = vld [vmem:[%s2 + $0x310] sm:$0xff]
  %v176 = vld [vmem:[%s2 + $0x318] sm:$0xff]
  %v177 = vld [vmem:[%s2 + $0x320] sm:$0xff]
  %v178 = vld [vmem:[%s2 + $0x328] sm:$0xff]
  %v179 = vld [vmem:[%s2 + $0x330] sm:$0xff]
  %v180 = vld [vmem:[%s2 + $0x338] sm:$0xff]
  %v181 = vld [vmem:[%s2 + $0x340] sm:$0xff]
  %v182 = vld [vmem:[%s2 + $0x348] sm:$0xff]
  %v183 = vld [vmem:[%s2 + $0x350] sm:$0xff]
  %v184 = vld [vmem:[%s2 + $0x358] sm:$0xff]
  %v185 = vld [vmem:[%s2 + $0x360] sm:$0xff]
  %v186 = vld [vmem:[%s2 + $0x368] sm:$0xff]
  %v187 = vld [vmem:[%s2 + $0x370] sm:$0xff]
  %v188 = vld [vmem:[%s2 + $0x378] sm:$0xff]
  %v189 = vld [vmem:[%s2 + $0x380] sm:$0xff]
  %v190 = vld [vmem:[%s2 + $0x388] sm:$0xff]
  %v191 = vld [vmem:[%s2 + $0x390] sm:$0xff]
  %v192 = vld [vmem:[%s2 + $0x398] sm:$0xff]
  %v193 = vld [vmem:[%s2 + $0x3a0] sm:$0xff]
  %v194 = vld [vmem:[%s2 + $0x3a8] sm:$0xff]
  %v195 = vld [vmem:[%s2 + $0x3b0] sm:$0xff]
  %v196 = vld [vmem:[%s2 + $0x3b8] sm:$0xff]
  %v197 = vld [vmem:[%s2 + $0x3c0] sm:$0xff]
  %v198 = vld [vmem:[%s2 + $0x3c8] sm:$0xff]
  %v199 = vld [vmem:[%s2 + $0x3d0] sm:$0xff]
  %v200 = vld [vmem:[%s2 + $0x3d8] sm:$0xff]
  %v201 = vld [vmem:[%s2 + $0x3e0] sm:$0xff]
  %v202 = vld [vmem:[%s2 + $0x3e8] sm:$0xff]
  %v203 = vld [vmem:[%s2 + $0x3f0] sm:$0xff]
  %v204 = vld [vmem:[%s2 + $0x3f8] sm:$0xff]
  %v205 = vld [vmem:[%s2 + $0x400] sm:$0xff]
  %v206 = vld [vmem:[%s2 + $0x408] sm:$0xff]
  %v207 = vld [vmem:[%s2 + $0x410] sm:$0xff]
  %v208 = vld [vmem:[%s2 + $0x418] sm:$0xff]
  %v209 = vld [vmem:[%s2 + $0x420] sm:$0xff]
  %v210 = vld [vmem:[%s2 + $0x428] sm:$0xff]
  %v211 = vld [vmem:[%s2 + $0x430] sm:$0xff]
  %v212 = vld [vmem:[%s2 + $0x438] sm:$0xff]
  %v213 = vld [vmem:[%s2 + $0x440] sm:$0xff]
  %v214 = vld [vmem:[%s2 + $0x448] sm:$0xff]
  %v215 = vld [vmem:[%s2 + $0x450] sm:$0xff]
  %v216 = vld [vmem:[%s2 + $0x458] sm:$0xff]
  %v217 = vld [vmem:[%s2 + $0x460] sm:$0xff]
  %v218 = vld [vmem:[%s2 + $0x468] sm:$0xff]
  %v219 = vld [vmem:[%s2 + $0x470] sm:$0xff]
  %v220 = vld [vmem:[%s2 + $0x478] sm:$0xff]
  %v221 = vld [vmem:[%s2 + $0x480] sm:$0xff]
  %v222 = vld [vmem:[%s2 + $0x488] sm:$0xff]
  %v223 = vld [vmem:[%s2 + $0x490] sm:$0xff]
  %v224 = vld [vmem:[%s2 + $0x498] sm:$0xff]
  %v225 = vld [vmem:[%s2 + $0x4a0] sm:$0xff]
  %v226 = vld [vmem:[%s2 + $0x4a8] sm:$0xff]
  %v227 = vld [vmem:[%s2 + $0x4b0] sm:$0xff]
  %v228 = vld [vmem:[%s2 + $0x4b8] sm:$0xff]
  %v229 = vld [vmem:[%s2 + $0x4c0] sm:$0xff]
  %v230 = vld [vmem:[%s2 + $0x4c8] sm:$0xff]
  %v231 = vld [vmem:[%s2 + $0x4d0] sm:$0xff]
  %v232 = vld [vmem:[%s2 + $0x4d8] sm:$0xff]
  %v233 = vld [vmem:[%s2 + $0x4e0] sm:$0xff]
  %v234 = vld [vmem:[%s2 + $0x4e8] sm:$0xff]
  %v235 = vld [vmem:[%s2 + $0x4f0] sm:$0xff]
  %v236 = vld [vmem:[%s2 + $0x4f8] sm:$0xff]
  %v237 = vld [vmem:[%s2 + $0x500] sm:$0xff]
  %v238 = vld [vmem:[%s2 + $0x508] sm:$0xff]
  %v239 = vld [vmem:[%s2 + $0x510] sm:$0xff]
  %v240 = vld [vmem:[%s2 + $0x518] sm:$0xff]
  %v241 = vld [vmem:[%s2 + $0x520] sm:$0xff]
  %v242 = vld [vmem:[%s2 + $0x528] sm:$0xff]
  %v243 = vld [vmem:[%s2 + $0x530] sm:$0xff]
  %v244 = vld [vmem:[%s2 + $0x538] sm:$0xff]
  %v245 = vld [vmem:[%s2 + $0x540] sm:$0xff]
  %v246 = vld [vmem:[%s2 + $0x548] sm:$0xff]
  %v247 = vld [vmem:[%s2 + $0x550] sm:$0xff]
  %v248 = vld [vmem:[%s2 + $0x558] sm:$0xff]
  %v249 = vld [vmem:[%s2 + $0x560] sm:$0xff]
  %v250 = vld [vmem:[%s2 + $0x568] sm:$0xff]
  %v251 = vld [vmem:[%s2 + $0x570] sm:$0xff]
  %v252 = vld [vmem:[%s2 + $0x578] sm:$0xff]
  %v253 = vld [vmem:[%s2 + $0x580] sm:$0xff]
  %v254 = vld [vmem:[%s2 + $0x588] sm:$0xff]
  %v255 = vld [vmem:[%s2 + $0x590] sm:$0xff]
  %v256 = vld [vmem:[%s2 + $0x598] sm:$0xff]
  %v257 = vld [vmem:[%s2 + $0x5a0] sm:$0xff]
  %v258 = vld [vmem:[%s2 + $0x5a8] sm:$0xff]
  %v259 = vld [vmem:[%s2 + $0x5b0] sm:$0xff]
  %v260 = vld [vmem:[%s2 + $0x5b8] sm:$0xff]
  %v261 = vld [vmem:[%s2 + $0x5c0] sm:$0xff]
  %v262 = vld [vmem:[%s2 + $0x5c8] sm:$0xff]
  %v263 = vld [vmem:[%s2 + $0x5d0] sm:$0xff]
  %v264 = vld [vmem:[%s2 + $0x5d8] sm:$0xff]
  %v265 = vld [vmem:[%s2 + $0x5e0] sm:$0xff]
  %v266 = vld [vmem:[%s2 + $0x5e8] sm:$0xff]
  %v267 = vld [vmem:[%s2 + $0x5f0] sm:$0xff]
  %v268 = vld [vmem:[%s2 + $0x5f8] sm:$0xff]
  %v269 = vld [vmem:[%s2 + $0x600] sm:$0xff]
  %v270 = vld [vmem:[%s2 + $0x608] sm:$0xff]
  %v271 = vld [vmem:[%s2 + $0x610] sm:$0xff]
  %v272 = vld [vmem:[%s2 + $0x618] sm:$0xff]
  %v273 = vld [vmem:[%s2 + $0x620] sm:$0xff]
  %v274 = vld [vmem:[%s2 + $0x628] sm:$0xff]
  %v275 = vld [vmem:[%s2 + $0x630] sm:$0xff]
  %v276 = vld [vmem:[%s2 + $0x638] sm:$0xff]
  %v277 = vld [vmem:[%s2 + $0x640] sm:$0xff]
  %v278 = vld [vmem:[%s2 + $0x648] sm:$0xff]
  %v279 = vld [vmem:[%s2 + $0x650] sm:$0xff]
  %v280 = vld [vmem:[%s2 + $0x658] sm:$0xff]
  %v281 = vld [vmem:[%s2 + $0x660] sm:$0xff]
  %v282 = vld [vmem:[%s2 + $0x668] sm:$0xff]
  %v283 = vld [vmem:[%s2 + $0x670] sm:$0xff]
  %v284 = vld [vmem:[%s2 + $0x678] sm:$0xff]
  %v285 = vld [vmem:[%s2 + $0x680] sm:$0xff]
  %v286 = vld [vmem:[%s2 + $0x688] sm:$0xff]
  %v287 = vld [vmem:[%s2 + $0x690] sm:$0xff]
  %v288 = vld [vmem:[%s2 + $0x698] sm:$0xff]
  %v289 = vld [vmem:[%s2 + $0x6a0] sm:$0xff]
  %v290 = vld [vmem:[%s2 + $0x6a8] sm:$0xff]
  %v291 = vld [vmem:[%s2 + $0x6b0] sm:$0xff]
  %v292 = vld [vmem:[%s2 + $0x6b8] sm:$0xff]
  %v293 = vld [vmem:[%s2 + $0x6c0] sm:$0xff]
  %v294 = vld [vmem:[%s2 + $0x6c8] sm:$0xff]
  %v295 = vld [vmem:[%s2 + $0x6d0] sm:$0xff]
  %v296 = vld [vmem:[%s2 + $0x6d8] sm:$0xff]
  %v297 = vld [vmem:[%s2 + $0x6e0] sm:$0xff]
  %v298 = vld [vmem:[%s2 + $0x6e8] sm:$0xff]
  %v299 = vld [vmem:[%s2 + $0x6f0] sm:$0xff]
  %v300 = vld [vmem:[%s2 + $0x6f8] sm:$0xff]
  %v301 = vld [vmem:[%s2 + $0x700] sm:$0xff]
  %v302 = vld [vmem:[%s2 + $0x708] sm:$0xff]
  %v303 = vld [vmem:[%s2 + $0x710] sm:$0xff]
  %v304 = vld [vmem:[%s2 + $0x718] sm:$0xff]
  %v305 = vld [vmem:[%s2 + $0x720] sm:$0xff]
  %v306 = vld [vmem:[%s2 + $0x728] sm:$0xff]
  %v307 = vld [vmem:[%s2 + $0x730] sm:$0xff]
  %v308 = vld [vmem:[%s2 + $0x738] sm:$0xff]
  %v309 = vld [vmem:[%s2 + $0x740] sm:$0xff]
  %v310 = vld [vmem:[%s2 + $0x748] sm:$0xff]
  %v311 = vld [vmem:[%s2 + $0x750] sm:$0xff]
  %v312 = vld [vmem:[%s2 + $0x758] sm:$0xff]
  %v313 = vld [vmem:[%s2 + $0x760] sm:$0xff]
  %v314 = vld [vmem:[%s2 + $0x768] sm:$0xff]
  %v315 = vld [vmem:[%s2 + $0x770] sm:$0xff]
  %v316 = vld [vmem:[%s2 + $0x778] sm:$0xff]
  %v317 = vld [vmem:[%s2 + $0x780] sm:$0xff]
  %v318 = vld [vmem:[%s2 + $0x788] sm:$0xff]
  %v319 = vld [vmem:[%s2 + $0x790] sm:$0xff]
  %v320 = vld [vmem:[%s2 + $0x798] sm:$0xff]
  %v321 = vld [vmem:[%s2 + $0x7a0] sm:$0xff]
  %v322 = vld [vmem:[%s2 + $0x7a8] sm:$0xff]
  %v323 = vld [vmem:[%s2 + $0x7b0] sm:$0xff]
  %v324 = vld [vmem:[%s2 + $0x7b8] sm:$0xff]
  %v325 = vld [vmem:[%s2 + $0x7c0] sm:$0xff]
  %v326 = vld [vmem:[%s2 + $0x7c8] sm:$0xff]
  %v327 = vld [vmem:[%s2 + $0x7d0] sm:$0xff]
  %v328 = vld [vmem:[%s2 + $0x7d8] sm:$0xff]
  %v329 = vld [vmem:[%s2 + $0x7e0] sm:$0xff]
  %v330 = vld [vmem:[%s2 + $0x7e8] sm:$0xff]
  %v331 = vld [vmem:[%s2 + $0x7f0] sm:$0xff]
  %v332 = vld [vmem:[%s2 + $0x7f8] sm:$0xff]
  %v333 = vld [vmem:[%s2 + $0x800] sm:$0xff]
  %v334 = vld [vmem:[%s2 + $0x808] sm:$0xff]
  %v335 = vld [vmem:[%s2 + $0x810] sm:$0xff]
  %v336 = vld [vmem:[%s2 + $0x818] sm:$0xff]
  %v337 = vld [vmem:[%s2 + $0x820] sm:$0xff]
  %v338 = vld [vmem:[%s2 + $0x828] sm:$0xff]
  %v339 = vld [vmem:[%s2 + $0x830] sm:$0xff]
  %v340 = vld [vmem:[%s2 + $0x838] sm:$0xff]
  %v341 = vld [vmem:[%s2 + $0x840] sm:$0xff]
  %v342 = vld [vmem:[%s2 + $0x848] sm:$0xff]
  %v343 = vld [vmem:[%s2 + $0x850] sm:$0xff]
  %v344 = vld [vmem:[%s2 + $0x858] sm:$0xff]
  %v345 = vld [vmem:[%s2 + $0x860] sm:$0xff]
  %v346 = vld [vmem:[%s2 + $0x868] sm:$0xff]
  %v347 = vld [vmem:[%s2 + $0x870] sm:$0xff]
  %v348 = vld [vmem:[%s2 + $0x878] sm:$0xff]
  %v349 = vld [vmem:[%s2 + $0x880] sm:$0xff]
  %v350 = vld [vmem:[%s2 + $0x888] sm:$0xff]
  %v351 = vld [vmem:[%s2 + $0x890] sm:$0xff]
  %v352 = vld [vmem:[%s2 + $0x898] sm:$0xff]
  %v353 = vld [vmem:[%s2 + $0x8a0] sm:$0xff]
  %v354 = vld [vmem:[%s2 + $0x8a8] sm:$0xff]
  %v355 = vld [vmem:[%s2 + $0x8b0] sm:$0xff]
  %v356 = vld [vmem:[%s2 + $0x8b8] sm:$0xff]
  %v357 = vld [vmem:[%s2 + $0x8c0] sm:$0xff]
  %v358 = vld [vmem:[%s2 + $0x8c8] sm:$0xff]
  %v359 = vld [vmem:[%s2 + $0x8d0] sm:$0xff]
  %v360 = vld [vmem:[%s2 + $0x8d8] sm:$0xff]
  %v361 = vld [vmem:[%s2 + $0x8e0] sm:$0xff]
  %v362 = vld [vmem:[%s2 + $0x8e8] sm:$0xff]
  %v363 = vld [vmem:[%s2 + $0x8f0] sm:$0xff]
  %v364 = vld [vmem:[%s2 + $0x8f8] sm:$0xff]
  %v365 = vld [vmem:[%s2 + $0x900] sm:$0xff]
  %v366 = vld [vmem:[%s2 + $0x908] sm:$0xff]
  %v367 = vld [vmem:[%s2 + $0x910] sm:$0xff]
  %v368 = vld [vmem:[%s2 + $0x918] sm:$0xff]
  %v369 = vld [vmem:[%s2 + $0x920] sm:$0xff]
  %v370 = vld [vmem:[%s2 + $0x928] sm:$0xff]
  %v371 = vld [vmem:[%s2 + $0x930] sm:$0xff]
  %v372 = vld [vmem:[%s2 + $0x938] sm:$0xff]
  %v373 = vld [vmem:[%s2 + $0x940] sm:$0xff]
  %v374 = vld [vmem:[%s2 + $0x948] sm:$0xff]
  %v375 = vld [vmem:[%s2 + $0x950] sm:$0xff]
  %v376 = vld [vmem:[%s2 + $0x958] sm:$0xff]
  %v377 = vld [vmem:[%s2 + $0x960] sm:$0xff]
  %v378 = vld [vmem:[%s2 + $0x968] sm:$0xff]
  %v379 = vld [vmem:[%s2 + $0x970] sm:$0xff]
  %v380 = vld [vmem:[%s2 + $0x978] sm:$0xff]
  %v381 = vld [vmem:[%s2 + $0x980] sm:$0xff]
  %v382 = vld [vmem:[%s2 + $0x988] sm:$0xff]
  %v383 = vld [vmem:[%s2 + $0x990] sm:$0xff]
  %v384 = vld [vmem:[%s2 + $0x998] sm:$0xff]
  %v385 = vld [vmem:[%s2 + $0x9a0] sm:$0xff]
  %v386 = vld [vmem:[%s2 + $0x9a8] sm:$0xff]
  %v387 = vld [vmem:[%s2 + $0x9b0] sm:$0xff]
  %v388 = vld [vmem:[%s2 + $0x9b8] sm:$0xff]
  %v389 = vld [vmem:[%s2 + $0x9c0] sm:$0xff]
  %v390 = vld [vmem:[%s2 + $0x9c8] sm:$0xff]
  %v391 = vld [vmem:[%s2 + $0x9d0] sm:$0xff]
  %v392 = vld [vmem:[%s2 + $0x9d8] sm:$0xff]
  %v393 = vld [vmem:[%s2 + $0x9e0] sm:$0xff]
  %v394 = vld [vmem:[%s2 + $0x9e8] sm:$0xff]
  %v395 = vld [vmem:[%s2 + $0x9f0] sm:$0xff]
  %v396 = vld [vmem:[%s2 + $0x9f8] sm:$0xff]
  %v397 = vld [vmem:[%s2 + $0xa00] sm:$0xff]
  %v398 = vld [vmem:[%s2 + $0xa08] sm:$0xff]
  %v399 = vld [vmem:[%s2 + $0xa10] sm:$0xff]
  %v400 = vld [vmem:[%s2 + $0xa18] sm:$0xff]
  %v401 = vld [vmem:[%s2 + $0xa20] sm:$0xff]
  %v402 = vld [vmem:[%s2 + $0xa28] sm:$0xff]
  %v403 = vld [vmem:[%s2 + $0xa30] sm:$0xff]
  %v404 = vld [vmem:[%s2 + $0xa38] sm:$0xff]
  %v405 = vld [vmem:[%s2 + $0xa40] sm:$0xff]
  %v406 = vld [vmem:[%s2 + $0xa48] sm:$0xff]
  %v407 = vld [vmem:[%s2 + $0xa50] sm:$0xff]
  %v408 = vld [vmem:[%s2 + $0xa58] sm:$0xff]
  %v409 = vld [vmem:[%s2 + $0xa60] sm:$0xff]
  %v410 = vld [vmem:[%s2 + $0xa68] sm:$0xff]
  %v411 = vld [vmem:[%s2 + $0xa70] sm:$0xff]
  %v412 = vld [vmem:[%s2 + $0xa78] sm:$0xff]
  %v413 = vld [vmem:[%s2 + $0xa80] sm:$0xff]
  %v414 = vld [vmem:[%s2 + $0xa88] sm:$0xff]
  %v415 = vld [vmem:[%s2 + $0xa90] sm:$0xff]
  %v416 = vld [vmem:[%s2 + $0xa98] sm:$0xff]
  %v417 = vld [vmem:[%s2 + $0xaa0] sm:$0xff]
  %v418 = vld [vmem:[%s2 + $0xaa8] sm:$0xff]
  %v419 = vld [vmem:[%s2 + $0xab0] sm:$0xff]
  %v420 = vld [vmem:[%s2 + $0xab8] sm:$0xff]
  %v421 = vld [vmem:[%s2 + $0xac0] sm:$0xff]
  %v422 = vld [vmem:[%s2 + $0xac8] sm:$0xff]
  %v423 = vld [vmem:[%s2 + $0xad0] sm:$0xff]
  %v424 = vld [vmem:[%s2 + $0xad8] sm:$0xff]
  %v425 = vld [vmem:[%s2 + $0xae0] sm:$0xff]
  %v426 = vld [vmem:[%s2 + $0xae8] sm:$0xff]
  %v427 = vld [vmem:[%s2 + $0xaf0] sm:$0xff]
  %v428 = vld [vmem:[%s2 + $0xaf8] sm:$0xff]
  %v429 = vld [vmem:[%s2 + $0xb00] sm:$0xff]
  %v430 = vld [vmem:[%s2 + $0xb08] sm:$0xff]
  %v431 = vld [vmem:[%s2 + $0xb10] sm:$0xff]
  %v432 = vld [vmem:[%s2 + $0xb18] sm:$0xff]
  %v433 = vld [vmem:[%s2 + $0xb20] sm:$0xff]
  %v434 = vld [vmem:[%s2 + $0xb28] sm:$0xff]
  %v435 = vld [vmem:[%s2 + $0xb30] sm:$0xff]
  %v436 = vld [vmem:[%s2 + $0xb38] sm:$0xff]
  %v437 = vld [vmem:[%s2 + $0xb40] sm:$0xff]
  %v438 = vld [vmem:[%s2 + $0xb48] sm:$0xff]
  %v439 = vld [vmem:[%s2 + $0xb50] sm:$0xff]
  %v440 = vld [vmem:[%s2 + $0xb58] sm:$0xff]
  %v441 = vld [vmem:[%s2 + $0xb60] sm:$0xff]
  %v442 = vld [vmem:[%s2 + $0xb68] sm:$0xff]
  %v443 = vld [vmem:[%s2 + $0xb70] sm:$0xff]
  %v444 = vld [vmem:[%s2 + $0xb78] sm:$0xff]
  %v445 = vld [vmem:[%s2 + $0xb80] sm:$0xff]
  %v446 = vld [vmem:[%s2 + $0xb88] sm:$0xff]
  %v447 = vld [vmem:[%s2 + $0xb90] sm:$0xff]
  %v448 = vld [vmem:[%s2 + $0xb98] sm:$0xff]
  %v449 = vld [vmem:[%s2 + $0xba0] sm:$0xff]
  %v450 = vld [vmem:[%s2 + $0xba8] sm:$0xff]
  %v451 = vld [vmem:[%s2 + $0xbb0] sm:$0xff]
  %v452 = vld [vmem:[%s2 + $0xbb8] sm:$0xff]
  %v453 = vld [vmem:[%s2 + $0xbc0] sm:$0xff]
  %v454 = vld [vmem:[%s2 + $0xbc8] sm:$0xff]
  %v455 = vld [vmem:[%s2 + $0xbd0] sm:$0xff]
  %v456 = vld [vmem:[%s2 + $0xbd8] sm:$0xff]
  %v457 = vld [vmem:[%s2 + $0xbe0] sm:$0xff]
  %v458 = vld [vmem:[%s2 + $0xbe8] sm:$0xff]
  %v459 = vld [vmem:[%s2 + $0xbf0] sm:$0xff]
  %v460 = vld [vmem:[%s2 + $0xbf8] sm:$0xff]
  %v461 = vld [vmem:[%s2 + $0xc00] sm:$0xff]
  %v462 = vld [vmem:[%s2 + $0xc08] sm:$0xff]
  %v463 = vld [vmem:[%s2 + $0xc10] sm:$0xff]
  %v464 = vld [vmem:[%s2 + $0xc18] sm:$0xff]
  %v465 = vld [vmem:[%s2 + $0xc20] sm:$0xff]
  %v466 = vld [vmem:[%s2 + $0xc28] sm:$0xff]
  %v467 = vld [vmem:[%s2 + $0xc30] sm:$0xff]
  %v468 = vld [vmem:[%s2 + $0xc38] sm:$0xff]
  %v469 = vld [vmem:[%s2 + $0xc40] sm:$0xff]
  %v470 = vld [vmem:[%s2 + $0xc48] sm:$0xff]
  %v471 = vld [vmem:[%s2 + $0xc50] sm:$0xff]
  %v472 = vld [vmem:[%s2 + $0xc58] sm:$0xff]
  %v473 = vld [vmem:[%s2 + $0xc60] sm:$0xff]
  %v474 = vld [vmem:[%s2 + $0xc68] sm:$0xff]
  %v475 = vld [vmem:[%s2 + $0xc70] sm:$0xff]
  %v476 = vld [vmem:[%s2 + $0xc78] sm:$0xff]
  %v477 = vld [vmem:[%s2 + $0xc80] sm:$0xff]
  %v478 = vld [vmem:[%s2 + $0xc88] sm:$0xff]
  %v479 = vld [vmem:[%s2 + $0xc90] sm:$0xff]
  %v480 = vld [vmem:[%s2 + $0xc98] sm:$0xff]
  %v481 = vld [vmem:[%s2 + $0xca0] sm:$0xff]
  %v482 = vld [vmem:[%s2 + $0xca8] sm:$0xff]
  %v483 = vld [vmem:[%s2 + $0xcb0] sm:$0xff]
  %v484 = vld [vmem:[%s2 + $0xcb8] sm:$0xff]
  %v485 = vld [vmem:[%s2 + $0xcc0] sm:$0xff]
  %v486 = vld [vmem:[%s2 + $0xcc8] sm:$0xff]
  %v487 = vld [vmem:[%s2 + $0xcd0] sm:$0xff]
  %v488 = vld [vmem:[%s2 + $0xcd8] sm:$0xff]
  %v489 = vld [vmem:[%s2 + $0xce0] sm:$0xff]
  %v490 = vld [vmem:[%s2 + $0xce8] sm:$0xff]
  %v491 = vld [vmem:[%s2 + $0xcf0] sm:$0xff]
  %v492 = vld [vmem:[%s2 + $0xcf8] sm:$0xff]
  %v493 = vld [vmem:[%s2 + $0xd00] sm:$0xff]
  %v494 = vld [vmem:[%s2 + $0xd08] sm:$0xff]
  %v495 = vld [vmem:[%s2 + $0xd10] sm:$0xff]
  %v496 = vld [vmem:[%s2 + $0xd18] sm:$0xff]
  %v497 = vld [vmem:[%s2 + $0xd20] sm:$0xff]
  %v498 = vld [vmem:[%s2 + $0xd28] sm:$0xff]
  %v499 = vld [vmem:[%s2 + $0xd30] sm:$0xff]
  %v500 = vld [vmem:[%s2 + $0xd38] sm:$0xff]
  %v501 = vld [vmem:[%s2 + $0xd40] sm:$0xff]
  %v502 = vld [vmem:[%s2 + $0xd48] sm:$0xff]
  %v503 = vld [vmem:[%s2 + $0xd50] sm:$0xff]
  %v504 = vld [vmem:[%s2 + $0xd58] sm:$0xff]
  %v505 = vld [vmem:[%s2 + $0xd60] sm:$0xff]
  %v506 = vld [vmem:[%s2 + $0xd68] sm:$0xff]
  %v507 = vld [vmem:[%s2 + $0xd70] sm:$0xff]
  %v508 = vld [vmem:[%s2 + $0xd78] sm:$0xff]
  %v509 = vld [vmem:[%s2 + $0xd80] sm:$0xff]
  %v510 = vld [vmem:[%s2 + $0xd88] sm:$0xff]
  %v511 = vld [vmem:[%s2 + $0xd90] sm:$0xff]
  %v512 = vld [vmem:[%s2 + $0xd98] sm:$0xff]
  %v513 = vld [vmem:[%s2 + $0xda0] sm:$0xff]
  %v514 = vld [vmem:[%s2 + $0xda8] sm:$0xff]
  %v515 = vld [vmem:[%s2 + $0xdb0] sm:$0xff]
  %v516 = vld [vmem:[%s2 + $0xdb8] sm:$0xff]
  %v517 = vld [vmem:[%s2 + $0xdc0] sm:$0xff]
  %v518 = vld [vmem:[%s2 + $0xdc8] sm:$0xff]
  %v519 = vld [vmem:[%s2 + $0xdd0] sm:$0xff]
  %v520 = vld [vmem:[%s2 + $0xdd8] sm:$0xff]
  %v521 = vld [vmem:[%s2 + $0xde0] sm:$0xff]
  %v522 = vld [vmem:[%s2 + $0xde8] sm:$0xff]
  %v523 = vld [vmem:[%s2 + $0xdf0] sm:$0xff]
  %v524 = vld [vmem:[%s2 + $0xdf8] sm:$0xff]
  %v525 = vld [vmem:[%s2 + $0xe00] sm:$0xff]
  %v526 = vld [vmem:[%s2 + $0xe08] sm:$0xff]
  %v527 = vld [vmem:[%s2 + $0xe10] sm:$0xff]
  %v528 = vld [vmem:[%s2 + $0xe18] sm:$0xff]
  %v529 = vld [vmem:[%s2 + $0xe20] sm:$0xff]
  %v530 = vld [vmem:[%s2 + $0xe28] sm:$0xff]
  %v531 = vld [vmem:[%s2 + $0xe30] sm:$0xff]
  %v532 = vld [vmem:[%s2 + $0xe38] sm:$0xff]
  %v533 = vld [vmem:[%s2 + $0xe40] sm:$0xff]
  %v534 = vld [vmem:[%s2 + $0xe48] sm:$0xff]
  %v535 = vld [vmem:[%s2 + $0xe50] sm:$0xff]
  %v536 = vld [vmem:[%s2 + $0xe58] sm:$0xff]
  %v537 = vld [vmem:[%s2 + $0xe60] sm:$0xff]
  %v538 = vld [vmem:[%s2 + $0xe68] sm:$0xff]
  %v539 = vld [vmem:[%s2 + $0xe70] sm:$0xff]
  %v540 = vld [vmem:[%s2 + $0xe78] sm:$0xff]
  %v541 = vld [vmem:[%s2 + $0xe80] sm:$0xff]
  %v542 = vld [vmem:[%s2 + $0xe88] sm:$0xff]
  %v543 = vld [vmem:[%s2 + $0xe90] sm:$0xff]
  %v544 = vld [vmem:[%s2 + $0xe98] sm:$0xff]
  %v545 = vld [vmem:[%s2 + $0xea0] sm:$0xff]
  %v546 = vld [vmem:[%s2 + $0xea8] sm:$0xff]
  %v547 = vld [vmem:[%s2 + $0xeb0] sm:$0xff]
  %v548 = vld [vmem:[%s2 + $0xeb8] sm:$0xff]
  %v549 = vld [vmem:[%s2 + $0xec0] sm:$0xff]
  %v550 = vld [vmem:[%s2 + $0xec8] sm:$0xff]
  %v551 = vld [vmem:[%s2 + $0xed0] sm:$0xff]
  %v552 = vld [vmem:[%s2 + $0xed8] sm:$0xff]
  %v553 = vld [vmem:[%s2 + $0xee0] sm:$0xff]
  %v554 = vld [vmem:[%s2 + $0xee8] sm:$0xff]
  %v555 = vld [vmem:[%s2 + $0xef0] sm:$0xff]
  %v556 = vld [vmem:[%s2 + $0xef8] sm:$0xff]
  %v557 = vld [vmem:[%s2 + $0xf00] sm:$0xff]
  %v558 = vld [vmem:[%s2 + $0xf08] sm:$0xff]
  %v559 = vld [vmem:[%s2 + $0xf10] sm:$0xff]
  %v560 = vld [vmem:[%s2 + $0xf18] sm:$0xff]
  %v561 = vld [vmem:[%s2 + $0xf20] sm:$0xff]
  %v562 = vld [vmem:[%s2 + $0xf28] sm:$0xff]
  %v563 = vld [vmem:[%s2 + $0xf30] sm:$0xff]
  %v564 = vld [vmem:[%s2 + $0xf38] sm:$0xff]
  %v565 = vld [vmem:[%s2 + $0xf40] sm:$0xff]
  %v566 = vld [vmem:[%s2 + $0xf48] sm:$0xff]
  %v567 = vld [vmem:[%s2 + $0xf50] sm:$0xff]
  %v568 = vld [vmem:[%s2 + $0xf58] sm:$0xff]
  %v569 = vld [vmem:[%s2 + $0xf60] sm:$0xff]
  %v570 = vld [vmem:[%s2 + $0xf68] sm:$0xff]
  %v571 = vld [vmem:[%s2 + $0xf70] sm:$0xff]
  %v572 = vld [vmem:[%s2 + $0xf78] sm:$0xff]
  %v573 = vld [vmem:[%s2 + $0xf80] sm:$0xff]
  %v574 = vld [vmem:[%s2 + $0xf88] sm:$0xff]
  %v575 = vld [vmem:[%s2 + $0xf90] sm:$0xff]
  %v576 = vld [vmem:[%s2 + $0xf98] sm:$0xff]
  %v577 = vld [vmem:[%s2 + $0xfa0] sm:$0xff]
  %v578 = vld [vmem:[%s2 + $0xfa8] sm:$0xff]
  %v579 = vld [vmem:[%s2 + $0xfb0] sm:$0xff]
  %v580 = vld [vmem:[%s2 + $0xfb8] sm:$0xff]
  %v581 = vld [vmem:[%s2 + $0xfc0] sm:$0xff]
  %v582 = vld [vmem:[%s2 + $0xfc8] sm:$0xff]
  %v583 = vld [vmem:[%s2 + $0xfd0] sm:$0xff]
  %v584 = vld [vmem:[%s2 + $0xfd8] sm:$0xff]
  %v585 = vld [vmem:[%s2 + $0xfe0] sm:$0xff]
  %v586 = vld [vmem:[%s2 + $0xfe8] sm:$0xff]
  %v587 = vld [vmem:[%s2 + $0xff0] sm:$0xff]
  %v588 = vld [vmem:[%s2 + $0xff8] sm:$0xff]
  %v589 = vld [vmem:[%s2 + $0x1000] sm:$0xff]
  %v590 = vld [vmem:[%s2 + $0x1008] sm:$0xff]
  %v591 = vld [vmem:[%s2 + $0x1010] sm:$0xff]
  %v592 = vld [vmem:[%s2 + $0x1018] sm:$0xff]
  %v593 = vld [vmem:[%s2 + $0x1020] sm:$0xff]
  %v594 = vld [vmem:[%s2 + $0x1028] sm:$0xff]
  %v595 = vld [vmem:[%s2 + $0x1030] sm:$0xff]
  %v596 = vld [vmem:[%s2 + $0x1038] sm:$0xff]
  %v597 = vld [vmem:[%s2 + $0x1040] sm:$0xff]
  %v598 = vld [vmem:[%s2 + $0x1048] sm:$0xff]
  %v599 = vld [vmem:[%s2 + $0x1050] sm:$0xff]
  %v600 = vld [vmem:[%s2 + $0x1058] sm:$0xff]
  %v601 = vld [vmem:[%s2 + $0x1060] sm:$0xff]
  %v602 = vld [vmem:[%s2 + $0x1068] sm:$0xff]
  %v603 = vld [vmem:[%s2 + $0x1070] sm:$0xff]
  %v604 = vld [vmem:[%s2 + $0x1078] sm:$0xff]
  %v605 = vld [vmem:[%s2 + $0x1080] sm:$0xff]
  %v606 = vld [vmem:[%s2 + $0x1088] sm:$0xff]
  %v607 = vld [vmem:[%s2 + $0x1090] sm:$0xff]
  %v608 = vld [vmem:[%s2 + $0x1098] sm:$0xff]
  %v609 = vld [vmem:[%s2 + $0x10a0] sm:$0xff]
  %v610 = vld [vmem:[%s2 + $0x10a8] sm:$0xff]
  %v611 = vld [vmem:[%s2 + $0x10b0] sm:$0xff]
  %v612 = vld [vmem:[%s2 + $0x10b8] sm:$0xff]
  %v613 = vld [vmem:[%s2 + $0x10c0] sm:$0xff]
  %v614 = vld [vmem:[%s2 + $0x10c8] sm:$0xff]
  %v615 = vld [vmem:[%s2 + $0x10d0] sm:$0xff]
  %v616 = vld [vmem:[%s2 + $0x10d8] sm:$0xff]
  %v617 = vld [vmem:[%s2 + $0x10e0] sm:$0xff]
  %v618 = vld [vmem:[%s2 + $0x10e8] sm:$0xff]
  %v619 = vld [vmem:[%s2 + $0x10f0] sm:$0xff]
  %v620 = vld [vmem:[%s2 + $0x10f8] sm:$0xff]
  %v621 = vld [vmem:[%s2 + $0x1100] sm:$0xff]
  %v622 = vld [vmem:[%s2 + $0x1108] sm:$0xff]
  %v623 = vld [vmem:[%s2 + $0x1110] sm:$0xff]
  %v624 = vld [vmem:[%s2 + $0x1118] sm:$0xff]
  %v625 = vld [vmem:[%s2 + $0x1120] sm:$0xff]
  %v626 = vld [vmem:[%s2 + $0x1128] sm:$0xff]
  %v627 = vld [vmem:[%s2 + $0x1130] sm:$0xff]
  %v628 = vld [vmem:[%s2 + $0x1138] sm:$0xff]
  %v629 = vld [vmem:[%s2 + $0x1140] sm:$0xff]
  %v630 = vld [vmem:[%s2 + $0x1148] sm:$0xff]
  %v631 = vld [vmem:[%s2 + $0x1150] sm:$0xff]
  %v632 = vld [vmem:[%s2 + $0x1158] sm:$0xff]
  %v633 = vld [vmem:[%s2 + $0x1160] sm:$0xff]
  %v634 = vld [vmem:[%s2 + $0x1168] sm:$0xff]
  %v635 = vld [vmem:[%s2 + $0x1170] sm:$0xff]
  %v636 = vld [vmem:[%s2 + $0x1178] sm:$0xff]
  %v637 = vld [vmem:[%s2 + $0x1180] sm:$0xff]
  %v638 = vld [vmem:[%s2 + $0x1188] sm:$0xff]
  %v639 = vld [vmem:[%s2 + $0x1190] sm:$0xff]
  %v640 = vld [vmem:[%s2 + $0x1198] sm:$0xff]
  %v641 = vld [vmem:[%s2 + $0x11a0] sm:$0xff]
  %v642 = vld [vmem:[%s2 + $0x11a8] sm:$0xff]
  %v643 = vld [vmem:[%s2 + $0x11b0] sm:$0xff]
  %v644 = vld [vmem:[%s2 + $0x11b8] sm:$0xff]
  %v645 = vld [vmem:[%s2 + $0x11c0] sm:$0xff]
  %v646 = vld [vmem:[%s2 + $0x11c8] sm:$0xff]
  %v647 = vld [vmem:[%s2 + $0x11d0] sm:$0xff]
  %v648 = vld [vmem:[%s2 + $0x11d8] sm:$0xff]
  %v649 = vld [vmem:[%s2 + $0x11e0] sm:$0xff]
  %v650 = vld [vmem:[%s2 + $0x11e8] sm:$0xff]
  %v651 = vld [vmem:[%s2 + $0x11f0] sm:$0xff]
  %v652 = vld [vmem:[%s2 + $0x11f8] sm:$0xff]
  %v653 = vld [vmem:[%s2 + $0x1200] sm:$0xff]
  %v654 = vld [vmem:[%s2 + $0x1208] sm:$0xff]
  %v655 = vld [vmem:[%s2 + $0x1210] sm:$0xff]
  %v656 = vld [vmem:[%s2 + $0x1218] sm:$0xff]
  %v657 = vld [vmem:[%s2 + $0x1220] sm:$0xff]
  %v658 = vld [vmem:[%s2 + $0x1228] sm:$0xff]
  %v659 = vld [vmem:[%s2 + $0x1230] sm:$0xff]
  %v660 = vld [vmem:[%s2 + $0x1238] sm:$0xff]
  %v661 = vld [vmem:[%s2 + $0x1240] sm:$0xff]
  %v662 = vld [vmem:[%s2 + $0x1248] sm:$0xff]
  %v663 = vld [vmem:[%s2 + $0x1250] sm:$0xff]
  %v664 = vld [vmem:[%s2 + $0x1258] sm:$0xff]
  %v665 = vld [vmem:[%s2 + $0x1260] sm:$0xff]
  %v666 = vld [vmem:[%s2 + $0x1268] sm:$0xff]
  %v667 = vld [vmem:[%s2 + $0x1270] sm:$0xff]
  %v668 = vld [vmem:[%s2 + $0x1278] sm:$0xff]
  %v669 = vld [vmem:[%s2 + $0x1280] sm:$0xff]
  %v670 = vld [vmem:[%s2 + $0x1288] sm:$0xff]
  %v671 = vld [vmem:[%s2 + $0x1290] sm:$0xff]
  %v672 = vld [vmem:[%s2 + $0x1298] sm:$0xff]
  %v673 = vld [vmem:[%s2 + $0x12a0] sm:$0xff]
  %v674 = vld [vmem:[%s2 + $0x12a8] sm:$0xff]
  %v675 = vld [vmem:[%s2 + $0x12b0] sm:$0xff]
  %v676 = vld [vmem:[%s2 + $0x12b8] sm:$0xff]
  %v677 = vld [vmem:[%s2 + $0x12c0] sm:$0xff]
  %v678 = vld [vmem:[%s2 + $0x12c8] sm:$0xff]
  %v679 = vld [vmem:[%s2 + $0x12d0] sm:$0xff]
  %v680 = vld [vmem:[%s2 + $0x12d8] sm:$0xff]
  %v681 = vld [vmem:[%s2 + $0x12e0] sm:$0xff]
  %v682 = vld [vmem:[%s2 + $0x12e8] sm:$0xff]
  %v683 = vld [vmem:[%s2 + $0x12f0] sm:$0xff]
  %v684 = vld [vmem:[%s2 + $0x12f8] sm:$0xff]
  %v685 = vld [vmem:[%s2 + $0x1300] sm:$0xff]
  %v686 = vld [vmem:[%s2 + $0x1308] sm:$0xff]
  %v687 = vld [vmem:[%s2 + $0x1310] sm:$0xff]
  %v688 = vld [vmem:[%s2 + $0x1318] sm:$0xff]
  %v689 = vld [vmem:[%s2 + $0x1320] sm:$0xff]
  %v690 = vld [vmem:[%s2 + $0x1328] sm:$0xff]
  %v691 = vld [vmem:[%s2 + $0x1330] sm:$0xff]
  %v692 = vld [vmem:[%s2 + $0x1338] sm:$0xff]
  %v693 = vld [vmem:[%s2 + $0x1340] sm:$0xff]
  %v694 = vld [vmem:[%s2 + $0x1348] sm:$0xff]
  %v695 = vld [vmem:[%s2 + $0x1350] sm:$0xff]
  %v696 = vld [vmem:[%s2 + $0x1358] sm:$0xff]
  %v697 = vld [vmem:[%s2 + $0x1360] sm:$0xff]
  %v698 = vld [vmem:[%s2 + $0x1368] sm:$0xff]
  %v699 = vld [vmem:[%s2 + $0x1370] sm:$0xff]
  %v700 = vld [vmem:[%s2 + $0x1378] sm:$0xff]
  %v701 = vld [vmem:[%s2 + $0x1380] sm:$0xff]
  %v702 = vld [vmem:[%s2 + $0x1388] sm:$0xff]
  %v703 = vld [vmem:[%s2 + $0x1390] sm:$0xff]
  %v704 = vld [vmem:[%s2 + $0x1398] sm:$0xff]
  %v705 = vld [vmem:[%s2 + $0x13a0] sm:$0xff]
  %v706 = vld [vmem:[%s2 + $0x13a8] sm:$0xff]
  %v707 = vld [vmem:[%s2 + $0x13b0] sm:$0xff]
  %v708 = vld [vmem:[%s2 + $0x13b8] sm:$0xff]
  %v709 = vld [vmem:[%s2 + $0x13c0] sm:$0xff]
  %v710 = vld [vmem:[%s2 + $0x13c8] sm:$0xff]
  %v711 = vld [vmem:[%s2 + $0x13d0] sm:$0xff]
  %v712 = vld [vmem:[%s2 + $0x13d8] sm:$0xff]
  %v713 = vld [vmem:[%s2 + $0x13e0] sm:$0xff]
  %v714 = vld [vmem:[%s2 + $0x13e8] sm:$0xff]
  %v715 = vld [vmem:[%s2 + $0x13f0] sm:$0xff]
  %v716 = vld [vmem:[%s2 + $0x13f8] sm:$0xff]
  %v717 = vld [vmem:[%s2 + $0x1400] sm:$0xff]
  %v718 = vld [vmem:[%s2 + $0x1408] sm:$0xff]
  %v719 = vld [vmem:[%s2 + $0x1410] sm:$0xff]
  %v720 = vld [vmem:[%s2 + $0x1418] sm:$0xff]
  %v721 = vld [vmem:[%s2 + $0x1420] sm:$0xff]
  %v722 = vld [vmem:[%s2 + $0x1428] sm:$0xff]
  %v723 = vld [vmem:[%s2 + $0x1430] sm:$0xff]
  %v724 = vld [vmem:[%s2 + $0x1438] sm:$0xff]
  %v725 = vld [vmem:[%s2 + $0x1440] sm:$0xff]
  %v726 = vld [vmem:[%s2 + $0x1448] sm:$0xff]
  %v727 = vld [vmem:[%s2 + $0x1450] sm:$0xff]
  %v728 = vld [vmem:[%s2 + $0x1458] sm:$0xff]
  %v729 = vld [vmem:[%s2 + $0x1460] sm:$0xff]
  %v730 = vld [vmem:[%s2 + $0x1468] sm:$0xff]
  %v731 = vld [vmem:[%s2 + $0x1470] sm:$0xff]
  %v732 = vld [vmem:[%s2 + $0x1478] sm:$0xff]
  %v733 = vld [vmem:[%s2 + $0x1480] sm:$0xff]
  %v734 = vld [vmem:[%s2 + $0x1488] sm:$0xff]
  %v735 = vld [vmem:[%s2 + $0x1490] sm:$0xff]
  %v736 = vld [vmem:[%s2 + $0x1498] sm:$0xff]
  %v737 = vld [vmem:[%s2 + $0x14a0] sm:$0xff]
  %v738 = vld [vmem:[%s2 + $0x14a8] sm:$0xff]
  %v739 = vld [vmem:[%s2 + $0x14b0] sm:$0xff]
  %v740 = vld [vmem:[%s2 + $0x14b8] sm:$0xff]
  %v741 = vld [vmem:[%s2 + $0x14c0] sm:$0xff]
  %v742 = vld [vmem:[%s2 + $0x14c8] sm:$0xff]
  %v743 = vld [vmem:[%s2 + $0x14d0] sm:$0xff]
  %v744 = vld [vmem:[%s2 + $0x14d8] sm:$0xff]
  %v745 = vld [vmem:[%s2 + $0x14e0] sm:$0xff]
  %v746 = vld [vmem:[%s2 + $0x14e8] sm:$0xff]
  %v747 = vld [vmem:[%s2 + $0x14f0] sm:$0xff]
  %v748 = vld [vmem:[%s2 + $0x14f8] sm:$0xff]
  %v749 = vld [vmem:[%s2 + $0x1500] sm:$0xff]
  %v750 = vld [vmem:[%s2 + $0x1508] sm:$0xff]
  %v751 = vld [vmem:[%s2 + $0x1510] sm:$0xff]
  %v752 = vld [vmem:[%s2 + $0x1518] sm:$0xff]
  %v753 = vld [vmem:[%s2 + $0x1520] sm:$0xff]
  %v754 = vld [vmem:[%s2 + $0x1528] sm:$0xff]
  %v755 = vld [vmem:[%s2 + $0x1530] sm:$0xff]
  %v756 = vld [vmem:[%s2 + $0x1538] sm:$0xff]
  %v757 = vld [vmem:[%s2 + $0x1540] sm:$0xff]
  %v758 = vld [vmem:[%s2 + $0x1548] sm:$0xff]
  %v759 = vld [vmem:[%s2 + $0x1550] sm:$0xff]
  %v760 = vld [vmem:[%s2 + $0x1558] sm:$0xff]
  %v761 = vld [vmem:[%s2 + $0x1560] sm:$0xff]
  %v762 = vld [vmem:[%s2 + $0x1568] sm:$0xff]
  %v763 = vld [vmem:[%s2 + $0x1570] sm:$0xff]
  %v764 = vld [vmem:[%s2 + $0x1578] sm:$0xff]
  %v765 = vld [vmem:[%s2 + $0x1580] sm:$0xff]
  %v766 = vld [vmem:[%s2 + $0x1588] sm:$0xff]
  %v767 = vld [vmem:[%s2 + $0x1590] sm:$0xff]
  %v768 = vld [vmem:[%s2 + $0x1598] sm:$0xff]
  %v769 = vld [vmem:[%s2 + $0x15a0] sm:$0xff]
  %v770 = vld [vmem:[%s2 + $0x15a8] sm:$0xff]
  %v771 = vld [vmem:[%s2 + $0x15b0] sm:$0xff]
  %v772 = vld [vmem:[%s2 + $0x15b8] sm:$0xff]
  %v773 = vld [vmem:[%s2 + $0x15c0] sm:$0xff]
  %v774 = vld [vmem:[%s2 + $0x15c8] sm:$0xff]
  %v775 = vld [vmem:[%s2 + $0x15d0] sm:$0xff]
  %v776 = vld [vmem:[%s2 + $0x15d8] sm:$0xff]
  %v777 = vld [vmem:[%s2 + $0x15e0] sm:$0xff]
  %v778 = vld [vmem:[%s2 + $0x15e8] sm:$0xff]
  %v779 = vld [vmem:[%s2 + $0x15f0] sm:$0xff]
  %v780 = vld [vmem:[%s2 + $0x15f8] sm:$0xff]
  %v781 = vld [vmem:[%s2 + $0x1600] sm:$0xff]
  %v782 = vld [vmem:[%s2 + $0x1608] sm:$0xff]
  %v783 = vld [vmem:[%s2 + $0x1610] sm:$0xff]
  %v784 = vld [vmem:[%s2 + $0x1618] sm:$0xff]
  %v785 = vld [vmem:[%s2 + $0x1620] sm:$0xff]
  %v786 = vld [vmem:[%s2 + $0x1628] sm:$0xff]
  %v787 = vld [vmem:[%s2 + $0x1630] sm:$0xff]
  %v788 = vld [vmem:[%s2 + $0x1638] sm:$0xff]
  %v789 = vld [vmem:[%s2 + $0x1640] sm:$0xff]
  %v790 = vld [vmem:[%s2 + $0x1648] sm:$0xff]
  %v791 = vld [vmem:[%s2 + $0x1650] sm:$0xff]
  %v792 = vld [vmem:[%s2 + $0x1658] sm:$0xff]
  %v793 = vld [vmem:[%s2 + $0x1660] sm:$0xff]
  %v794 = vld [vmem:[%s2 + $0x1668] sm:$0xff]
  %v795 = vld [vmem:[%s2 + $0x1670] sm:$0xff]
  %v796 = vld [vmem:[%s2 + $0x1678] sm:$0xff]
  %v797 = vld [vmem:[%s2 + $0x1680] sm:$0xff]
  %v798 = vld [vmem:[%s2 + $0x1688] sm:$0xff]
  %v799 = vld [vmem:[%s2 + $0x1690] sm:$0xff]
  %v800 = vld [vmem:[%s2 + $0x1698] sm:$0xff]
  %v801 = vld [vmem:[%s2 + $0x16a0] sm:$0xff]
  %v802 = vld [vmem:[%s2 + $0x16a8] sm:$0xff]
  %v803 = vld [vmem:[%s2 + $0x16b0] sm:$0xff]
  %v804 = vld [vmem:[%s2 + $0x16b8] sm:$0xff]
  %v805 = vld [vmem:[%s2 + $0x16c0] sm:$0xff]
  %v806 = vld [vmem:[%s2 + $0x16c8] sm:$0xff]
  %v807 = vld [vmem:[%s2 + $0x16d0] sm:$0xff]
  %v808 = vld [vmem:[%s2 + $0x16d8] sm:$0xff]
  %v809 = vld [vmem:[%s2 + $0x16e0] sm:$0xff]
  %v810 = vld [vmem:[%s2 + $0x16e8] sm:$0xff]
  %v811 = vld [vmem:[%s2 + $0x16f0] sm:$0xff]
  %v812 = vld [vmem:[%s2 + $0x16f8] sm:$0xff]
  %v813 = vld [vmem:[%s2 + $0x1700] sm:$0xff]
  %v814 = vld [vmem:[%s2 + $0x1708] sm:$0xff]
  %v815 = vld [vmem:[%s2 + $0x1710] sm:$0xff]
  %v816 = vld [vmem:[%s2 + $0x1718] sm:$0xff]
  %v817 = vld [vmem:[%s2 + $0x1720] sm:$0xff]
  %v818 = vld [vmem:[%s2 + $0x1728] sm:$0xff]
  %v819 = vld [vmem:[%s2 + $0x1730] sm:$0xff]
  %v820 = vld [vmem:[%s2 + $0x1738] sm:$0xff]
  %v821 = vld [vmem:[%s2 + $0x1740] sm:$0xff]
  %v822 = vld [vmem:[%s2 + $0x1748] sm:$0xff]
  %v823 = vld [vmem:[%s2 + $0x1750] sm:$0xff]
  %v824 = vld [vmem:[%s2 + $0x1758] sm:$0xff]
  %v825 = vld [vmem:[%s2 + $0x1760] sm:$0xff]
  %v826 = vld [vmem:[%s2 + $0x1768] sm:$0xff]
  %v827 = vld [vmem:[%s2 + $0x1770] sm:$0xff]
  %v828 = vld [vmem:[%s2 + $0x1778] sm:$0xff]
  %v829 = vld [vmem:[%s2 + $0x1780] sm:$0xff]
  %v830 = vld [vmem:[%s2 + $0x1788] sm:$0xff]
  %v831 = vld [vmem:[%s2 + $0x1790] sm:$0xff]
  %v832 = vld [vmem:[%s2 + $0x1798] sm:$0xff]
  %v833 = vld [vmem:[%s2 + $0x17a0] sm:$0xff]
  %v834 = vld [vmem:[%s2 + $0x17a8] sm:$0xff]
  %v835 = vld [vmem:[%s2 + $0x17b0] sm:$0xff]
  %v836 = vld [vmem:[%s2 + $0x17b8] sm:$0xff]
  %v837 = vld [vmem:[%s2 + $0x17c0] sm:$0xff]
  %v838 = vld [vmem:[%s2 + $0x17c8] sm:$0xff]
  %v839 = vld [vmem:[%s2 + $0x17d0] sm:$0xff]
  %v840 = vld [vmem:[%s2 + $0x17d8] sm:$0xff]
  %v841 = vld [vmem:[%s2 + $0x17e0] sm:$0xff]
  %v842 = vld [vmem:[%s2 + $0x17e8] sm:$0xff]
  %v843 = vld [vmem:[%s2 + $0x17f0] sm:$0xff]
  %v844 = vld [vmem:[%s2 + $0x17f8] sm:$0xff]
  %v845 = vld [vmem:[%s3] sm:$0xff]
  %v847 = vperm.slane %v845, 0
  %v848 = vperm.slane %v845, 1
  %v849 = vperm.slane %v845, 2
  %v850 = vperm.slane %v845, 3
  %v851 = vperm.slane %v845, 4
  %v852 = vperm.slane %v845, 5
  %v853 = vperm.slane %v845, 6
  %v854 = vperm.slane %v845, 7
  %863 = vmatpush.msra.mxu0 %v197
  %864 = vmatpush.msra.mxu0 %v189
  %865 = vmatpush.msra.mxu0 %v181
  %866 = vmatpush.msra.mxu0 %v173
  %867 = vmatpush.msra.mxu0 %v165
  %868 = vmatpush.msra.mxu0 %v157
  %869 = vmatpush.msra.mxu0 %v149
  %870 = vmatpush.msra.mxu0 %v141
  %871 = vmatpush.msra.mxu0 %v133
  %872 = vmatpush.msra.mxu0 %v125
  %873 = vmatpush.msra.mxu0 %v117
  %874 = vmatpush.msra.mxu0 %v109
  %875 = vmatpush.msra.mxu0 %v101
  %876 = vmatpush.msra.mxu0 %v93
  %877 = vmatpush.msra.mxu0 %v85
  %878 = vmatpush.msra.mxu0 %v77
  %879 = vmatmul.f32.gmra.mxu0 %v29
  %v880 = vpop.f32.mrf.mxu0
  %v881 = vadd.f32 %v847, %v880
  %882 = vmatmul.f32.gmra.mxu0 %v35
  %v883 = vpop.f32.mrf.mxu0
  %v884 = vadd.f32 %v847, %v883
  %885 = vmatmul.f32.gmra.mxu0 %v41
  %v886 = vpop.f32.mrf.mxu0
  %v887 = vadd.f32 %v847, %v886
  %888 = vmatmul.f32.gmra.mxu0 %v47
  %v889 = vpop.f32.mrf.mxu0
  %v890 = vadd.f32 %v847, %v889
  %891 = vmatmul.f32.gmra.mxu0 %v53
  %v892 = vpop.f32.mrf.mxu0
  %v893 = vadd.f32 %v847, %v892
  %894 = vmatmul.f32.gmra.mxu0 %v59
  %v895 = vpop.f32.mrf.mxu0
  %v896 = vadd.f32 %v847, %v895
  %897 = vmatmul.f32.gmra.mxu0 %v65
  %v898 = vpop.f32.mrf.mxu0
  %v899 = vadd.f32 %v847, %v898
  %900 = vmatmul.f32.gmra.mxu0 %v71
  %v901 = vpop.f32.mrf.mxu0
  %v902 = vadd.f32 %v847, %v901
  %903 = vdwg.mxu0
  %904 = vmatpush.msra.mxu0 %v325
  %905 = vmatpush.msra.mxu0 %v317
  %906 = vmatpush.msra.mxu0 %v309
  %907 = vmatpush.msra.mxu0 %v301
  %908 = vmatpush.msra.mxu0 %v293
  %909 = vmatpush.msra.mxu0 %v285
  %910 = vmatpush.msra.mxu0 %v277
  %911 = vmatpush.msra.mxu0 %v269
  %912 = vmatpush.msra.mxu0 %v261
  %913 = vmatpush.msra.mxu0 %v253
  %914 = vmatpush.msra.mxu0 %v245
  %915 = vmatpush.msra.mxu0 %v237
  %916 = vmatpush.msra.mxu0 %v229
  %917 = vmatpush.msra.mxu0 %v221
  %918 = vmatpush.msra.mxu0 %v213
  %919 = vmatpush.msra.mxu0 %v205
  %920 = vmatmul.f32.gmra.mxu0 %v30
  %v921 = vpop.f32.mrf.mxu0
  %v922 = vadd.f32 %v881, %v921
  %923 = vmatmul.f32.gmra.mxu0 %v36
  %v924 = vpop.f32.mrf.mxu0
  %v925 = vadd.f32 %v884, %v924
  %926 = vmatmul.f32.gmra.mxu0 %v42
  %v927 = vpop.f32.mrf.mxu0
  %v928 = vadd.f32 %v887, %v927
  %929 = vmatmul.f32.gmra.mxu0 %v48
  %v930 = vpop.f32.mrf.mxu0
  %v931 = vadd.f32 %v890, %v930
  %932 = vmatmul.f32.gmra.mxu0 %v54
  %v933 = vpop.f32.mrf.mxu0
  %v934 = vadd.f32 %v893, %v933
  %935 = vmatmul.f32.gmra.mxu0 %v60
  %v936 = vpop.f32.mrf.mxu0
  %v937 = vadd.f32 %v896, %v936
  %938 = vmatmul.f32.gmra.mxu0 %v66
  %v939 = vpop.f32.mrf.mxu0
  %v940 = vadd.f32 %v899, %v939
  %941 = vmatmul.f32.gmra.mxu0 %v72
  %v942 = vpop.f32.mrf.mxu0
  %v943 = vadd.f32 %v902, %v942
  %944 = vdwg.mxu0
  %945 = vmatpush.msra.mxu0 %v453
  %946 = vmatpush.msra.mxu0 %v445
  %947 = vmatpush.msra.mxu0 %v437
  %948 = vmatpush.msra.mxu0 %v429
  %949 = vmatpush.msra.mxu0 %v421
  %950 = vmatpush.msra.mxu0 %v413
  %951 = vmatpush.msra.mxu0 %v405
  %952 = vmatpush.msra.mxu0 %v397
  %953 = vmatpush.msra.mxu0 %v389
  %954 = vmatpush.msra.mxu0 %v381
  %955 = vmatpush.msra.mxu0 %v373
  %956 = vmatpush.msra.mxu0 %v365
  %957 = vmatpush.msra.mxu0 %v357
  %958 = vmatpush.msra.mxu0 %v349
  %959 = vmatpush.msra.mxu0 %v341
  %960 = vmatpush.msra.mxu0 %v333
  %961 = vmatmul.f32.gmra.mxu0 %v31
  %v962 = vpop.f32.mrf.mxu0
  %v963 = vadd.f32 %v922, %v962
  %964 = vmatmul.f32.gmra.mxu0 %v37
  %v965 = vpop.f32.mrf.mxu0
  %v966 = vadd.f32 %v925, %v965
  %967 = vmatmul.f32.gmra.mxu0 %v43
  %v968 = vpop.f32.mrf.mxu0
  %v969 = vadd.f32 %v928, %v968
  %970 = vmatmul.f32.gmra.mxu0 %v49
  %v971 = vpop.f32.mrf.mxu0
  %v972 = vadd.f32 %v931, %v971
  %973 = vmatmul.f32.gmra.mxu0 %v55
  %v974 = vpop.f32.mrf.mxu0
  %v975 = vadd.f32 %v934, %v974
  %976 = vmatmul.f32.gmra.mxu0 %v61
  %v977 = vpop.f32.mrf.mxu0
  %v978 = vadd.f32 %v937, %v977
  %979 = vmatmul.f32.gmra.mxu0 %v67
  %v980 = vpop.f32.mrf.mxu0
  %v981 = vadd.f32 %v940, %v980
  %982 = vmatmul.f32.gmra.mxu0 %v73
  %v983 = vpop.f32.mrf.mxu0
  %v984 = vadd.f32 %v943, %v983
  %985 = vdwg.mxu0
  %986 = vmatpush.msra.mxu0 %v581
  %987 = vmatpush.msra.mxu0 %v573
  %988 = vmatpush.msra.mxu0 %v565
  %989 = vmatpush.msra.mxu0 %v557
  %990 = vmatpush.msra.mxu0 %v549
  %991 = vmatpush.msra.mxu0 %v541
  %992 = vmatpush.msra.mxu0 %v533
  %993 = vmatpush.msra.mxu0 %v525
  %994 = vmatpush.msra.mxu0 %v517
  %995 = vmatpush.msra.mxu0 %v509
  %996 = vmatpush.msra.mxu0 %v501
  %997 = vmatpush.msra.mxu0 %v493
  %998 = vmatpush.msra.mxu0 %v485
  %999 = vmatpush.msra.mxu0 %v477
  %1000 = vmatpush.msra.mxu0 %v469
  %1001 = vmatpush.msra.mxu0 %v461
  %1002 = vmatmul.f32.gmra.mxu0 %v32
  %v1003 = vpop.f32.mrf.mxu0
  %v1004 = vadd.f32 %v963, %v1003
  %1005 = vmatmul.f32.gmra.mxu0 %v38
  %v1006 = vpop.f32.mrf.mxu0
  %v1007 = vadd.f32 %v966, %v1006
  %1008 = vmatmul.f32.gmra.mxu0 %v44
  %v1009 = vpop.f32.mrf.mxu0
  %v1010 = vadd.f32 %v969, %v1009
  %1011 = vmatmul.f32.gmra.mxu0 %v50
  %v1012 = vpop.f32.mrf.mxu0
  %v1013 = vadd.f32 %v972, %v1012
  %1014 = vmatmul.f32.gmra.mxu0 %v56
  %v1015 = vpop.f32.mrf.mxu0
  %v1016 = vadd.f32 %v975, %v1015
  %1017 = vmatmul.f32.gmra.mxu0 %v62
  %v1018 = vpop.f32.mrf.mxu0
  %v1019 = vadd.f32 %v978, %v1018
  %1020 = vmatmul.f32.gmra.mxu0 %v68
  %v1021 = vpop.f32.mrf.mxu0
  %v1022 = vadd.f32 %v981, %v1021
  %1023 = vmatmul.f32.gmra.mxu0 %v74
  %v1024 = vpop.f32.mrf.mxu0
  %v1025 = vadd.f32 %v984, %v1024
  %1026 = vdwg.mxu0
  %1027 = vmatpush.msra.mxu0 %v709
  %1028 = vmatpush.msra.mxu0 %v701
  %1029 = vmatpush.msra.mxu0 %v693
  %1030 = vmatpush.msra.mxu0 %v685
  %1031 = vmatpush.msra.mxu0 %v677
  %1032 = vmatpush.msra.mxu0 %v669
  %1033 = vmatpush.msra.mxu0 %v661
  %1034 = vmatpush.msra.mxu0 %v653
  %1035 = vmatpush.msra.mxu0 %v645
  %1036 = vmatpush.msra.mxu0 %v637
  %1037 = vmatpush.msra.mxu0 %v629
  %1038 = vmatpush.msra.mxu0 %v621
  %1039 = vmatpush.msra.mxu0 %v613
  %1040 = vmatpush.msra.mxu0 %v605
  %1041 = vmatpush.msra.mxu0 %v597
  %1042 = vmatpush.msra.mxu0 %v589
  %1043 = vmatmul.f32.gmra.mxu0 %v33
  %v1044 = vpop.f32.mrf.mxu0
  %v1045 = vadd.f32 %v1004, %v1044
  %1046 = vmatmul.f32.gmra.mxu0 %v39
  %v1047 = vpop.f32.mrf.mxu0
  %v1048 = vadd.f32 %v1007, %v1047
  %1049 = vmatmul.f32.gmra.mxu0 %v45
  %v1050 = vpop.f32.mrf.mxu0
  %v1051 = vadd.f32 %v1010, %v1050
  %1052 = vmatmul.f32.gmra.mxu0 %v51
  %v1053 = vpop.f32.mrf.mxu0
  %v1054 = vadd.f32 %v1013, %v1053
  %1055 = vmatmul.f32.gmra.mxu0 %v57
  %v1056 = vpop.f32.mrf.mxu0
  %v1057 = vadd.f32 %v1016, %v1056
  %1058 = vmatmul.f32.gmra.mxu0 %v63
  %v1059 = vpop.f32.mrf.mxu0
  %v1060 = vadd.f32 %v1019, %v1059
  %1061 = vmatmul.f32.gmra.mxu0 %v69
  %v1062 = vpop.f32.mrf.mxu0
  %v1063 = vadd.f32 %v1022, %v1062
  %1064 = vmatmul.f32.gmra.mxu0 %v75
  %v1065 = vpop.f32.mrf.mxu0
  %v1066 = vadd.f32 %v1025, %v1065
  %1067 = vdwg.mxu0
  %1068 = vmatpush.msra.mxu0 %v837
  %1069 = vmatpush.msra.mxu0 %v829
  %1070 = vmatpush.msra.mxu0 %v821
  %1071 = vmatpush.msra.mxu0 %v813
  %1072 = vmatpush.msra.mxu0 %v805
  %1073 = vmatpush.msra.mxu0 %v797
  %1074 = vmatpush.msra.mxu0 %v789
  %1075 = vmatpush.msra.mxu0 %v781
  %1076 = vmatpush.msra.mxu0 %v773
  %1077 = vmatpush.msra.mxu0 %v765
  %1078 = vmatpush.msra.mxu0 %v757
  %1079 = vmatpush.msra.mxu0 %v749
  %1080 = vmatpush.msra.mxu0 %v741
  %1081 = vmatpush.msra.mxu0 %v733
  %1082 = vmatpush.msra.mxu0 %v725
  %1083 = vmatpush.msra.mxu0 %v717
  %1084 = vmatmul.f32.gmra.mxu0 %v34
  %v1085 = vpop.f32.mrf.mxu0
  %v1086 = vadd.f32 %v1045, %v1085
  %1087 = vmatmul.f32.gmra.mxu0 %v40
  %v1088 = vpop.f32.mrf.mxu0
  %v1089 = vadd.f32 %v1048, %v1088
  %1090 = vmatmul.f32.gmra.mxu0 %v46
  %v1091 = vpop.f32.mrf.mxu0
  %v1092 = vadd.f32 %v1051, %v1091
  %1093 = vmatmul.f32.gmra.mxu0 %v52
  %v1094 = vpop.f32.mrf.mxu0
  %v1095 = vadd.f32 %v1054, %v1094
  %1096 = vmatmul.f32.gmra.mxu0 %v58
  %v1097 = vpop.f32.mrf.mxu0
  %v1098 = vadd.f32 %v1057, %v1097
  %1099 = vmatmul.f32.gmra.mxu0 %v64
  %v1100 = vpop.f32.mrf.mxu0
  %v1101 = vadd.f32 %v1060, %v1100
  %1102 = vmatmul.f32.gmra.mxu0 %v70
  %v1103 = vpop.f32.mrf.mxu0
  %v1104 = vadd.f32 %v1063, %v1103
  %1105 = vmatmul.f32.gmra.mxu0 %v76
  %v1106 = vpop.f32.mrf.mxu0
  %v1107 = vadd.f32 %v1066, %v1106
  %1108 = vdwg.mxu0
  %1109 = vmatpush.msra.mxu0 %v198
  %1110 = vmatpush.msra.mxu0 %v190
  %1111 = vmatpush.msra.mxu0 %v182
  %1112 = vmatpush.msra.mxu0 %v174
  %1113 = vmatpush.msra.mxu0 %v166
  %1114 = vmatpush.msra.mxu0 %v158
  %1115 = vmatpush.msra.mxu0 %v150
  %1116 = vmatpush.msra.mxu0 %v142
  %1117 = vmatpush.msra.mxu0 %v134
  %1118 = vmatpush.msra.mxu0 %v126
  %1119 = vmatpush.msra.mxu0 %v118
  %1120 = vmatpush.msra.mxu0 %v110
  %1121 = vmatpush.msra.mxu0 %v102
  %1122 = vmatpush.msra.mxu0 %v94
  %1123 = vmatpush.msra.mxu0 %v86
  %1124 = vmatpush.msra.mxu0 %v78
  %1125 = vmatmul.f32.gmra.mxu0 %v29
  %v1126 = vpop.f32.mrf.mxu0
  %v1127 = vadd.f32 %v848, %v1126
  %1128 = vmatmul.f32.gmra.mxu0 %v35
  %v1129 = vpop.f32.mrf.mxu0
  %v1130 = vadd.f32 %v848, %v1129
  %1131 = vmatmul.f32.gmra.mxu0 %v41
  %v1132 = vpop.f32.mrf.mxu0
  %v1133 = vadd.f32 %v848, %v1132
  %1134 = vmatmul.f32.gmra.mxu0 %v47
  %v1135 = vpop.f32.mrf.mxu0
  %v1136 = vadd.f32 %v848, %v1135
  %1137 = vmatmul.f32.gmra.mxu0 %v53
  %v1138 = vpop.f32.mrf.mxu0
  %v1139 = vadd.f32 %v848, %v1138
  %1140 = vmatmul.f32.gmra.mxu0 %v59
  %v1141 = vpop.f32.mrf.mxu0
  %v1142 = vadd.f32 %v848, %v1141
  %1143 = vmatmul.f32.gmra.mxu0 %v65
  %v1144 = vpop.f32.mrf.mxu0
  %v1145 = vadd.f32 %v848, %v1144
  %1146 = vmatmul.f32.gmra.mxu0 %v71
  %v1147 = vpop.f32.mrf.mxu0
  %v1148 = vadd.f32 %v848, %v1147
  %1149 = vdwg.mxu0
  %1150 = vmatpush.msra.mxu0 %v326
  %1151 = vmatpush.msra.mxu0 %v318
  %1152 = vmatpush.msra.mxu0 %v310
  %1153 = vmatpush.msra.mxu0 %v302
  %1154 = vmatpush.msra.mxu0 %v294
  %1155 = vmatpush.msra.mxu0 %v286
  %1156 = vmatpush.msra.mxu0 %v278
  %1157 = vmatpush.msra.mxu0 %v270
  %1158 = vmatpush.msra.mxu0 %v262
  %1159 = vmatpush.msra.mxu0 %v254
  %1160 = vmatpush.msra.mxu0 %v246
  %1161 = vmatpush.msra.mxu0 %v238
  %1162 = vmatpush.msra.mxu0 %v230
  %1163 = vmatpush.msra.mxu0 %v222
  %1164 = vmatpush.msra.mxu0 %v214
  %1165 = vmatpush.msra.mxu0 %v206
  %1166 = vmatmul.f32.gmra.mxu0 %v30
  %v1167 = vpop.f32.mrf.mxu0
  %v1168 = vadd.f32 %v1127, %v1167
  %1169 = vmatmul.f32.gmra.mxu0 %v36
  %v1170 = vpop.f32.mrf.mxu0
  %v1171 = vadd.f32 %v1130, %v1170
  %1172 = vmatmul.f32.gmra.mxu0 %v42
  %v1173 = vpop.f32.mrf.mxu0
  %v1174 = vadd.f32 %v1133, %v1173
  %1175 = vmatmul.f32.gmra.mxu0 %v48
  %v1176 = vpop.f32.mrf.mxu0
  %v1177 = vadd.f32 %v1136, %v1176
  %1178 = vmatmul.f32.gmra.mxu0 %v54
  %v1179 = vpop.f32.mrf.mxu0
  %v1180 = vadd.f32 %v1139, %v1179
  %1181 = vmatmul.f32.gmra.mxu0 %v60
  %v1182 = vpop.f32.mrf.mxu0
  %v1183 = vadd.f32 %v1142, %v1182
  %1184 = vmatmul.f32.gmra.mxu0 %v66
  %v1185 = vpop.f32.mrf.mxu0
  %v1186 = vadd.f32 %v1145, %v1185
  %1187 = vmatmul.f32.gmra.mxu0 %v72
  %v1188 = vpop.f32.mrf.mxu0
  %v1189 = vadd.f32 %v1148, %v1188
  %1190 = vdwg.mxu0
  %1191 = vmatpush.msra.mxu0 %v454
  %1192 = vmatpush.msra.mxu0 %v446
  %1193 = vmatpush.msra.mxu0 %v438
  %1194 = vmatpush.msra.mxu0 %v430
  %1195 = vmatpush.msra.mxu0 %v422
  %1196 = vmatpush.msra.mxu0 %v414
  %1197 = vmatpush.msra.mxu0 %v406
  %1198 = vmatpush.msra.mxu0 %v398
  %1199 = vmatpush.msra.mxu0 %v390
  %1200 = vmatpush.msra.mxu0 %v382
  %1201 = vmatpush.msra.mxu0 %v374
  %1202 = vmatpush.msra.mxu0 %v366
  %1203 = vmatpush.msra.mxu0 %v358
  %1204 = vmatpush.msra.mxu0 %v350
  %1205 = vmatpush.msra.mxu0 %v342
  %1206 = vmatpush.msra.mxu0 %v334
  %1207 = vmatmul.f32.gmra.mxu0 %v31
  %v1208 = vpop.f32.mrf.mxu0
  %v1209 = vadd.f32 %v1168, %v1208
  %1210 = vmatmul.f32.gmra.mxu0 %v37
  %v1211 = vpop.f32.mrf.mxu0
  %v1212 = vadd.f32 %v1171, %v1211
  %1213 = vmatmul.f32.gmra.mxu0 %v43
  %v1214 = vpop.f32.mrf.mxu0
  %v1215 = vadd.f32 %v1174, %v1214
  %1216 = vmatmul.f32.gmra.mxu0 %v49
  %v1217 = vpop.f32.mrf.mxu0
  %v1218 = vadd.f32 %v1177, %v1217
  %1219 = vmatmul.f32.gmra.mxu0 %v55
  %v1220 = vpop.f32.mrf.mxu0
  %v1221 = vadd.f32 %v1180, %v1220
  %1222 = vmatmul.f32.gmra.mxu0 %v61
  %v1223 = vpop.f32.mrf.mxu0
  %v1224 = vadd.f32 %v1183, %v1223
  %1225 = vmatmul.f32.gmra.mxu0 %v67
  %v1226 = vpop.f32.mrf.mxu0
  %v1227 = vadd.f32 %v1186, %v1226
  %1228 = vmatmul.f32.gmra.mxu0 %v73
  %v1229 = vpop.f32.mrf.mxu0
  %v1230 = vadd.f32 %v1189, %v1229
  %1231 = vdwg.mxu0
  %1232 = vmatpush.msra.mxu0 %v582
  %1233 = vmatpush.msra.mxu0 %v574
  %1234 = vmatpush.msra.mxu0 %v566
  %1235 = vmatpush.msra.mxu0 %v558
  %1236 = vmatpush.msra.mxu0 %v550
  %1237 = vmatpush.msra.mxu0 %v542
  %1238 = vmatpush.msra.mxu0 %v534
  %1239 = vmatpush.msra.mxu0 %v526
  %1240 = vmatpush.msra.mxu0 %v518
  %1241 = vmatpush.msra.mxu0 %v510
  %1242 = vmatpush.msra.mxu0 %v502
  %1243 = vmatpush.msra.mxu0 %v494
  %1244 = vmatpush.msra.mxu0 %v486
  %1245 = vmatpush.msra.mxu0 %v478
  %1246 = vmatpush.msra.mxu0 %v470
  %1247 = vmatpush.msra.mxu0 %v462
  %1248 = vmatmul.f32.gmra.mxu0 %v32
  %v1249 = vpop.f32.mrf.mxu0
  %v1250 = vadd.f32 %v1209, %v1249
  %1251 = vmatmul.f32.gmra.mxu0 %v38
  %v1252 = vpop.f32.mrf.mxu0
  %v1253 = vadd.f32 %v1212, %v1252
  %1254 = vmatmul.f32.gmra.mxu0 %v44
  %v1255 = vpop.f32.mrf.mxu0
  %v1256 = vadd.f32 %v1215, %v1255
  %1257 = vmatmul.f32.gmra.mxu0 %v50
  %v1258 = vpop.f32.mrf.mxu0
  %v1259 = vadd.f32 %v1218, %v1258
  %1260 = vmatmul.f32.gmra.mxu0 %v56
  %v1261 = vpop.f32.mrf.mxu0
  %v1262 = vadd.f32 %v1221, %v1261
  %1263 = vmatmul.f32.gmra.mxu0 %v62
  %v1264 = vpop.f32.mrf.mxu0
  %v1265 = vadd.f32 %v1224, %v1264
  %1266 = vmatmul.f32.gmra.mxu0 %v68
  %v1267 = vpop.f32.mrf.mxu0
  %v1268 = vadd.f32 %v1227, %v1267
  %1269 = vmatmul.f32.gmra.mxu0 %v74
  %v1270 = vpop.f32.mrf.mxu0
  %v1271 = vadd.f32 %v1230, %v1270
  %1272 = vdwg.mxu0
  %1273 = vmatpush.msra.mxu0 %v710
  %1274 = vmatpush.msra.mxu0 %v702
  %1275 = vmatpush.msra.mxu0 %v694
  %1276 = vmatpush.msra.mxu0 %v686
  %1277 = vmatpush.msra.mxu0 %v678
  %1278 = vmatpush.msra.mxu0 %v670
  %1279 = vmatpush.msra.mxu0 %v662
  %1280 = vmatpush.msra.mxu0 %v654
  %1281 = vmatpush.msra.mxu0 %v646
  %1282 = vmatpush.msra.mxu0 %v638
  %1283 = vmatpush.msra.mxu0 %v630
  %1284 = vmatpush.msra.mxu0 %v622
  %1285 = vmatpush.msra.mxu0 %v614
  %1286 = vmatpush.msra.mxu0 %v606
  %1287 = vmatpush.msra.mxu0 %v598
  %1288 = vmatpush.msra.mxu0 %v590
  %1289 = vmatmul.f32.gmra.mxu0 %v33
  %v1290 = vpop.f32.mrf.mxu0
  %v1291 = vadd.f32 %v1250, %v1290
  %1292 = vmatmul.f32.gmra.mxu0 %v39
  %v1293 = vpop.f32.mrf.mxu0
  %v1294 = vadd.f32 %v1253, %v1293
  %1295 = vmatmul.f32.gmra.mxu0 %v45
  %v1296 = vpop.f32.mrf.mxu0
  %v1297 = vadd.f32 %v1256, %v1296
  %1298 = vmatmul.f32.gmra.mxu0 %v51
  %v1299 = vpop.f32.mrf.mxu0
  %v1300 = vadd.f32 %v1259, %v1299
  %1301 = vmatmul.f32.gmra.mxu0 %v57
  %v1302 = vpop.f32.mrf.mxu0
  %v1303 = vadd.f32 %v1262, %v1302
  %1304 = vmatmul.f32.gmra.mxu0 %v63
  %v1305 = vpop.f32.mrf.mxu0
  %v1306 = vadd.f32 %v1265, %v1305
  %1307 = vmatmul.f32.gmra.mxu0 %v69
  %v1308 = vpop.f32.mrf.mxu0
  %v1309 = vadd.f32 %v1268, %v1308
  %1310 = vmatmul.f32.gmra.mxu0 %v75
  %v1311 = vpop.f32.mrf.mxu0
  %v1312 = vadd.f32 %v1271, %v1311
  %1313 = vdwg.mxu0
  %1314 = vmatpush.msra.mxu0 %v838
  %1315 = vmatpush.msra.mxu0 %v830
  %1316 = vmatpush.msra.mxu0 %v822
  %1317 = vmatpush.msra.mxu0 %v814
  %1318 = vmatpush.msra.mxu0 %v806
  %1319 = vmatpush.msra.mxu0 %v798
  %1320 = vmatpush.msra.mxu0 %v790
  %1321 = vmatpush.msra.mxu0 %v782
  %1322 = vmatpush.msra.mxu0 %v774
  %1323 = vmatpush.msra.mxu0 %v766
  %1324 = vmatpush.msra.mxu0 %v758
  %1325 = vmatpush.msra.mxu0 %v750
  %1326 = vmatpush.msra.mxu0 %v742
  %1327 = vmatpush.msra.mxu0 %v734
  %1328 = vmatpush.msra.mxu0 %v726
  %1329 = vmatpush.msra.mxu0 %v718
  %1330 = vmatmul.f32.gmra.mxu0 %v34
  %v1331 = vpop.f32.mrf.mxu0
  %v1332 = vadd.f32 %v1291, %v1331
  %1333 = vmatmul.f32.gmra.mxu0 %v40
  %v1334 = vpop.f32.mrf.mxu0
  %v1335 = vadd.f32 %v1294, %v1334
  %1336 = vmatmul.f32.gmra.mxu0 %v46
  %v1337 = vpop.f32.mrf.mxu0
  %v1338 = vadd.f32 %v1297, %v1337
  %1339 = vmatmul.f32.gmra.mxu0 %v52
  %v1340 = vpop.f32.mrf.mxu0
  %v1341 = vadd.f32 %v1300, %v1340
  %1342 = vmatmul.f32.gmra.mxu0 %v58
  %v1343 = vpop.f32.mrf.mxu0
  %v1344 = vadd.f32 %v1303, %v1343
  %1345 = vmatmul.f32.gmra.mxu0 %v64
  %v1346 = vpop.f32.mrf.mxu0
  %v1347 = vadd.f32 %v1306, %v1346
  %1348 = vmatmul.f32.gmra.mxu0 %v70
  %v1349 = vpop.f32.mrf.mxu0
  %v1350 = vadd.f32 %v1309, %v1349
  %1351 = vmatmul.f32.gmra.mxu0 %v76
  %v1352 = vpop.f32.mrf.mxu0
  %v1353 = vadd.f32 %v1312, %v1352
  %1354 = vdwg.mxu0
  %1355 = vmatpush.msra.mxu0 %v199
  %1356 = vmatpush.msra.mxu0 %v191
  %1357 = vmatpush.msra.mxu0 %v183
  %1358 = vmatpush.msra.mxu0 %v175
  %1359 = vmatpush.msra.mxu0 %v167
  %1360 = vmatpush.msra.mxu0 %v159
  %1361 = vmatpush.msra.mxu0 %v151
  %1362 = vmatpush.msra.mxu0 %v143
  %1363 = vmatpush.msra.mxu0 %v135
  %1364 = vmatpush.msra.mxu0 %v127
  %1365 = vmatpush.msra.mxu0 %v119
  %1366 = vmatpush.msra.mxu0 %v111
  %1367 = vmatpush.msra.mxu0 %v103
  %1368 = vmatpush.msra.mxu0 %v95
  %1369 = vmatpush.msra.mxu0 %v87
  %1370 = vmatpush.msra.mxu0 %v79
  %1371 = vmatmul.f32.gmra.mxu0 %v29
  %v1372 = vpop.f32.mrf.mxu0
  %v1373 = vadd.f32 %v849, %v1372
  %1374 = vmatmul.f32.gmra.mxu0 %v35
  %v1375 = vpop.f32.mrf.mxu0
  %v1376 = vadd.f32 %v849, %v1375
  %1377 = vmatmul.f32.gmra.mxu0 %v41
  %v1378 = vpop.f32.mrf.mxu0
  %v1379 = vadd.f32 %v849, %v1378
  %1380 = vmatmul.f32.gmra.mxu0 %v47
  %v1381 = vpop.f32.mrf.mxu0
  %v1382 = vadd.f32 %v849, %v1381
  %1383 = vmatmul.f32.gmra.mxu0 %v53
  %v1384 = vpop.f32.mrf.mxu0
  %v1385 = vadd.f32 %v849, %v1384
  %1386 = vmatmul.f32.gmra.mxu0 %v59
  %v1387 = vpop.f32.mrf.mxu0
  %v1388 = vadd.f32 %v849, %v1387
  %1389 = vmatmul.f32.gmra.mxu0 %v65
  %v1390 = vpop.f32.mrf.mxu0
  %v1391 = vadd.f32 %v849, %v1390
  %1392 = vmatmul.f32.gmra.mxu0 %v71
  %v1393 = vpop.f32.mrf.mxu0
  %v1394 = vadd.f32 %v849, %v1393
  %1395 = vdwg.mxu0
  %1396 = vmatpush.msra.mxu0 %v327
  %1397 = vmatpush.msra.mxu0 %v319
  %1398 = vmatpush.msra.mxu0 %v311
  %1399 = vmatpush.msra.mxu0 %v303
  %1400 = vmatpush.msra.mxu0 %v295
  %1401 = vmatpush.msra.mxu0 %v287
  %1402 = vmatpush.msra.mxu0 %v279
  %1403 = vmatpush.msra.mxu0 %v271
  %1404 = vmatpush.msra.mxu0 %v263
  %1405 = vmatpush.msra.mxu0 %v255
  %1406 = vmatpush.msra.mxu0 %v247
  %1407 = vmatpush.msra.mxu0 %v239
  %1408 = vmatpush.msra.mxu0 %v231
  %1409 = vmatpush.msra.mxu0 %v223
  %1410 = vmatpush.msra.mxu0 %v215
  %1411 = vmatpush.msra.mxu0 %v207
  %1412 = vmatmul.f32.gmra.mxu0 %v30
  %v1413 = vpop.f32.mrf.mxu0
  %v1414 = vadd.f32 %v1373, %v1413
  %1415 = vmatmul.f32.gmra.mxu0 %v36
  %v1416 = vpop.f32.mrf.mxu0
  %v1417 = vadd.f32 %v1376, %v1416
  %1418 = vmatmul.f32.gmra.mxu0 %v42
  %v1419 = vpop.f32.mrf.mxu0
  %v1420 = vadd.f32 %v1379, %v1419
  %1421 = vmatmul.f32.gmra.mxu0 %v48
  %v1422 = vpop.f32.mrf.mxu0
  %v1423 = vadd.f32 %v1382, %v1422
  %1424 = vmatmul.f32.gmra.mxu0 %v54
  %v1425 = vpop.f32.mrf.mxu0
  %v1426 = vadd.f32 %v1385, %v1425
  %1427 = vmatmul.f32.gmra.mxu0 %v60
  %v1428 = vpop.f32.mrf.mxu0
  %v1429 = vadd.f32 %v1388, %v1428
  %1430 = vmatmul.f32.gmra.mxu0 %v66
  %v1431 = vpop.f32.mrf.mxu0
  %v1432 = vadd.f32 %v1391, %v1431
  %1433 = vmatmul.f32.gmra.mxu0 %v72
  %v1434 = vpop.f32.mrf.mxu0
  %v1435 = vadd.f32 %v1394, %v1434
  %1436 = vdwg.mxu0
  %1437 = vmatpush.msra.mxu0 %v455
  %1438 = vmatpush.msra.mxu0 %v447
  %1439 = vmatpush.msra.mxu0 %v439
  %1440 = vmatpush.msra.mxu0 %v431
  %1441 = vmatpush.msra.mxu0 %v423
  %1442 = vmatpush.msra.mxu0 %v415
  %1443 = vmatpush.msra.mxu0 %v407
  %1444 = vmatpush.msra.mxu0 %v399
  %1445 = vmatpush.msra.mxu0 %v391
  %1446 = vmatpush.msra.mxu0 %v383
  %1447 = vmatpush.msra.mxu0 %v375
  %1448 = vmatpush.msra.mxu0 %v367
  %1449 = vmatpush.msra.mxu0 %v359
  %1450 = vmatpush.msra.mxu0 %v351
  %1451 = vmatpush.msra.mxu0 %v343
  %1452 = vmatpush.msra.mxu0 %v335
  %1453 = vmatmul.f32.gmra.mxu0 %v31
  %v1454 = vpop.f32.mrf.mxu0
  %v1455 = vadd.f32 %v1414, %v1454
  %1456 = vmatmul.f32.gmra.mxu0 %v37
  %v1457 = vpop.f32.mrf.mxu0
  %v1458 = vadd.f32 %v1417, %v1457
  %1459 = vmatmul.f32.gmra.mxu0 %v43
  %v1460 = vpop.f32.mrf.mxu0
  %v1461 = vadd.f32 %v1420, %v1460
  %1462 = vmatmul.f32.gmra.mxu0 %v49
  %v1463 = vpop.f32.mrf.mxu0
  %v1464 = vadd.f32 %v1423, %v1463
  %1465 = vmatmul.f32.gmra.mxu0 %v55
  %v1466 = vpop.f32.mrf.mxu0
  %v1467 = vadd.f32 %v1426, %v1466
  %1468 = vmatmul.f32.gmra.mxu0 %v61
  %v1469 = vpop.f32.mrf.mxu0
  %v1470 = vadd.f32 %v1429, %v1469
  %1471 = vmatmul.f32.gmra.mxu0 %v67
  %v1472 = vpop.f32.mrf.mxu0
  %v1473 = vadd.f32 %v1432, %v1472
  %1474 = vmatmul.f32.gmra.mxu0 %v73
  %v1475 = vpop.f32.mrf.mxu0
  %v1476 = vadd.f32 %v1435, %v1475
  %1477 = vdwg.mxu0
  %1478 = vmatpush.msra.mxu0 %v583
  %1479 = vmatpush.msra.mxu0 %v575
  %1480 = vmatpush.msra.mxu0 %v567
  %1481 = vmatpush.msra.mxu0 %v559
  %1482 = vmatpush.msra.mxu0 %v551
  %1483 = vmatpush.msra.mxu0 %v543
  %1484 = vmatpush.msra.mxu0 %v535
  %1485 = vmatpush.msra.mxu0 %v527
  %1486 = vmatpush.msra.mxu0 %v519
  %1487 = vmatpush.msra.mxu0 %v511
  %1488 = vmatpush.msra.mxu0 %v503
  %1489 = vmatpush.msra.mxu0 %v495
  %1490 = vmatpush.msra.mxu0 %v487
  %1491 = vmatpush.msra.mxu0 %v479
  %1492 = vmatpush.msra.mxu0 %v471
  %1493 = vmatpush.msra.mxu0 %v463
  %1494 = vmatmul.f32.gmra.mxu0 %v32
  %v1495 = vpop.f32.mrf.mxu0
  %v1496 = vadd.f32 %v1455, %v1495
  %1497 = vmatmul.f32.gmra.mxu0 %v38
  %v1498 = vpop.f32.mrf.mxu0
  %v1499 = vadd.f32 %v1458, %v1498
  %1500 = vmatmul.f32.gmra.mxu0 %v44
  %v1501 = vpop.f32.mrf.mxu0
  %v1502 = vadd.f32 %v1461, %v1501
  %1503 = vmatmul.f32.gmra.mxu0 %v50
  %v1504 = vpop.f32.mrf.mxu0
  %v1505 = vadd.f32 %v1464, %v1504
  %1506 = vmatmul.f32.gmra.mxu0 %v56
  %v1507 = vpop.f32.mrf.mxu0
  %v1508 = vadd.f32 %v1467, %v1507
  %1509 = vmatmul.f32.gmra.mxu0 %v62
  %v1510 = vpop.f32.mrf.mxu0
  %v1511 = vadd.f32 %v1470, %v1510
  %1512 = vmatmul.f32.gmra.mxu0 %v68
  %v1513 = vpop.f32.mrf.mxu0
  %v1514 = vadd.f32 %v1473, %v1513
  %1515 = vmatmul.f32.gmra.mxu0 %v74
  %v1516 = vpop.f32.mrf.mxu0
  %v1517 = vadd.f32 %v1476, %v1516
  %1518 = vdwg.mxu0
  %1519 = vmatpush.msra.mxu0 %v711
  %1520 = vmatpush.msra.mxu0 %v703
  %1521 = vmatpush.msra.mxu0 %v695
  %1522 = vmatpush.msra.mxu0 %v687
  %1523 = vmatpush.msra.mxu0 %v679
  %1524 = vmatpush.msra.mxu0 %v671
  %1525 = vmatpush.msra.mxu0 %v663
  %1526 = vmatpush.msra.mxu0 %v655
  %1527 = vmatpush.msra.mxu0 %v647
  %1528 = vmatpush.msra.mxu0 %v639
  %1529 = vmatpush.msra.mxu0 %v631
  %1530 = vmatpush.msra.mxu0 %v623
  %1531 = vmatpush.msra.mxu0 %v615
  %1532 = vmatpush.msra.mxu0 %v607
  %1533 = vmatpush.msra.mxu0 %v599
  %1534 = vmatpush.msra.mxu0 %v591
  %1535 = vmatmul.f32.gmra.mxu0 %v33
  %v1536 = vpop.f32.mrf.mxu0
  %v1537 = vadd.f32 %v1496, %v1536
  %1538 = vmatmul.f32.gmra.mxu0 %v39
  %v1539 = vpop.f32.mrf.mxu0
  %v1540 = vadd.f32 %v1499, %v1539
  %1541 = vmatmul.f32.gmra.mxu0 %v45
  %v1542 = vpop.f32.mrf.mxu0
  %v1543 = vadd.f32 %v1502, %v1542
  %1544 = vmatmul.f32.gmra.mxu0 %v51
  %v1545 = vpop.f32.mrf.mxu0
  %v1546 = vadd.f32 %v1505, %v1545
  %1547 = vmatmul.f32.gmra.mxu0 %v57
  %v1548 = vpop.f32.mrf.mxu0
  %v1549 = vadd.f32 %v1508, %v1548
  %1550 = vmatmul.f32.gmra.mxu0 %v63
  %v1551 = vpop.f32.mrf.mxu0
  %v1552 = vadd.f32 %v1511, %v1551
  %1553 = vmatmul.f32.gmra.mxu0 %v69
  %v1554 = vpop.f32.mrf.mxu0
  %v1555 = vadd.f32 %v1514, %v1554
  %1556 = vmatmul.f32.gmra.mxu0 %v75
  %v1557 = vpop.f32.mrf.mxu0
  %v1558 = vadd.f32 %v1517, %v1557
  %1559 = vdwg.mxu0
  %1560 = vmatpush.msra.mxu0 %v839
  %1561 = vmatpush.msra.mxu0 %v831
  %1562 = vmatpush.msra.mxu0 %v823
  %1563 = vmatpush.msra.mxu0 %v815
  %1564 = vmatpush.msra.mxu0 %v807
  %1565 = vmatpush.msra.mxu0 %v799
  %1566 = vmatpush.msra.mxu0 %v791
  %1567 = vmatpush.msra.mxu0 %v783
  %1568 = vmatpush.msra.mxu0 %v775
  %1569 = vmatpush.msra.mxu0 %v767
  %1570 = vmatpush.msra.mxu0 %v759
  %1571 = vmatpush.msra.mxu0 %v751
  %1572 = vmatpush.msra.mxu0 %v743
  %1573 = vmatpush.msra.mxu0 %v735
  %1574 = vmatpush.msra.mxu0 %v727
  %1575 = vmatpush.msra.mxu0 %v719
  %1576 = vmatmul.f32.gmra.mxu0 %v34
  %v1577 = vpop.f32.mrf.mxu0
  %v1578 = vadd.f32 %v1537, %v1577
  %1579 = vmatmul.f32.gmra.mxu0 %v40
  %v1580 = vpop.f32.mrf.mxu0
  %v1581 = vadd.f32 %v1540, %v1580
  %1582 = vmatmul.f32.gmra.mxu0 %v46
  %v1583 = vpop.f32.mrf.mxu0
  %v1584 = vadd.f32 %v1543, %v1583
  %1585 = vmatmul.f32.gmra.mxu0 %v52
  %v1586 = vpop.f32.mrf.mxu0
  %v1587 = vadd.f32 %v1546, %v1586
  %1588 = vmatmul.f32.gmra.mxu0 %v58
  %v1589 = vpop.f32.mrf.mxu0
  %v1590 = vadd.f32 %v1549, %v1589
  %1591 = vmatmul.f32.gmra.mxu0 %v64
  %v1592 = vpop.f32.mrf.mxu0
  %v1593 = vadd.f32 %v1552, %v1592
  %1594 = vmatmul.f32.gmra.mxu0 %v70
  %v1595 = vpop.f32.mrf.mxu0
  %v1596 = vadd.f32 %v1555, %v1595
  %1597 = vmatmul.f32.gmra.mxu0 %v76
  %v1598 = vpop.f32.mrf.mxu0
  %v1599 = vadd.f32 %v1558, %v1598
  %1600 = vdwg.mxu0
  %1601 = vmatpush.msra.mxu0 %v200
  %1602 = vmatpush.msra.mxu0 %v192
  %1603 = vmatpush.msra.mxu0 %v184
  %1604 = vmatpush.msra.mxu0 %v176
  %1605 = vmatpush.msra.mxu0 %v168
  %1606 = vmatpush.msra.mxu0 %v160
  %1607 = vmatpush.msra.mxu0 %v152
  %1608 = vmatpush.msra.mxu0 %v144
  %1609 = vmatpush.msra.mxu0 %v136
  %1610 = vmatpush.msra.mxu0 %v128
  %1611 = vmatpush.msra.mxu0 %v120
  %1612 = vmatpush.msra.mxu0 %v112
  %1613 = vmatpush.msra.mxu0 %v104
  %1614 = vmatpush.msra.mxu0 %v96
  %1615 = vmatpush.msra.mxu0 %v88
  %1616 = vmatpush.msra.mxu0 %v80
  %1617 = vmatmul.f32.gmra.mxu0 %v29
  %v1618 = vpop.f32.mrf.mxu0
  %v1619 = vadd.f32 %v850, %v1618
  %1620 = vmatmul.f32.gmra.mxu0 %v35
  %v1621 = vpop.f32.mrf.mxu0
  %v1622 = vadd.f32 %v850, %v1621
  %1623 = vmatmul.f32.gmra.mxu0 %v41
  %v1624 = vpop.f32.mrf.mxu0
  %v1625 = vadd.f32 %v850, %v1624
  %1626 = vmatmul.f32.gmra.mxu0 %v47
  %v1627 = vpop.f32.mrf.mxu0
  %v1628 = vadd.f32 %v850, %v1627
  %1629 = vmatmul.f32.gmra.mxu0 %v53
  %v1630 = vpop.f32.mrf.mxu0
  %v1631 = vadd.f32 %v850, %v1630
  %1632 = vmatmul.f32.gmra.mxu0 %v59
  %v1633 = vpop.f32.mrf.mxu0
  %v1634 = vadd.f32 %v850, %v1633
  %1635 = vmatmul.f32.gmra.mxu0 %v65
  %v1636 = vpop.f32.mrf.mxu0
  %v1637 = vadd.f32 %v850, %v1636
  %1638 = vmatmul.f32.gmra.mxu0 %v71
  %v1639 = vpop.f32.mrf.mxu0
  %v1640 = vadd.f32 %v850, %v1639
  %1641 = vdwg.mxu0
  %1642 = vmatpush.msra.mxu0 %v328
  %1643 = vmatpush.msra.mxu0 %v320
  %1644 = vmatpush.msra.mxu0 %v312
  %1645 = vmatpush.msra.mxu0 %v304
  %1646 = vmatpush.msra.mxu0 %v296
  %1647 = vmatpush.msra.mxu0 %v288
  %1648 = vmatpush.msra.mxu0 %v280
  %1649 = vmatpush.msra.mxu0 %v272
  %1650 = vmatpush.msra.mxu0 %v264
  %1651 = vmatpush.msra.mxu0 %v256
  %1652 = vmatpush.msra.mxu0 %v248
  %1653 = vmatpush.msra.mxu0 %v240
  %1654 = vmatpush.msra.mxu0 %v232
  %1655 = vmatpush.msra.mxu0 %v224
  %1656 = vmatpush.msra.mxu0 %v216
  %1657 = vmatpush.msra.mxu0 %v208
  %1658 = vmatmul.f32.gmra.mxu0 %v30
  %v1659 = vpop.f32.mrf.mxu0
  %v1660 = vadd.f32 %v1619, %v1659
  %1661 = vmatmul.f32.gmra.mxu0 %v36
  %v1662 = vpop.f32.mrf.mxu0
  %v1663 = vadd.f32 %v1622, %v1662
  %1664 = vmatmul.f32.gmra.mxu0 %v42
  %v1665 = vpop.f32.mrf.mxu0
  %v1666 = vadd.f32 %v1625, %v1665
  %1667 = vmatmul.f32.gmra.mxu0 %v48
  %v1668 = vpop.f32.mrf.mxu0
  %v1669 = vadd.f32 %v1628, %v1668
  %1670 = vmatmul.f32.gmra.mxu0 %v54
  %v1671 = vpop.f32.mrf.mxu0
  %v1672 = vadd.f32 %v1631, %v1671
  %1673 = vmatmul.f32.gmra.mxu0 %v60
  %v1674 = vpop.f32.mrf.mxu0
  %v1675 = vadd.f32 %v1634, %v1674
  %1676 = vmatmul.f32.gmra.mxu0 %v66
  %v1677 = vpop.f32.mrf.mxu0
  %v1678 = vadd.f32 %v1637, %v1677
  %1679 = vmatmul.f32.gmra.mxu0 %v72
  %v1680 = vpop.f32.mrf.mxu0
  %v1681 = vadd.f32 %v1640, %v1680
  %1682 = vdwg.mxu0
  %1683 = vmatpush.msra.mxu0 %v456
  %1684 = vmatpush.msra.mxu0 %v448
  %1685 = vmatpush.msra.mxu0 %v440
  %1686 = vmatpush.msra.mxu0 %v432
  %1687 = vmatpush.msra.mxu0 %v424
  %1688 = vmatpush.msra.mxu0 %v416
  %1689 = vmatpush.msra.mxu0 %v408
  %1690 = vmatpush.msra.mxu0 %v400
  %1691 = vmatpush.msra.mxu0 %v392
  %1692 = vmatpush.msra.mxu0 %v384
  %1693 = vmatpush.msra.mxu0 %v376
  %1694 = vmatpush.msra.mxu0 %v368
  %1695 = vmatpush.msra.mxu0 %v360
  %1696 = vmatpush.msra.mxu0 %v352
  %1697 = vmatpush.msra.mxu0 %v344
  %1698 = vmatpush.msra.mxu0 %v336
  %1699 = vmatmul.f32.gmra.mxu0 %v31
  %v1700 = vpop.f32.mrf.mxu0
  %v1701 = vadd.f32 %v1660, %v1700
  %1702 = vmatmul.f32.gmra.mxu0 %v37
  %v1703 = vpop.f32.mrf.mxu0
  %v1704 = vadd.f32 %v1663, %v1703
  %1705 = vmatmul.f32.gmra.mxu0 %v43
  %v1706 = vpop.f32.mrf.mxu0
  %v1707 = vadd.f32 %v1666, %v1706
  %1708 = vmatmul.f32.gmra.mxu0 %v49
  %v1709 = vpop.f32.mrf.mxu0
  %v1710 = vadd.f32 %v1669, %v1709
  %1711 = vmatmul.f32.gmra.mxu0 %v55
  %v1712 = vpop.f32.mrf.mxu0
  %v1713 = vadd.f32 %v1672, %v1712
  %1714 = vmatmul.f32.gmra.mxu0 %v61
  %v1715 = vpop.f32.mrf.mxu0
  %v1716 = vadd.f32 %v1675, %v1715
  %1717 = vmatmul.f32.gmra.mxu0 %v67
  %v1718 = vpop.f32.mrf.mxu0
  %v1719 = vadd.f32 %v1678, %v1718
  %1720 = vmatmul.f32.gmra.mxu0 %v73
  %v1721 = vpop.f32.mrf.mxu0
  %v1722 = vadd.f32 %v1681, %v1721
  %1723 = vdwg.mxu0
  %1724 = vmatpush.msra.mxu0 %v584
  %1725 = vmatpush.msra.mxu0 %v576
  %1726 = vmatpush.msra.mxu0 %v568
  %1727 = vmatpush.msra.mxu0 %v560
  %1728 = vmatpush.msra.mxu0 %v552
  %1729 = vmatpush.msra.mxu0 %v544
  %1730 = vmatpush.msra.mxu0 %v536
  %1731 = vmatpush.msra.mxu0 %v528
  %1732 = vmatpush.msra.mxu0 %v520
  %1733 = vmatpush.msra.mxu0 %v512
  %1734 = vmatpush.msra.mxu0 %v504
  %1735 = vmatpush.msra.mxu0 %v496
  %1736 = vmatpush.msra.mxu0 %v488
  %1737 = vmatpush.msra.mxu0 %v480
  %1738 = vmatpush.msra.mxu0 %v472
  %1739 = vmatpush.msra.mxu0 %v464
  %1740 = vmatmul.f32.gmra.mxu0 %v32
  %v1741 = vpop.f32.mrf.mxu0
  %v1742 = vadd.f32 %v1701, %v1741
  %1743 = vmatmul.f32.gmra.mxu0 %v38
  %v1744 = vpop.f32.mrf.mxu0
  %v1745 = vadd.f32 %v1704, %v1744
  %1746 = vmatmul.f32.gmra.mxu0 %v44
  %v1747 = vpop.f32.mrf.mxu0
  %v1748 = vadd.f32 %v1707, %v1747
  %1749 = vmatmul.f32.gmra.mxu0 %v50
  %v1750 = vpop.f32.mrf.mxu0
  %v1751 = vadd.f32 %v1710, %v1750
  %1752 = vmatmul.f32.gmra.mxu0 %v56
  %v1753 = vpop.f32.mrf.mxu0
  %v1754 = vadd.f32 %v1713, %v1753
  %1755 = vmatmul.f32.gmra.mxu0 %v62
  %v1756 = vpop.f32.mrf.mxu0
  %v1757 = vadd.f32 %v1716, %v1756
  %1758 = vmatmul.f32.gmra.mxu0 %v68
  %v1759 = vpop.f32.mrf.mxu0
  %v1760 = vadd.f32 %v1719, %v1759
  %1761 = vmatmul.f32.gmra.mxu0 %v74
  %v1762 = vpop.f32.mrf.mxu0
  %v1763 = vadd.f32 %v1722, %v1762
  %1764 = vdwg.mxu0
  %1765 = vmatpush.msra.mxu0 %v712
  %1766 = vmatpush.msra.mxu0 %v704
  %1767 = vmatpush.msra.mxu0 %v696
  %1768 = vmatpush.msra.mxu0 %v688
  %1769 = vmatpush.msra.mxu0 %v680
  %1770 = vmatpush.msra.mxu0 %v672
  %1771 = vmatpush.msra.mxu0 %v664
  %1772 = vmatpush.msra.mxu0 %v656
  %1773 = vmatpush.msra.mxu0 %v648
  %1774 = vmatpush.msra.mxu0 %v640
  %1775 = vmatpush.msra.mxu0 %v632
  %1776 = vmatpush.msra.mxu0 %v624
  %1777 = vmatpush.msra.mxu0 %v616
  %1778 = vmatpush.msra.mxu0 %v608
  %1779 = vmatpush.msra.mxu0 %v600
  %1780 = vmatpush.msra.mxu0 %v592
  %1781 = vmatmul.f32.gmra.mxu0 %v33
  %v1782 = vpop.f32.mrf.mxu0
  %v1783 = vadd.f32 %v1742, %v1782
  %1784 = vmatmul.f32.gmra.mxu0 %v39
  %v1785 = vpop.f32.mrf.mxu0
  %v1786 = vadd.f32 %v1745, %v1785
  %1787 = vmatmul.f32.gmra.mxu0 %v45
  %v1788 = vpop.f32.mrf.mxu0
  %v1789 = vadd.f32 %v1748, %v1788
  %1790 = vmatmul.f32.gmra.mxu0 %v51
  %v1791 = vpop.f32.mrf.mxu0
  %v1792 = vadd.f32 %v1751, %v1791
  %1793 = vmatmul.f32.gmra.mxu0 %v57
  %v1794 = vpop.f32.mrf.mxu0
  %v1795 = vadd.f32 %v1754, %v1794
  %1796 = vmatmul.f32.gmra.mxu0 %v63
  %v1797 = vpop.f32.mrf.mxu0
  %v1798 = vadd.f32 %v1757, %v1797
  %1799 = vmatmul.f32.gmra.mxu0 %v69
  %v1800 = vpop.f32.mrf.mxu0
  %v1801 = vadd.f32 %v1760, %v1800
  %1802 = vmatmul.f32.gmra.mxu0 %v75
  %v1803 = vpop.f32.mrf.mxu0
  %v1804 = vadd.f32 %v1763, %v1803
  %1805 = vdwg.mxu0
  %1806 = vmatpush.msra.mxu0 %v840
  %1807 = vmatpush.msra.mxu0 %v832
  %1808 = vmatpush.msra.mxu0 %v824
  %1809 = vmatpush.msra.mxu0 %v816
  %1810 = vmatpush.msra.mxu0 %v808
  %1811 = vmatpush.msra.mxu0 %v800
  %1812 = vmatpush.msra.mxu0 %v792
  %1813 = vmatpush.msra.mxu0 %v784
  %1814 = vmatpush.msra.mxu0 %v776
  %1815 = vmatpush.msra.mxu0 %v768
  %1816 = vmatpush.msra.mxu0 %v760
  %1817 = vmatpush.msra.mxu0 %v752
  %1818 = vmatpush.msra.mxu0 %v744
  %1819 = vmatpush.msra.mxu0 %v736
  %1820 = vmatpush.msra.mxu0 %v728
  %1821 = vmatpush.msra.mxu0 %v720
  %1822 = vmatmul.f32.gmra.mxu0 %v34
  %v1823 = vpop.f32.mrf.mxu0
  %v1824 = vadd.f32 %v1783, %v1823
  %1825 = vmatmul.f32.gmra.mxu0 %v40
  %v1826 = vpop.f32.mrf.mxu0
  %v1827 = vadd.f32 %v1786, %v1826
  %1828 = vmatmul.f32.gmra.mxu0 %v46
  %v1829 = vpop.f32.mrf.mxu0
  %v1830 = vadd.f32 %v1789, %v1829
  %1831 = vmatmul.f32.gmra.mxu0 %v52
  %v1832 = vpop.f32.mrf.mxu0
  %v1833 = vadd.f32 %v1792, %v1832
  %1834 = vmatmul.f32.gmra.mxu0 %v58
  %v1835 = vpop.f32.mrf.mxu0
  %v1836 = vadd.f32 %v1795, %v1835
  %1837 = vmatmul.f32.gmra.mxu0 %v64
  %v1838 = vpop.f32.mrf.mxu0
  %v1839 = vadd.f32 %v1798, %v1838
  %1840 = vmatmul.f32.gmra.mxu0 %v70
  %v1841 = vpop.f32.mrf.mxu0
  %v1842 = vadd.f32 %v1801, %v1841
  %1843 = vmatmul.f32.gmra.mxu0 %v76
  %v1844 = vpop.f32.mrf.mxu0
  %v1845 = vadd.f32 %v1804, %v1844
  %1846 = vdwg.mxu0
  %1847 = vmatpush.msra.mxu0 %v201
  %1848 = vmatpush.msra.mxu0 %v193
  %1849 = vmatpush.msra.mxu0 %v185
  %1850 = vmatpush.msra.mxu0 %v177
  %1851 = vmatpush.msra.mxu0 %v169
  %1852 = vmatpush.msra.mxu0 %v161
  %1853 = vmatpush.msra.mxu0 %v153
  %1854 = vmatpush.msra.mxu0 %v145
  %1855 = vmatpush.msra.mxu0 %v137
  %1856 = vmatpush.msra.mxu0 %v129
  %1857 = vmatpush.msra.mxu0 %v121
  %1858 = vmatpush.msra.mxu0 %v113
  %1859 = vmatpush.msra.mxu0 %v105
  %1860 = vmatpush.msra.mxu0 %v97
  %1861 = vmatpush.msra.mxu0 %v89
  %1862 = vmatpush.msra.mxu0 %v81
  %1863 = vmatmul.f32.gmra.mxu0 %v29
  %v1864 = vpop.f32.mrf.mxu0
  %v1865 = vadd.f32 %v851, %v1864
  %1866 = vmatmul.f32.gmra.mxu0 %v35
  %v1867 = vpop.f32.mrf.mxu0
  %v1868 = vadd.f32 %v851, %v1867
  %1869 = vmatmul.f32.gmra.mxu0 %v41
  %v1870 = vpop.f32.mrf.mxu0
  %v1871 = vadd.f32 %v851, %v1870
  %1872 = vmatmul.f32.gmra.mxu0 %v47
  %v1873 = vpop.f32.mrf.mxu0
  %v1874 = vadd.f32 %v851, %v1873
  %1875 = vmatmul.f32.gmra.mxu0 %v53
  %v1876 = vpop.f32.mrf.mxu0
  %v1877 = vadd.f32 %v851, %v1876
  %1878 = vmatmul.f32.gmra.mxu0 %v59
  %v1879 = vpop.f32.mrf.mxu0
  %v1880 = vadd.f32 %v851, %v1879
  %1881 = vmatmul.f32.gmra.mxu0 %v65
  %v1882 = vpop.f32.mrf.mxu0
  %v1883 = vadd.f32 %v851, %v1882
  %1884 = vmatmul.f32.gmra.mxu0 %v71
  %v1885 = vpop.f32.mrf.mxu0
  %v1886 = vadd.f32 %v851, %v1885
  %1887 = vdwg.mxu0
  %1888 = vmatpush.msra.mxu0 %v329
  %1889 = vmatpush.msra.mxu0 %v321
  %1890 = vmatpush.msra.mxu0 %v313
  %1891 = vmatpush.msra.mxu0 %v305
  %1892 = vmatpush.msra.mxu0 %v297
  %1893 = vmatpush.msra.mxu0 %v289
  %1894 = vmatpush.msra.mxu0 %v281
  %1895 = vmatpush.msra.mxu0 %v273
  %1896 = vmatpush.msra.mxu0 %v265
  %1897 = vmatpush.msra.mxu0 %v257
  %1898 = vmatpush.msra.mxu0 %v249
  %1899 = vmatpush.msra.mxu0 %v241
  %1900 = vmatpush.msra.mxu0 %v233
  %1901 = vmatpush.msra.mxu0 %v225
  %1902 = vmatpush.msra.mxu0 %v217
  %1903 = vmatpush.msra.mxu0 %v209
  %1904 = vmatmul.f32.gmra.mxu0 %v30
  %v1905 = vpop.f32.mrf.mxu0
  %v1906 = vadd.f32 %v1865, %v1905
  %1907 = vmatmul.f32.gmra.mxu0 %v36
  %v1908 = vpop.f32.mrf.mxu0
  %v1909 = vadd.f32 %v1868, %v1908
  %1910 = vmatmul.f32.gmra.mxu0 %v42
  %v1911 = vpop.f32.mrf.mxu0
  %v1912 = vadd.f32 %v1871, %v1911
  %1913 = vmatmul.f32.gmra.mxu0 %v48
  %v1914 = vpop.f32.mrf.mxu0
  %v1915 = vadd.f32 %v1874, %v1914
  %1916 = vmatmul.f32.gmra.mxu0 %v54
  %v1917 = vpop.f32.mrf.mxu0
  %v1918 = vadd.f32 %v1877, %v1917
  %1919 = vmatmul.f32.gmra.mxu0 %v60
  %v1920 = vpop.f32.mrf.mxu0
  %v1921 = vadd.f32 %v1880, %v1920
  %1922 = vmatmul.f32.gmra.mxu0 %v66
  %v1923 = vpop.f32.mrf.mxu0
  %v1924 = vadd.f32 %v1883, %v1923
  %1925 = vmatmul.f32.gmra.mxu0 %v72
  %v1926 = vpop.f32.mrf.mxu0
  %v1927 = vadd.f32 %v1886, %v1926
  %1928 = vdwg.mxu0
  %1929 = vmatpush.msra.mxu0 %v457
  %1930 = vmatpush.msra.mxu0 %v449
  %1931 = vmatpush.msra.mxu0 %v441
  %1932 = vmatpush.msra.mxu0 %v433
  %1933 = vmatpush.msra.mxu0 %v425
  %1934 = vmatpush.msra.mxu0 %v417
  %1935 = vmatpush.msra.mxu0 %v409
  %1936 = vmatpush.msra.mxu0 %v401
  %1937 = vmatpush.msra.mxu0 %v393
  %1938 = vmatpush.msra.mxu0 %v385
  %1939 = vmatpush.msra.mxu0 %v377
  %1940 = vmatpush.msra.mxu0 %v369
  %1941 = vmatpush.msra.mxu0 %v361
  %1942 = vmatpush.msra.mxu0 %v353
  %1943 = vmatpush.msra.mxu0 %v345
  %1944 = vmatpush.msra.mxu0 %v337
  %1945 = vmatmul.f32.gmra.mxu0 %v31
  %v1946 = vpop.f32.mrf.mxu0
  %v1947 = vadd.f32 %v1906, %v1946
  %1948 = vmatmul.f32.gmra.mxu0 %v37
  %v1949 = vpop.f32.mrf.mxu0
  %v1950 = vadd.f32 %v1909, %v1949
  %1951 = vmatmul.f32.gmra.mxu0 %v43
  %v1952 = vpop.f32.mrf.mxu0
  %v1953 = vadd.f32 %v1912, %v1952
  %1954 = vmatmul.f32.gmra.mxu0 %v49
  %v1955 = vpop.f32.mrf.mxu0
  %v1956 = vadd.f32 %v1915, %v1955
  %1957 = vmatmul.f32.gmra.mxu0 %v55
  %v1958 = vpop.f32.mrf.mxu0
  %v1959 = vadd.f32 %v1918, %v1958
  %1960 = vmatmul.f32.gmra.mxu0 %v61
  %v1961 = vpop.f32.mrf.mxu0
  %v1962 = vadd.f32 %v1921, %v1961
  %1963 = vmatmul.f32.gmra.mxu0 %v67
  %v1964 = vpop.f32.mrf.mxu0
  %v1965 = vadd.f32 %v1924, %v1964
  %1966 = vmatmul.f32.gmra.mxu0 %v73
  %v1967 = vpop.f32.mrf.mxu0
  %v1968 = vadd.f32 %v1927, %v1967
  %1969 = vdwg.mxu0
  %1970 = vmatpush.msra.mxu0 %v585
  %1971 = vmatpush.msra.mxu0 %v577
  %1972 = vmatpush.msra.mxu0 %v569
  %1973 = vmatpush.msra.mxu0 %v561
  %1974 = vmatpush.msra.mxu0 %v553
  %1975 = vmatpush.msra.mxu0 %v545
  %1976 = vmatpush.msra.mxu0 %v537
  %1977 = vmatpush.msra.mxu0 %v529
  %1978 = vmatpush.msra.mxu0 %v521
  %1979 = vmatpush.msra.mxu0 %v513
  %1980 = vmatpush.msra.mxu0 %v505
  %1981 = vmatpush.msra.mxu0 %v497
  %1982 = vmatpush.msra.mxu0 %v489
  %1983 = vmatpush.msra.mxu0 %v481
  %1984 = vmatpush.msra.mxu0 %v473
  %1985 = vmatpush.msra.mxu0 %v465
  %1986 = vmatmul.f32.gmra.mxu0 %v32
  %v1987 = vpop.f32.mrf.mxu0
  %v1988 = vadd.f32 %v1947, %v1987
  %1989 = vmatmul.f32.gmra.mxu0 %v38
  %v1990 = vpop.f32.mrf.mxu0
  %v1991 = vadd.f32 %v1950, %v1990
  %1992 = vmatmul.f32.gmra.mxu0 %v44
  %v1993 = vpop.f32.mrf.mxu0
  %v1994 = vadd.f32 %v1953, %v1993
  %1995 = vmatmul.f32.gmra.mxu0 %v50
  %v1996 = vpop.f32.mrf.mxu0
  %v1997 = vadd.f32 %v1956, %v1996
  %1998 = vmatmul.f32.gmra.mxu0 %v56
  %v1999 = vpop.f32.mrf.mxu0
  %v2000 = vadd.f32 %v1959, %v1999
  %2001 = vmatmul.f32.gmra.mxu0 %v62
  %v2002 = vpop.f32.mrf.mxu0
  %v2003 = vadd.f32 %v1962, %v2002
  %2004 = vmatmul.f32.gmra.mxu0 %v68
  %v2005 = vpop.f32.mrf.mxu0
  %v2006 = vadd.f32 %v1965, %v2005
  %2007 = vmatmul.f32.gmra.mxu0 %v74
  %v2008 = vpop.f32.mrf.mxu0
  %v2009 = vadd.f32 %v1968, %v2008
  %2010 = vdwg.mxu0
  %2011 = vmatpush.msra.mxu0 %v713
  %2012 = vmatpush.msra.mxu0 %v705
  %2013 = vmatpush.msra.mxu0 %v697
  %2014 = vmatpush.msra.mxu0 %v689
  %2015 = vmatpush.msra.mxu0 %v681
  %2016 = vmatpush.msra.mxu0 %v673
  %2017 = vmatpush.msra.mxu0 %v665
  %2018 = vmatpush.msra.mxu0 %v657
  %2019 = vmatpush.msra.mxu0 %v649
  %2020 = vmatpush.msra.mxu0 %v641
  %2021 = vmatpush.msra.mxu0 %v633
  %2022 = vmatpush.msra.mxu0 %v625
  %2023 = vmatpush.msra.mxu0 %v617
  %2024 = vmatpush.msra.mxu0 %v609
  %2025 = vmatpush.msra.mxu0 %v601
  %2026 = vmatpush.msra.mxu0 %v593
  %2027 = vmatmul.f32.gmra.mxu0 %v33
  %v2028 = vpop.f32.mrf.mxu0
  %v2029 = vadd.f32 %v1988, %v2028
  %2030 = vmatmul.f32.gmra.mxu0 %v39
  %v2031 = vpop.f32.mrf.mxu0
  %v2032 = vadd.f32 %v1991, %v2031
  %2033 = vmatmul.f32.gmra.mxu0 %v45
  %v2034 = vpop.f32.mrf.mxu0
  %v2035 = vadd.f32 %v1994, %v2034
  %2036 = vmatmul.f32.gmra.mxu0 %v51
  %v2037 = vpop.f32.mrf.mxu0
  %v2038 = vadd.f32 %v1997, %v2037
  %2039 = vmatmul.f32.gmra.mxu0 %v57
  %v2040 = vpop.f32.mrf.mxu0
  %v2041 = vadd.f32 %v2000, %v2040
  %2042 = vmatmul.f32.gmra.mxu0 %v63
  %v2043 = vpop.f32.mrf.mxu0
  %v2044 = vadd.f32 %v2003, %v2043
  %2045 = vmatmul.f32.gmra.mxu0 %v69
  %v2046 = vpop.f32.mrf.mxu0
  %v2047 = vadd.f32 %v2006, %v2046
  %2048 = vmatmul.f32.gmra.mxu0 %v75
  %v2049 = vpop.f32.mrf.mxu0
  %v2050 = vadd.f32 %v2009, %v2049
  %2051 = vdwg.mxu0
  %2052 = vmatpush.msra.mxu0 %v841
  %2053 = vmatpush.msra.mxu0 %v833
  %2054 = vmatpush.msra.mxu0 %v825
  %2055 = vmatpush.msra.mxu0 %v817
  %2056 = vmatpush.msra.mxu0 %v809
  %2057 = vmatpush.msra.mxu0 %v801
  %2058 = vmatpush.msra.mxu0 %v793
  %2059 = vmatpush.msra.mxu0 %v785
  %2060 = vmatpush.msra.mxu0 %v777
  %2061 = vmatpush.msra.mxu0 %v769
  %2062 = vmatpush.msra.mxu0 %v761
  %2063 = vmatpush.msra.mxu0 %v753
  %2064 = vmatpush.msra.mxu0 %v745
  %2065 = vmatpush.msra.mxu0 %v737
  %2066 = vmatpush.msra.mxu0 %v729
  %2067 = vmatpush.msra.mxu0 %v721
  %2068 = vmatmul.f32.gmra.mxu0 %v34
  %v2069 = vpop.f32.mrf.mxu0
  %v2070 = vadd.f32 %v2029, %v2069
  %2071 = vmatmul.f32.gmra.mxu0 %v40
  %v2072 = vpop.f32.mrf.mxu0
  %v2073 = vadd.f32 %v2032, %v2072
  %2074 = vmatmul.f32.gmra.mxu0 %v46
  %v2075 = vpop.f32.mrf.mxu0
  %v2076 = vadd.f32 %v2035, %v2075
  %2077 = vmatmul.f32.gmra.mxu0 %v52
  %v2078 = vpop.f32.mrf.mxu0
  %v2079 = vadd.f32 %v2038, %v2078
  %2080 = vmatmul.f32.gmra.mxu0 %v58
  %v2081 = vpop.f32.mrf.mxu0
  %v2082 = vadd.f32 %v2041, %v2081
  %2083 = vmatmul.f32.gmra.mxu0 %v64
  %v2084 = vpop.f32.mrf.mxu0
  %v2085 = vadd.f32 %v2044, %v2084
  %2086 = vmatmul.f32.gmra.mxu0 %v70
  %v2087 = vpop.f32.mrf.mxu0
  %v2088 = vadd.f32 %v2047, %v2087
  %2089 = vmatmul.f32.gmra.mxu0 %v76
  %v2090 = vpop.f32.mrf.mxu0
  %v2091 = vadd.f32 %v2050, %v2090
  %2092 = vdwg.mxu0
  %2093 = vmatpush.msra.mxu0 %v202
  %2094 = vmatpush.msra.mxu0 %v194
  %2095 = vmatpush.msra.mxu0 %v186
  %2096 = vmatpush.msra.mxu0 %v178
  %2097 = vmatpush.msra.mxu0 %v170
  %2098 = vmatpush.msra.mxu0 %v162
  %2099 = vmatpush.msra.mxu0 %v154
  %2100 = vmatpush.msra.mxu0 %v146
  %2101 = vmatpush.msra.mxu0 %v138
  %2102 = vmatpush.msra.mxu0 %v130
  %2103 = vmatpush.msra.mxu0 %v122
  %2104 = vmatpush.msra.mxu0 %v114
  %2105 = vmatpush.msra.mxu0 %v106
  %2106 = vmatpush.msra.mxu0 %v98
  %2107 = vmatpush.msra.mxu0 %v90
  %2108 = vmatpush.msra.mxu0 %v82
  %2109 = vmatmul.f32.gmra.mxu0 %v29
  %v2110 = vpop.f32.mrf.mxu0
  %v2111 = vadd.f32 %v852, %v2110
  %2112 = vmatmul.f32.gmra.mxu0 %v35
  %v2113 = vpop.f32.mrf.mxu0
  %v2114 = vadd.f32 %v852, %v2113
  %2115 = vmatmul.f32.gmra.mxu0 %v41
  %v2116 = vpop.f32.mrf.mxu0
  %v2117 = vadd.f32 %v852, %v2116
  %2118 = vmatmul.f32.gmra.mxu0 %v47
  %v2119 = vpop.f32.mrf.mxu0
  %v2120 = vadd.f32 %v852, %v2119
  %2121 = vmatmul.f32.gmra.mxu0 %v53
  %v2122 = vpop.f32.mrf.mxu0
  %v2123 = vadd.f32 %v852, %v2122
  %2124 = vmatmul.f32.gmra.mxu0 %v59
  %v2125 = vpop.f32.mrf.mxu0
  %v2126 = vadd.f32 %v852, %v2125
  %2127 = vmatmul.f32.gmra.mxu0 %v65
  %v2128 = vpop.f32.mrf.mxu0
  %v2129 = vadd.f32 %v852, %v2128
  %2130 = vmatmul.f32.gmra.mxu0 %v71
  %v2131 = vpop.f32.mrf.mxu0
  %v2132 = vadd.f32 %v852, %v2131
  %2133 = vdwg.mxu0
  %2134 = vmatpush.msra.mxu0 %v330
  %2135 = vmatpush.msra.mxu0 %v322
  %2136 = vmatpush.msra.mxu0 %v314
  %2137 = vmatpush.msra.mxu0 %v306
  %2138 = vmatpush.msra.mxu0 %v298
  %2139 = vmatpush.msra.mxu0 %v290
  %2140 = vmatpush.msra.mxu0 %v282
  %2141 = vmatpush.msra.mxu0 %v274
  %2142 = vmatpush.msra.mxu0 %v266
  %2143 = vmatpush.msra.mxu0 %v258
  %2144 = vmatpush.msra.mxu0 %v250
  %2145 = vmatpush.msra.mxu0 %v242
  %2146 = vmatpush.msra.mxu0 %v234
  %2147 = vmatpush.msra.mxu0 %v226
  %2148 = vmatpush.msra.mxu0 %v218
  %2149 = vmatpush.msra.mxu0 %v210
  %2150 = vmatmul.f32.gmra.mxu0 %v30
  %v2151 = vpop.f32.mrf.mxu0
  %v2152 = vadd.f32 %v2111, %v2151
  %2153 = vmatmul.f32.gmra.mxu0 %v36
  %v2154 = vpop.f32.mrf.mxu0
  %v2155 = vadd.f32 %v2114, %v2154
  %2156 = vmatmul.f32.gmra.mxu0 %v42
  %v2157 = vpop.f32.mrf.mxu0
  %v2158 = vadd.f32 %v2117, %v2157
  %2159 = vmatmul.f32.gmra.mxu0 %v48
  %v2160 = vpop.f32.mrf.mxu0
  %v2161 = vadd.f32 %v2120, %v2160
  %2162 = vmatmul.f32.gmra.mxu0 %v54
  %v2163 = vpop.f32.mrf.mxu0
  %v2164 = vadd.f32 %v2123, %v2163
  %2165 = vmatmul.f32.gmra.mxu0 %v60
  %v2166 = vpop.f32.mrf.mxu0
  %v2167 = vadd.f32 %v2126, %v2166
  %2168 = vmatmul.f32.gmra.mxu0 %v66
  %v2169 = vpop.f32.mrf.mxu0
  %v2170 = vadd.f32 %v2129, %v2169
  %2171 = vmatmul.f32.gmra.mxu0 %v72
  %v2172 = vpop.f32.mrf.mxu0
  %v2173 = vadd.f32 %v2132, %v2172
  %2174 = vdwg.mxu0
  %2175 = vmatpush.msra.mxu0 %v458
  %2176 = vmatpush.msra.mxu0 %v450
  %2177 = vmatpush.msra.mxu0 %v442
  %2178 = vmatpush.msra.mxu0 %v434
  %2179 = vmatpush.msra.mxu0 %v426
  %2180 = vmatpush.msra.mxu0 %v418
  %2181 = vmatpush.msra.mxu0 %v410
  %2182 = vmatpush.msra.mxu0 %v402
  %2183 = vmatpush.msra.mxu0 %v394
  %2184 = vmatpush.msra.mxu0 %v386
  %2185 = vmatpush.msra.mxu0 %v378
  %2186 = vmatpush.msra.mxu0 %v370
  %2187 = vmatpush.msra.mxu0 %v362
  %2188 = vmatpush.msra.mxu0 %v354
  %2189 = vmatpush.msra.mxu0 %v346
  %2190 = vmatpush.msra.mxu0 %v338
  %2191 = vmatmul.f32.gmra.mxu0 %v31
  %v2192 = vpop.f32.mrf.mxu0
  %v2193 = vadd.f32 %v2152, %v2192
  %2194 = vmatmul.f32.gmra.mxu0 %v37
  %v2195 = vpop.f32.mrf.mxu0
  %v2196 = vadd.f32 %v2155, %v2195
  %2197 = vmatmul.f32.gmra.mxu0 %v43
  %v2198 = vpop.f32.mrf.mxu0
  %v2199 = vadd.f32 %v2158, %v2198
  %2200 = vmatmul.f32.gmra.mxu0 %v49
  %v2201 = vpop.f32.mrf.mxu0
  %v2202 = vadd.f32 %v2161, %v2201
  %2203 = vmatmul.f32.gmra.mxu0 %v55
  %v2204 = vpop.f32.mrf.mxu0
  %v2205 = vadd.f32 %v2164, %v2204
  %2206 = vmatmul.f32.gmra.mxu0 %v61
  %v2207 = vpop.f32.mrf.mxu0
  %v2208 = vadd.f32 %v2167, %v2207
  %2209 = vmatmul.f32.gmra.mxu0 %v67
  %v2210 = vpop.f32.mrf.mxu0
  %v2211 = vadd.f32 %v2170, %v2210
  %2212 = vmatmul.f32.gmra.mxu0 %v73
  %v2213 = vpop.f32.mrf.mxu0
  %v2214 = vadd.f32 %v2173, %v2213
  %2215 = vdwg.mxu0
  %2216 = vmatpush.msra.mxu0 %v586
  %2217 = vmatpush.msra.mxu0 %v578
  %2218 = vmatpush.msra.mxu0 %v570
  %2219 = vmatpush.msra.mxu0 %v562
  %2220 = vmatpush.msra.mxu0 %v554
  %2221 = vmatpush.msra.mxu0 %v546
  %2222 = vmatpush.msra.mxu0 %v538
  %2223 = vmatpush.msra.mxu0 %v530
  %2224 = vmatpush.msra.mxu0 %v522
  %2225 = vmatpush.msra.mxu0 %v514
  %2226 = vmatpush.msra.mxu0 %v506
  %2227 = vmatpush.msra.mxu0 %v498
  %2228 = vmatpush.msra.mxu0 %v490
  %2229 = vmatpush.msra.mxu0 %v482
  %2230 = vmatpush.msra.mxu0 %v474
  %2231 = vmatpush.msra.mxu0 %v466
  %2232 = vmatmul.f32.gmra.mxu0 %v32
  %v2233 = vpop.f32.mrf.mxu0
  %v2234 = vadd.f32 %v2193, %v2233
  %2235 = vmatmul.f32.gmra.mxu0 %v38
  %v2236 = vpop.f32.mrf.mxu0
  %v2237 = vadd.f32 %v2196, %v2236
  %2238 = vmatmul.f32.gmra.mxu0 %v44
  %v2239 = vpop.f32.mrf.mxu0
  %v2240 = vadd.f32 %v2199, %v2239
  %2241 = vmatmul.f32.gmra.mxu0 %v50
  %v2242 = vpop.f32.mrf.mxu0
  %v2243 = vadd.f32 %v2202, %v2242
  %2244 = vmatmul.f32.gmra.mxu0 %v56
  %v2245 = vpop.f32.mrf.mxu0
  %v2246 = vadd.f32 %v2205, %v2245
  %2247 = vmatmul.f32.gmra.mxu0 %v62
  %v2248 = vpop.f32.mrf.mxu0
  %v2249 = vadd.f32 %v2208, %v2248
  %2250 = vmatmul.f32.gmra.mxu0 %v68
  %v2251 = vpop.f32.mrf.mxu0
  %v2252 = vadd.f32 %v2211, %v2251
  %2253 = vmatmul.f32.gmra.mxu0 %v74
  %v2254 = vpop.f32.mrf.mxu0
  %v2255 = vadd.f32 %v2214, %v2254
  %2256 = vdwg.mxu0
  %2257 = vmatpush.msra.mxu0 %v714
  %2258 = vmatpush.msra.mxu0 %v706
  %2259 = vmatpush.msra.mxu0 %v698
  %2260 = vmatpush.msra.mxu0 %v690
  %2261 = vmatpush.msra.mxu0 %v682
  %2262 = vmatpush.msra.mxu0 %v674
  %2263 = vmatpush.msra.mxu0 %v666
  %2264 = vmatpush.msra.mxu0 %v658
  %2265 = vmatpush.msra.mxu0 %v650
  %2266 = vmatpush.msra.mxu0 %v642
  %2267 = vmatpush.msra.mxu0 %v634
  %2268 = vmatpush.msra.mxu0 %v626
  %2269 = vmatpush.msra.mxu0 %v618
  %2270 = vmatpush.msra.mxu0 %v610
  %2271 = vmatpush.msra.mxu0 %v602
  %2272 = vmatpush.msra.mxu0 %v594
  %2273 = vmatmul.f32.gmra.mxu0 %v33
  %v2274 = vpop.f32.mrf.mxu0
  %v2275 = vadd.f32 %v2234, %v2274
  %2276 = vmatmul.f32.gmra.mxu0 %v39
  %v2277 = vpop.f32.mrf.mxu0
  %v2278 = vadd.f32 %v2237, %v2277
  %2279 = vmatmul.f32.gmra.mxu0 %v45
  %v2280 = vpop.f32.mrf.mxu0
  %v2281 = vadd.f32 %v2240, %v2280
  %2282 = vmatmul.f32.gmra.mxu0 %v51
  %v2283 = vpop.f32.mrf.mxu0
  %v2284 = vadd.f32 %v2243, %v2283
  %2285 = vmatmul.f32.gmra.mxu0 %v57
  %v2286 = vpop.f32.mrf.mxu0
  %v2287 = vadd.f32 %v2246, %v2286
  %2288 = vmatmul.f32.gmra.mxu0 %v63
  %v2289 = vpop.f32.mrf.mxu0
  %v2290 = vadd.f32 %v2249, %v2289
  %2291 = vmatmul.f32.gmra.mxu0 %v69
  %v2292 = vpop.f32.mrf.mxu0
  %v2293 = vadd.f32 %v2252, %v2292
  %2294 = vmatmul.f32.gmra.mxu0 %v75
  %v2295 = vpop.f32.mrf.mxu0
  %v2296 = vadd.f32 %v2255, %v2295
  %2297 = vdwg.mxu0
  %2298 = vmatpush.msra.mxu0 %v842
  %2299 = vmatpush.msra.mxu0 %v834
  %2300 = vmatpush.msra.mxu0 %v826
  %2301 = vmatpush.msra.mxu0 %v818
  %2302 = vmatpush.msra.mxu0 %v810
  %2303 = vmatpush.msra.mxu0 %v802
  %2304 = vmatpush.msra.mxu0 %v794
  %2305 = vmatpush.msra.mxu0 %v786
  %2306 = vmatpush.msra.mxu0 %v778
  %2307 = vmatpush.msra.mxu0 %v770
  %2308 = vmatpush.msra.mxu0 %v762
  %2309 = vmatpush.msra.mxu0 %v754
  %2310 = vmatpush.msra.mxu0 %v746
  %2311 = vmatpush.msra.mxu0 %v738
  %2312 = vmatpush.msra.mxu0 %v730
  %2313 = vmatpush.msra.mxu0 %v722
  %2314 = vmatmul.f32.gmra.mxu0 %v34
  %v2315 = vpop.f32.mrf.mxu0
  %v2316 = vadd.f32 %v2275, %v2315
  %2317 = vmatmul.f32.gmra.mxu0 %v40
  %v2318 = vpop.f32.mrf.mxu0
  %v2319 = vadd.f32 %v2278, %v2318
  %2320 = vmatmul.f32.gmra.mxu0 %v46
  %v2321 = vpop.f32.mrf.mxu0
  %v2322 = vadd.f32 %v2281, %v2321
  %2323 = vmatmul.f32.gmra.mxu0 %v52
  %v2324 = vpop.f32.mrf.mxu0
  %v2325 = vadd.f32 %v2284, %v2324
  %2326 = vmatmul.f32.gmra.mxu0 %v58
  %v2327 = vpop.f32.mrf.mxu0
  %v2328 = vadd.f32 %v2287, %v2327
  %2329 = vmatmul.f32.gmra.mxu0 %v64
  %v2330 = vpop.f32.mrf.mxu0
  %v2331 = vadd.f32 %v2290, %v2330
  %2332 = vmatmul.f32.gmra.mxu0 %v70
  %v2333 = vpop.f32.mrf.mxu0
  %v2334 = vadd.f32 %v2293, %v2333
  %2335 = vmatmul.f32.gmra.mxu0 %v76
  %v2336 = vpop.f32.mrf.mxu0
  %v2337 = vadd.f32 %v2296, %v2336
  %2338 = vdwg.mxu0
  %2339 = vmatpush.msra.mxu0 %v203
  %2340 = vmatpush.msra.mxu0 %v195
  %2341 = vmatpush.msra.mxu0 %v187
  %2342 = vmatpush.msra.mxu0 %v179
  %2343 = vmatpush.msra.mxu0 %v171
  %2344 = vmatpush.msra.mxu0 %v163
  %2345 = vmatpush.msra.mxu0 %v155
  %2346 = vmatpush.msra.mxu0 %v147
  %2347 = vmatpush.msra.mxu0 %v139
  %2348 = vmatpush.msra.mxu0 %v131
  %2349 = vmatpush.msra.mxu0 %v123
  %2350 = vmatpush.msra.mxu0 %v115
  %2351 = vmatpush.msra.mxu0 %v107
  %2352 = vmatpush.msra.mxu0 %v99
  %2353 = vmatpush.msra.mxu0 %v91
  %2354 = vmatpush.msra.mxu0 %v83
  %2355 = vmatmul.f32.gmra.mxu0 %v29
  %v2356 = vpop.f32.mrf.mxu0
  %v2357 = vadd.f32 %v853, %v2356
  %2358 = vmatmul.f32.gmra.mxu0 %v35
  %v2359 = vpop.f32.mrf.mxu0
  %v2360 = vadd.f32 %v853, %v2359
  %2361 = vmatmul.f32.gmra.mxu0 %v41
  %v2362 = vpop.f32.mrf.mxu0
  %v2363 = vadd.f32 %v853, %v2362
  %2364 = vmatmul.f32.gmra.mxu0 %v47
  %v2365 = vpop.f32.mrf.mxu0
  %v2366 = vadd.f32 %v853, %v2365
  %2367 = vmatmul.f32.gmra.mxu0 %v53
  %v2368 = vpop.f32.mrf.mxu0
  %v2369 = vadd.f32 %v853, %v2368
  %2370 = vmatmul.f32.gmra.mxu0 %v59
  %v2371 = vpop.f32.mrf.mxu0
  %v2372 = vadd.f32 %v853, %v2371
  %2373 = vmatmul.f32.gmra.mxu0 %v65
  %v2374 = vpop.f32.mrf.mxu0
  %v2375 = vadd.f32 %v853, %v2374
  %2376 = vmatmul.f32.gmra.mxu0 %v71
  %v2377 = vpop.f32.mrf.mxu0
  %v2378 = vadd.f32 %v853, %v2377
  %2379 = vdwg.mxu0
  %2380 = vmatpush.msra.mxu0 %v331
  %2381 = vmatpush.msra.mxu0 %v323
  %2382 = vmatpush.msra.mxu0 %v315
  %2383 = vmatpush.msra.mxu0 %v307
  %2384 = vmatpush.msra.mxu0 %v299
  %2385 = vmatpush.msra.mxu0 %v291
  %2386 = vmatpush.msra.mxu0 %v283
  %2387 = vmatpush.msra.mxu0 %v275
  %2388 = vmatpush.msra.mxu0 %v267
  %2389 = vmatpush.msra.mxu0 %v259
  %2390 = vmatpush.msra.mxu0 %v251
  %2391 = vmatpush.msra.mxu0 %v243
  %2392 = vmatpush.msra.mxu0 %v235
  %2393 = vmatpush.msra.mxu0 %v227
  %2394 = vmatpush.msra.mxu0 %v219
  %2395 = vmatpush.msra.mxu0 %v211
  %2396 = vmatmul.f32.gmra.mxu0 %v30
  %v2397 = vpop.f32.mrf.mxu0
  %v2398 = vadd.f32 %v2357, %v2397
  %2399 = vmatmul.f32.gmra.mxu0 %v36
  %v2400 = vpop.f32.mrf.mxu0
  %v2401 = vadd.f32 %v2360, %v2400
  %2402 = vmatmul.f32.gmra.mxu0 %v42
  %v2403 = vpop.f32.mrf.mxu0
  %v2404 = vadd.f32 %v2363, %v2403
  %2405 = vmatmul.f32.gmra.mxu0 %v48
  %v2406 = vpop.f32.mrf.mxu0
  %v2407 = vadd.f32 %v2366, %v2406
  %2408 = vmatmul.f32.gmra.mxu0 %v54
  %v2409 = vpop.f32.mrf.mxu0
  %v2410 = vadd.f32 %v2369, %v2409
  %2411 = vmatmul.f32.gmra.mxu0 %v60
  %v2412 = vpop.f32.mrf.mxu0
  %v2413 = vadd.f32 %v2372, %v2412
  %2414 = vmatmul.f32.gmra.mxu0 %v66
  %v2415 = vpop.f32.mrf.mxu0
  %v2416 = vadd.f32 %v2375, %v2415
  %2417 = vmatmul.f32.gmra.mxu0 %v72
  %v2418 = vpop.f32.mrf.mxu0
  %v2419 = vadd.f32 %v2378, %v2418
  %2420 = vdwg.mxu0
  %2421 = vmatpush.msra.mxu0 %v459
  %2422 = vmatpush.msra.mxu0 %v451
  %2423 = vmatpush.msra.mxu0 %v443
  %2424 = vmatpush.msra.mxu0 %v435
  %2425 = vmatpush.msra.mxu0 %v427
  %2426 = vmatpush.msra.mxu0 %v419
  %2427 = vmatpush.msra.mxu0 %v411
  %2428 = vmatpush.msra.mxu0 %v403
  %2429 = vmatpush.msra.mxu0 %v395
  %2430 = vmatpush.msra.mxu0 %v387
  %2431 = vmatpush.msra.mxu0 %v379
  %2432 = vmatpush.msra.mxu0 %v371
  %2433 = vmatpush.msra.mxu0 %v363
  %2434 = vmatpush.msra.mxu0 %v355
  %2435 = vmatpush.msra.mxu0 %v347
  %2436 = vmatpush.msra.mxu0 %v339
  %2437 = vmatmul.f32.gmra.mxu0 %v31
  %v2438 = vpop.f32.mrf.mxu0
  %v2439 = vadd.f32 %v2398, %v2438
  %2440 = vmatmul.f32.gmra.mxu0 %v37
  %v2441 = vpop.f32.mrf.mxu0
  %v2442 = vadd.f32 %v2401, %v2441
  %2443 = vmatmul.f32.gmra.mxu0 %v43
  %v2444 = vpop.f32.mrf.mxu0
  %v2445 = vadd.f32 %v2404, %v2444
  %2446 = vmatmul.f32.gmra.mxu0 %v49
  %v2447 = vpop.f32.mrf.mxu0
  %v2448 = vadd.f32 %v2407, %v2447
  %2449 = vmatmul.f32.gmra.mxu0 %v55
  %v2450 = vpop.f32.mrf.mxu0
  %v2451 = vadd.f32 %v2410, %v2450
  %2452 = vmatmul.f32.gmra.mxu0 %v61
  %v2453 = vpop.f32.mrf.mxu0
  %v2454 = vadd.f32 %v2413, %v2453
  %2455 = vmatmul.f32.gmra.mxu0 %v67
  %v2456 = vpop.f32.mrf.mxu0
  %v2457 = vadd.f32 %v2416, %v2456
  %2458 = vmatmul.f32.gmra.mxu0 %v73
  %v2459 = vpop.f32.mrf.mxu0
  %v2460 = vadd.f32 %v2419, %v2459
  %2461 = vdwg.mxu0
  %2462 = vmatpush.msra.mxu0 %v587
  %2463 = vmatpush.msra.mxu0 %v579
  %2464 = vmatpush.msra.mxu0 %v571
  %2465 = vmatpush.msra.mxu0 %v563
  %2466 = vmatpush.msra.mxu0 %v555
  %2467 = vmatpush.msra.mxu0 %v547
  %2468 = vmatpush.msra.mxu0 %v539
  %2469 = vmatpush.msra.mxu0 %v531
  %2470 = vmatpush.msra.mxu0 %v523
  %2471 = vmatpush.msra.mxu0 %v515
  %2472 = vmatpush.msra.mxu0 %v507
  %2473 = vmatpush.msra.mxu0 %v499
  %2474 = vmatpush.msra.mxu0 %v491
  %2475 = vmatpush.msra.mxu0 %v483
  %2476 = vmatpush.msra.mxu0 %v475
  %2477 = vmatpush.msra.mxu0 %v467
  %2478 = vmatmul.f32.gmra.mxu0 %v32
  %v2479 = vpop.f32.mrf.mxu0
  %v2480 = vadd.f32 %v2439, %v2479
  %2481 = vmatmul.f32.gmra.mxu0 %v38
  %v2482 = vpop.f32.mrf.mxu0
  %v2483 = vadd.f32 %v2442, %v2482
  %2484 = vmatmul.f32.gmra.mxu0 %v44
  %v2485 = vpop.f32.mrf.mxu0
  %v2486 = vadd.f32 %v2445, %v2485
  %2487 = vmatmul.f32.gmra.mxu0 %v50
  %v2488 = vpop.f32.mrf.mxu0
  %v2489 = vadd.f32 %v2448, %v2488
  %2490 = vmatmul.f32.gmra.mxu0 %v56
  %v2491 = vpop.f32.mrf.mxu0
  %v2492 = vadd.f32 %v2451, %v2491
  %2493 = vmatmul.f32.gmra.mxu0 %v62
  %v2494 = vpop.f32.mrf.mxu0
  %v2495 = vadd.f32 %v2454, %v2494
  %2496 = vmatmul.f32.gmra.mxu0 %v68
  %v2497 = vpop.f32.mrf.mxu0
  %v2498 = vadd.f32 %v2457, %v2497
  %2499 = vmatmul.f32.gmra.mxu0 %v74
  %v2500 = vpop.f32.mrf.mxu0
  %v2501 = vadd.f32 %v2460, %v2500
  %2502 = vdwg.mxu0
  %2503 = vmatpush.msra.mxu0 %v715
  %2504 = vmatpush.msra.mxu0 %v707
  %2505 = vmatpush.msra.mxu0 %v699
  %2506 = vmatpush.msra.mxu0 %v691
  %2507 = vmatpush.msra.mxu0 %v683
  %2508 = vmatpush.msra.mxu0 %v675
  %2509 = vmatpush.msra.mxu0 %v667
  %2510 = vmatpush.msra.mxu0 %v659
  %2511 = vmatpush.msra.mxu0 %v651
  %2512 = vmatpush.msra.mxu0 %v643
  %2513 = vmatpush.msra.mxu0 %v635
  %2514 = vmatpush.msra.mxu0 %v627
  %2515 = vmatpush.msra.mxu0 %v619
  %2516 = vmatpush.msra.mxu0 %v611
  %2517 = vmatpush.msra.mxu0 %v603
  %2518 = vmatpush.msra.mxu0 %v595
  %2519 = vmatmul.f32.gmra.mxu0 %v33
  %v2520 = vpop.f32.mrf.mxu0
  %v2521 = vadd.f32 %v2480, %v2520
  %2522 = vmatmul.f32.gmra.mxu0 %v39
  %v2523 = vpop.f32.mrf.mxu0
  %v2524 = vadd.f32 %v2483, %v2523
  %2525 = vmatmul.f32.gmra.mxu0 %v45
  %v2526 = vpop.f32.mrf.mxu0
  %v2527 = vadd.f32 %v2486, %v2526
  %2528 = vmatmul.f32.gmra.mxu0 %v51
  %v2529 = vpop.f32.mrf.mxu0
  %v2530 = vadd.f32 %v2489, %v2529
  %2531 = vmatmul.f32.gmra.mxu0 %v57
  %v2532 = vpop.f32.mrf.mxu0
  %v2533 = vadd.f32 %v2492, %v2532
  %2534 = vmatmul.f32.gmra.mxu0 %v63
  %v2535 = vpop.f32.mrf.mxu0
  %v2536 = vadd.f32 %v2495, %v2535
  %2537 = vmatmul.f32.gmra.mxu0 %v69
  %v2538 = vpop.f32.mrf.mxu0
  %v2539 = vadd.f32 %v2498, %v2538
  %2540 = vmatmul.f32.gmra.mxu0 %v75
  %v2541 = vpop.f32.mrf.mxu0
  %v2542 = vadd.f32 %v2501, %v2541
  %2543 = vdwg.mxu0
  %2544 = vmatpush.msra.mxu0 %v843
  %2545 = vmatpush.msra.mxu0 %v835
  %2546 = vmatpush.msra.mxu0 %v827
  %2547 = vmatpush.msra.mxu0 %v819
  %2548 = vmatpush.msra.mxu0 %v811
  %2549 = vmatpush.msra.mxu0 %v803
  %2550 = vmatpush.msra.mxu0 %v795
  %2551 = vmatpush.msra.mxu0 %v787
  %2552 = vmatpush.msra.mxu0 %v779
  %2553 = vmatpush.msra.mxu0 %v771
  %2554 = vmatpush.msra.mxu0 %v763
  %2555 = vmatpush.msra.mxu0 %v755
  %2556 = vmatpush.msra.mxu0 %v747
  %2557 = vmatpush.msra.mxu0 %v739
  %2558 = vmatpush.msra.mxu0 %v731
  %2559 = vmatpush.msra.mxu0 %v723
  %2560 = vmatmul.f32.gmra.mxu0 %v34
  %v2561 = vpop.f32.mrf.mxu0
  %v2562 = vadd.f32 %v2521, %v2561
  %2563 = vmatmul.f32.gmra.mxu0 %v40
  %v2564 = vpop.f32.mrf.mxu0
  %v2565 = vadd.f32 %v2524, %v2564
  %2566 = vmatmul.f32.gmra.mxu0 %v46
  %v2567 = vpop.f32.mrf.mxu0
  %v2568 = vadd.f32 %v2527, %v2567
  %2569 = vmatmul.f32.gmra.mxu0 %v52
  %v2570 = vpop.f32.mrf.mxu0
  %v2571 = vadd.f32 %v2530, %v2570
  %2572 = vmatmul.f32.gmra.mxu0 %v58
  %v2573 = vpop.f32.mrf.mxu0
  %v2574 = vadd.f32 %v2533, %v2573
  %2575 = vmatmul.f32.gmra.mxu0 %v64
  %v2576 = vpop.f32.mrf.mxu0
  %v2577 = vadd.f32 %v2536, %v2576
  %2578 = vmatmul.f32.gmra.mxu0 %v70
  %v2579 = vpop.f32.mrf.mxu0
  %v2580 = vadd.f32 %v2539, %v2579
  %2581 = vmatmul.f32.gmra.mxu0 %v76
  %v2582 = vpop.f32.mrf.mxu0
  %v2583 = vadd.f32 %v2542, %v2582
  %2584 = vdwg.mxu0
  %2585 = vmatpush.msra.mxu0 %v204
  %2586 = vmatpush.msra.mxu0 %v196
  %2587 = vmatpush.msra.mxu0 %v188
  %2588 = vmatpush.msra.mxu0 %v180
  %2589 = vmatpush.msra.mxu0 %v172
  %2590 = vmatpush.msra.mxu0 %v164
  %2591 = vmatpush.msra.mxu0 %v156
  %2592 = vmatpush.msra.mxu0 %v148
  %2593 = vmatpush.msra.mxu0 %v140
  %2594 = vmatpush.msra.mxu0 %v132
  %2595 = vmatpush.msra.mxu0 %v124
  %2596 = vmatpush.msra.mxu0 %v116
  %2597 = vmatpush.msra.mxu0 %v108
  %2598 = vmatpush.msra.mxu0 %v100
  %2599 = vmatpush.msra.mxu0 %v92
  %2600 = vmatpush.msra.mxu0 %v84
  %2601 = vmatmul.f32.gmra.mxu0 %v29
  %v2602 = vpop.f32.mrf.mxu0
  %v2603 = vadd.f32 %v854, %v2602
  %2604 = vmatmul.f32.gmra.mxu0 %v35
  %v2605 = vpop.f32.mrf.mxu0
  %v2606 = vadd.f32 %v854, %v2605
  %2607 = vmatmul.f32.gmra.mxu0 %v41
  %v2608 = vpop.f32.mrf.mxu0
  %v2609 = vadd.f32 %v854, %v2608
  %2610 = vmatmul.f32.gmra.mxu0 %v47
  %v2611 = vpop.f32.mrf.mxu0
  %v2612 = vadd.f32 %v854, %v2611
  %2613 = vmatmul.f32.gmra.mxu0 %v53
  %v2614 = vpop.f32.mrf.mxu0
  %v2615 = vadd.f32 %v854, %v2614
  %2616 = vmatmul.f32.gmra.mxu0 %v59
  %v2617 = vpop.f32.mrf.mxu0
  %v2618 = vadd.f32 %v854, %v2617
  %2619 = vmatmul.f32.gmra.mxu0 %v65
  %v2620 = vpop.f32.mrf.mxu0
  %v2621 = vadd.f32 %v854, %v2620
  %2622 = vmatmul.f32.gmra.mxu0 %v71
  %v2623 = vpop.f32.mrf.mxu0
  %v2624 = vadd.f32 %v854, %v2623
  %2625 = vdwg.mxu0
  %2626 = vmatpush.msra.mxu0 %v332
  %2627 = vmatpush.msra.mxu0 %v324
  %2628 = vmatpush.msra.mxu0 %v316
  %2629 = vmatpush.msra.mxu0 %v308
  %2630 = vmatpush.msra.mxu0 %v300
  %2631 = vmatpush.msra.mxu0 %v292
  %2632 = vmatpush.msra.mxu0 %v284
  %2633 = vmatpush.msra.mxu0 %v276
  %2634 = vmatpush.msra.mxu0 %v268
  %2635 = vmatpush.msra.mxu0 %v260
  %2636 = vmatpush.msra.mxu0 %v252
  %2637 = vmatpush.msra.mxu0 %v244
  %2638 = vmatpush.msra.mxu0 %v236
  %2639 = vmatpush.msra.mxu0 %v228
  %2640 = vmatpush.msra.mxu0 %v220
  %2641 = vmatpush.msra.mxu0 %v212
  %2642 = vmatmul.f32.gmra.mxu0 %v30
  %v2643 = vpop.f32.mrf.mxu0
  %v2644 = vadd.f32 %v2603, %v2643
  %2645 = vmatmul.f32.gmra.mxu0 %v36
  %v2646 = vpop.f32.mrf.mxu0
  %v2647 = vadd.f32 %v2606, %v2646
  %2648 = vmatmul.f32.gmra.mxu0 %v42
  %v2649 = vpop.f32.mrf.mxu0
  %v2650 = vadd.f32 %v2609, %v2649
  %2651 = vmatmul.f32.gmra.mxu0 %v48
  %v2652 = vpop.f32.mrf.mxu0
  %v2653 = vadd.f32 %v2612, %v2652
  %2654 = vmatmul.f32.gmra.mxu0 %v54
  %v2655 = vpop.f32.mrf.mxu0
  %v2656 = vadd.f32 %v2615, %v2655
  %2657 = vmatmul.f32.gmra.mxu0 %v60
  %v2658 = vpop.f32.mrf.mxu0
  %v2659 = vadd.f32 %v2618, %v2658
  %2660 = vmatmul.f32.gmra.mxu0 %v66
  %v2661 = vpop.f32.mrf.mxu0
  %v2662 = vadd.f32 %v2621, %v2661
  %2663 = vmatmul.f32.gmra.mxu0 %v72
  %v2664 = vpop.f32.mrf.mxu0
  %v2665 = vadd.f32 %v2624, %v2664
  %2666 = vdwg.mxu0
  %2667 = vmatpush.msra.mxu0 %v460
  %2668 = vmatpush.msra.mxu0 %v452
  %2669 = vmatpush.msra.mxu0 %v444
  %2670 = vmatpush.msra.mxu0 %v436
  %2671 = vmatpush.msra.mxu0 %v428
  %2672 = vmatpush.msra.mxu0 %v420
  %2673 = vmatpush.msra.mxu0 %v412
  %2674 = vmatpush.msra.mxu0 %v404
  %2675 = vmatpush.msra.mxu0 %v396
  %2676 = vmatpush.msra.mxu0 %v388
  %2677 = vmatpush.msra.mxu0 %v380
  %2678 = vmatpush.msra.mxu0 %v372
  %2679 = vmatpush.msra.mxu0 %v364
  %2680 = vmatpush.msra.mxu0 %v356
  %2681 = vmatpush.msra.mxu0 %v348
  %2682 = vmatpush.msra.mxu0 %v340
  %2683 = vmatmul.f32.gmra.mxu0 %v31
  %v2684 = vpop.f32.mrf.mxu0
  %v2685 = vadd.f32 %v2644, %v2684
  %2686 = vmatmul.f32.gmra.mxu0 %v37
  %v2687 = vpop.f32.mrf.mxu0
  %v2688 = vadd.f32 %v2647, %v2687
  %2689 = vmatmul.f32.gmra.mxu0 %v43
  %v2690 = vpop.f32.mrf.mxu0
  %v2691 = vadd.f32 %v2650, %v2690
  %2692 = vmatmul.f32.gmra.mxu0 %v49
  %v2693 = vpop.f32.mrf.mxu0
  %v2694 = vadd.f32 %v2653, %v2693
  %2695 = vmatmul.f32.gmra.mxu0 %v55
  %v2696 = vpop.f32.mrf.mxu0
  %v2697 = vadd.f32 %v2656, %v2696
  %2698 = vmatmul.f32.gmra.mxu0 %v61
  %v2699 = vpop.f32.mrf.mxu0
  %v2700 = vadd.f32 %v2659, %v2699
  %2701 = vmatmul.f32.gmra.mxu0 %v67
  %v2702 = vpop.f32.mrf.mxu0
  %v2703 = vadd.f32 %v2662, %v2702
  %2704 = vmatmul.f32.gmra.mxu0 %v73
  %v2705 = vpop.f32.mrf.mxu0
  %v2706 = vadd.f32 %v2665, %v2705
  %2707 = vdwg.mxu0
  %2708 = vmatpush.msra.mxu0 %v588
  %2709 = vmatpush.msra.mxu0 %v580
  %2710 = vmatpush.msra.mxu0 %v572
  %2711 = vmatpush.msra.mxu0 %v564
  %2712 = vmatpush.msra.mxu0 %v556
  %2713 = vmatpush.msra.mxu0 %v548
  %2714 = vmatpush.msra.mxu0 %v540
  %2715 = vmatpush.msra.mxu0 %v532
  %2716 = vmatpush.msra.mxu0 %v524
  %2717 = vmatpush.msra.mxu0 %v516
  %2718 = vmatpush.msra.mxu0 %v508
  %2719 = vmatpush.msra.mxu0 %v500
  %2720 = vmatpush.msra.mxu0 %v492
  %2721 = vmatpush.msra.mxu0 %v484
  %2722 = vmatpush.msra.mxu0 %v476
  %2723 = vmatpush.msra.mxu0 %v468
  %2724 = vmatmul.f32.gmra.mxu0 %v32
  %v2725 = vpop.f32.mrf.mxu0
  %v2726 = vadd.f32 %v2685, %v2725
  %2727 = vmatmul.f32.gmra.mxu0 %v38
  %v2728 = vpop.f32.mrf.mxu0
  %v2729 = vadd.f32 %v2688, %v2728
  %2730 = vmatmul.f32.gmra.mxu0 %v44
  %v2731 = vpop.f32.mrf.mxu0
  %v2732 = vadd.f32 %v2691, %v2731
  %2733 = vmatmul.f32.gmra.mxu0 %v50
  %v2734 = vpop.f32.mrf.mxu0
  %v2735 = vadd.f32 %v2694, %v2734
  %2736 = vmatmul.f32.gmra.mxu0 %v56
  %v2737 = vpop.f32.mrf.mxu0
  %v2738 = vadd.f32 %v2697, %v2737
  %2739 = vmatmul.f32.gmra.mxu0 %v62
  %v2740 = vpop.f32.mrf.mxu0
  %v2741 = vadd.f32 %v2700, %v2740
  %2742 = vmatmul.f32.gmra.mxu0 %v68
  %v2743 = vpop.f32.mrf.mxu0
  %v2744 = vadd.f32 %v2703, %v2743
  %2745 = vmatmul.f32.gmra.mxu0 %v74
  %v2746 = vpop.f32.mrf.mxu0
  %v2747 = vadd.f32 %v2706, %v2746
  %2748 = vdwg.mxu0
  %2749 = vmatpush.msra.mxu0 %v716
  %2750 = vmatpush.msra.mxu0 %v708
  %2751 = vmatpush.msra.mxu0 %v700
  %2752 = vmatpush.msra.mxu0 %v692
  %2753 = vmatpush.msra.mxu0 %v684
  %2754 = vmatpush.msra.mxu0 %v676
  %2755 = vmatpush.msra.mxu0 %v668
  %2756 = vmatpush.msra.mxu0 %v660
  %2757 = vmatpush.msra.mxu0 %v652
  %2758 = vmatpush.msra.mxu0 %v644
  %2759 = vmatpush.msra.mxu0 %v636
  %2760 = vmatpush.msra.mxu0 %v628
  %2761 = vmatpush.msra.mxu0 %v620
  %2762 = vmatpush.msra.mxu0 %v612
  %2763 = vmatpush.msra.mxu0 %v604
  %2764 = vmatpush.msra.mxu0 %v596
  %2765 = vmatmul.f32.gmra.mxu0 %v33
  %v2766 = vpop.f32.mrf.mxu0
  %v2767 = vadd.f32 %v2726, %v2766
  %2768 = vmatmul.f32.gmra.mxu0 %v39
  %v2769 = vpop.f32.mrf.mxu0
  %v2770 = vadd.f32 %v2729, %v2769
  %2771 = vmatmul.f32.gmra.mxu0 %v45
  %v2772 = vpop.f32.mrf.mxu0
  %v2773 = vadd.f32 %v2732, %v2772
  %2774 = vmatmul.f32.gmra.mxu0 %v51
  %v2775 = vpop.f32.mrf.mxu0
  %v2776 = vadd.f32 %v2735, %v2775
  %2777 = vmatmul.f32.gmra.mxu0 %v57
  %v2778 = vpop.f32.mrf.mxu0
  %v2779 = vadd.f32 %v2738, %v2778
  %2780 = vmatmul.f32.gmra.mxu0 %v63
  %v2781 = vpop.f32.mrf.mxu0
  %v2782 = vadd.f32 %v2741, %v2781
  %2783 = vmatmul.f32.gmra.mxu0 %v69
  %v2784 = vpop.f32.mrf.mxu0
  %v2785 = vadd.f32 %v2744, %v2784
  %2786 = vmatmul.f32.gmra.mxu0 %v75
  %v2787 = vpop.f32.mrf.mxu0
  %v2788 = vadd.f32 %v2747, %v2787
  %2789 = vdwg.mxu0
  %2790 = vmatpush.msra.mxu0 %v844
  %2791 = vmatpush.msra.mxu0 %v836
  %2792 = vmatpush.msra.mxu0 %v828
  %2793 = vmatpush.msra.mxu0 %v820
  %2794 = vmatpush.msra.mxu0 %v812
  %2795 = vmatpush.msra.mxu0 %v804
  %2796 = vmatpush.msra.mxu0 %v796
  %2797 = vmatpush.msra.mxu0 %v788
  %2798 = vmatpush.msra.mxu0 %v780
  %2799 = vmatpush.msra.mxu0 %v772
  %2800 = vmatpush.msra.mxu0 %v764
  %2801 = vmatpush.msra.mxu0 %v756
  %2802 = vmatpush.msra.mxu0 %v748
  %2803 = vmatpush.msra.mxu0 %v740
  %2804 = vmatpush.msra.mxu0 %v732
  %2805 = vmatpush.msra.mxu0 %v724
  %2806 = vmatmul.f32.gmra.mxu0 %v34
  %v2807 = vpop.f32.mrf.mxu0
  %v2808 = vadd.f32 %v2767, %v2807
  %2809 = vmatmul.f32.gmra.mxu0 %v40
  %v2810 = vpop.f32.mrf.mxu0
  %v2811 = vadd.f32 %v2770, %v2810
  %2812 = vmatmul.f32.gmra.mxu0 %v46
  %v2813 = vpop.f32.mrf.mxu0
  %v2814 = vadd.f32 %v2773, %v2813
  %2815 = vmatmul.f32.gmra.mxu0 %v52
  %v2816 = vpop.f32.mrf.mxu0
  %v2817 = vadd.f32 %v2776, %v2816
  %2818 = vmatmul.f32.gmra.mxu0 %v58
  %v2819 = vpop.f32.mrf.mxu0
  %v2820 = vadd.f32 %v2779, %v2819
  %2821 = vmatmul.f32.gmra.mxu0 %v64
  %v2822 = vpop.f32.mrf.mxu0
  %v2823 = vadd.f32 %v2782, %v2822
  %2824 = vmatmul.f32.gmra.mxu0 %v70
  %v2825 = vpop.f32.mrf.mxu0
  %v2826 = vadd.f32 %v2785, %v2825
  %2827 = vmatmul.f32.gmra.mxu0 %v76
  %v2828 = vpop.f32.mrf.mxu0
  %v2829 = vadd.f32 %v2788, %v2828
  %2830 = vdwg.mxu0
  %2831 = vst [vmem:[#allocation2] sm:$0xff] %v1086
  %2832 = vst [vmem:[#allocation2 + $0x8] sm:$0xff] %v1332
  %2833 = vst [vmem:[#allocation2 + $0x10] sm:$0xff] %v1578
  %2834 = vst [vmem:[#allocation2 + $0x18] sm:$0xff] %v1824
  %2835 = vst [vmem:[#allocation2 + $0x20] sm:$0xff] %v1089
  %2836 = vst [vmem:[#allocation2 + $0x28] sm:$0xff] %v1335
  %2837 = vst [vmem:[#allocation2 + $0x30] sm:$0xff] %v1581
  %2838 = vst [vmem:[#allocation2 + $0x38] sm:$0xff] %v1827
  %2839 = vst [vmem:[#allocation2 + $0x40] sm:$0xff] %v1092
  %2840 = vst [vmem:[#allocation2 + $0x48] sm:$0xff] %v1338
  %2841 = vst [vmem:[#allocation2 + $0x50] sm:$0xff] %v1584
  %2842 = vst [vmem:[#allocation2 + $0x58] sm:$0xff] %v1830
  %2843 = vst [vmem:[#allocation2 + $0x60] sm:$0xff] %v1095
  %2844 = vst [vmem:[#allocation2 + $0x68] sm:$0xff] %v1341
  %2845 = vst [vmem:[#allocation2 + $0x70] sm:$0xff] %v1587
  %2846 = vst [vmem:[#allocation2 + $0x78] sm:$0xff] %v1833
  %2847 = vst [vmem:[#allocation2 + $0x80] sm:$0xff] %v1098
  %2848 = vst [vmem:[#allocation2 + $0x88] sm:$0xff] %v1344
  %2849 = vst [vmem:[#allocation2 + $0x90] sm:$0xff] %v1590
  %2850 = vst [vmem:[#allocation2 + $0x98] sm:$0xff] %v1836
  %2851 = vst [vmem:[#allocation2 + $0xa0] sm:$0xff] %v1101
  %2852 = vst [vmem:[#allocation2 + $0xa8] sm:$0xff] %v1347
  %2853 = vst [vmem:[#allocation2 + $0xb0] sm:$0xff] %v1593
  %2854 = vst [vmem:[#allocation2 + $0xb8] sm:$0xff] %v1839
  %2855 = vst [vmem:[#allocation2 + $0xc0] sm:$0xff] %v1104
  %2856 = vst [vmem:[#allocation2 + $0xc8] sm:$0xff] %v1350
  %2857 = vst [vmem:[#allocation2 + $0xd0] sm:$0xff] %v1596
  %2858 = vst [vmem:[#allocation2 + $0xd8] sm:$0xff] %v1842
  %2859 = vst [vmem:[#allocation2 + $0xe0] sm:$0xff] %v1107
  %2860 = vst [vmem:[#allocation2 + $0xe8] sm:$0xff] %v1353
  %2861 = vst [vmem:[#allocation2 + $0xf0] sm:$0xff] %v1599
  %2862 = vst [vmem:[#allocation2 + $0xf8] sm:$0xff] %v1845
  %2863 = vst [vmem:[#allocation3] sm:$0xff] %v2070
  %2864 = vst [vmem:[#allocation3 + $0x8] sm:$0xff] %v2316
  %2865 = vst [vmem:[#allocation3 + $0x10] sm:$0xff] %v2562
  %2866 = vst [vmem:[#allocation3 + $0x18] sm:$0xff] %v2808
  %2867 = vst [vmem:[#allocation3 + $0x20] sm:$0xff] %v2073
  %2868 = vst [vmem:[#allocation3 + $0x28] sm:$0xff] %v2319
  %2869 = vst [vmem:[#allocation3 + $0x30] sm:$0xff] %v2565
  %2870 = vst [vmem:[#allocation3 + $0x38] sm:$0xff] %v2811
  %2871 = vst [vmem:[#allocation3 + $0x40] sm:$0xff] %v2076
  %2872 = vst [vmem:[#allocation3 + $0x48] sm:$0xff] %v2322
  %2873 = vst [vmem:[#allocation3 + $0x50] sm:$0xff] %v2568
  %2874 = vst [vmem:[#allocation3 + $0x58] sm:$0xff] %v2814
  %2875 = vst [vmem:[#allocation3 + $0x60] sm:$0xff] %v2079
  %2876 = vst [vmem:[#allocation3 + $0x68] sm:$0xff] %v2325
  %2877 = vst [vmem:[#allocation3 + $0x70] sm:$0xff] %v2571
  %2878 = vst [vmem:[#allocation3 + $0x78] sm:$0xff] %v2817
  %2879 = vst [vmem:[#allocation3 + $0x80] sm:$0xff] %v2082
  %2880 = vst [vmem:[#allocation3 + $0x88] sm:$0xff] %v2328
  %2881 = vst [vmem:[#allocation3 + $0x90] sm:$0xff] %v2574
  %2882 = vst [vmem:[#allocation3 + $0x98] sm:$0xff] %v2820
  %2883 = vst [vmem:[#allocation3 + $0xa0] sm:$0xff] %v2085
  %2884 = vst [vmem:[#allocation3 + $0xa8] sm:$0xff] %v2331
  %2885 = vst [vmem:[#allocation3 + $0xb0] sm:$0xff] %v2577
  %2886 = vst [vmem:[#allocation3 + $0xb8] sm:$0xff] %v2823
  %2887 = vst [vmem:[#allocation3 + $0xc0] sm:$0xff] %v2088
  %2888 = vst [vmem:[#allocation3 + $0xc8] sm:$0xff] %v2334
  %2889 = vst [vmem:[#allocation3 + $0xd0] sm:$0xff] %v2580
  %2890 = vst [vmem:[#allocation3 + $0xd8] sm:$0xff] %v2826
  %2891 = vst [vmem:[#allocation3 + $0xe0] sm:$0xff] %v2091
  %2892 = vst [vmem:[#allocation3 + $0xe8] sm:$0xff] %v2337
  %2893 = vst [vmem:[#allocation3 + $0xf0] sm:$0xff] %v2583
  %2894 = vst [vmem:[#allocation3 + $0xf8] sm:$0xff] %v2829
  %v2895 = vld [vmem:[%s0] sm:$0xff]
  %v2896 = vld [vmem:[%s4] sm:$0xff]
  %v2897 = vld [vmem:[%s4 + $0x8] sm:$0xff]
  %v2898 = vld [vmem:[%s4 + $0x10] sm:$0xff]
  %v2899 = vld [vmem:[%s4 + $0x18] sm:$0xff]
  %v2900 = vld [vmem:[%s4 + $0x20] sm:$0xff]
  %v2901 = vld [vmem:[%s4 + $0x28] sm:$0xff]
  %v2902 = vld [vmem:[%s4 + $0x30] sm:$0xff]
  %v2903 = vld [vmem:[%s4 + $0x38] sm:$0xff]
  %v2904 = vld [vmem:[%s4 + $0x40] sm:$0xff]
  %v2905 = vld [vmem:[%s4 + $0x48] sm:$0xff]
  %v2906 = vld [vmem:[%s4 + $0x50] sm:$0xff]
  %v2907 = vld [vmem:[%s4 + $0x58] sm:$0xff]
  %v2908 = vld [vmem:[%s4 + $0x60] sm:$0xff]
  %v2909 = vld [vmem:[%s4 + $0x68] sm:$0xff]
  %v2910 = vld [vmem:[%s4 + $0x70] sm:$0xff]
  %v2911 = vld [vmem:[%s4 + $0x78] sm:$0xff]
  %v2912 = vld [vmem:[%s4 + $0x80] sm:$0xff]
  %v2913 = vld [vmem:[%s4 + $0x88] sm:$0xff]
  %v2914 = vld [vmem:[%s4 + $0x90] sm:$0xff]
  %v2915 = vld [vmem:[%s4 + $0x98] sm:$0xff]
  %v2916 = vld [vmem:[%s4 + $0xa0] sm:$0xff]
  %v2917 = vld [vmem:[%s4 + $0xa8] sm:$0xff]
  %v2918 = vld [vmem:[%s4 + $0xb0] sm:$0xff]
  %v2919 = vld [vmem:[%s4 + $0xb8] sm:$0xff]
  %v2920 = vld [vmem:[%s4 + $0xc0] sm:$0xff]
  %v2921 = vld [vmem:[%s4 + $0xc8] sm:$0xff]
  %v2922 = vld [vmem:[%s4 + $0xd0] sm:$0xff]
  %v2923 = vld [vmem:[%s4 + $0xd8] sm:$0xff]
  %v2924 = vld [vmem:[%s4 + $0xe0] sm:$0xff]
  %v2925 = vld [vmem:[%s4 + $0xe8] sm:$0xff]
  %v2926 = vld [vmem:[%s4 + $0xf0] sm:$0xff]
  %v2927 = vld [vmem:[%s4 + $0xf8] sm:$0xff]
  %v2928 = vld [vmem:[%s4 + $0x100] sm:$0xff]
  %v2929 = vld [vmem:[%s4 + $0x108] sm:$0xff]
  %v2930 = vld [vmem:[%s4 + $0x110] sm:$0xff]
  %v2931 = vld [vmem:[%s4 + $0x118] sm:$0xff]
  %v2932 = vld [vmem:[%s4 + $0x120] sm:$0xff]
  %v2933 = vld [vmem:[%s4 + $0x128] sm:$0xff]
  %v2934 = vld [vmem:[%s4 + $0x130] sm:$0xff]
  %v2935 = vld [vmem:[%s4 + $0x138] sm:$0xff]
  %v2936 = vld [vmem:[%s4 + $0x140] sm:$0xff]
  %v2937 = vld [vmem:[%s4 + $0x148] sm:$0xff]
  %v2938 = vld [vmem:[%s4 + $0x150] sm:$0xff]
  %v2939 = vld [vmem:[%s4 + $0x158] sm:$0xff]
  %v2940 = vld [vmem:[%s4 + $0x160] sm:$0xff]
  %v2941 = vld [vmem:[%s4 + $0x168] sm:$0xff]
  %v2942 = vld [vmem:[%s4 + $0x170] sm:$0xff]
  %v2943 = vld [vmem:[%s4 + $0x178] sm:$0xff]
  %v2944 = vld [vmem:[%s4 + $0x180] sm:$0xff]
  %v2945 = vld [vmem:[%s4 + $0x188] sm:$0xff]
  %v2946 = vld [vmem:[%s4 + $0x190] sm:$0xff]
  %v2947 = vld [vmem:[%s4 + $0x198] sm:$0xff]
  %v2948 = vld [vmem:[%s4 + $0x1a0] sm:$0xff]
  %v2949 = vld [vmem:[%s4 + $0x1a8] sm:$0xff]
  %v2950 = vld [vmem:[%s4 + $0x1b0] sm:$0xff]
  %v2951 = vld [vmem:[%s4 + $0x1b8] sm:$0xff]
  %v2952 = vld [vmem:[%s4 + $0x1c0] sm:$0xff]
  %v2953 = vld [vmem:[%s4 + $0x1c8] sm:$0xff]
  %v2954 = vld [vmem:[%s4 + $0x1d0] sm:$0xff]
  %v2955 = vld [vmem:[%s4 + $0x1d8] sm:$0xff]
  %v2956 = vld [vmem:[%s4 + $0x1e0] sm:$0xff]
  %v2957 = vld [vmem:[%s4 + $0x1e8] sm:$0xff]
  %v2958 = vld [vmem:[%s4 + $0x1f0] sm:$0xff]
  %v2959 = vld [vmem:[%s4 + $0x1f8] sm:$0xff]
  %v2960 = vld [vmem:[%s5] sm:$0xff]
  %v2961 = vld [vmem:[%s5 + $0x8] sm:$0xff]
  %v2962 = vld [vmem:[%s5 + $0x10] sm:$0xff]
  %v2963 = vld [vmem:[%s5 + $0x18] sm:$0xff]
  %v2964 = vld [vmem:[%s5 + $0x20] sm:$0xff]
  %v2965 = vld [vmem:[%s5 + $0x28] sm:$0xff]
  %v2966 = vld [vmem:[%s5 + $0x30] sm:$0xff]
  %v2967 = vld [vmem:[%s5 + $0x38] sm:$0xff]
  %v2968 = vld [vmem:[%s5 + $0x40] sm:$0xff]
  %v2969 = vld [vmem:[%s5 + $0x48] sm:$0xff]
  %v2970 = vld [vmem:[%s5 + $0x50] sm:$0xff]
  %v2971 = vld [vmem:[%s5 + $0x58] sm:$0xff]
  %v2972 = vld [vmem:[%s5 + $0x60] sm:$0xff]
  %v2973 = vld [vmem:[%s5 + $0x68] sm:$0xff]
  %v2974 = vld [vmem:[%s5 + $0x70] sm:$0xff]
  %v2975 = vld [vmem:[%s5 + $0x78] sm:$0xff]
  %v2976 = vld [vmem:[%s5 + $0x80] sm:$0xff]
  %v2977 = vld [vmem:[%s5 + $0x88] sm:$0xff]
  %v2978 = vld [vmem:[%s5 + $0x90] sm:$0xff]
  %v2979 = vld [vmem:[%s5 + $0x98] sm:$0xff]
  %v2980 = vld [vmem:[%s5 + $0xa0] sm:$0xff]
  %v2981 = vld [vmem:[%s5 + $0xa8] sm:$0xff]
  %v2982 = vld [vmem:[%s5 + $0xb0] sm:$0xff]
  %v2983 = vld [vmem:[%s5 + $0xb8] sm:$0xff]
  %v2984 = vld [vmem:[%s5 + $0xc0] sm:$0xff]
  %v2985 = vld [vmem:[%s5 + $0xc8] sm:$0xff]
  %v2986 = vld [vmem:[%s5 + $0xd0] sm:$0xff]
  %v2987 = vld [vmem:[%s5 + $0xd8] sm:$0xff]
  %v2988 = vld [vmem:[%s5 + $0xe0] sm:$0xff]
  %v2989 = vld [vmem:[%s5 + $0xe8] sm:$0xff]
  %v2990 = vld [vmem:[%s5 + $0xf0] sm:$0xff]
  %v2991 = vld [vmem:[%s5 + $0xf8] sm:$0xff]
  %v2992 = vld [vmem:[%s5 + $0x100] sm:$0xff]
  %v2993 = vld [vmem:[%s5 + $0x108] sm:$0xff]
  %v2994 = vld [vmem:[%s5 + $0x110] sm:$0xff]
  %v2995 = vld [vmem:[%s5 + $0x118] sm:$0xff]
  %v2996 = vld [vmem:[%s5 + $0x120] sm:$0xff]
  %v2997 = vld [vmem:[%s5 + $0x128] sm:$0xff]
  %v2998 = vld [vmem:[%s5 + $0x130] sm:$0xff]
  %v2999 = vld [vmem:[%s5 + $0x138] sm:$0xff]
  %v3000 = vld [vmem:[%s5 + $0x140] sm:$0xff]
  %v3001 = vld [vmem:[%s5 + $0x148] sm:$0xff]
  %v3002 = vld [vmem:[%s5 + $0x150] sm:$0xff]
  %v3003 = vld [vmem:[%s5 + $0x158] sm:$0xff]
  %v3004 = vld [vmem:[%s5 + $0x160] sm:$0xff]
  %v3005 = vld [vmem:[%s5 + $0x168] sm:$0xff]
  %v3006 = vld [vmem:[%s5 + $0x170] sm:$0xff]
  %v3007 = vld [vmem:[%s5 + $0x178] sm:$0xff]
  %v3008 = vld [vmem:[%s5 + $0x180] sm:$0xff]
  %v3009 = vld [vmem:[%s5 + $0x188] sm:$0xff]
  %v3010 = vld [vmem:[%s5 + $0x190] sm:$0xff]
  %v3011 = vld [vmem:[%s5 + $0x198] sm:$0xff]
  %v3012 = vld [vmem:[%s5 + $0x1a0] sm:$0xff]
  %v3013 = vld [vmem:[%s5 + $0x1a8] sm:$0xff]
  %v3014 = vld [vmem:[%s5 + $0x1b0] sm:$0xff]
  %v3015 = vld [vmem:[%s5 + $0x1b8] sm:$0xff]
  %v3016 = vld [vmem:[%s5 + $0x1c0] sm:$0xff]
  %v3017 = vld [vmem:[%s5 + $0x1c8] sm:$0xff]
  %v3018 = vld [vmem:[%s5 + $0x1d0] sm:$0xff]
  %v3019 = vld [vmem:[%s5 + $0x1d8] sm:$0xff]
  %v3020 = vld [vmem:[%s5 + $0x1e0] sm:$0xff]
  %v3021 = vld [vmem:[%s5 + $0x1e8] sm:$0xff]
  %v3022 = vld [vmem:[%s5 + $0x1f0] sm:$0xff]
  %v3023 = vld [vmem:[%s5 + $0x1f8] sm:$0xff]
  %v3024 = vld [vmem:[#allocation2] sm:$0xff]
  %v3025 = vld [vmem:[#allocation2 + $0x8] sm:$0xff]
  %v3026 = vld [vmem:[#allocation2 + $0x10] sm:$0xff]
  %v3027 = vld [vmem:[#allocation2 + $0x18] sm:$0xff]
  %3028 = vmatpush.msra.mxu0 %v2956
  %3029 = vmatpush.msra.mxu0 %v2952
  %3030 = vmatpush.msra.mxu0 %v2948
  %3031 = vmatpush.msra.mxu0 %v2944
  %3032 = vmatpush.msra.mxu0 %v2940
  %3033 = vmatpush.msra.mxu0 %v2936
  %3034 = vmatpush.msra.mxu0 %v2932
  %3035 = vmatpush.msra.mxu0 %v2928
  %3036 = vmatpush.msra.mxu0 %v2924
  %3037 = vmatpush.msra.mxu0 %v2920
  %3038 = vmatpush.msra.mxu0 %v2916
  %3039 = vmatpush.msra.mxu0 %v2912
  %3040 = vmatpush.msra.mxu0 %v2908
  %3041 = vmatpush.msra.mxu0 %v2904
  %3042 = vmatpush.msra.mxu0 %v2900
  %3043 = vmatpush.msra.mxu0 %v2896
  %3044 = vmatmul.f32.gmra.mxu0 0.0
  %v3045 = vpop.f32.mrf.mxu0
  %v3046 = vadd.f32 0.0, %v3045
  %3047 = vdwg.mxu0
  %3048 = vmatpush.msra.mxu0 %v2957
  %3049 = vmatpush.msra.mxu0 %v2953
  %3050 = vmatpush.msra.mxu0 %v2949
  %3051 = vmatpush.msra.mxu0 %v2945
  %3052 = vmatpush.msra.mxu0 %v2941
  %3053 = vmatpush.msra.mxu0 %v2937
  %3054 = vmatpush.msra.mxu0 %v2933
  %3055 = vmatpush.msra.mxu0 %v2929
  %3056 = vmatpush.msra.mxu0 %v2925
  %3057 = vmatpush.msra.mxu0 %v2921
  %3058 = vmatpush.msra.mxu0 %v2917
  %3059 = vmatpush.msra.mxu0 %v2913
  %3060 = vmatpush.msra.mxu0 %v2909
  %3061 = vmatpush.msra.mxu0 %v2905
  %3062 = vmatpush.msra.mxu0 %v2901
  %3063 = vmatpush.msra.mxu0 %v2897
  %3064 = vmatmul.f32.gmra.mxu0 0.0
  %v3065 = vpop.f32.mrf.mxu0
  %v3066 = vadd.f32 0.0, %v3065
  %3067 = vdwg.mxu0
  %3068 = vmatpush.msra.mxu0 %v2958
  %3069 = vmatpush.msra.mxu0 %v2954
  %3070 = vmatpush.msra.mxu0 %v2950
  %3071 = vmatpush.msra.mxu0 %v2946
  %3072 = vmatpush.msra.mxu0 %v2942
  %3073 = vmatpush.msra.mxu0 %v2938
  %3074 = vmatpush.msra.mxu0 %v2934
  %3075 = vmatpush.msra.mxu0 %v2930
  %3076 = vmatpush.msra.mxu0 %v2926
  %3077 = vmatpush.msra.mxu0 %v2922
  %3078 = vmatpush.msra.mxu0 %v2918
  %3079 = vmatpush.msra.mxu0 %v2914
  %3080 = vmatpush.msra.mxu0 %v2910
  %3081 = vmatpush.msra.mxu0 %v2906
  %3082 = vmatpush.msra.mxu0 %v2902
  %3083 = vmatpush.msra.mxu0 %v2898
  %3084 = vmatmul.f32.gmra.mxu0 0.0
  %v3085 = vpop.f32.mrf.mxu0
  %v3086 = vadd.f32 0.0, %v3085
  %3087 = vdwg.mxu0
  %3088 = vmatpush.msra.mxu0 %v2959
  %3089 = vmatpush.msra.mxu0 %v2955
  %3090 = vmatpush.msra.mxu0 %v2951
  %3091 = vmatpush.msra.mxu0 %v2947
  %3092 = vmatpush.msra.mxu0 %v2943
  %3093 = vmatpush.msra.mxu0 %v2939
  %3094 = vmatpush.msra.mxu0 %v2935
  %3095 = vmatpush.msra.mxu0 %v2931
  %3096 = vmatpush.msra.mxu0 %v2927
  %3097 = vmatpush.msra.mxu0 %v2923
  %3098 = vmatpush.msra.mxu0 %v2919
  %3099 = vmatpush.msra.mxu0 %v2915
  %3100 = vmatpush.msra.mxu0 %v2911
  %3101 = vmatpush.msra.mxu0 %v2907
  %3102 = vmatpush.msra.mxu0 %v2903
  %3103 = vmatpush.msra.mxu0 %v2899
  %3104 = vmatmul.f32.gmra.mxu0 0.0
  %v3105 = vpop.f32.mrf.mxu0
  %v3106 = vadd.f32 0.0, %v3105
  %3107 = vdwg.mxu0
  %v3108 = vadd.f32 %v3024, %v3046
  %v3109 = vadd.f32 %v3025, %v3066
  %v3110 = vadd.f32 %v3026, %v3086
  %v3111 = vadd.f32 %v3027, %v3106
  %v3112 = vxor.u32 %v3108, 2147483648
  %v3113 = vmul.f32 %v3112, 1.442695
  %v3114 = vpow.pop %v3113
  %v3115 = vadd.f32 %v3114, 1.0
  %v3116 = vrcp.pop %v3115
  %v3117 = vmul.f32 %v3115, %v3116
  %v3118 = vsub.f32 1.0, %v3117
  %v3119 = vmul.f32 %v3116, %v3118
  %v3120 = vadd.f32 %v3116, %v3119
  %vm3121 = vweird.f32 %v3115
  %vm3122 = vweird.f32 %v3116
  %vm3123 = vmor %vm3121, %vm3122
  %v3124 = vsel %vm3123, %v3116, %v3120
  %v3125 = vand.u32 2147483647, %v3115
  %vm3126 = vcmp.eq.f32.partialorder %v3125, 8.507059e+37
  %v3127 = vand.u32 %v3115, 2147483648
  %v3128 = vor.u32 1.1754944e-38, %v3127
  %v3129 = vsel %vm3126, %v3128, %v3124
  %v3130 = vmul.f32 1.0, %v3129
  %v3131 = vxor.u32 %v3109, 2147483648
  %v3132 = vmul.f32 %v3131, 1.442695
  %v3133 = vpow.pop %v3132
  %v3134 = vadd.f32 %v3133, 1.0
  %v3135 = vrcp.pop %v3134
  %v3136 = vmul.f32 %v3134, %v3135
  %v3137 = vsub.f32 1.0, %v3136
  %v3138 = vmul.f32 %v3135, %v3137
  %v3139 = vadd.f32 %v3135, %v3138
  %vm3140 = vweird.f32 %v3134
  %vm3141 = vweird.f32 %v3135
  %vm3142 = vmor %vm3140, %vm3141
  %v3143 = vsel %vm3142, %v3135, %v3139
  %v3144 = vand.u32 2147483647, %v3134
  %vm3145 = vcmp.eq.f32.partialorder %v3144, 8.507059e+37
  %v3146 = vand.u32 %v3134, 2147483648
  %v3147 = vor.u32 1.1754944e-38, %v3146
  %v3148 = vsel %vm3145, %v3147, %v3143
  %v3149 = vmul.f32 1.0, %v3148
  %v3150 = vtanh.pop %v3110
  %v3151 = vxor.u32 %v3111, 2147483648
  %v3152 = vmul.f32 %v3151, 1.442695
  %v3153 = vpow.pop %v3152
  %v3154 = vadd.f32 %v3153, 1.0
  %v3155 = vrcp.pop %v3154
  %v3156 = vmul.f32 %v3154, %v3155
  %v3157 = vsub.f32 1.0, %v3156
  %v3158 = vmul.f32 %v3155, %v3157
  %v3159 = vadd.f32 %v3155, %v3158
  %vm3160 = vweird.f32 %v3154
  %vm3161 = vweird.f32 %v3155
  %vm3162 = vmor %vm3160, %vm3161
  %v3163 = vsel %vm3162, %v3155, %v3159
  %v3164 = vand.u32 2147483647, %v3154
  %vm3165 = vcmp.eq.f32.partialorder %v3164, 8.507059e+37
  %v3166 = vand.u32 %v3154, 2147483648
  %v3167 = vor.u32 1.1754944e-38, %v3166
  %v3168 = vsel %vm3165, %v3167, %v3163
  %v3169 = vmul.f32 1.0, %v3168
  %v3170 = vmul.f32 %v3149, 0.0
  %v3171 = vmul.f32 %v3130, %v3150
  %v3172 = vadd.f32 %v3170, %v3171
  %v3173 = vtanh.pop %v3172
  %v3174 = vmul.f32 %v3169, %v3173
  %s3175 = scalar_lea.vmem [#allocation3], 224
  %v3176 = vld [vmem:[%s3175] sm:$0xff]
  %v3177 = vld [vmem:[%s3175 + $0x8] sm:$0xff]
  %v3178 = vld [vmem:[%s3175 + $0x10] sm:$0xff]
  %v3179 = vld [vmem:[%s3175 + $0x18] sm:$0xff]
  %3180 = vmatpush.msra.mxu0 %v3020
  %3181 = vmatpush.msra.mxu0 %v3016
  %3182 = vmatpush.msra.mxu0 %v3012
  %3183 = vmatpush.msra.mxu0 %v3008
  %3184 = vmatpush.msra.mxu0 %v3004
  %3185 = vmatpush.msra.mxu0 %v3000
  %3186 = vmatpush.msra.mxu0 %v2996
  %3187 = vmatpush.msra.mxu0 %v2992
  %3188 = vmatpush.msra.mxu0 %v2988
  %3189 = vmatpush.msra.mxu0 %v2984
  %3190 = vmatpush.msra.mxu0 %v2980
  %3191 = vmatpush.msra.mxu0 %v2976
  %3192 = vmatpush.msra.mxu0 %v2972
  %3193 = vmatpush.msra.mxu0 %v2968
  %3194 = vmatpush.msra.mxu0 %v2964
  %3195 = vmatpush.msra.mxu0 %v2960
  %3196 = vmatmul.f32.gmra.mxu0 0.0
  %v3197 = vpop.f32.mrf.mxu0
  %v3198 = vadd.f32 0.0, %v3197
  %3199 = vdwg.mxu0
  %3200 = vmatpush.msra.mxu0 %v3021
  %3201 = vmatpush.msra.mxu0 %v3017
  %3202 = vmatpush.msra.mxu0 %v3013
  %3203 = vmatpush.msra.mxu0 %v3009
  %3204 = vmatpush.msra.mxu0 %v3005
  %3205 = vmatpush.msra.mxu0 %v3001
  %3206 = vmatpush.msra.mxu0 %v2997
  %3207 = vmatpush.msra.mxu0 %v2993
  %3208 = vmatpush.msra.mxu0 %v2989
  %3209 = vmatpush.msra.mxu0 %v2985
  %3210 = vmatpush.msra.mxu0 %v2981
  %3211 = vmatpush.msra.mxu0 %v2977
  %3212 = vmatpush.msra.mxu0 %v2973
  %3213 = vmatpush.msra.mxu0 %v2969
  %3214 = vmatpush.msra.mxu0 %v2965
  %3215 = vmatpush.msra.mxu0 %v2961
  %3216 = vmatmul.f32.gmra.mxu0 0.0
  %v3217 = vpop.f32.mrf.mxu0
  %v3218 = vadd.f32 0.0, %v3217
  %3219 = vdwg.mxu0
  %3220 = vmatpush.msra.mxu0 %v3022
  %3221 = vmatpush.msra.mxu0 %v3018
  %3222 = vmatpush.msra.mxu0 %v3014
  %3223 = vmatpush.msra.mxu0 %v3010
  %3224 = vmatpush.msra.mxu0 %v3006
  %3225 = vmatpush.msra.mxu0 %v3002
  %3226 = vmatpush.msra.mxu0 %v2998
  %3227 = vmatpush.msra.mxu0 %v2994
  %3228 = vmatpush.msra.mxu0 %v2990
  %3229 = vmatpush.msra.mxu0 %v2986
  %3230 = vmatpush.msra.mxu0 %v2982
  %3231 = vmatpush.msra.mxu0 %v2978
  %3232 = vmatpush.msra.mxu0 %v2974
  %3233 = vmatpush.msra.mxu0 %v2970
  %3234 = vmatpush.msra.mxu0 %v2966
  %3235 = vmatpush.msra.mxu0 %v2962
  %3236 = vmatmul.f32.gmra.mxu0 0.0
  %v3237 = vpop.f32.mrf.mxu0
  %v3238 = vadd.f32 0.0, %v3237
  %3239 = vdwg.mxu0
  %3240 = vmatpush.msra.mxu0 %v3023
  %3241 = vmatpush.msra.mxu0 %v3019
  %3242 = vmatpush.msra.mxu0 %v3015
  %3243 = vmatpush.msra.mxu0 %v3011
  %3244 = vmatpush.msra.mxu0 %v3007
  %3245 = vmatpush.msra.mxu0 %v3003
  %3246 = vmatpush.msra.mxu0 %v2999
  %3247 = vmatpush.msra.mxu0 %v2995
  %3248 = vmatpush.msra.mxu0 %v2991
  %3249 = vmatpush.msra.mxu0 %v2987
  %3250 = vmatpush.msra.mxu0 %v2983
  %3251 = vmatpush.msra.mxu0 %v2979
  %3252 = vmatpush.msra.mxu0 %v2975
  %3253 = vmatpush.msra.mxu0 %v2971
  %3254 = vmatpush.msra.mxu0 %v2967
  %3255 = vmatpush.msra.mxu0 %v2963
  %3256 = vmatmul.f32.gmra.mxu0 0.0
  %v3257 = vpop.f32.mrf.mxu0
  %v3258 = vadd.f32 0.0, %v3257
  %3259 = vdwg.mxu0
  %v3260 = vadd.f32 %v3176, %v3198
  %v3261 = vadd.f32 %v3177, %v3218
  %v3262 = vadd.f32 %v3178, %v3238
  %v3263 = vadd.f32 %v3179, %v3258
  %v3264 = vxor.u32 %v3260, 2147483648
  %v3265 = vmul.f32 %v3264, 1.442695
  %v3266 = vpow.pop %v3265
  %v3267 = vadd.f32 %v3266, 1.0
  %v3268 = vrcp.pop %v3267
  %v3269 = vmul.f32 %v3267, %v3268
  %v3270 = vsub.f32 1.0, %v3269
  %v3271 = vmul.f32 %v3268, %v3270
  %v3272 = vadd.f32 %v3268, %v3271
  %vm3273 = vweird.f32 %v3267
  %vm3274 = vweird.f32 %v3268
  %vm3275 = vmor %vm3273, %vm3274
  %v3276 = vsel %vm3275, %v3268, %v3272
  %v3277 = vand.u32 2147483647, %v3267
  %vm3278 = vcmp.eq.f32.partialorder %v3277, 8.507059e+37
  %v3279 = vand.u32 %v3267, 2147483648
  %v3280 = vor.u32 1.1754944e-38, %v3279
  %v3281 = vsel %vm3278, %v3280, %v3276
  %v3282 = vmul.f32 1.0, %v3281
  %v3283 = vxor.u32 %v3261, 2147483648
  %v3284 = vmul.f32 %v3283, 1.442695
  %v3285 = vpow.pop %v3284
  %v3286 = vadd.f32 %v3285, 1.0
  %v3287 = vrcp.pop %v3286
  %v3288 = vmul.f32 %v3286, %v3287
  %v3289 = vsub.f32 1.0, %v3288
  %v3290 = vmul.f32 %v3287, %v3289
  %v3291 = vadd.f32 %v3287, %v3290
  %vm3292 = vweird.f32 %v3286
  %vm3293 = vweird.f32 %v3287
  %vm3294 = vmor %vm3292, %vm3293
  %v3295 = vsel %vm3294, %v3287, %v3291
  %v3296 = vand.u32 2147483647, %v3286
  %vm3297 = vcmp.eq.f32.partialorder %v3296, 8.507059e+37
  %v3298 = vand.u32 %v3286, 2147483648
  %v3299 = vor.u32 1.1754944e-38, %v3298
  %v3300 = vsel %vm3297, %v3299, %v3295
  %v3301 = vmul.f32 1.0, %v3300
  %v3302 = vtanh.pop %v3262
  %v3303 = vxor.u32 %v3263, 2147483648
  %v3304 = vmul.f32 %v3303, 1.442695
  %v3305 = vpow.pop %v3304
  %v3306 = vadd.f32 %v3305, 1.0
  %v3307 = vrcp.pop %v3306
  %v3308 = vmul.f32 %v3306, %v3307
  %v3309 = vsub.f32 1.0, %v3308
  %v3310 = vmul.f32 %v3307, %v3309
  %v3311 = vadd.f32 %v3307, %v3310
  %vm3312 = vweird.f32 %v3306
  %vm3313 = vweird.f32 %v3307
  %vm3314 = vmor %vm3312, %vm3313
  %v3315 = vsel %vm3314, %v3307, %v3311
  %v3316 = vand.u32 2147483647, %v3306
  %vm3317 = vcmp.eq.f32.partialorder %v3316, 8.507059e+37
  %v3318 = vand.u32 %v3306, 2147483648
  %v3319 = vor.u32 1.1754944e-38, %v3318
  %v3320 = vsel %vm3317, %v3319, %v3315
  %v3321 = vmul.f32 1.0, %v3320
  %v3322 = vmul.f32 %v3301, 0.0
  %v3323 = vmul.f32 %v3282, %v3302
  %v3324 = vadd.f32 %v3322, %v3323
  %v3325 = vtanh.pop %v3324
  %v3326 = vmul.f32 %v3321, %v3325
  %vm3327 = vcmp.gt.s32.totalorder %v2895, 0
  %vm3328 = vcmp.gt.s32.totalorder %v2895, 7
  %v3329 = vsel %vm3327, 1, 0
  %3330 = vset.pattern.permute.xlu0 0
  %3331 = vperm.xlu0 %3330, %v3329
  %v3332 = vpop.permute.xlu0 %3331
  %vm3333 = vcmp.eq.s32.totalorder %v3332, 1
  %v3334 = vsel %vm3333, %v3174, 0.0
  %v3335 = vsel %vm3333, %v3172, 0.0
  %v3336 = vsel %vm3328, 1, 0
  %3337 = vset.pattern.permute.xlu0 0
  %3338 = vperm.xlu0 %3337, %v3336
  %v3339 = vpop.permute.xlu0 %3338
  %vm3340 = vcmp.eq.s32.totalorder %v3339, 1
  %v3341 = vsel %vm3340, %v3326, 0.0
  %v3342 = vsel %vm3340, %v3324, 0.0
  %s3343 = scalar_lea.vmem [#allocation2], 32
  %v3344 = vld [vmem:[%s3343] sm:$0xff]
  %v3345 = vld [vmem:[%s3343 + $0x8] sm:$0xff]
  %v3346 = vld [vmem:[%s3343 + $0x10] sm:$0xff]
  %v3347 = vld [vmem:[%s3343 + $0x18] sm:$0xff]
  %3348 = vmatpush.msra.mxu0 %v2956
  %3349 = vmatpush.msra.mxu0 %v2952
  %3350 = vmatpush.msra.mxu0 %v2948
  %3351 = vmatpush.msra.mxu0 %v2944
  %3352 = vmatpush.msra.mxu0 %v2940
  %3353 = vmatpush.msra.mxu0 %v2936
  %3354 = vmatpush.msra.mxu0 %v2932
  %3355 = vmatpush.msra.mxu0 %v2928
  %3356 = vmatpush.msra.mxu0 %v2924
  %3357 = vmatpush.msra.mxu0 %v2920
  %3358 = vmatpush.msra.mxu0 %v2916
  %3359 = vmatpush.msra.mxu0 %v2912
  %3360 = vmatpush.msra.mxu0 %v2908
  %3361 = vmatpush.msra.mxu0 %v2904
  %3362 = vmatpush.msra.mxu0 %v2900
  %3363 = vmatpush.msra.mxu0 %v2896
  %3364 = vmatmul.f32.gmra.mxu0 %v3334
  %v3365 = vpop.f32.mrf.mxu0
  %v3366 = vadd.f32 0.0, %v3365
  %3367 = vdwg.mxu0
  %3368 = vmatpush.msra.mxu0 %v2957
  %3369 = vmatpush.msra.mxu0 %v2953
  %3370 = vmatpush.msra.mxu0 %v2949
  %3371 = vmatpush.msra.mxu0 %v2945
  %3372 = vmatpush.msra.mxu0 %v2941
  %3373 = vmatpush.msra.mxu0 %v2937
  %3374 = vmatpush.msra.mxu0 %v2933
  %3375 = vmatpush.msra.mxu0 %v2929
  %3376 = vmatpush.msra.mxu0 %v2925
  %3377 = vmatpush.msra.mxu0 %v2921
  %3378 = vmatpush.msra.mxu0 %v2917
  %3379 = vmatpush.msra.mxu0 %v2913
  %3380 = vmatpush.msra.mxu0 %v2909
  %3381 = vmatpush.msra.mxu0 %v2905
  %3382 = vmatpush.msra.mxu0 %v2901
  %3383 = vmatpush.msra.mxu0 %v2897
  %3384 = vmatmul.f32.gmra.mxu0 %v3334
  %v3385 = vpop.f32.mrf.mxu0
  %v3386 = vadd.f32 0.0, %v3385
  %3387 = vdwg.mxu0
  %3388 = vmatpush.msra.mxu0 %v2958
  %3389 = vmatpush.msra.mxu0 %v2954
  %3390 = vmatpush.msra.mxu0 %v2950
  %3391 = vmatpush.msra.mxu0 %v2946
  %3392 = vmatpush.msra.mxu0 %v2942
  %3393 = vmatpush.msra.mxu0 %v2938
  %3394 = vmatpush.msra.mxu0 %v2934
  %3395 = vmatpush.msra.mxu0 %v2930
  %3396 = vmatpush.msra.mxu0 %v2926
  %3397 = vmatpush.msra.mxu0 %v2922
  %3398 = vmatpush.msra.mxu0 %v2918
  %3399 = vmatpush.msra.mxu0 %v2914
  %3400 = vmatpush.msra.mxu0 %v2910
  %3401 = vmatpush.msra.mxu0 %v2906
  %3402 = vmatpush.msra.mxu0 %v2902
  %3403 = vmatpush.msra.mxu0 %v2898
  %3404 = vmatmul.f32.gmra.mxu0 %v3334
  %v3405 = vpop.f32.mrf.mxu0
  %v3406 = vadd.f32 0.0, %v3405
  %3407 = vdwg.mxu0
  %3408 = vmatpush.msra.mxu0 %v2959
  %3409 = vmatpush.msra.mxu0 %v2955
  %3410 = vmatpush.msra.mxu0 %v2951
  %3411 = vmatpush.msra.mxu0 %v2947
  %3412 = vmatpush.msra.mxu0 %v2943
  %3413 = vmatpush.msra.mxu0 %v2939
  %3414 = vmatpush.msra.mxu0 %v2935
  %3415 = vmatpush.msra.mxu0 %v2931
  %3416 = vmatpush.msra.mxu0 %v2927
  %3417 = vmatpush.msra.mxu0 %v2923
  %3418 = vmatpush.msra.mxu0 %v2919
  %3419 = vmatpush.msra.mxu0 %v2915
  %3420 = vmatpush.msra.mxu0 %v2911
  %3421 = vmatpush.msra.mxu0 %v2907
  %3422 = vmatpush.msra.mxu0 %v2903
  %3423 = vmatpush.msra.mxu0 %v2899
  %3424 = vmatmul.f32.gmra.mxu0 %v3334
  %v3425 = vpop.f32.mrf.mxu0
  %v3426 = vadd.f32 0.0, %v3425
  %3427 = vdwg.mxu0
  %v3428 = vadd.f32 %v3344, %v3366
  %v3429 = vadd.f32 %v3345, %v3386
  %v3430 = vadd.f32 %v3346, %v3406
  %v3431 = vadd.f32 %v3347, %v3426
  %v3432 = vxor.u32 %v3428, 2147483648
  %v3433 = vmul.f32 %v3432, 1.442695
  %v3434 = vpow.pop %v3433
  %v3435 = vadd.f32 %v3434, 1.0
  %v3436 = vrcp.pop %v3435
  %v3437 = vmul.f32 %v3435, %v3436
  %v3438 = vsub.f32 1.0, %v3437
  %v3439 = vmul.f32 %v3436, %v3438
  %v3440 = vadd.f32 %v3436, %v3439
  %vm3441 = vweird.f32 %v3435
  %vm3442 = vweird.f32 %v3436
  %vm3443 = vmor %vm3441, %vm3442
  %v3444 = vsel %vm3443, %v3436, %v3440
  %v3445 = vand.u32 2147483647, %v3435
  %vm3446 = vcmp.eq.f32.partialorder %v3445, 8.507059e+37
  %v3447 = vand.u32 %v3435, 2147483648
  %v3448 = vor.u32 1.1754944e-38, %v3447
  %v3449 = vsel %vm3446, %v3448, %v3444
  %v3450 = vmul.f32 1.0, %v3449
  %v3451 = vxor.u32 %v3429, 2147483648
  %v3452 = vmul.f32 %v3451, 1.442695
  %v3453 = vpow.pop %v3452
  %v3454 = vadd.f32 %v3453, 1.0
  %v3455 = vrcp.pop %v3454
  %v3456 = vmul.f32 %v3454, %v3455
  %v3457 = vsub.f32 1.0, %v3456
  %v3458 = vmul.f32 %v3455, %v3457
  %v3459 = vadd.f32 %v3455, %v3458
  %vm3460 = vweird.f32 %v3454
  %vm3461 = vweird.f32 %v3455
  %vm3462 = vmor %vm3460, %vm3461
  %v3463 = vsel %vm3462, %v3455, %v3459
  %v3464 = vand.u32 2147483647, %v3454
  %vm3465 = vcmp.eq.f32.partialorder %v3464, 8.507059e+37
  %v3466 = vand.u32 %v3454, 2147483648
  %v3467 = vor.u32 1.1754944e-38, %v3466
  %v3468 = vsel %vm3465, %v3467, %v3463
  %v3469 = vmul.f32 1.0, %v3468
  %v3470 = vtanh.pop %v3430
  %v3471 = vxor.u32 %v3431, 2147483648
  %v3472 = vmul.f32 %v3471, 1.442695
  %v3473 = vpow.pop %v3472
  %v3474 = vadd.f32 %v3473, 1.0
  %v3475 = vrcp.pop %v3474
  %v3476 = vmul.f32 %v3474, %v3475
  %v3477 = vsub.f32 1.0, %v3476
  %v3478 = vmul.f32 %v3475, %v3477
  %v3479 = vadd.f32 %v3475, %v3478
  %vm3480 = vweird.f32 %v3474
  %vm3481 = vweird.f32 %v3475
  %vm3482 = vmor %vm3480, %vm3481
  %v3483 = vsel %vm3482, %v3475, %v3479
  %v3484 = vand.u32 2147483647, %v3474
  %vm3485 = vcmp.eq.f32.partialorder %v3484, 8.507059e+37
  %v3486 = vand.u32 %v3474, 2147483648
  %v3487 = vor.u32 1.1754944e-38, %v3486
  %v3488 = vsel %vm3485, %v3487, %v3483
  %v3489 = vmul.f32 1.0, %v3488
  %v3490 = vmul.f32 %v3469, %v3335
  %v3491 = vmul.f32 %v3450, %v3470
  %v3492 = vadd.f32 %v3490, %v3491
  %v3493 = vtanh.pop %v3492
  %v3494 = vmul.f32 %v3489, %v3493
  %s3495 = scalar_lea.vmem [#allocation3], 192
  %v3496 = vld [vmem:[%s3495] sm:$0xff]
  %v3497 = vld [vmem:[%s3495 + $0x8] sm:$0xff]
  %v3498 = vld [vmem:[%s3495 + $0x10] sm:$0xff]
  %v3499 = vld [vmem:[%s3495 + $0x18] sm:$0xff]
  %3500 = vmatpush.msra.mxu0 %v3020
  %3501 = vmatpush.msra.mxu0 %v3016
  %3502 = vmatpush.msra.mxu0 %v3012
  %3503 = vmatpush.msra.mxu0 %v3008
  %3504 = vmatpush.msra.mxu0 %v3004
  %3505 = vmatpush.msra.mxu0 %v3000
  %3506 = vmatpush.msra.mxu0 %v2996
  %3507 = vmatpush.msra.mxu0 %v2992
  %3508 = vmatpush.msra.mxu0 %v2988
  %3509 = vmatpush.msra.mxu0 %v2984
  %3510 = vmatpush.msra.mxu0 %v2980
  %3511 = vmatpush.msra.mxu0 %v2976
  %3512 = vmatpush.msra.mxu0 %v2972
  %3513 = vmatpush.msra.mxu0 %v2968
  %3514 = vmatpush.msra.mxu0 %v2964
  %3515 = vmatpush.msra.mxu0 %v2960
  %3516 = vmatmul.f32.gmra.mxu0 %v3341
  %v3517 = vpop.f32.mrf.mxu0
  %v3518 = vadd.f32 0.0, %v3517
  %3519 = vdwg.mxu0
  %3520 = vmatpush.msra.mxu0 %v3021
  %3521 = vmatpush.msra.mxu0 %v3017
  %3522 = vmatpush.msra.mxu0 %v3013
  %3523 = vmatpush.msra.mxu0 %v3009
  %3524 = vmatpush.msra.mxu0 %v3005
  %3525 = vmatpush.msra.mxu0 %v3001
  %3526 = vmatpush.msra.mxu0 %v2997
  %3527 = vmatpush.msra.mxu0 %v2993
  %3528 = vmatpush.msra.mxu0 %v2989
  %3529 = vmatpush.msra.mxu0 %v2985
  %3530 = vmatpush.msra.mxu0 %v2981
  %3531 = vmatpush.msra.mxu0 %v2977
  %3532 = vmatpush.msra.mxu0 %v2973
  %3533 = vmatpush.msra.mxu0 %v2969
  %3534 = vmatpush.msra.mxu0 %v2965
  %3535 = vmatpush.msra.mxu0 %v2961
  %3536 = vmatmul.f32.gmra.mxu0 %v3341
  %v3537 = vpop.f32.mrf.mxu0
  %v3538 = vadd.f32 0.0, %v3537
  %3539 = vdwg.mxu0
  %3540 = vmatpush.msra.mxu0 %v3022
  %3541 = vmatpush.msra.mxu0 %v3018
  %3542 = vmatpush.msra.mxu0 %v3014
  %3543 = vmatpush.msra.mxu0 %v3010
  %3544 = vmatpush.msra.mxu0 %v3006
  %3545 = vmatpush.msra.mxu0 %v3002
  %3546 = vmatpush.msra.mxu0 %v2998
  %3547 = vmatpush.msra.mxu0 %v2994
  %3548 = vmatpush.msra.mxu0 %v2990
  %3549 = vmatpush.msra.mxu0 %v2986
  %3550 = vmatpush.msra.mxu0 %v2982
  %3551 = vmatpush.msra.mxu0 %v2978
  %3552 = vmatpush.msra.mxu0 %v2974
  %3553 = vmatpush.msra.mxu0 %v2970
  %3554 = vmatpush.msra.mxu0 %v2966
  %3555 = vmatpush.msra.mxu0 %v2962
  %3556 = vmatmul.f32.gmra.mxu0 %v3341
  %v3557 = vpop.f32.mrf.mxu0
  %v3558 = vadd.f32 0.0, %v3557
  %3559 = vdwg.mxu0
  %3560 = vmatpush.msra.mxu0 %v3023
  %3561 = vmatpush.msra.mxu0 %v3019
  %3562 = vmatpush.msra.mxu0 %v3015
  %3563 = vmatpush.msra.mxu0 %v3011
  %3564 = vmatpush.msra.mxu0 %v3007
  %3565 = vmatpush.msra.mxu0 %v3003
  %3566 = vmatpush.msra.mxu0 %v2999
  %3567 = vmatpush.msra.mxu0 %v2995
  %3568 = vmatpush.msra.mxu0 %v2991
  %3569 = vmatpush.msra.mxu0 %v2987
  %3570 = vmatpush.msra.mxu0 %v2983
  %3571 = vmatpush.msra.mxu0 %v2979
  %3572 = vmatpush.msra.mxu0 %v2975
  %3573 = vmatpush.msra.mxu0 %v2971
  %3574 = vmatpush.msra.mxu0 %v2967
  %3575 = vmatpush.msra.mxu0 %v2963
  %3576 = vmatmul.f32.gmra.mxu0 %v3341
  %v3577 = vpop.f32.mrf.mxu0
  %v3578 = vadd.f32 0.0, %v3577
  %3579 = vdwg.mxu0
  %v3580 = vadd.f32 %v3496, %v3518
  %v3581 = vadd.f32 %v3497, %v3538
  %v3582 = vadd.f32 %v3498, %v3558
  %v3583 = vadd.f32 %v3499, %v3578
  %v3584 = vxor.u32 %v3580, 2147483648
  %v3585 = vmul.f32 %v3584, 1.442695
  %v3586 = vpow.pop %v3585
  %v3587 = vadd.f32 %v3586, 1.0
  %v3588 = vrcp.pop %v3587
  %v3589 = vmul.f32 %v3587, %v3588
  %v3590 = vsub.f32 1.0, %v3589
  %v3591 = vmul.f32 %v3588, %v3590
  %v3592 = vadd.f32 %v3588, %v3591
  %vm3593 = vweird.f32 %v3587
  %vm3594 = vweird.f32 %v3588
  %vm3595 = vmor %vm3593, %vm3594
  %v3596 = vsel %vm3595, %v3588, %v3592
  %v3597 = vand.u32 2147483647, %v3587
  %vm3598 = vcmp.eq.f32.partialorder %v3597, 8.507059e+37
  %v3599 = vand.u32 %v3587, 2147483648
  %v3600 = vor.u32 1.1754944e-38, %v3599
  %v3601 = vsel %vm3598, %v3600, %v3596
  %v3602 = vmul.f32 1.0, %v3601
  %v3603 = vxor.u32 %v3581, 2147483648
  %v3604 = vmul.f32 %v3603, 1.442695
  %v3605 = vpow.pop %v3604
  %v3606 = vadd.f32 %v3605, 1.0
  %v3607 = vrcp.pop %v3606
  %v3608 = vmul.f32 %v3606, %v3607
  %v3609 = vsub.f32 1.0, %v3608
  %v3610 = vmul.f32 %v3607, %v3609
  %v3611 = vadd.f32 %v3607, %v3610
  %vm3612 = vweird.f32 %v3606
  %vm3613 = vweird.f32 %v3607
  %vm3614 = vmor %vm3612, %vm3613
  %v3615 = vsel %vm3614, %v3607, %v3611
  %v3616 = vand.u32 2147483647, %v3606
  %vm3617 = vcmp.eq.f32.partialorder %v3616, 8.507059e+37
  %v3618 = vand.u32 %v3606, 2147483648
  %v3619 = vor.u32 1.1754944e-38, %v3618
  %v3620 = vsel %vm3617, %v3619, %v3615
  %v3621 = vmul.f32 1.0, %v3620
  %v3622 = vtanh.pop %v3582
  %v3623 = vxor.u32 %v3583, 2147483648
  %v3624 = vmul.f32 %v3623, 1.442695
  %v3625 = vpow.pop %v3624
  %v3626 = vadd.f32 %v3625, 1.0
  %v3627 = vrcp.pop %v3626
  %v3628 = vmul.f32 %v3626, %v3627
  %v3629 = vsub.f32 1.0, %v3628
  %v3630 = vmul.f32 %v3627, %v3629
  %v3631 = vadd.f32 %v3627, %v3630
  %vm3632 = vweird.f32 %v3626
  %vm3633 = vweird.f32 %v3627
  %vm3634 = vmor %vm3632, %vm3633
  %v3635 = vsel %vm3634, %v3627, %v3631
  %v3636 = vand.u32 2147483647, %v3626
  %vm3637 = vcmp.eq.f32.partialorder %v3636, 8.507059e+37
  %v3638 = vand.u32 %v3626, 2147483648
  %v3639 = vor.u32 1.1754944e-38, %v3638
  %v3640 = vsel %vm3637, %v3639, %v3635
  %v3641 = vmul.f32 1.0, %v3640
  %v3642 = vmul.f32 %v3621, %v3342
  %v3643 = vmul.f32 %v3602, %v3622
  %v3644 = vadd.f32 %v3642, %v3643
  %v3645 = vtanh.pop %v3644
  %v3646 = vmul.f32 %v3641, %v3645
  %vm3647 = vcmp.gt.s32.totalorder %v2895, 1
  %vm3648 = vcmp.gt.s32.totalorder %v2895, 6
  %v3649 = vsel %vm3647, 1, 0
  %3650 = vset.pattern.permute.xlu0 0
  %3651 = vperm.xlu0 %3650, %v3649
  %v3652 = vpop.permute.xlu0 %3651
  %vm3653 = vcmp.eq.s32.totalorder %v3652, 1
  %v3654 = vsel %vm3653, %v3494, %v3334
  %v3655 = vsel %vm3653, %v3492, %v3335
  %v3656 = vsel %vm3648, 1, 0
  %3657 = vset.pattern.permute.xlu0 0
  %3658 = vperm.xlu0 %3657, %v3656
  %v3659 = vpop.permute.xlu0 %3658
  %vm3660 = vcmp.eq.s32.totalorder %v3659, 1
  %v3661 = vsel %vm3660, %v3646, %v3341
  %v3662 = vsel %vm3660, %v3644, %v3342
  %s3663 = scalar_lea.vmem [#allocation2], 64
  %v3664 = vld [vmem:[%s3663] sm:$0xff]
  %v3665 = vld [vmem:[%s3663 + $0x8] sm:$0xff]
  %v3666 = vld [vmem:[%s3663 + $0x10] sm:$0xff]
  %v3667 = vld [vmem:[%s3663 + $0x18] sm:$0xff]
  %3668 = vmatpush.msra.mxu0 %v2956
  %3669 = vmatpush.msra.mxu0 %v2952
  %3670 = vmatpush.msra.mxu0 %v2948
  %3671 = vmatpush.msra.mxu0 %v2944
  %3672 = vmatpush.msra.mxu0 %v2940
  %3673 = vmatpush.msra.mxu0 %v2936
  %3674 = vmatpush.msra.mxu0 %v2932
  %3675 = vmatpush.msra.mxu0 %v2928
  %3676 = vmatpush.msra.mxu0 %v2924
  %3677 = vmatpush.msra.mxu0 %v2920
  %3678 = vmatpush.msra.mxu0 %v2916
  %3679 = vmatpush.msra.mxu0 %v2912
  %3680 = vmatpush.msra.mxu0 %v2908
  %3681 = vmatpush.msra.mxu0 %v2904
  %3682 = vmatpush.msra.mxu0 %v2900
  %3683 = vmatpush.msra.mxu0 %v2896
  %3684 = vmatmul.f32.gmra.mxu0 %v3654
  %v3685 = vpop.f32.mrf.mxu0
  %v3686 = vadd.f32 0.0, %v3685
  %3687 = vdwg.mxu0
  %3688 = vmatpush.msra.mxu0 %v2957
  %3689 = vmatpush.msra.mxu0 %v2953
  %3690 = vmatpush.msra.mxu0 %v2949
  %3691 = vmatpush.msra.mxu0 %v2945
  %3692 = vmatpush.msra.mxu0 %v2941
  %3693 = vmatpush.msra.mxu0 %v2937
  %3694 = vmatpush.msra.mxu0 %v2933
  %3695 = vmatpush.msra.mxu0 %v2929
  %3696 = vmatpush.msra.mxu0 %v2925
  %3697 = vmatpush.msra.mxu0 %v2921
  %3698 = vmatpush.msra.mxu0 %v2917
  %3699 = vmatpush.msra.mxu0 %v2913
  %3700 = vmatpush.msra.mxu0 %v2909
  %3701 = vmatpush.msra.mxu0 %v2905
  %3702 = vmatpush.msra.mxu0 %v2901
  %3703 = vmatpush.msra.mxu0 %v2897
  %3704 = vmatmul.f32.gmra.mxu0 %v3654
  %v3705 = vpop.f32.mrf.mxu0
  %v3706 = vadd.f32 0.0, %v3705
  %3707 = vdwg.mxu0
  %3708 = vmatpush.msra.mxu0 %v2958
  %3709 = vmatpush.msra.mxu0 %v2954
  %3710 = vmatpush.msra.mxu0 %v2950
  %3711 = vmatpush.msra.mxu0 %v2946
  %3712 = vmatpush.msra.mxu0 %v2942
  %3713 = vmatpush.msra.mxu0 %v2938
  %3714 = vmatpush.msra.mxu0 %v2934
  %3715 = vmatpush.msra.mxu0 %v2930
  %3716 = vmatpush.msra.mxu0 %v2926
  %3717 = vmatpush.msra.mxu0 %v2922
  %3718 = vmatpush.msra.mxu0 %v2918
  %3719 = vmatpush.msra.mxu0 %v2914
  %3720 = vmatpush.msra.mxu0 %v2910
  %3721 = vmatpush.msra.mxu0 %v2906
  %3722 = vmatpush.msra.mxu0 %v2902
  %3723 = vmatpush.msra.mxu0 %v2898
  %3724 = vmatmul.f32.gmra.mxu0 %v3654
  %v3725 = vpop.f32.mrf.mxu0
  %v3726 = vadd.f32 0.0, %v3725
  %3727 = vdwg.mxu0
  %3728 = vmatpush.msra.mxu0 %v2959
  %3729 = vmatpush.msra.mxu0 %v2955
  %3730 = vmatpush.msra.mxu0 %v2951
  %3731 = vmatpush.msra.mxu0 %v2947
  %3732 = vmatpush.msra.mxu0 %v2943
  %3733 = vmatpush.msra.mxu0 %v2939
  %3734 = vmatpush.msra.mxu0 %v2935
  %3735 = vmatpush.msra.mxu0 %v2931
  %3736 = vmatpush.msra.mxu0 %v2927
  %3737 = vmatpush.msra.mxu0 %v2923
  %3738 = vmatpush.msra.mxu0 %v2919
  %3739 = vmatpush.msra.mxu0 %v2915
  %3740 = vmatpush.msra.mxu0 %v2911
  %3741 = vmatpush.msra.mxu0 %v2907
  %3742 = vmatpush.msra.mxu0 %v2903
  %3743 = vmatpush.msra.mxu0 %v2899
  %3744 = vmatmul.f32.gmra.mxu0 %v3654
  %v3745 = vpop.f32.mrf.mxu0
  %v3746 = vadd.f32 0.0, %v3745
  %3747 = vdwg.mxu0
  %v3748 = vadd.f32 %v3664, %v3686
  %v3749 = vadd.f32 %v3665, %v3706
  %v3750 = vadd.f32 %v3666, %v3726
  %v3751 = vadd.f32 %v3667, %v3746
  %v3752 = vxor.u32 %v3748, 2147483648
  %v3753 = vmul.f32 %v3752, 1.442695
  %v3754 = vpow.pop %v3753
  %v3755 = vadd.f32 %v3754, 1.0
  %v3756 = vrcp.pop %v3755
  %v3757 = vmul.f32 %v3755, %v3756
  %v3758 = vsub.f32 1.0, %v3757
  %v3759 = vmul.f32 %v3756, %v3758
  %v3760 = vadd.f32 %v3756, %v3759
  %vm3761 = vweird.f32 %v3755
  %vm3762 = vweird.f32 %v3756
  %vm3763 = vmor %vm3761, %vm3762
  %v3764 = vsel %vm3763, %v3756, %v3760
  %v3765 = vand.u32 2147483647, %v3755
  %vm3766 = vcmp.eq.f32.partialorder %v3765, 8.507059e+37
  %v3767 = vand.u32 %v3755, 2147483648
  %v3768 = vor.u32 1.1754944e-38, %v3767
  %v3769 = vsel %vm3766, %v3768, %v3764
  %v3770 = vmul.f32 1.0, %v3769
  %v3771 = vxor.u32 %v3749, 2147483648
  %v3772 = vmul.f32 %v3771, 1.442695
  %v3773 = vpow.pop %v3772
  %v3774 = vadd.f32 %v3773, 1.0
  %v3775 = vrcp.pop %v3774
  %v3776 = vmul.f32 %v3774, %v3775
  %v3777 = vsub.f32 1.0, %v3776
  %v3778 = vmul.f32 %v3775, %v3777
  %v3779 = vadd.f32 %v3775, %v3778
  %vm3780 = vweird.f32 %v3774
  %vm3781 = vweird.f32 %v3775
  %vm3782 = vmor %vm3780, %vm3781
  %v3783 = vsel %vm3782, %v3775, %v3779
  %v3784 = vand.u32 2147483647, %v3774
  %vm3785 = vcmp.eq.f32.partialorder %v3784, 8.507059e+37
  %v3786 = vand.u32 %v3774, 2147483648
  %v3787 = vor.u32 1.1754944e-38, %v3786
  %v3788 = vsel %vm3785, %v3787, %v3783
  %v3789 = vmul.f32 1.0, %v3788
  %v3790 = vtanh.pop %v3750
  %v3791 = vxor.u32 %v3751, 2147483648
  %v3792 = vmul.f32 %v3791, 1.442695
  %v3793 = vpow.pop %v3792
  %v3794 = vadd.f32 %v3793, 1.0
  %v3795 = vrcp.pop %v3794
  %v3796 = vmul.f32 %v3794, %v3795
  %v3797 = vsub.f32 1.0, %v3796
  %v3798 = vmul.f32 %v3795, %v3797
  %v3799 = vadd.f32 %v3795, %v3798
  %vm3800 = vweird.f32 %v3794
  %vm3801 = vweird.f32 %v3795
  %vm3802 = vmor %vm3800, %vm3801
  %v3803 = vsel %vm3802, %v3795, %v3799
  %v3804 = vand.u32 2147483647, %v3794
  %vm3805 = vcmp.eq.f32.partialorder %v3804, 8.507059e+37
  %v3806 = vand.u32 %v3794, 2147483648
  %v3807 = vor.u32 1.1754944e-38, %v3806
  %v3808 = vsel %vm3805, %v3807, %v3803
  %v3809 = vmul.f32 1.0, %v3808
  %v3810 = vmul.f32 %v3789, %v3655
  %v3811 = vmul.f32 %v3770, %v3790
  %v3812 = vadd.f32 %v3810, %v3811
  %v3813 = vtanh.pop %v3812
  %v3814 = vmul.f32 %v3809, %v3813
  %s3815 = scalar_lea.vmem [#allocation3], 160
  %v3816 = vld [vmem:[%s3815] sm:$0xff]
  %v3817 = vld [vmem:[%s3815 + $0x8] sm:$0xff]
  %v3818 = vld [vmem:[%s3815 + $0x10] sm:$0xff]
  %v3819 = vld [vmem:[%s3815 + $0x18] sm:$0xff]
  %3820 = vmatpush.msra.mxu0 %v3020
  %3821 = vmatpush.msra.mxu0 %v3016
  %3822 = vmatpush.msra.mxu0 %v3012
  %3823 = vmatpush.msra.mxu0 %v3008
  %3824 = vmatpush.msra.mxu0 %v3004
  %3825 = vmatpush.msra.mxu0 %v3000
  %3826 = vmatpush.msra.mxu0 %v2996
  %3827 = vmatpush.msra.mxu0 %v2992
  %3828 = vmatpush.msra.mxu0 %v2988
  %3829 = vmatpush.msra.mxu0 %v2984
  %3830 = vmatpush.msra.mxu0 %v2980
  %3831 = vmatpush.msra.mxu0 %v2976
  %3832 = vmatpush.msra.mxu0 %v2972
  %3833 = vmatpush.msra.mxu0 %v2968
  %3834 = vmatpush.msra.mxu0 %v2964
  %3835 = vmatpush.msra.mxu0 %v2960
  %3836 = vmatmul.f32.gmra.mxu0 %v3661
  %v3837 = vpop.f32.mrf.mxu0
  %v3838 = vadd.f32 0.0, %v3837
  %3839 = vdwg.mxu0
  %3840 = vmatpush.msra.mxu0 %v3021
  %3841 = vmatpush.msra.mxu0 %v3017
  %3842 = vmatpush.msra.mxu0 %v3013
  %3843 = vmatpush.msra.mxu0 %v3009
  %3844 = vmatpush.msra.mxu0 %v3005
  %3845 = vmatpush.msra.mxu0 %v3001
  %3846 = vmatpush.msra.mxu0 %v2997
  %3847 = vmatpush.msra.mxu0 %v2993
  %3848 = vmatpush.msra.mxu0 %v2989
  %3849 = vmatpush.msra.mxu0 %v2985
  %3850 = vmatpush.msra.mxu0 %v2981
  %3851 = vmatpush.msra.mxu0 %v2977
  %3852 = vmatpush.msra.mxu0 %v2973
  %3853 = vmatpush.msra.mxu0 %v2969
  %3854 = vmatpush.msra.mxu0 %v2965
  %3855 = vmatpush.msra.mxu0 %v2961
  %3856 = vmatmul.f32.gmra.mxu0 %v3661
  %v3857 = vpop.f32.mrf.mxu0
  %v3858 = vadd.f32 0.0, %v3857
  %3859 = vdwg.mxu0
  %3860 = vmatpush.msra.mxu0 %v3022
  %3861 = vmatpush.msra.mxu0 %v3018
  %3862 = vmatpush.msra.mxu0 %v3014
  %3863 = vmatpush.msra.mxu0 %v3010
  %3864 = vmatpush.msra.mxu0 %v3006
  %3865 = vmatpush.msra.mxu0 %v3002
  %3866 = vmatpush.msra.mxu0 %v2998
  %3867 = vmatpush.msra.mxu0 %v2994
  %3868 = vmatpush.msra.mxu0 %v2990
  %3869 = vmatpush.msra.mxu0 %v2986
  %3870 = vmatpush.msra.mxu0 %v2982
  %3871 = vmatpush.msra.mxu0 %v2978
  %3872 = vmatpush.msra.mxu0 %v2974
  %3873 = vmatpush.msra.mxu0 %v2970
  %3874 = vmatpush.msra.mxu0 %v2966
  %3875 = vmatpush.msra.mxu0 %v2962
  %3876 = vmatmul.f32.gmra.mxu0 %v3661
  %v3877 = vpop.f32.mrf.mxu0
  %v3878 = vadd.f32 0.0, %v3877
  %3879 = vdwg.mxu0
  %3880 = vmatpush.msra.mxu0 %v3023
  %3881 = vmatpush.msra.mxu0 %v3019
  %3882 = vmatpush.msra.mxu0 %v3015
  %3883 = vmatpush.msra.mxu0 %v3011
  %3884 = vmatpush.msra.mxu0 %v3007
  %3885 = vmatpush.msra.mxu0 %v3003
  %3886 = vmatpush.msra.mxu0 %v2999
  %3887 = vmatpush.msra.mxu0 %v2995
  %3888 = vmatpush.msra.mxu0 %v2991
  %3889 = vmatpush.msra.mxu0 %v2987
  %3890 = vmatpush.msra.mxu0 %v2983
  %3891 = vmatpush.msra.mxu0 %v2979
  %3892 = vmatpush.msra.mxu0 %v2975
  %3893 = vmatpush.msra.mxu0 %v2971
  %3894 = vmatpush.msra.mxu0 %v2967
  %3895 = vmatpush.msra.mxu0 %v2963
  %3896 = vmatmul.f32.gmra.mxu0 %v3661
  %v3897 = vpop.f32.mrf.mxu0
  %v3898 = vadd.f32 0.0, %v3897
  %3899 = vdwg.mxu0
  %v3900 = vadd.f32 %v3816, %v3838
  %v3901 = vadd.f32 %v3817, %v3858
  %v3902 = vadd.f32 %v3818, %v3878
  %v3903 = vadd.f32 %v3819, %v3898
  %v3904 = vxor.u32 %v3900, 2147483648
  %v3905 = vmul.f32 %v3904, 1.442695
  %v3906 = vpow.pop %v3905
  %v3907 = vadd.f32 %v3906, 1.0
  %v3908 = vrcp.pop %v3907
  %v3909 = vmul.f32 %v3907, %v3908
  %v3910 = vsub.f32 1.0, %v3909
  %v3911 = vmul.f32 %v3908, %v3910
  %v3912 = vadd.f32 %v3908, %v3911
  %vm3913 = vweird.f32 %v3907
  %vm3914 = vweird.f32 %v3908
  %vm3915 = vmor %vm3913, %vm3914
  %v3916 = vsel %vm3915, %v3908, %v3912
  %v3917 = vand.u32 2147483647, %v3907
  %vm3918 = vcmp.eq.f32.partialorder %v3917, 8.507059e+37
  %v3919 = vand.u32 %v3907, 2147483648
  %v3920 = vor.u32 1.1754944e-38, %v3919
  %v3921 = vsel %vm3918, %v3920, %v3916
  %v3922 = vmul.f32 1.0, %v3921
  %v3923 = vxor.u32 %v3901, 2147483648
  %v3924 = vmul.f32 %v3923, 1.442695
  %v3925 = vpow.pop %v3924
  %v3926 = vadd.f32 %v3925, 1.0
  %v3927 = vrcp.pop %v3926
  %v3928 = vmul.f32 %v3926, %v3927
  %v3929 = vsub.f32 1.0, %v3928
  %v3930 = vmul.f32 %v3927, %v3929
  %v3931 = vadd.f32 %v3927, %v3930
  %vm3932 = vweird.f32 %v3926
  %vm3933 = vweird.f32 %v3927
  %vm3934 = vmor %vm3932, %vm3933
  %v3935 = vsel %vm3934, %v3927, %v3931
  %v3936 = vand.u32 2147483647, %v3926
  %vm3937 = vcmp.eq.f32.partialorder %v3936, 8.507059e+37
  %v3938 = vand.u32 %v3926, 2147483648
  %v3939 = vor.u32 1.1754944e-38, %v3938
  %v3940 = vsel %vm3937, %v3939, %v3935
  %v3941 = vmul.f32 1.0, %v3940
  %v3942 = vtanh.pop %v3902
  %v3943 = vxor.u32 %v3903, 2147483648
  %v3944 = vmul.f32 %v3943, 1.442695
  %v3945 = vpow.pop %v3944
  %v3946 = vadd.f32 %v3945, 1.0
  %v3947 = vrcp.pop %v3946
  %v3948 = vmul.f32 %v3946, %v3947
  %v3949 = vsub.f32 1.0, %v3948
  %v3950 = vmul.f32 %v3947, %v3949
  %v3951 = vadd.f32 %v3947, %v3950
  %vm3952 = vweird.f32 %v3946
  %vm3953 = vweird.f32 %v3947
  %vm3954 = vmor %vm3952, %vm3953
  %v3955 = vsel %vm3954, %v3947, %v3951
  %v3956 = vand.u32 2147483647, %v3946
  %vm3957 = vcmp.eq.f32.partialorder %v3956, 8.507059e+37
  %v3958 = vand.u32 %v3946, 2147483648
  %v3959 = vor.u32 1.1754944e-38, %v3958
  %v3960 = vsel %vm3957, %v3959, %v3955
  %v3961 = vmul.f32 1.0, %v3960
  %v3962 = vmul.f32 %v3941, %v3662
  %v3963 = vmul.f32 %v3922, %v3942
  %v3964 = vadd.f32 %v3962, %v3963
  %v3965 = vtanh.pop %v3964
  %v3966 = vmul.f32 %v3961, %v3965
  %vm3967 = vcmp.gt.s32.totalorder %v2895, 2
  %vm3968 = vcmp.gt.s32.totalorder %v2895, 5
  %v3969 = vsel %vm3967, 1, 0
  %3970 = vset.pattern.permute.xlu0 0
  %3971 = vperm.xlu0 %3970, %v3969
  %v3972 = vpop.permute.xlu0 %3971
  %vm3973 = vcmp.eq.s32.totalorder %v3972, 1
  %v3974 = vsel %vm3973, %v3814, %v3654
  %v3975 = vsel %vm3973, %v3812, %v3655
  %v3976 = vsel %vm3968, 1, 0
  %3977 = vset.pattern.permute.xlu0 0
  %3978 = vperm.xlu0 %3977, %v3976
  %v3979 = vpop.permute.xlu0 %3978
  %vm3980 = vcmp.eq.s32.totalorder %v3979, 1
  %v3981 = vsel %vm3980, %v3966, %v3661
  %v3982 = vsel %vm3980, %v3964, %v3662
  %s3983 = scalar_lea.vmem [#allocation2], 96
  %v3984 = vld [vmem:[%s3983] sm:$0xff]
  %v3985 = vld [vmem:[%s3983 + $0x8] sm:$0xff]
  %v3986 = vld [vmem:[%s3983 + $0x10] sm:$0xff]
  %v3987 = vld [vmem:[%s3983 + $0x18] sm:$0xff]
  %3988 = vmatpush.msra.mxu0 %v2956
  %3989 = vmatpush.msra.mxu0 %v2952
  %3990 = vmatpush.msra.mxu0 %v2948
  %3991 = vmatpush.msra.mxu0 %v2944
  %3992 = vmatpush.msra.mxu0 %v2940
  %3993 = vmatpush.msra.mxu0 %v2936
  %3994 = vmatpush.msra.mxu0 %v2932
  %3995 = vmatpush.msra.mxu0 %v2928
  %3996 = vmatpush.msra.mxu0 %v2924
  %3997 = vmatpush.msra.mxu0 %v2920
  %3998 = vmatpush.msra.mxu0 %v2916
  %3999 = vmatpush.msra.mxu0 %v2912
  %4000 = vmatpush.msra.mxu0 %v2908
  %4001 = vmatpush.msra.mxu0 %v2904
  %4002 = vmatpush.msra.mxu0 %v2900
  %4003 = vmatpush.msra.mxu0 %v2896
  %4004 = vmatmul.f32.gmra.mxu0 %v3974
  %v4005 = vpop.f32.mrf.mxu0
  %v4006 = vadd.f32 0.0, %v4005
  %4007 = vdwg.mxu0
  %4008 = vmatpush.msra.mxu0 %v2957
  %4009 = vmatpush.msra.mxu0 %v2953
  %4010 = vmatpush.msra.mxu0 %v2949
  %4011 = vmatpush.msra.mxu0 %v2945
  %4012 = vmatpush.msra.mxu0 %v2941
  %4013 = vmatpush.msra.mxu0 %v2937
  %4014 = vmatpush.msra.mxu0 %v2933
  %4015 = vmatpush.msra.mxu0 %v2929
  %4016 = vmatpush.msra.mxu0 %v2925
  %4017 = vmatpush.msra.mxu0 %v2921
  %4018 = vmatpush.msra.mxu0 %v2917
  %4019 = vmatpush.msra.mxu0 %v2913
  %4020 = vmatpush.msra.mxu0 %v2909
  %4021 = vmatpush.msra.mxu0 %v2905
  %4022 = vmatpush.msra.mxu0 %v2901
  %4023 = vmatpush.msra.mxu0 %v2897
  %4024 = vmatmul.f32.gmra.mxu0 %v3974
  %v4025 = vpop.f32.mrf.mxu0
  %v4026 = vadd.f32 0.0, %v4025
  %4027 = vdwg.mxu0
  %4028 = vmatpush.msra.mxu0 %v2958
  %4029 = vmatpush.msra.mxu0 %v2954
  %4030 = vmatpush.msra.mxu0 %v2950
  %4031 = vmatpush.msra.mxu0 %v2946
  %4032 = vmatpush.msra.mxu0 %v2942
  %4033 = vmatpush.msra.mxu0 %v2938
  %4034 = vmatpush.msra.mxu0 %v2934
  %4035 = vmatpush.msra.mxu0 %v2930
  %4036 = vmatpush.msra.mxu0 %v2926
  %4037 = vmatpush.msra.mxu0 %v2922
  %4038 = vmatpush.msra.mxu0 %v2918
  %4039 = vmatpush.msra.mxu0 %v2914
  %4040 = vmatpush.msra.mxu0 %v2910
  %4041 = vmatpush.msra.mxu0 %v2906
  %4042 = vmatpush.msra.mxu0 %v2902
  %4043 = vmatpush.msra.mxu0 %v2898
  %4044 = vmatmul.f32.gmra.mxu0 %v3974
  %v4045 = vpop.f32.mrf.mxu0
  %v4046 = vadd.f32 0.0, %v4045
  %4047 = vdwg.mxu0
  %4048 = vmatpush.msra.mxu0 %v2959
  %4049 = vmatpush.msra.mxu0 %v2955
  %4050 = vmatpush.msra.mxu0 %v2951
  %4051 = vmatpush.msra.mxu0 %v2947
  %4052 = vmatpush.msra.mxu0 %v2943
  %4053 = vmatpush.msra.mxu0 %v2939
  %4054 = vmatpush.msra.mxu0 %v2935
  %4055 = vmatpush.msra.mxu0 %v2931
  %4056 = vmatpush.msra.mxu0 %v2927
  %4057 = vmatpush.msra.mxu0 %v2923
  %4058 = vmatpush.msra.mxu0 %v2919
  %4059 = vmatpush.msra.mxu0 %v2915
  %4060 = vmatpush.msra.mxu0 %v2911
  %4061 = vmatpush.msra.mxu0 %v2907
  %4062 = vmatpush.msra.mxu0 %v2903
  %4063 = vmatpush.msra.mxu0 %v2899
  %4064 = vmatmul.f32.gmra.mxu0 %v3974
  %v4065 = vpop.f32.mrf.mxu0
  %v4066 = vadd.f32 0.0, %v4065
  %4067 = vdwg.mxu0
  %v4068 = vadd.f32 %v3984, %v4006
  %v4069 = vadd.f32 %v3985, %v4026
  %v4070 = vadd.f32 %v3986, %v4046
  %v4071 = vadd.f32 %v3987, %v4066
  %v4072 = vxor.u32 %v4068, 2147483648
  %v4073 = vmul.f32 %v4072, 1.442695
  %v4074 = vpow.pop %v4073
  %v4075 = vadd.f32 %v4074, 1.0
  %v4076 = vrcp.pop %v4075
  %v4077 = vmul.f32 %v4075, %v4076
  %v4078 = vsub.f32 1.0, %v4077
  %v4079 = vmul.f32 %v4076, %v4078
  %v4080 = vadd.f32 %v4076, %v4079
  %vm4081 = vweird.f32 %v4075
  %vm4082 = vweird.f32 %v4076
  %vm4083 = vmor %vm4081, %vm4082
  %v4084 = vsel %vm4083, %v4076, %v4080
  %v4085 = vand.u32 2147483647, %v4075
  %vm4086 = vcmp.eq.f32.partialorder %v4085, 8.507059e+37
  %v4087 = vand.u32 %v4075, 2147483648
  %v4088 = vor.u32 1.1754944e-38, %v4087
  %v4089 = vsel %vm4086, %v4088, %v4084
  %v4090 = vmul.f32 1.0, %v4089
  %v4091 = vxor.u32 %v4069, 2147483648
  %v4092 = vmul.f32 %v4091, 1.442695
  %v4093 = vpow.pop %v4092
  %v4094 = vadd.f32 %v4093, 1.0
  %v4095 = vrcp.pop %v4094
  %v4096 = vmul.f32 %v4094, %v4095
  %v4097 = vsub.f32 1.0, %v4096
  %v4098 = vmul.f32 %v4095, %v4097
  %v4099 = vadd.f32 %v4095, %v4098
  %vm4100 = vweird.f32 %v4094
  %vm4101 = vweird.f32 %v4095
  %vm4102 = vmor %vm4100, %vm4101
  %v4103 = vsel %vm4102, %v4095, %v4099
  %v4104 = vand.u32 2147483647, %v4094
  %vm4105 = vcmp.eq.f32.partialorder %v4104, 8.507059e+37
  %v4106 = vand.u32 %v4094, 2147483648
  %v4107 = vor.u32 1.1754944e-38, %v4106
  %v4108 = vsel %vm4105, %v4107, %v4103
  %v4109 = vmul.f32 1.0, %v4108
  %v4110 = vtanh.pop %v4070
  %v4111 = vxor.u32 %v4071, 2147483648
  %v4112 = vmul.f32 %v4111, 1.442695
  %v4113 = vpow.pop %v4112
  %v4114 = vadd.f32 %v4113, 1.0
  %v4115 = vrcp.pop %v4114
  %v4116 = vmul.f32 %v4114, %v4115
  %v4117 = vsub.f32 1.0, %v4116
  %v4118 = vmul.f32 %v4115, %v4117
  %v4119 = vadd.f32 %v4115, %v4118
  %vm4120 = vweird.f32 %v4114
  %vm4121 = vweird.f32 %v4115
  %vm4122 = vmor %vm4120, %vm4121
  %v4123 = vsel %vm4122, %v4115, %v4119
  %v4124 = vand.u32 2147483647, %v4114
  %vm4125 = vcmp.eq.f32.partialorder %v4124, 8.507059e+37
  %v4126 = vand.u32 %v4114, 2147483648
  %v4127 = vor.u32 1.1754944e-38, %v4126
  %v4128 = vsel %vm4125, %v4127, %v4123
  %v4129 = vmul.f32 1.0, %v4128
  %v4130 = vmul.f32 %v4109, %v3975
  %v4131 = vmul.f32 %v4090, %v4110
  %v4132 = vadd.f32 %v4130, %v4131
  %v4133 = vtanh.pop %v4132
  %v4134 = vmul.f32 %v4129, %v4133
  %s4135 = scalar_lea.vmem [#allocation3], 128
  %v4136 = vld [vmem:[%s4135] sm:$0xff]
  %v4137 = vld [vmem:[%s4135 + $0x8] sm:$0xff]
  %v4138 = vld [vmem:[%s4135 + $0x10] sm:$0xff]
  %v4139 = vld [vmem:[%s4135 + $0x18] sm:$0xff]
  %4140 = vmatpush.msra.mxu0 %v3020
  %4141 = vmatpush.msra.mxu0 %v3016
  %4142 = vmatpush.msra.mxu0 %v3012
  %4143 = vmatpush.msra.mxu0 %v3008
  %4144 = vmatpush.msra.mxu0 %v3004
  %4145 = vmatpush.msra.mxu0 %v3000
  %4146 = vmatpush.msra.mxu0 %v2996
  %4147 = vmatpush.msra.mxu0 %v2992
  %4148 = vmatpush.msra.mxu0 %v2988
  %4149 = vmatpush.msra.mxu0 %v2984
  %4150 = vmatpush.msra.mxu0 %v2980
  %4151 = vmatpush.msra.mxu0 %v2976
  %4152 = vmatpush.msra.mxu0 %v2972
  %4153 = vmatpush.msra.mxu0 %v2968
  %4154 = vmatpush.msra.mxu0 %v2964
  %4155 = vmatpush.msra.mxu0 %v2960
  %4156 = vmatmul.f32.gmra.mxu0 %v3981
  %v4157 = vpop.f32.mrf.mxu0
  %v4158 = vadd.f32 0.0, %v4157
  %4159 = vdwg.mxu0
  %4160 = vmatpush.msra.mxu0 %v3021
  %4161 = vmatpush.msra.mxu0 %v3017
  %4162 = vmatpush.msra.mxu0 %v3013
  %4163 = vmatpush.msra.mxu0 %v3009
  %4164 = vmatpush.msra.mxu0 %v3005
  %4165 = vmatpush.msra.mxu0 %v3001
  %4166 = vmatpush.msra.mxu0 %v2997
  %4167 = vmatpush.msra.mxu0 %v2993
  %4168 = vmatpush.msra.mxu0 %v2989
  %4169 = vmatpush.msra.mxu0 %v2985
  %4170 = vmatpush.msra.mxu0 %v2981
  %4171 = vmatpush.msra.mxu0 %v2977
  %4172 = vmatpush.msra.mxu0 %v2973
  %4173 = vmatpush.msra.mxu0 %v2969
  %4174 = vmatpush.msra.mxu0 %v2965
  %4175 = vmatpush.msra.mxu0 %v2961
  %4176 = vmatmul.f32.gmra.mxu0 %v3981
  %v4177 = vpop.f32.mrf.mxu0
  %v4178 = vadd.f32 0.0, %v4177
  %4179 = vdwg.mxu0
  %4180 = vmatpush.msra.mxu0 %v3022
  %4181 = vmatpush.msra.mxu0 %v3018
  %4182 = vmatpush.msra.mxu0 %v3014
  %4183 = vmatpush.msra.mxu0 %v3010
  %4184 = vmatpush.msra.mxu0 %v3006
  %4185 = vmatpush.msra.mxu0 %v3002
  %4186 = vmatpush.msra.mxu0 %v2998
  %4187 = vmatpush.msra.mxu0 %v2994
  %4188 = vmatpush.msra.mxu0 %v2990
  %4189 = vmatpush.msra.mxu0 %v2986
  %4190 = vmatpush.msra.mxu0 %v2982
  %4191 = vmatpush.msra.mxu0 %v2978
  %4192 = vmatpush.msra.mxu0 %v2974
  %4193 = vmatpush.msra.mxu0 %v2970
  %4194 = vmatpush.msra.mxu0 %v2966
  %4195 = vmatpush.msra.mxu0 %v2962
  %4196 = vmatmul.f32.gmra.mxu0 %v3981
  %v4197 = vpop.f32.mrf.mxu0
  %v4198 = vadd.f32 0.0, %v4197
  %4199 = vdwg.mxu0
  %4200 = vmatpush.msra.mxu0 %v3023
  %4201 = vmatpush.msra.mxu0 %v3019
  %4202 = vmatpush.msra.mxu0 %v3015
  %4203 = vmatpush.msra.mxu0 %v3011
  %4204 = vmatpush.msra.mxu0 %v3007
  %4205 = vmatpush.msra.mxu0 %v3003
  %4206 = vmatpush.msra.mxu0 %v2999
  %4207 = vmatpush.msra.mxu0 %v2995
  %4208 = vmatpush.msra.mxu0 %v2991
  %4209 = vmatpush.msra.mxu0 %v2987
  %4210 = vmatpush.msra.mxu0 %v2983
  %4211 = vmatpush.msra.mxu0 %v2979
  %4212 = vmatpush.msra.mxu0 %v2975
  %4213 = vmatpush.msra.mxu0 %v2971
  %4214 = vmatpush.msra.mxu0 %v2967
  %4215 = vmatpush.msra.mxu0 %v2963
  %4216 = vmatmul.f32.gmra.mxu0 %v3981
  %v4217 = vpop.f32.mrf.mxu0
  %v4218 = vadd.f32 0.0, %v4217
  %4219 = vdwg.mxu0
  %v4220 = vadd.f32 %v4136, %v4158
  %v4221 = vadd.f32 %v4137, %v4178
  %v4222 = vadd.f32 %v4138, %v4198
  %v4223 = vadd.f32 %v4139, %v4218
  %v4224 = vxor.u32 %v4220, 2147483648
  %v4225 = vmul.f32 %v4224, 1.442695
  %v4226 = vpow.pop %v4225
  %v4227 = vadd.f32 %v4226, 1.0
  %v4228 = vrcp.pop %v4227
  %v4229 = vmul.f32 %v4227, %v4228
  %v4230 = vsub.f32 1.0, %v4229
  %v4231 = vmul.f32 %v4228, %v4230
  %v4232 = vadd.f32 %v4228, %v4231
  %vm4233 = vweird.f32 %v4227
  %vm4234 = vweird.f32 %v4228
  %vm4235 = vmor %vm4233, %vm4234
  %v4236 = vsel %vm4235, %v4228, %v4232
  %v4237 = vand.u32 2147483647, %v4227
  %vm4238 = vcmp.eq.f32.partialorder %v4237, 8.507059e+37
  %v4239 = vand.u32 %v4227, 2147483648
  %v4240 = vor.u32 1.1754944e-38, %v4239
  %v4241 = vsel %vm4238, %v4240, %v4236
  %v4242 = vmul.f32 1.0, %v4241
  %v4243 = vxor.u32 %v4221, 2147483648
  %v4244 = vmul.f32 %v4243, 1.442695
  %v4245 = vpow.pop %v4244
  %v4246 = vadd.f32 %v4245, 1.0
  %v4247 = vrcp.pop %v4246
  %v4248 = vmul.f32 %v4246, %v4247
  %v4249 = vsub.f32 1.0, %v4248
  %v4250 = vmul.f32 %v4247, %v4249
  %v4251 = vadd.f32 %v4247, %v4250
  %vm4252 = vweird.f32 %v4246
  %vm4253 = vweird.f32 %v4247
  %vm4254 = vmor %vm4252, %vm4253
  %v4255 = vsel %vm4254, %v4247, %v4251
  %v4256 = vand.u32 2147483647, %v4246
  %vm4257 = vcmp.eq.f32.partialorder %v4256, 8.507059e+37
  %v4258 = vand.u32 %v4246, 2147483648
  %v4259 = vor.u32 1.1754944e-38, %v4258
  %v4260 = vsel %vm4257, %v4259, %v4255
  %v4261 = vmul.f32 1.0, %v4260
  %v4262 = vtanh.pop %v4222
  %v4263 = vxor.u32 %v4223, 2147483648
  %v4264 = vmul.f32 %v4263, 1.442695
  %v4265 = vpow.pop %v4264
  %v4266 = vadd.f32 %v4265, 1.0
  %v4267 = vrcp.pop %v4266
  %v4268 = vmul.f32 %v4266, %v4267
  %v4269 = vsub.f32 1.0, %v4268
  %v4270 = vmul.f32 %v4267, %v4269
  %v4271 = vadd.f32 %v4267, %v4270
  %vm4272 = vweird.f32 %v4266
  %vm4273 = vweird.f32 %v4267
  %vm4274 = vmor %vm4272, %vm4273
  %v4275 = vsel %vm4274, %v4267, %v4271
  %v4276 = vand.u32 2147483647, %v4266
  %vm4277 = vcmp.eq.f32.partialorder %v4276, 8.507059e+37
  %v4278 = vand.u32 %v4266, 2147483648
  %v4279 = vor.u32 1.1754944e-38, %v4278
  %v4280 = vsel %vm4277, %v4279, %v4275
  %v4281 = vmul.f32 1.0, %v4280
  %v4282 = vmul.f32 %v4261, %v3982
  %v4283 = vmul.f32 %v4242, %v4262
  %v4284 = vadd.f32 %v4282, %v4283
  %v4285 = vtanh.pop %v4284
  %v4286 = vmul.f32 %v4281, %v4285
  %vm4287 = vcmp.gt.s32.totalorder %v2895, 3
  %vm4288 = vcmp.gt.s32.totalorder %v2895, 4
  %v4289 = vsel %vm4287, 1, 0
  %4290 = vset.pattern.permute.xlu0 0
  %4291 = vperm.xlu0 %4290, %v4289
  %v4292 = vpop.permute.xlu0 %4291
  %vm4293 = vcmp.eq.s32.totalorder %v4292, 1
  %v4294 = vsel %vm4293, %v4134, %v3974
  %v4295 = vsel %vm4293, %v4132, %v3975
  %v4296 = vsel %vm4288, 1, 0
  %4297 = vset.pattern.permute.xlu0 0
  %4298 = vperm.xlu0 %4297, %v4296
  %v4299 = vpop.permute.xlu0 %4298
  %vm4300 = vcmp.eq.s32.totalorder %v4299, 1
  %v4301 = vsel %vm4300, %v4286, %v3981
  %v4302 = vsel %vm4300, %v4284, %v3982
  %s4303 = scalar_lea.vmem [#allocation2], 128
  %v4304 = vld [vmem:[%s4303] sm:$0xff]
  %v4305 = vld [vmem:[%s4303 + $0x8] sm:$0xff]
  %v4306 = vld [vmem:[%s4303 + $0x10] sm:$0xff]
  %v4307 = vld [vmem:[%s4303 + $0x18] sm:$0xff]
  %4308 = vmatpush.msra.mxu0 %v2956
  %4309 = vmatpush.msra.mxu0 %v2952
  %4310 = vmatpush.msra.mxu0 %v2948
  %4311 = vmatpush.msra.mxu0 %v2944
  %4312 = vmatpush.msra.mxu0 %v2940
  %4313 = vmatpush.msra.mxu0 %v2936
  %4314 = vmatpush.msra.mxu0 %v2932
  %4315 = vmatpush.msra.mxu0 %v2928
  %4316 = vmatpush.msra.mxu0 %v2924
  %4317 = vmatpush.msra.mxu0 %v2920
  %4318 = vmatpush.msra.mxu0 %v2916
  %4319 = vmatpush.msra.mxu0 %v2912
  %4320 = vmatpush.msra.mxu0 %v2908
  %4321 = vmatpush.msra.mxu0 %v2904
  %4322 = vmatpush.msra.mxu0 %v2900
  %4323 = vmatpush.msra.mxu0 %v2896
  %4324 = vmatmul.f32.gmra.mxu0 %v4294
  %v4325 = vpop.f32.mrf.mxu0
  %v4326 = vadd.f32 0.0, %v4325
  %4327 = vdwg.mxu0
  %4328 = vmatpush.msra.mxu0 %v2957
  %4329 = vmatpush.msra.mxu0 %v2953
  %4330 = vmatpush.msra.mxu0 %v2949
  %4331 = vmatpush.msra.mxu0 %v2945
  %4332 = vmatpush.msra.mxu0 %v2941
  %4333 = vmatpush.msra.mxu0 %v2937
  %4334 = vmatpush.msra.mxu0 %v2933
  %4335 = vmatpush.msra.mxu0 %v2929
  %4336 = vmatpush.msra.mxu0 %v2925
  %4337 = vmatpush.msra.mxu0 %v2921
  %4338 = vmatpush.msra.mxu0 %v2917
  %4339 = vmatpush.msra.mxu0 %v2913
  %4340 = vmatpush.msra.mxu0 %v2909
  %4341 = vmatpush.msra.mxu0 %v2905
  %4342 = vmatpush.msra.mxu0 %v2901
  %4343 = vmatpush.msra.mxu0 %v2897
  %4344 = vmatmul.f32.gmra.mxu0 %v4294
  %v4345 = vpop.f32.mrf.mxu0
  %v4346 = vadd.f32 0.0, %v4345
  %4347 = vdwg.mxu0
  %4348 = vmatpush.msra.mxu0 %v2958
  %4349 = vmatpush.msra.mxu0 %v2954
  %4350 = vmatpush.msra.mxu0 %v2950
  %4351 = vmatpush.msra.mxu0 %v2946
  %4352 = vmatpush.msra.mxu0 %v2942
  %4353 = vmatpush.msra.mxu0 %v2938
  %4354 = vmatpush.msra.mxu0 %v2934
  %4355 = vmatpush.msra.mxu0 %v2930
  %4356 = vmatpush.msra.mxu0 %v2926
  %4357 = vmatpush.msra.mxu0 %v2922
  %4358 = vmatpush.msra.mxu0 %v2918
  %4359 = vmatpush.msra.mxu0 %v2914
  %4360 = vmatpush.msra.mxu0 %v2910
  %4361 = vmatpush.msra.mxu0 %v2906
  %4362 = vmatpush.msra.mxu0 %v2902
  %4363 = vmatpush.msra.mxu0 %v2898
  %4364 = vmatmul.f32.gmra.mxu0 %v4294
  %v4365 = vpop.f32.mrf.mxu0
  %v4366 = vadd.f32 0.0, %v4365
  %4367 = vdwg.mxu0
  %4368 = vmatpush.msra.mxu0 %v2959
  %4369 = vmatpush.msra.mxu0 %v2955
  %4370 = vmatpush.msra.mxu0 %v2951
  %4371 = vmatpush.msra.mxu0 %v2947
  %4372 = vmatpush.msra.mxu0 %v2943
  %4373 = vmatpush.msra.mxu0 %v2939
  %4374 = vmatpush.msra.mxu0 %v2935
  %4375 = vmatpush.msra.mxu0 %v2931
  %4376 = vmatpush.msra.mxu0 %v2927
  %4377 = vmatpush.msra.mxu0 %v2923
  %4378 = vmatpush.msra.mxu0 %v2919
  %4379 = vmatpush.msra.mxu0 %v2915
  %4380 = vmatpush.msra.mxu0 %v2911
  %4381 = vmatpush.msra.mxu0 %v2907
  %4382 = vmatpush.msra.mxu0 %v2903
  %4383 = vmatpush.msra.mxu0 %v2899
  %4384 = vmatmul.f32.gmra.mxu0 %v4294
  %v4385 = vpop.f32.mrf.mxu0
  %v4386 = vadd.f32 0.0, %v4385
  %4387 = vdwg.mxu0
  %v4388 = vadd.f32 %v4304, %v4326
  %v4389 = vadd.f32 %v4305, %v4346
  %v4390 = vadd.f32 %v4306, %v4366
  %v4391 = vadd.f32 %v4307, %v4386
  %v4392 = vxor.u32 %v4388, 2147483648
  %v4393 = vmul.f32 %v4392, 1.442695
  %v4394 = vpow.pop %v4393
  %v4395 = vadd.f32 %v4394, 1.0
  %v4396 = vrcp.pop %v4395
  %v4397 = vmul.f32 %v4395, %v4396
  %v4398 = vsub.f32 1.0, %v4397
  %v4399 = vmul.f32 %v4396, %v4398
  %v4400 = vadd.f32 %v4396, %v4399
  %vm4401 = vweird.f32 %v4395
  %vm4402 = vweird.f32 %v4396
  %vm4403 = vmor %vm4401, %vm4402
  %v4404 = vsel %vm4403, %v4396, %v4400
  %v4405 = vand.u32 2147483647, %v4395
  %vm4406 = vcmp.eq.f32.partialorder %v4405, 8.507059e+37
  %v4407 = vand.u32 %v4395, 2147483648
  %v4408 = vor.u32 1.1754944e-38, %v4407
  %v4409 = vsel %vm4406, %v4408, %v4404
  %v4410 = vmul.f32 1.0, %v4409
  %v4411 = vxor.u32 %v4389, 2147483648
  %v4412 = vmul.f32 %v4411, 1.442695
  %v4413 = vpow.pop %v4412
  %v4414 = vadd.f32 %v4413, 1.0
  %v4415 = vrcp.pop %v4414
  %v4416 = vmul.f32 %v4414, %v4415
  %v4417 = vsub.f32 1.0, %v4416
  %v4418 = vmul.f32 %v4415, %v4417
  %v4419 = vadd.f32 %v4415, %v4418
  %vm4420 = vweird.f32 %v4414
  %vm4421 = vweird.f32 %v4415
  %vm4422 = vmor %vm4420, %vm4421
  %v4423 = vsel %vm4422, %v4415, %v4419
  %v4424 = vand.u32 2147483647, %v4414
  %vm4425 = vcmp.eq.f32.partialorder %v4424, 8.507059e+37
  %v4426 = vand.u32 %v4414, 2147483648
  %v4427 = vor.u32 1.1754944e-38, %v4426
  %v4428 = vsel %vm4425, %v4427, %v4423
  %v4429 = vmul.f32 1.0, %v4428
  %v4430 = vtanh.pop %v4390
  %v4431 = vxor.u32 %v4391, 2147483648
  %v4432 = vmul.f32 %v4431, 1.442695
  %v4433 = vpow.pop %v4432
  %v4434 = vadd.f32 %v4433, 1.0
  %v4435 = vrcp.pop %v4434
  %v4436 = vmul.f32 %v4434, %v4435
  %v4437 = vsub.f32 1.0, %v4436
  %v4438 = vmul.f32 %v4435, %v4437
  %v4439 = vadd.f32 %v4435, %v4438
  %vm4440 = vweird.f32 %v4434
  %vm4441 = vweird.f32 %v4435
  %vm4442 = vmor %vm4440, %vm4441
  %v4443 = vsel %vm4442, %v4435, %v4439
  %v4444 = vand.u32 2147483647, %v4434
  %vm4445 = vcmp.eq.f32.partialorder %v4444, 8.507059e+37
  %v4446 = vand.u32 %v4434, 2147483648
  %v4447 = vor.u32 1.1754944e-38, %v4446
  %v4448 = vsel %vm4445, %v4447, %v4443
  %v4449 = vmul.f32 1.0, %v4448
  %v4450 = vmul.f32 %v4429, %v4295
  %v4451 = vmul.f32 %v4410, %v4430
  %v4452 = vadd.f32 %v4450, %v4451
  %v4453 = vtanh.pop %v4452
  %v4454 = vmul.f32 %v4449, %v4453
  %s4455 = scalar_lea.vmem [#allocation3], 96
  %v4456 = vld [vmem:[%s4455] sm:$0xff]
  %v4457 = vld [vmem:[%s4455 + $0x8] sm:$0xff]
  %v4458 = vld [vmem:[%s4455 + $0x10] sm:$0xff]
  %v4459 = vld [vmem:[%s4455 + $0x18] sm:$0xff]
  %4460 = vmatpush.msra.mxu0 %v3020
  %4461 = vmatpush.msra.mxu0 %v3016
  %4462 = vmatpush.msra.mxu0 %v3012
  %4463 = vmatpush.msra.mxu0 %v3008
  %4464 = vmatpush.msra.mxu0 %v3004
  %4465 = vmatpush.msra.mxu0 %v3000
  %4466 = vmatpush.msra.mxu0 %v2996
  %4467 = vmatpush.msra.mxu0 %v2992
  %4468 = vmatpush.msra.mxu0 %v2988
  %4469 = vmatpush.msra.mxu0 %v2984
  %4470 = vmatpush.msra.mxu0 %v2980
  %4471 = vmatpush.msra.mxu0 %v2976
  %4472 = vmatpush.msra.mxu0 %v2972
  %4473 = vmatpush.msra.mxu0 %v2968
  %4474 = vmatpush.msra.mxu0 %v2964
  %4475 = vmatpush.msra.mxu0 %v2960
  %4476 = vmatmul.f32.gmra.mxu0 %v4301
  %v4477 = vpop.f32.mrf.mxu0
  %v4478 = vadd.f32 0.0, %v4477
  %4479 = vdwg.mxu0
  %4480 = vmatpush.msra.mxu0 %v3021
  %4481 = vmatpush.msra.mxu0 %v3017
  %4482 = vmatpush.msra.mxu0 %v3013
  %4483 = vmatpush.msra.mxu0 %v3009
  %4484 = vmatpush.msra.mxu0 %v3005
  %4485 = vmatpush.msra.mxu0 %v3001
  %4486 = vmatpush.msra.mxu0 %v2997
  %4487 = vmatpush.msra.mxu0 %v2993
  %4488 = vmatpush.msra.mxu0 %v2989
  %4489 = vmatpush.msra.mxu0 %v2985
  %4490 = vmatpush.msra.mxu0 %v2981
  %4491 = vmatpush.msra.mxu0 %v2977
  %4492 = vmatpush.msra.mxu0 %v2973
  %4493 = vmatpush.msra.mxu0 %v2969
  %4494 = vmatpush.msra.mxu0 %v2965
  %4495 = vmatpush.msra.mxu0 %v2961
  %4496 = vmatmul.f32.gmra.mxu0 %v4301
  %v4497 = vpop.f32.mrf.mxu0
  %v4498 = vadd.f32 0.0, %v4497
  %4499 = vdwg.mxu0
  %4500 = vmatpush.msra.mxu0 %v3022
  %4501 = vmatpush.msra.mxu0 %v3018
  %4502 = vmatpush.msra.mxu0 %v3014
  %4503 = vmatpush.msra.mxu0 %v3010
  %4504 = vmatpush.msra.mxu0 %v3006
  %4505 = vmatpush.msra.mxu0 %v3002
  %4506 = vmatpush.msra.mxu0 %v2998
  %4507 = vmatpush.msra.mxu0 %v2994
  %4508 = vmatpush.msra.mxu0 %v2990
  %4509 = vmatpush.msra.mxu0 %v2986
  %4510 = vmatpush.msra.mxu0 %v2982
  %4511 = vmatpush.msra.mxu0 %v2978
  %4512 = vmatpush.msra.mxu0 %v2974
  %4513 = vmatpush.msra.mxu0 %v2970
  %4514 = vmatpush.msra.mxu0 %v2966
  %4515 = vmatpush.msra.mxu0 %v2962
  %4516 = vmatmul.f32.gmra.mxu0 %v4301
  %v4517 = vpop.f32.mrf.mxu0
  %v4518 = vadd.f32 0.0, %v4517
  %4519 = vdwg.mxu0
  %4520 = vmatpush.msra.mxu0 %v3023
  %4521 = vmatpush.msra.mxu0 %v3019
  %4522 = vmatpush.msra.mxu0 %v3015
  %4523 = vmatpush.msra.mxu0 %v3011
  %4524 = vmatpush.msra.mxu0 %v3007
  %4525 = vmatpush.msra.mxu0 %v3003
  %4526 = vmatpush.msra.mxu0 %v2999
  %4527 = vmatpush.msra.mxu0 %v2995
  %4528 = vmatpush.msra.mxu0 %v2991
  %4529 = vmatpush.msra.mxu0 %v2987
  %4530 = vmatpush.msra.mxu0 %v2983
  %4531 = vmatpush.msra.mxu0 %v2979
  %4532 = vmatpush.msra.mxu0 %v2975
  %4533 = vmatpush.msra.mxu0 %v2971
  %4534 = vmatpush.msra.mxu0 %v2967
  %4535 = vmatpush.msra.mxu0 %v2963
  %4536 = vmatmul.f32.gmra.mxu0 %v4301
  %v4537 = vpop.f32.mrf.mxu0
  %v4538 = vadd.f32 0.0, %v4537
  %4539 = vdwg.mxu0
  %v4540 = vadd.f32 %v4456, %v4478
  %v4541 = vadd.f32 %v4457, %v4498
  %v4542 = vadd.f32 %v4458, %v4518
  %v4543 = vadd.f32 %v4459, %v4538
  %v4544 = vxor.u32 %v4540, 2147483648
  %v4545 = vmul.f32 %v4544, 1.442695
  %v4546 = vpow.pop %v4545
  %v4547 = vadd.f32 %v4546, 1.0
  %v4548 = vrcp.pop %v4547
  %v4549 = vmul.f32 %v4547, %v4548
  %v4550 = vsub.f32 1.0, %v4549
  %v4551 = vmul.f32 %v4548, %v4550
  %v4552 = vadd.f32 %v4548, %v4551
  %vm4553 = vweird.f32 %v4547
  %vm4554 = vweird.f32 %v4548
  %vm4555 = vmor %vm4553, %vm4554
  %v4556 = vsel %vm4555, %v4548, %v4552
  %v4557 = vand.u32 2147483647, %v4547
  %vm4558 = vcmp.eq.f32.partialorder %v4557, 8.507059e+37
  %v4559 = vand.u32 %v4547, 2147483648
  %v4560 = vor.u32 1.1754944e-38, %v4559
  %v4561 = vsel %vm4558, %v4560, %v4556
  %v4562 = vmul.f32 1.0, %v4561
  %v4563 = vxor.u32 %v4541, 2147483648
  %v4564 = vmul.f32 %v4563, 1.442695
  %v4565 = vpow.pop %v4564
  %v4566 = vadd.f32 %v4565, 1.0
  %v4567 = vrcp.pop %v4566
  %v4568 = vmul.f32 %v4566, %v4567
  %v4569 = vsub.f32 1.0, %v4568
  %v4570 = vmul.f32 %v4567, %v4569
  %v4571 = vadd.f32 %v4567, %v4570
  %vm4572 = vweird.f32 %v4566
  %vm4573 = vweird.f32 %v4567
  %vm4574 = vmor %vm4572, %vm4573
  %v4575 = vsel %vm4574, %v4567, %v4571
  %v4576 = vand.u32 2147483647, %v4566
  %vm4577 = vcmp.eq.f32.partialorder %v4576, 8.507059e+37
  %v4578 = vand.u32 %v4566, 2147483648
  %v4579 = vor.u32 1.1754944e-38, %v4578
  %v4580 = vsel %vm4577, %v4579, %v4575
  %v4581 = vmul.f32 1.0, %v4580
  %v4582 = vtanh.pop %v4542
  %v4583 = vxor.u32 %v4543, 2147483648
  %v4584 = vmul.f32 %v4583, 1.442695
  %v4585 = vpow.pop %v4584
  %v4586 = vadd.f32 %v4585, 1.0
  %v4587 = vrcp.pop %v4586
  %v4588 = vmul.f32 %v4586, %v4587
  %v4589 = vsub.f32 1.0, %v4588
  %v4590 = vmul.f32 %v4587, %v4589
  %v4591 = vadd.f32 %v4587, %v4590
  %vm4592 = vweird.f32 %v4586
  %vm4593 = vweird.f32 %v4587
  %vm4594 = vmor %vm4592, %vm4593
  %v4595 = vsel %vm4594, %v4587, %v4591
  %v4596 = vand.u32 2147483647, %v4586
  %vm4597 = vcmp.eq.f32.partialorder %v4596, 8.507059e+37
  %v4598 = vand.u32 %v4586, 2147483648
  %v4599 = vor.u32 1.1754944e-38, %v4598
  %v4600 = vsel %vm4597, %v4599, %v4595
  %v4601 = vmul.f32 1.0, %v4600
  %v4602 = vmul.f32 %v4581, %v4302
  %v4603 = vmul.f32 %v4562, %v4582
  %v4604 = vadd.f32 %v4602, %v4603
  %v4605 = vtanh.pop %v4604
  %v4606 = vmul.f32 %v4601, %v4605
  %v4607 = vsel %vm4300, %v4454, %v4294
  %v4608 = vsel %vm4300, %v4452, %v4295
  %v4609 = vsel %vm4293, %v4606, %v4301
  %v4610 = vsel %vm4293, %v4604, %v4302
  %s4611 = scalar_lea.vmem [#allocation2], 160
  %v4612 = vld [vmem:[%s4611] sm:$0xff]
  %v4613 = vld [vmem:[%s4611 + $0x8] sm:$0xff]
  %v4614 = vld [vmem:[%s4611 + $0x10] sm:$0xff]
  %v4615 = vld [vmem:[%s4611 + $0x18] sm:$0xff]
  %4616 = vmatpush.msra.mxu0 %v2956
  %4617 = vmatpush.msra.mxu0 %v2952
  %4618 = vmatpush.msra.mxu0 %v2948
  %4619 = vmatpush.msra.mxu0 %v2944
  %4620 = vmatpush.msra.mxu0 %v2940
  %4621 = vmatpush.msra.mxu0 %v2936
  %4622 = vmatpush.msra.mxu0 %v2932
  %4623 = vmatpush.msra.mxu0 %v2928
  %4624 = vmatpush.msra.mxu0 %v2924
  %4625 = vmatpush.msra.mxu0 %v2920
  %4626 = vmatpush.msra.mxu0 %v2916
  %4627 = vmatpush.msra.mxu0 %v2912
  %4628 = vmatpush.msra.mxu0 %v2908
  %4629 = vmatpush.msra.mxu0 %v2904
  %4630 = vmatpush.msra.mxu0 %v2900
  %4631 = vmatpush.msra.mxu0 %v2896
  %4632 = vmatmul.f32.gmra.mxu0 %v4607
  %v4633 = vpop.f32.mrf.mxu0
  %v4634 = vadd.f32 0.0, %v4633
  %4635 = vdwg.mxu0
  %4636 = vmatpush.msra.mxu0 %v2957
  %4637 = vmatpush.msra.mxu0 %v2953
  %4638 = vmatpush.msra.mxu0 %v2949
  %4639 = vmatpush.msra.mxu0 %v2945
  %4640 = vmatpush.msra.mxu0 %v2941
  %4641 = vmatpush.msra.mxu0 %v2937
  %4642 = vmatpush.msra.mxu0 %v2933
  %4643 = vmatpush.msra.mxu0 %v2929
  %4644 = vmatpush.msra.mxu0 %v2925
  %4645 = vmatpush.msra.mxu0 %v2921
  %4646 = vmatpush.msra.mxu0 %v2917
  %4647 = vmatpush.msra.mxu0 %v2913
  %4648 = vmatpush.msra.mxu0 %v2909
  %4649 = vmatpush.msra.mxu0 %v2905
  %4650 = vmatpush.msra.mxu0 %v2901
  %4651 = vmatpush.msra.mxu0 %v2897
  %4652 = vmatmul.f32.gmra.mxu0 %v4607
  %v4653 = vpop.f32.mrf.mxu0
  %v4654 = vadd.f32 0.0, %v4653
  %4655 = vdwg.mxu0
  %4656 = vmatpush.msra.mxu0 %v2958
  %4657 = vmatpush.msra.mxu0 %v2954
  %4658 = vmatpush.msra.mxu0 %v2950
  %4659 = vmatpush.msra.mxu0 %v2946
  %4660 = vmatpush.msra.mxu0 %v2942
  %4661 = vmatpush.msra.mxu0 %v2938
  %4662 = vmatpush.msra.mxu0 %v2934
  %4663 = vmatpush.msra.mxu0 %v2930
  %4664 = vmatpush.msra.mxu0 %v2926
  %4665 = vmatpush.msra.mxu0 %v2922
  %4666 = vmatpush.msra.mxu0 %v2918
  %4667 = vmatpush.msra.mxu0 %v2914
  %4668 = vmatpush.msra.mxu0 %v2910
  %4669 = vmatpush.msra.mxu0 %v2906
  %4670 = vmatpush.msra.mxu0 %v2902
  %4671 = vmatpush.msra.mxu0 %v2898
  %4672 = vmatmul.f32.gmra.mxu0 %v4607
  %v4673 = vpop.f32.mrf.mxu0
  %v4674 = vadd.f32 0.0, %v4673
  %4675 = vdwg.mxu0
  %4676 = vmatpush.msra.mxu0 %v2959
  %4677 = vmatpush.msra.mxu0 %v2955
  %4678 = vmatpush.msra.mxu0 %v2951
  %4679 = vmatpush.msra.mxu0 %v2947
  %4680 = vmatpush.msra.mxu0 %v2943
  %4681 = vmatpush.msra.mxu0 %v2939
  %4682 = vmatpush.msra.mxu0 %v2935
  %4683 = vmatpush.msra.mxu0 %v2931
  %4684 = vmatpush.msra.mxu0 %v2927
  %4685 = vmatpush.msra.mxu0 %v2923
  %4686 = vmatpush.msra.mxu0 %v2919
  %4687 = vmatpush.msra.mxu0 %v2915
  %4688 = vmatpush.msra.mxu0 %v2911
  %4689 = vmatpush.msra.mxu0 %v2907
  %4690 = vmatpush.msra.mxu0 %v2903
  %4691 = vmatpush.msra.mxu0 %v2899
  %4692 = vmatmul.f32.gmra.mxu0 %v4607
  %v4693 = vpop.f32.mrf.mxu0
  %v4694 = vadd.f32 0.0, %v4693
  %4695 = vdwg.mxu0
  %v4696 = vadd.f32 %v4612, %v4634
  %v4697 = vadd.f32 %v4613, %v4654
  %v4698 = vadd.f32 %v4614, %v4674
  %v4699 = vadd.f32 %v4615, %v4694
  %v4700 = vxor.u32 %v4696, 2147483648
  %v4701 = vmul.f32 %v4700, 1.442695
  %v4702 = vpow.pop %v4701
  %v4703 = vadd.f32 %v4702, 1.0
  %v4704 = vrcp.pop %v4703
  %v4705 = vmul.f32 %v4703, %v4704
  %v4706 = vsub.f32 1.0, %v4705
  %v4707 = vmul.f32 %v4704, %v4706
  %v4708 = vadd.f32 %v4704, %v4707
  %vm4709 = vweird.f32 %v4703
  %vm4710 = vweird.f32 %v4704
  %vm4711 = vmor %vm4709, %vm4710
  %v4712 = vsel %vm4711, %v4704, %v4708
  %v4713 = vand.u32 2147483647, %v4703
  %vm4714 = vcmp.eq.f32.partialorder %v4713, 8.507059e+37
  %v4715 = vand.u32 %v4703, 2147483648
  %v4716 = vor.u32 1.1754944e-38, %v4715
  %v4717 = vsel %vm4714, %v4716, %v4712
  %v4718 = vmul.f32 1.0, %v4717
  %v4719 = vxor.u32 %v4697, 2147483648
  %v4720 = vmul.f32 %v4719, 1.442695
  %v4721 = vpow.pop %v4720
  %v4722 = vadd.f32 %v4721, 1.0
  %v4723 = vrcp.pop %v4722
  %v4724 = vmul.f32 %v4722, %v4723
  %v4725 = vsub.f32 1.0, %v4724
  %v4726 = vmul.f32 %v4723, %v4725
  %v4727 = vadd.f32 %v4723, %v4726
  %vm4728 = vweird.f32 %v4722
  %vm4729 = vweird.f32 %v4723
  %vm4730 = vmor %vm4728, %vm4729
  %v4731 = vsel %vm4730, %v4723, %v4727
  %v4732 = vand.u32 2147483647, %v4722
  %vm4733 = vcmp.eq.f32.partialorder %v4732, 8.507059e+37
  %v4734 = vand.u32 %v4722, 2147483648
  %v4735 = vor.u32 1.1754944e-38, %v4734
  %v4736 = vsel %vm4733, %v4735, %v4731
  %v4737 = vmul.f32 1.0, %v4736
  %v4738 = vtanh.pop %v4698
  %v4739 = vxor.u32 %v4699, 2147483648
  %v4740 = vmul.f32 %v4739, 1.442695
  %v4741 = vpow.pop %v4740
  %v4742 = vadd.f32 %v4741, 1.0
  %v4743 = vrcp.pop %v4742
  %v4744 = vmul.f32 %v4742, %v4743
  %v4745 = vsub.f32 1.0, %v4744
  %v4746 = vmul.f32 %v4743, %v4745
  %v4747 = vadd.f32 %v4743, %v4746
  %vm4748 = vweird.f32 %v4742
  %vm4749 = vweird.f32 %v4743
  %vm4750 = vmor %vm4748, %vm4749
  %v4751 = vsel %vm4750, %v4743, %v4747
  %v4752 = vand.u32 2147483647, %v4742
  %vm4753 = vcmp.eq.f32.partialorder %v4752, 8.507059e+37
  %v4754 = vand.u32 %v4742, 2147483648
  %v4755 = vor.u32 1.1754944e-38, %v4754
  %v4756 = vsel %vm4753, %v4755, %v4751
  %v4757 = vmul.f32 1.0, %v4756
  %v4758 = vmul.f32 %v4737, %v4608
  %v4759 = vmul.f32 %v4718, %v4738
  %v4760 = vadd.f32 %v4758, %v4759
  %v4761 = vtanh.pop %v4760
  %v4762 = vmul.f32 %v4757, %v4761
  %s4763 = scalar_lea.vmem [#allocation3], 64
  %v4764 = vld [vmem:[%s4763] sm:$0xff]
  %v4765 = vld [vmem:[%s4763 + $0x8] sm:$0xff]
  %v4766 = vld [vmem:[%s4763 + $0x10] sm:$0xff]
  %v4767 = vld [vmem:[%s4763 + $0x18] sm:$0xff]
  %4768 = vmatpush.msra.mxu0 %v3020
  %4769 = vmatpush.msra.mxu0 %v3016
  %4770 = vmatpush.msra.mxu0 %v3012
  %4771 = vmatpush.msra.mxu0 %v3008
  %4772 = vmatpush.msra.mxu0 %v3004
  %4773 = vmatpush.msra.mxu0 %v3000
  %4774 = vmatpush.msra.mxu0 %v2996
  %4775 = vmatpush.msra.mxu0 %v2992
  %4776 = vmatpush.msra.mxu0 %v2988
  %4777 = vmatpush.msra.mxu0 %v2984
  %4778 = vmatpush.msra.mxu0 %v2980
  %4779 = vmatpush.msra.mxu0 %v2976
  %4780 = vmatpush.msra.mxu0 %v2972
  %4781 = vmatpush.msra.mxu0 %v2968
  %4782 = vmatpush.msra.mxu0 %v2964
  %4783 = vmatpush.msra.mxu0 %v2960
  %4784 = vmatmul.f32.gmra.mxu0 %v4609
  %v4785 = vpop.f32.mrf.mxu0
  %v4786 = vadd.f32 0.0, %v4785
  %4787 = vdwg.mxu0
  %4788 = vmatpush.msra.mxu0 %v3021
  %4789 = vmatpush.msra.mxu0 %v3017
  %4790 = vmatpush.msra.mxu0 %v3013
  %4791 = vmatpush.msra.mxu0 %v3009
  %4792 = vmatpush.msra.mxu0 %v3005
  %4793 = vmatpush.msra.mxu0 %v3001
  %4794 = vmatpush.msra.mxu0 %v2997
  %4795 = vmatpush.msra.mxu0 %v2993
  %4796 = vmatpush.msra.mxu0 %v2989
  %4797 = vmatpush.msra.mxu0 %v2985
  %4798 = vmatpush.msra.mxu0 %v2981
  %4799 = vmatpush.msra.mxu0 %v2977
  %4800 = vmatpush.msra.mxu0 %v2973
  %4801 = vmatpush.msra.mxu0 %v2969
  %4802 = vmatpush.msra.mxu0 %v2965
  %4803 = vmatpush.msra.mxu0 %v2961
  %4804 = vmatmul.f32.gmra.mxu0 %v4609
  %v4805 = vpop.f32.mrf.mxu0
  %v4806 = vadd.f32 0.0, %v4805
  %4807 = vdwg.mxu0
  %4808 = vmatpush.msra.mxu0 %v3022
  %4809 = vmatpush.msra.mxu0 %v3018
  %4810 = vmatpush.msra.mxu0 %v3014
  %4811 = vmatpush.msra.mxu0 %v3010
  %4812 = vmatpush.msra.mxu0 %v3006
  %4813 = vmatpush.msra.mxu0 %v3002
  %4814 = vmatpush.msra.mxu0 %v2998
  %4815 = vmatpush.msra.mxu0 %v2994
  %4816 = vmatpush.msra.mxu0 %v2990
  %4817 = vmatpush.msra.mxu0 %v2986
  %4818 = vmatpush.msra.mxu0 %v2982
  %4819 = vmatpush.msra.mxu0 %v2978
  %4820 = vmatpush.msra.mxu0 %v2974
  %4821 = vmatpush.msra.mxu0 %v2970
  %4822 = vmatpush.msra.mxu0 %v2966
  %4823 = vmatpush.msra.mxu0 %v2962
  %4824 = vmatmul.f32.gmra.mxu0 %v4609
  %v4825 = vpop.f32.mrf.mxu0
  %v4826 = vadd.f32 0.0, %v4825
  %4827 = vdwg.mxu0
  %4828 = vmatpush.msra.mxu0 %v3023
  %4829 = vmatpush.msra.mxu0 %v3019
  %4830 = vmatpush.msra.mxu0 %v3015
  %4831 = vmatpush.msra.mxu0 %v3011
  %4832 = vmatpush.msra.mxu0 %v3007
  %4833 = vmatpush.msra.mxu0 %v3003
  %4834 = vmatpush.msra.mxu0 %v2999
  %4835 = vmatpush.msra.mxu0 %v2995
  %4836 = vmatpush.msra.mxu0 %v2991
  %4837 = vmatpush.msra.mxu0 %v2987
  %4838 = vmatpush.msra.mxu0 %v2983
  %4839 = vmatpush.msra.mxu0 %v2979
  %4840 = vmatpush.msra.mxu0 %v2975
  %4841 = vmatpush.msra.mxu0 %v2971
  %4842 = vmatpush.msra.mxu0 %v2967
  %4843 = vmatpush.msra.mxu0 %v2963
  %4844 = vmatmul.f32.gmra.mxu0 %v4609
  %v4845 = vpop.f32.mrf.mxu0
  %v4846 = vadd.f32 0.0, %v4845
  %4847 = vdwg.mxu0
  %v4848 = vadd.f32 %v4764, %v4786
  %v4849 = vadd.f32 %v4765, %v4806
  %v4850 = vadd.f32 %v4766, %v4826
  %v4851 = vadd.f32 %v4767, %v4846
  %v4852 = vxor.u32 %v4848, 2147483648
  %v4853 = vmul.f32 %v4852, 1.442695
  %v4854 = vpow.pop %v4853
  %v4855 = vadd.f32 %v4854, 1.0
  %v4856 = vrcp.pop %v4855
  %v4857 = vmul.f32 %v4855, %v4856
  %v4858 = vsub.f32 1.0, %v4857
  %v4859 = vmul.f32 %v4856, %v4858
  %v4860 = vadd.f32 %v4856, %v4859
  %vm4861 = vweird.f32 %v4855
  %vm4862 = vweird.f32 %v4856
  %vm4863 = vmor %vm4861, %vm4862
  %v4864 = vsel %vm4863, %v4856, %v4860
  %v4865 = vand.u32 2147483647, %v4855
  %vm4866 = vcmp.eq.f32.partialorder %v4865, 8.507059e+37
  %v4867 = vand.u32 %v4855, 2147483648
  %v4868 = vor.u32 1.1754944e-38, %v4867
  %v4869 = vsel %vm4866, %v4868, %v4864
  %v4870 = vmul.f32 1.0, %v4869
  %v4871 = vxor.u32 %v4849, 2147483648
  %v4872 = vmul.f32 %v4871, 1.442695
  %v4873 = vpow.pop %v4872
  %v4874 = vadd.f32 %v4873, 1.0
  %v4875 = vrcp.pop %v4874
  %v4876 = vmul.f32 %v4874, %v4875
  %v4877 = vsub.f32 1.0, %v4876
  %v4878 = vmul.f32 %v4875, %v4877
  %v4879 = vadd.f32 %v4875, %v4878
  %vm4880 = vweird.f32 %v4874
  %vm4881 = vweird.f32 %v4875
  %vm4882 = vmor %vm4880, %vm4881
  %v4883 = vsel %vm4882, %v4875, %v4879
  %v4884 = vand.u32 2147483647, %v4874
  %vm4885 = vcmp.eq.f32.partialorder %v4884, 8.507059e+37
  %v4886 = vand.u32 %v4874, 2147483648
  %v4887 = vor.u32 1.1754944e-38, %v4886
  %v4888 = vsel %vm4885, %v4887, %v4883
  %v4889 = vmul.f32 1.0, %v4888
  %v4890 = vtanh.pop %v4850
  %v4891 = vxor.u32 %v4851, 2147483648
  %v4892 = vmul.f32 %v4891, 1.442695
  %v4893 = vpow.pop %v4892
  %v4894 = vadd.f32 %v4893, 1.0
  %v4895 = vrcp.pop %v4894
  %v4896 = vmul.f32 %v4894, %v4895
  %v4897 = vsub.f32 1.0, %v4896
  %v4898 = vmul.f32 %v4895, %v4897
  %v4899 = vadd.f32 %v4895, %v4898
  %vm4900 = vweird.f32 %v4894
  %vm4901 = vweird.f32 %v4895
  %vm4902 = vmor %vm4900, %vm4901
  %v4903 = vsel %vm4902, %v4895, %v4899
  %v4904 = vand.u32 2147483647, %v4894
  %vm4905 = vcmp.eq.f32.partialorder %v4904, 8.507059e+37
  %v4906 = vand.u32 %v4894, 2147483648
  %v4907 = vor.u32 1.1754944e-38, %v4906
  %v4908 = vsel %vm4905, %v4907, %v4903
  %v4909 = vmul.f32 1.0, %v4908
  %v4910 = vmul.f32 %v4889, %v4610
  %v4911 = vmul.f32 %v4870, %v4890
  %v4912 = vadd.f32 %v4910, %v4911
  %v4913 = vtanh.pop %v4912
  %v4914 = vmul.f32 %v4909, %v4913
  %v4915 = vsel %vm3980, %v4762, %v4607
  %v4916 = vsel %vm3980, %v4760, %v4608
  %v4917 = vsel %vm3973, %v4914, %v4609
  %v4918 = vsel %vm3973, %v4912, %v4610
  %s4919 = scalar_lea.vmem [#allocation2], 192
  %v4920 = vld [vmem:[%s4919] sm:$0xff]
  %v4921 = vld [vmem:[%s4919 + $0x8] sm:$0xff]
  %v4922 = vld [vmem:[%s4919 + $0x10] sm:$0xff]
  %v4923 = vld [vmem:[%s4919 + $0x18] sm:$0xff]
  %4924 = vmatpush.msra.mxu0 %v2956
  %4925 = vmatpush.msra.mxu0 %v2952
  %4926 = vmatpush.msra.mxu0 %v2948
  %4927 = vmatpush.msra.mxu0 %v2944
  %4928 = vmatpush.msra.mxu0 %v2940
  %4929 = vmatpush.msra.mxu0 %v2936
  %4930 = vmatpush.msra.mxu0 %v2932
  %4931 = vmatpush.msra.mxu0 %v2928
  %4932 = vmatpush.msra.mxu0 %v2924
  %4933 = vmatpush.msra.mxu0 %v2920
  %4934 = vmatpush.msra.mxu0 %v2916
  %4935 = vmatpush.msra.mxu0 %v2912
  %4936 = vmatpush.msra.mxu0 %v2908
  %4937 = vmatpush.msra.mxu0 %v2904
  %4938 = vmatpush.msra.mxu0 %v2900
  %4939 = vmatpush.msra.mxu0 %v2896
  %4940 = vmatmul.f32.gmra.mxu0 %v4915
  %v4941 = vpop.f32.mrf.mxu0
  %v4942 = vadd.f32 0.0, %v4941
  %4943 = vdwg.mxu0
  %4944 = vmatpush.msra.mxu0 %v2957
  %4945 = vmatpush.msra.mxu0 %v2953
  %4946 = vmatpush.msra.mxu0 %v2949
  %4947 = vmatpush.msra.mxu0 %v2945
  %4948 = vmatpush.msra.mxu0 %v2941
  %4949 = vmatpush.msra.mxu0 %v2937
  %4950 = vmatpush.msra.mxu0 %v2933
  %4951 = vmatpush.msra.mxu0 %v2929
  %4952 = vmatpush.msra.mxu0 %v2925
  %4953 = vmatpush.msra.mxu0 %v2921
  %4954 = vmatpush.msra.mxu0 %v2917
  %4955 = vmatpush.msra.mxu0 %v2913
  %4956 = vmatpush.msra.mxu0 %v2909
  %4957 = vmatpush.msra.mxu0 %v2905
  %4958 = vmatpush.msra.mxu0 %v2901
  %4959 = vmatpush.msra.mxu0 %v2897
  %4960 = vmatmul.f32.gmra.mxu0 %v4915
  %v4961 = vpop.f32.mrf.mxu0
  %v4962 = vadd.f32 0.0, %v4961
  %4963 = vdwg.mxu0
  %4964 = vmatpush.msra.mxu0 %v2958
  %4965 = vmatpush.msra.mxu0 %v2954
  %4966 = vmatpush.msra.mxu0 %v2950
  %4967 = vmatpush.msra.mxu0 %v2946
  %4968 = vmatpush.msra.mxu0 %v2942
  %4969 = vmatpush.msra.mxu0 %v2938
  %4970 = vmatpush.msra.mxu0 %v2934
  %4971 = vmatpush.msra.mxu0 %v2930
  %4972 = vmatpush.msra.mxu0 %v2926
  %4973 = vmatpush.msra.mxu0 %v2922
  %4974 = vmatpush.msra.mxu0 %v2918
  %4975 = vmatpush.msra.mxu0 %v2914
  %4976 = vmatpush.msra.mxu0 %v2910
  %4977 = vmatpush.msra.mxu0 %v2906
  %4978 = vmatpush.msra.mxu0 %v2902
  %4979 = vmatpush.msra.mxu0 %v2898
  %4980 = vmatmul.f32.gmra.mxu0 %v4915
  %v4981 = vpop.f32.mrf.mxu0
  %v4982 = vadd.f32 0.0, %v4981
  %4983 = vdwg.mxu0
  %4984 = vmatpush.msra.mxu0 %v2959
  %4985 = vmatpush.msra.mxu0 %v2955
  %4986 = vmatpush.msra.mxu0 %v2951
  %4987 = vmatpush.msra.mxu0 %v2947
  %4988 = vmatpush.msra.mxu0 %v2943
  %4989 = vmatpush.msra.mxu0 %v2939
  %4990 = vmatpush.msra.mxu0 %v2935
  %4991 = vmatpush.msra.mxu0 %v2931
  %4992 = vmatpush.msra.mxu0 %v2927
  %4993 = vmatpush.msra.mxu0 %v2923
  %4994 = vmatpush.msra.mxu0 %v2919
  %4995 = vmatpush.msra.mxu0 %v2915
  %4996 = vmatpush.msra.mxu0 %v2911
  %4997 = vmatpush.msra.mxu0 %v2907
  %4998 = vmatpush.msra.mxu0 %v2903
  %4999 = vmatpush.msra.mxu0 %v2899
  %5000 = vmatmul.f32.gmra.mxu0 %v4915
  %v5001 = vpop.f32.mrf.mxu0
  %v5002 = vadd.f32 0.0, %v5001
  %5003 = vdwg.mxu0
  %v5004 = vadd.f32 %v4920, %v4942
  %v5005 = vadd.f32 %v4921, %v4962
  %v5006 = vadd.f32 %v4922, %v4982
  %v5007 = vadd.f32 %v4923, %v5002
  %v5008 = vxor.u32 %v5004, 2147483648
  %v5009 = vmul.f32 %v5008, 1.442695
  %v5010 = vpow.pop %v5009
  %v5011 = vadd.f32 %v5010, 1.0
  %v5012 = vrcp.pop %v5011
  %v5013 = vmul.f32 %v5011, %v5012
  %v5014 = vsub.f32 1.0, %v5013
  %v5015 = vmul.f32 %v5012, %v5014
  %v5016 = vadd.f32 %v5012, %v5015
  %vm5017 = vweird.f32 %v5011
  %vm5018 = vweird.f32 %v5012
  %vm5019 = vmor %vm5017, %vm5018
  %v5020 = vsel %vm5019, %v5012, %v5016
  %v5021 = vand.u32 2147483647, %v5011
  %vm5022 = vcmp.eq.f32.partialorder %v5021, 8.507059e+37
  %v5023 = vand.u32 %v5011, 2147483648
  %v5024 = vor.u32 1.1754944e-38, %v5023
  %v5025 = vsel %vm5022, %v5024, %v5020
  %v5026 = vmul.f32 1.0, %v5025
  %v5027 = vxor.u32 %v5005, 2147483648
  %v5028 = vmul.f32 %v5027, 1.442695
  %v5029 = vpow.pop %v5028
  %v5030 = vadd.f32 %v5029, 1.0
  %v5031 = vrcp.pop %v5030
  %v5032 = vmul.f32 %v5030, %v5031
  %v5033 = vsub.f32 1.0, %v5032
  %v5034 = vmul.f32 %v5031, %v5033
  %v5035 = vadd.f32 %v5031, %v5034
  %vm5036 = vweird.f32 %v5030
  %vm5037 = vweird.f32 %v5031
  %vm5038 = vmor %vm5036, %vm5037
  %v5039 = vsel %vm5038, %v5031, %v5035
  %v5040 = vand.u32 2147483647, %v5030
  %vm5041 = vcmp.eq.f32.partialorder %v5040, 8.507059e+37
  %v5042 = vand.u32 %v5030, 2147483648
  %v5043 = vor.u32 1.1754944e-38, %v5042
  %v5044 = vsel %vm5041, %v5043, %v5039
  %v5045 = vmul.f32 1.0, %v5044
  %v5046 = vtanh.pop %v5006
  %v5047 = vxor.u32 %v5007, 2147483648
  %v5048 = vmul.f32 %v5047, 1.442695
  %v5049 = vpow.pop %v5048
  %v5050 = vadd.f32 %v5049, 1.0
  %v5051 = vrcp.pop %v5050
  %v5052 = vmul.f32 %v5050, %v5051
  %v5053 = vsub.f32 1.0, %v5052
  %v5054 = vmul.f32 %v5051, %v5053
  %v5055 = vadd.f32 %v5051, %v5054
  %vm5056 = vweird.f32 %v5050
  %vm5057 = vweird.f32 %v5051
  %vm5058 = vmor %vm5056, %vm5057
  %v5059 = vsel %vm5058, %v5051, %v5055
  %v5060 = vand.u32 2147483647, %v5050
  %vm5061 = vcmp.eq.f32.partialorder %v5060, 8.507059e+37
  %v5062 = vand.u32 %v5050, 2147483648
  %v5063 = vor.u32 1.1754944e-38, %v5062
  %v5064 = vsel %vm5061, %v5063, %v5059
  %v5065 = vmul.f32 1.0, %v5064
  %v5066 = vmul.f32 %v5045, %v4916
  %v5067 = vmul.f32 %v5026, %v5046
  %v5068 = vadd.f32 %v5066, %v5067
  %v5069 = vtanh.pop %v5068
  %v5070 = vmul.f32 %v5065, %v5069
  %s5071 = scalar_lea.vmem [#allocation3], 32
  %v5072 = vld [vmem:[%s5071] sm:$0xff]
  %v5073 = vld [vmem:[%s5071 + $0x8] sm:$0xff]
  %v5074 = vld [vmem:[%s5071 + $0x10] sm:$0xff]
  %v5075 = vld [vmem:[%s5071 + $0x18] sm:$0xff]
  %5076 = vmatpush.msra.mxu0 %v3020
  %5077 = vmatpush.msra.mxu0 %v3016
  %5078 = vmatpush.msra.mxu0 %v3012
  %5079 = vmatpush.msra.mxu0 %v3008
  %5080 = vmatpush.msra.mxu0 %v3004
  %5081 = vmatpush.msra.mxu0 %v3000
  %5082 = vmatpush.msra.mxu0 %v2996
  %5083 = vmatpush.msra.mxu0 %v2992
  %5084 = vmatpush.msra.mxu0 %v2988
  %5085 = vmatpush.msra.mxu0 %v2984
  %5086 = vmatpush.msra.mxu0 %v2980
  %5087 = vmatpush.msra.mxu0 %v2976
  %5088 = vmatpush.msra.mxu0 %v2972
  %5089 = vmatpush.msra.mxu0 %v2968
  %5090 = vmatpush.msra.mxu0 %v2964
  %5091 = vmatpush.msra.mxu0 %v2960
  %5092 = vmatmul.f32.gmra.mxu0 %v4917
  %v5093 = vpop.f32.mrf.mxu0
  %v5094 = vadd.f32 0.0, %v5093
  %5095 = vdwg.mxu0
  %5096 = vmatpush.msra.mxu0 %v3021
  %5097 = vmatpush.msra.mxu0 %v3017
  %5098 = vmatpush.msra.mxu0 %v3013
  %5099 = vmatpush.msra.mxu0 %v3009
  %5100 = vmatpush.msra.mxu0 %v3005
  %5101 = vmatpush.msra.mxu0 %v3001
  %5102 = vmatpush.msra.mxu0 %v2997
  %5103 = vmatpush.msra.mxu0 %v2993
  %5104 = vmatpush.msra.mxu0 %v2989
  %5105 = vmatpush.msra.mxu0 %v2985
  %5106 = vmatpush.msra.mxu0 %v2981
  %5107 = vmatpush.msra.mxu0 %v2977
  %5108 = vmatpush.msra.mxu0 %v2973
  %5109 = vmatpush.msra.mxu0 %v2969
  %5110 = vmatpush.msra.mxu0 %v2965
  %5111 = vmatpush.msra.mxu0 %v2961
  %5112 = vmatmul.f32.gmra.mxu0 %v4917
  %v5113 = vpop.f32.mrf.mxu0
  %v5114 = vadd.f32 0.0, %v5113
  %5115 = vdwg.mxu0
  %5116 = vmatpush.msra.mxu0 %v3022
  %5117 = vmatpush.msra.mxu0 %v3018
  %5118 = vmatpush.msra.mxu0 %v3014
  %5119 = vmatpush.msra.mxu0 %v3010
  %5120 = vmatpush.msra.mxu0 %v3006
  %5121 = vmatpush.msra.mxu0 %v3002
  %5122 = vmatpush.msra.mxu0 %v2998
  %5123 = vmatpush.msra.mxu0 %v2994
  %5124 = vmatpush.msra.mxu0 %v2990
  %5125 = vmatpush.msra.mxu0 %v2986
  %5126 = vmatpush.msra.mxu0 %v2982
  %5127 = vmatpush.msra.mxu0 %v2978
  %5128 = vmatpush.msra.mxu0 %v2974
  %5129 = vmatpush.msra.mxu0 %v2970
  %5130 = vmatpush.msra.mxu0 %v2966
  %5131 = vmatpush.msra.mxu0 %v2962
  %5132 = vmatmul.f32.gmra.mxu0 %v4917
  %v5133 = vpop.f32.mrf.mxu0
  %v5134 = vadd.f32 0.0, %v5133
  %5135 = vdwg.mxu0
  %5136 = vmatpush.msra.mxu0 %v3023
  %5137 = vmatpush.msra.mxu0 %v3019
  %5138 = vmatpush.msra.mxu0 %v3015
  %5139 = vmatpush.msra.mxu0 %v3011
  %5140 = vmatpush.msra.mxu0 %v3007
  %5141 = vmatpush.msra.mxu0 %v3003
  %5142 = vmatpush.msra.mxu0 %v2999
  %5143 = vmatpush.msra.mxu0 %v2995
  %5144 = vmatpush.msra.mxu0 %v2991
  %5145 = vmatpush.msra.mxu0 %v2987
  %5146 = vmatpush.msra.mxu0 %v2983
  %5147 = vmatpush.msra.mxu0 %v2979
  %5148 = vmatpush.msra.mxu0 %v2975
  %5149 = vmatpush.msra.mxu0 %v2971
  %5150 = vmatpush.msra.mxu0 %v2967
  %5151 = vmatpush.msra.mxu0 %v2963
  %5152 = vmatmul.f32.gmra.mxu0 %v4917
  %v5153 = vpop.f32.mrf.mxu0
  %v5154 = vadd.f32 0.0, %v5153
  %5155 = vdwg.mxu0
  %v5156 = vadd.f32 %v5072, %v5094
  %v5157 = vadd.f32 %v5073, %v5114
  %v5158 = vadd.f32 %v5074, %v5134
  %v5159 = vadd.f32 %v5075, %v5154
  %v5160 = vxor.u32 %v5156, 2147483648
  %v5161 = vmul.f32 %v5160, 1.442695
  %v5162 = vpow.pop %v5161
  %v5163 = vadd.f32 %v5162, 1.0
  %v5164 = vrcp.pop %v5163
  %v5165 = vmul.f32 %v5163, %v5164
  %v5166 = vsub.f32 1.0, %v5165
  %v5167 = vmul.f32 %v5164, %v5166
  %v5168 = vadd.f32 %v5164, %v5167
  %vm5169 = vweird.f32 %v5163
  %vm5170 = vweird.f32 %v5164
  %vm5171 = vmor %vm5169, %vm5170
  %v5172 = vsel %vm5171, %v5164, %v5168
  %v5173 = vand.u32 2147483647, %v5163
  %vm5174 = vcmp.eq.f32.partialorder %v5173, 8.507059e+37
  %v5175 = vand.u32 %v5163, 2147483648
  %v5176 = vor.u32 1.1754944e-38, %v5175
  %v5177 = vsel %vm5174, %v5176, %v5172
  %v5178 = vmul.f32 1.0, %v5177
  %v5179 = vxor.u32 %v5157, 2147483648
  %v5180 = vmul.f32 %v5179, 1.442695
  %v5181 = vpow.pop %v5180
  %v5182 = vadd.f32 %v5181, 1.0
  %v5183 = vrcp.pop %v5182
  %v5184 = vmul.f32 %v5182, %v5183
  %v5185 = vsub.f32 1.0, %v5184
  %v5186 = vmul.f32 %v5183, %v5185
  %v5187 = vadd.f32 %v5183, %v5186
  %vm5188 = vweird.f32 %v5182
  %vm5189 = vweird.f32 %v5183
  %vm5190 = vmor %vm5188, %vm5189
  %v5191 = vsel %vm5190, %v5183, %v5187
  %v5192 = vand.u32 2147483647, %v5182
  %vm5193 = vcmp.eq.f32.partialorder %v5192, 8.507059e+37
  %v5194 = vand.u32 %v5182, 2147483648
  %v5195 = vor.u32 1.1754944e-38, %v5194
  %v5196 = vsel %vm5193, %v5195, %v5191
  %v5197 = vmul.f32 1.0, %v5196
  %v5198 = vtanh.pop %v5158
  %v5199 = vxor.u32 %v5159, 2147483648
  %v5200 = vmul.f32 %v5199, 1.442695
  %v5201 = vpow.pop %v5200
  %v5202 = vadd.f32 %v5201, 1.0
  %v5203 = vrcp.pop %v5202
  %v5204 = vmul.f32 %v5202, %v5203
  %v5205 = vsub.f32 1.0, %v5204
  %v5206 = vmul.f32 %v5203, %v5205
  %v5207 = vadd.f32 %v5203, %v5206
  %vm5208 = vweird.f32 %v5202
  %vm5209 = vweird.f32 %v5203
  %vm5210 = vmor %vm5208, %vm5209
  %v5211 = vsel %vm5210, %v5203, %v5207
  %v5212 = vand.u32 2147483647, %v5202
  %vm5213 = vcmp.eq.f32.partialorder %v5212, 8.507059e+37
  %v5214 = vand.u32 %v5202, 2147483648
  %v5215 = vor.u32 1.1754944e-38, %v5214
  %v5216 = vsel %vm5213, %v5215, %v5211
  %v5217 = vmul.f32 1.0, %v5216
  %v5218 = vmul.f32 %v5197, %v4918
  %v5219 = vmul.f32 %v5178, %v5198
  %v5220 = vadd.f32 %v5218, %v5219
  %v5221 = vtanh.pop %v5220
  %v5222 = vmul.f32 %v5217, %v5221
  %v5223 = vsel %vm3660, %v5070, %v4915
  %v5224 = vsel %vm3660, %v5068, %v4916
  %v5225 = vsel %vm3653, %v5222, %v4917
  %v5226 = vsel %vm3653, %v5220, %v4918
  %s5227 = scalar_lea.vmem [#allocation2], 224
  %v5228 = vld [vmem:[%s5227] sm:$0xff]
  %v5229 = vld [vmem:[%s5227 + $0x8] sm:$0xff]
  %v5230 = vld [vmem:[%s5227 + $0x10] sm:$0xff]
  %v5231 = vld [vmem:[%s5227 + $0x18] sm:$0xff]
  %5232 = vmatpush.msra.mxu0 %v2956
  %5233 = vmatpush.msra.mxu0 %v2952
  %5234 = vmatpush.msra.mxu0 %v2948
  %5235 = vmatpush.msra.mxu0 %v2944
  %5236 = vmatpush.msra.mxu0 %v2940
  %5237 = vmatpush.msra.mxu0 %v2936
  %5238 = vmatpush.msra.mxu0 %v2932
  %5239 = vmatpush.msra.mxu0 %v2928
  %5240 = vmatpush.msra.mxu0 %v2924
  %5241 = vmatpush.msra.mxu0 %v2920
  %5242 = vmatpush.msra.mxu0 %v2916
  %5243 = vmatpush.msra.mxu0 %v2912
  %5244 = vmatpush.msra.mxu0 %v2908
  %5245 = vmatpush.msra.mxu0 %v2904
  %5246 = vmatpush.msra.mxu0 %v2900
  %5247 = vmatpush.msra.mxu0 %v2896
  %5248 = vmatmul.f32.gmra.mxu0 %v5223
  %v5249 = vpop.f32.mrf.mxu0
  %v5250 = vadd.f32 0.0, %v5249
  %5251 = vdwg.mxu0
  %5252 = vmatpush.msra.mxu0 %v2957
  %5253 = vmatpush.msra.mxu0 %v2953
  %5254 = vmatpush.msra.mxu0 %v2949
  %5255 = vmatpush.msra.mxu0 %v2945
  %5256 = vmatpush.msra.mxu0 %v2941
  %5257 = vmatpush.msra.mxu0 %v2937
  %5258 = vmatpush.msra.mxu0 %v2933
  %5259 = vmatpush.msra.mxu0 %v2929
  %5260 = vmatpush.msra.mxu0 %v2925
  %5261 = vmatpush.msra.mxu0 %v2921
  %5262 = vmatpush.msra.mxu0 %v2917
  %5263 = vmatpush.msra.mxu0 %v2913
  %5264 = vmatpush.msra.mxu0 %v2909
  %5265 = vmatpush.msra.mxu0 %v2905
  %5266 = vmatpush.msra.mxu0 %v2901
  %5267 = vmatpush.msra.mxu0 %v2897
  %5268 = vmatmul.f32.gmra.mxu0 %v5223
  %v5269 = vpop.f32.mrf.mxu0
  %v5270 = vadd.f32 0.0, %v5269
  %5271 = vdwg.mxu0
  %5272 = vmatpush.msra.mxu0 %v2958
  %5273 = vmatpush.msra.mxu0 %v2954
  %5274 = vmatpush.msra.mxu0 %v2950
  %5275 = vmatpush.msra.mxu0 %v2946
  %5276 = vmatpush.msra.mxu0 %v2942
  %5277 = vmatpush.msra.mxu0 %v2938
  %5278 = vmatpush.msra.mxu0 %v2934
  %5279 = vmatpush.msra.mxu0 %v2930
  %5280 = vmatpush.msra.mxu0 %v2926
  %5281 = vmatpush.msra.mxu0 %v2922
  %5282 = vmatpush.msra.mxu0 %v2918
  %5283 = vmatpush.msra.mxu0 %v2914
  %5284 = vmatpush.msra.mxu0 %v2910
  %5285 = vmatpush.msra.mxu0 %v2906
  %5286 = vmatpush.msra.mxu0 %v2902
  %5287 = vmatpush.msra.mxu0 %v2898
  %5288 = vmatmul.f32.gmra.mxu0 %v5223
  %v5289 = vpop.f32.mrf.mxu0
  %v5290 = vadd.f32 0.0, %v5289
  %5291 = vdwg.mxu0
  %5292 = vmatpush.msra.mxu0 %v2959
  %5293 = vmatpush.msra.mxu0 %v2955
  %5294 = vmatpush.msra.mxu0 %v2951
  %5295 = vmatpush.msra.mxu0 %v2947
  %5296 = vmatpush.msra.mxu0 %v2943
  %5297 = vmatpush.msra.mxu0 %v2939
  %5298 = vmatpush.msra.mxu0 %v2935
  %5299 = vmatpush.msra.mxu0 %v2931
  %5300 = vmatpush.msra.mxu0 %v2927
  %5301 = vmatpush.msra.mxu0 %v2923
  %5302 = vmatpush.msra.mxu0 %v2919
  %5303 = vmatpush.msra.mxu0 %v2915
  %5304 = vmatpush.msra.mxu0 %v2911
  %5305 = vmatpush.msra.mxu0 %v2907
  %5306 = vmatpush.msra.mxu0 %v2903
  %5307 = vmatpush.msra.mxu0 %v2899
  %5308 = vmatmul.f32.gmra.mxu0 %v5223
  %v5309 = vpop.f32.mrf.mxu0
  %v5310 = vadd.f32 0.0, %v5309
  %5311 = vdwg.mxu0
  %v5312 = vadd.f32 %v5228, %v5250
  %v5313 = vadd.f32 %v5229, %v5270
  %v5314 = vadd.f32 %v5230, %v5290
  %v5315 = vadd.f32 %v5231, %v5310
  %v5316 = vxor.u32 %v5312, 2147483648
  %v5317 = vmul.f32 %v5316, 1.442695
  %v5318 = vpow.pop %v5317
  %v5319 = vadd.f32 %v5318, 1.0
  %v5320 = vrcp.pop %v5319
  %v5321 = vmul.f32 %v5319, %v5320
  %v5322 = vsub.f32 1.0, %v5321
  %v5323 = vmul.f32 %v5320, %v5322
  %v5324 = vadd.f32 %v5320, %v5323
  %vm5325 = vweird.f32 %v5319
  %vm5326 = vweird.f32 %v5320
  %vm5327 = vmor %vm5325, %vm5326
  %v5328 = vsel %vm5327, %v5320, %v5324
  %v5329 = vand.u32 2147483647, %v5319
  %vm5330 = vcmp.eq.f32.partialorder %v5329, 8.507059e+37
  %v5331 = vand.u32 %v5319, 2147483648
  %v5332 = vor.u32 1.1754944e-38, %v5331
  %v5333 = vsel %vm5330, %v5332, %v5328
  %v5334 = vmul.f32 1.0, %v5333
  %v5335 = vxor.u32 %v5313, 2147483648
  %v5336 = vmul.f32 %v5335, 1.442695
  %v5337 = vpow.pop %v5336
  %v5338 = vadd.f32 %v5337, 1.0
  %v5339 = vrcp.pop %v5338
  %v5340 = vmul.f32 %v5338, %v5339
  %v5341 = vsub.f32 1.0, %v5340
  %v5342 = vmul.f32 %v5339, %v5341
  %v5343 = vadd.f32 %v5339, %v5342
  %vm5344 = vweird.f32 %v5338
  %vm5345 = vweird.f32 %v5339
  %vm5346 = vmor %vm5344, %vm5345
  %v5347 = vsel %vm5346, %v5339, %v5343
  %v5348 = vand.u32 2147483647, %v5338
  %vm5349 = vcmp.eq.f32.partialorder %v5348, 8.507059e+37
  %v5350 = vand.u32 %v5338, 2147483648
  %v5351 = vor.u32 1.1754944e-38, %v5350
  %v5352 = vsel %vm5349, %v5351, %v5347
  %v5353 = vmul.f32 1.0, %v5352
  %v5354 = vtanh.pop %v5314
  %v5355 = vxor.u32 %v5315, 2147483648
  %v5356 = vmul.f32 %v5355, 1.442695
  %v5357 = vpow.pop %v5356
  %v5358 = vadd.f32 %v5357, 1.0
  %v5359 = vrcp.pop %v5358
  %v5360 = vmul.f32 %v5358, %v5359
  %v5361 = vsub.f32 1.0, %v5360
  %v5362 = vmul.f32 %v5359, %v5361
  %v5363 = vadd.f32 %v5359, %v5362
  %vm5364 = vweird.f32 %v5358
  %vm5365 = vweird.f32 %v5359
  %vm5366 = vmor %vm5364, %vm5365
  %v5367 = vsel %vm5366, %v5359, %v5363
  %v5368 = vand.u32 2147483647, %v5358
  %vm5369 = vcmp.eq.f32.partialorder %v5368, 8.507059e+37
  %v5370 = vand.u32 %v5358, 2147483648
  %v5371 = vor.u32 1.1754944e-38, %v5370
  %v5372 = vsel %vm5369, %v5371, %v5367
  %v5373 = vmul.f32 1.0, %v5372
  %v5374 = vmul.f32 %v5353, %v5224
  %v5375 = vmul.f32 %v5334, %v5354
  %v5376 = vadd.f32 %v5374, %v5375
  %v5377 = vtanh.pop %v5376
  %v5378 = vmul.f32 %v5373, %v5377
  %v5379 = vld [vmem:[#allocation3] sm:$0xff]
  %v5380 = vld [vmem:[#allocation3 + $0x8] sm:$0xff]
  %v5381 = vld [vmem:[#allocation3 + $0x10] sm:$0xff]
  %v5382 = vld [vmem:[#allocation3 + $0x18] sm:$0xff]
  %5383 = vmatpush.msra.mxu0 %v3020
  %5384 = vmatpush.msra.mxu0 %v3016
  %5385 = vmatpush.msra.mxu0 %v3012
  %5386 = vmatpush.msra.mxu0 %v3008
  %5387 = vmatpush.msra.mxu0 %v3004
  %5388 = vmatpush.msra.mxu0 %v3000
  %5389 = vmatpush.msra.mxu0 %v2996
  %5390 = vmatpush.msra.mxu0 %v2992
  %5391 = vmatpush.msra.mxu0 %v2988
  %5392 = vmatpush.msra.mxu0 %v2984
  %5393 = vmatpush.msra.mxu0 %v2980
  %5394 = vmatpush.msra.mxu0 %v2976
  %5395 = vmatpush.msra.mxu0 %v2972
  %5396 = vmatpush.msra.mxu0 %v2968
  %5397 = vmatpush.msra.mxu0 %v2964
  %5398 = vmatpush.msra.mxu0 %v2960
  %5399 = vmatmul.f32.gmra.mxu0 %v5225
  %v5400 = vpop.f32.mrf.mxu0
  %v5401 = vadd.f32 0.0, %v5400
  %5402 = vdwg.mxu0
  %5403 = vmatpush.msra.mxu0 %v3021
  %5404 = vmatpush.msra.mxu0 %v3017
  %5405 = vmatpush.msra.mxu0 %v3013
  %5406 = vmatpush.msra.mxu0 %v3009
  %5407 = vmatpush.msra.mxu0 %v3005
  %5408 = vmatpush.msra.mxu0 %v3001
  %5409 = vmatpush.msra.mxu0 %v2997
  %5410 = vmatpush.msra.mxu0 %v2993
  %5411 = vmatpush.msra.mxu0 %v2989
  %5412 = vmatpush.msra.mxu0 %v2985
  %5413 = vmatpush.msra.mxu0 %v2981
  %5414 = vmatpush.msra.mxu0 %v2977
  %5415 = vmatpush.msra.mxu0 %v2973
  %5416 = vmatpush.msra.mxu0 %v2969
  %5417 = vmatpush.msra.mxu0 %v2965
  %5418 = vmatpush.msra.mxu0 %v2961
  %5419 = vmatmul.f32.gmra.mxu0 %v5225
  %v5420 = vpop.f32.mrf.mxu0
  %v5421 = vadd.f32 0.0, %v5420
  %5422 = vdwg.mxu0
  %5423 = vmatpush.msra.mxu0 %v3022
  %5424 = vmatpush.msra.mxu0 %v3018
  %5425 = vmatpush.msra.mxu0 %v3014
  %5426 = vmatpush.msra.mxu0 %v3010
  %5427 = vmatpush.msra.mxu0 %v3006
  %5428 = vmatpush.msra.mxu0 %v3002
  %5429 = vmatpush.msra.mxu0 %v2998
  %5430 = vmatpush.msra.mxu0 %v2994
  %5431 = vmatpush.msra.mxu0 %v2990
  %5432 = vmatpush.msra.mxu0 %v2986
  %5433 = vmatpush.msra.mxu0 %v2982
  %5434 = vmatpush.msra.mxu0 %v2978
  %5435 = vmatpush.msra.mxu0 %v2974
  %5436 = vmatpush.msra.mxu0 %v2970
  %5437 = vmatpush.msra.mxu0 %v2966
  %5438 = vmatpush.msra.mxu0 %v2962
  %5439 = vmatmul.f32.gmra.mxu0 %v5225
  %v5440 = vpop.f32.mrf.mxu0
  %v5441 = vadd.f32 0.0, %v5440
  %5442 = vdwg.mxu0
  %5443 = vmatpush.msra.mxu0 %v3023
  %5444 = vmatpush.msra.mxu0 %v3019
  %5445 = vmatpush.msra.mxu0 %v3015
  %5446 = vmatpush.msra.mxu0 %v3011
  %5447 = vmatpush.msra.mxu0 %v3007
  %5448 = vmatpush.msra.mxu0 %v3003
  %5449 = vmatpush.msra.mxu0 %v2999
  %5450 = vmatpush.msra.mxu0 %v2995
  %5451 = vmatpush.msra.mxu0 %v2991
  %5452 = vmatpush.msra.mxu0 %v2987
  %5453 = vmatpush.msra.mxu0 %v2983
  %5454 = vmatpush.msra.mxu0 %v2979
  %5455 = vmatpush.msra.mxu0 %v2975
  %5456 = vmatpush.msra.mxu0 %v2971
  %5457 = vmatpush.msra.mxu0 %v2967
  %5458 = vmatpush.msra.mxu0 %v2963
  %5459 = vmatmul.f32.gmra.mxu0 %v5225
  %v5460 = vpop.f32.mrf.mxu0
  %v5461 = vadd.f32 0.0, %v5460
  %5462 = vdwg.mxu0
  %v5463 = vadd.f32 %v5379, %v5401
  %v5464 = vadd.f32 %v5380, %v5421
  %v5465 = vadd.f32 %v5381, %v5441
  %v5466 = vadd.f32 %v5382, %v5461
  %v5467 = vxor.u32 %v5463, 2147483648
  %v5468 = vmul.f32 %v5467, 1.442695
  %v5469 = vpow.pop %v5468
  %v5470 = vadd.f32 %v5469, 1.0
  %v5471 = vrcp.pop %v5470
  %v5472 = vmul.f32 %v5470, %v5471
  %v5473 = vsub.f32 1.0, %v5472
  %v5474 = vmul.f32 %v5471, %v5473
  %v5475 = vadd.f32 %v5471, %v5474
  %vm5476 = vweird.f32 %v5470
  %vm5477 = vweird.f32 %v5471
  %vm5478 = vmor %vm5476, %vm5477
  %v5479 = vsel %vm5478, %v5471, %v5475
  %v5480 = vand.u32 2147483647, %v5470
  %vm5481 = vcmp.eq.f32.partialorder %v5480, 8.507059e+37
  %v5482 = vand.u32 %v5470, 2147483648
  %v5483 = vor.u32 1.1754944e-38, %v5482
  %v5484 = vsel %vm5481, %v5483, %v5479
  %v5485 = vmul.f32 1.0, %v5484
  %v5486 = vxor.u32 %v5464, 2147483648
  %v5487 = vmul.f32 %v5486, 1.442695
  %v5488 = vpow.pop %v5487
  %v5489 = vadd.f32 %v5488, 1.0
  %v5490 = vrcp.pop %v5489
  %v5491 = vmul.f32 %v5489, %v5490
  %v5492 = vsub.f32 1.0, %v5491
  %v5493 = vmul.f32 %v5490, %v5492
  %v5494 = vadd.f32 %v5490, %v5493
  %vm5495 = vweird.f32 %v5489
  %vm5496 = vweird.f32 %v5490
  %vm5497 = vmor %vm5495, %vm5496
  %v5498 = vsel %vm5497, %v5490, %v5494
  %v5499 = vand.u32 2147483647, %v5489
  %vm5500 = vcmp.eq.f32.partialorder %v5499, 8.507059e+37
  %v5501 = vand.u32 %v5489, 2147483648
  %v5502 = vor.u32 1.1754944e-38, %v5501
  %v5503 = vsel %vm5500, %v5502, %v5498
  %v5504 = vmul.f32 1.0, %v5503
  %v5505 = vtanh.pop %v5465
  %v5506 = vxor.u32 %v5466, 2147483648
  %v5507 = vmul.f32 %v5506, 1.442695
  %v5508 = vpow.pop %v5507
  %v5509 = vadd.f32 %v5508, 1.0
  %v5510 = vrcp.pop %v5509
  %v5511 = vmul.f32 %v5509, %v5510
  %v5512 = vsub.f32 1.0, %v5511
  %v5513 = vmul.f32 %v5510, %v5512
  %v5514 = vadd.f32 %v5510, %v5513
  %vm5515 = vweird.f32 %v5509
  %vm5516 = vweird.f32 %v5510
  %vm5517 = vmor %vm5515, %vm5516
  %v5518 = vsel %vm5517, %v5510, %v5514
  %v5519 = vand.u32 2147483647, %v5509
  %vm5520 = vcmp.eq.f32.partialorder %v5519, 8.507059e+37
  %v5521 = vand.u32 %v5509, 2147483648
  %v5522 = vor.u32 1.1754944e-38, %v5521
  %v5523 = vsel %vm5520, %v5522, %v5518
  %v5524 = vmul.f32 1.0, %v5523
  %v5525 = vmul.f32 %v5504, %v5226
  %v5526 = vmul.f32 %v5485, %v5505
  %v5527 = vadd.f32 %v5525, %v5526
  %v5528 = vtanh.pop %v5527
  %v5529 = vmul.f32 %v5524, %v5528
  %v5530 = vsel %vm3340, %v5378, %v5223
  %v5531 = vsel %vm3333, %v5529, %v5225
  %v5532 = vld [vmem:[%s6] sm:$0xff]
  %v5533 = vld [vmem:[%s6 + $0x8] sm:$0xff]
  %v5534 = vld [vmem:[%s6 + $0x10] sm:$0xff]
  %v5535 = vld [vmem:[%s6 + $0x18] sm:$0xff]
  %v5536 = vld [vmem:[%s6 + $0x20] sm:$0xff]
  %v5537 = vld [vmem:[%s6 + $0x28] sm:$0xff]
  %v5538 = vld [vmem:[%s6 + $0x30] sm:$0xff]
  %v5539 = vld [vmem:[%s6 + $0x38] sm:$0xff]
  %v5540 = vld [vmem:[%s6 + $0x40] sm:$0xff]
  %v5541 = vld [vmem:[%s6 + $0x48] sm:$0xff]
  %v5542 = vld [vmem:[%s6 + $0x50] sm:$0xff]
  %v5543 = vld [vmem:[%s6 + $0x58] sm:$0xff]
  %v5544 = vld [vmem:[%s6 + $0x60] sm:$0xff]
  %v5545 = vld [vmem:[%s6 + $0x68] sm:$0xff]
  %v5546 = vld [vmem:[%s6 + $0x70] sm:$0xff]
  %v5547 = vld [vmem:[%s6 + $0x78] sm:$0xff]
  %v5548 = vld [vmem:[%s6 + $0x80] sm:$0xff]
  %v5549 = vld [vmem:[%s6 + $0x88] sm:$0xff]
  %v5550 = vld [vmem:[%s6 + $0x90] sm:$0xff]
  %v5551 = vld [vmem:[%s6 + $0x98] sm:$0xff]
  %v5552 = vld [vmem:[%s6 + $0xa0] sm:$0xff]
  %v5553 = vld [vmem:[%s6 + $0xa8] sm:$0xff]
  %v5554 = vld [vmem:[%s6 + $0xb0] sm:$0xff]
  %v5555 = vld [vmem:[%s6 + $0xb8] sm:$0xff]
  %v5556 = vld [vmem:[%s6 + $0xc0] sm:$0xff]
  %v5557 = vld [vmem:[%s6 + $0xc8] sm:$0xff]
  %v5558 = vld [vmem:[%s6 + $0xd0] sm:$0xff]
  %v5559 = vld [vmem:[%s6 + $0xd8] sm:$0xff]
  %v5560 = vld [vmem:[%s6 + $0xe0] sm:$0xff]
  %v5561 = vld [vmem:[%s6 + $0xe8] sm:$0xff]
  %v5562 = vld [vmem:[%s6 + $0xf0] sm:$0xff]
  %v5563 = vld [vmem:[%s6 + $0xf8] sm:$0xff]
  %v5564 = vld [vmem:[%s7] sm:$0x1]
  %v5566 = vperm.slane %v5564, 0
  %5568 = vmatpush.msra.mxu0 %v5547
  %5569 = vmatpush.msra.mxu0 %v5546
  %5570 = vmatpush.msra.mxu0 %v5545
  %5571 = vmatpush.msra.mxu0 %v5544
  %5572 = vmatpush.msra.mxu0 %v5543
  %5573 = vmatpush.msra.mxu0 %v5542
  %5574 = vmatpush.msra.mxu0 %v5541
  %5575 = vmatpush.msra.mxu0 %v5540
  %5576 = vmatpush.msra.mxu0 %v5539
  %5577 = vmatpush.msra.mxu0 %v5538
  %5578 = vmatpush.msra.mxu0 %v5537
  %5579 = vmatpush.msra.mxu0 %v5536
  %5580 = vmatpush.msra.mxu0 %v5535
  %5581 = vmatpush.msra.mxu0 %v5534
  %5582 = vmatpush.msra.mxu0 %v5533
  %5583 = vmatpush.msra.mxu0 %v5532
  %5584 = vmatmul.f32.gmra.mxu0 %v5530
  %v5585 = vpop.f32.mrf.mxu0
  %v5586 = vadd.f32 %v5566, %v5585
  %5587 = vdwg.mxu0
  %5588 = vmatpush.msra.mxu0 %v5563
  %5589 = vmatpush.msra.mxu0 %v5562
  %5590 = vmatpush.msra.mxu0 %v5561
  %5591 = vmatpush.msra.mxu0 %v5560
  %5592 = vmatpush.msra.mxu0 %v5559
  %5593 = vmatpush.msra.mxu0 %v5558
  %5594 = vmatpush.msra.mxu0 %v5557
  %5595 = vmatpush.msra.mxu0 %v5556
  %5596 = vmatpush.msra.mxu0 %v5555
  %5597 = vmatpush.msra.mxu0 %v5554
  %5598 = vmatpush.msra.mxu0 %v5553
  %5599 = vmatpush.msra.mxu0 %v5552
  %5600 = vmatpush.msra.mxu0 %v5551
  %5601 = vmatpush.msra.mxu0 %v5550
  %5602 = vmatpush.msra.mxu0 %v5549
  %5603 = vmatpush.msra.mxu0 %v5548
  %5604 = vmatmul.f32.gmra.mxu0 %v5531
  %v5605 = vpop.f32.mrf.mxu0
  %v5606 = vadd.f32 %v5586, %v5605
  %5607 = vdwg.mxu0
  %5608 = vst [vmem:[%s8] sm:$0xff] %v5606
  // Predicated region
  $region34: #{bilstm_classifier.1} parent=0 // pred_check
    _
  $region35: #{bilstm_classifier.1} parent=0 // pred_check_branch
    %5610 = sbr.rel (0) target = $region37
  $region36: #{bilstm_classifier.1} parent=0 // pred_region
    _
  $region37: #{bilstm_classifier.1} parent=0 // pred_fallthru
    _
  // Predicated region
  $region38: #{bilstm_classifier.1} parent=0 // pred_check
    _
  $region39: #{bilstm_classifier.1} parent=0 // pred_check_branch
    %5612 = sbr.rel (0) target = $region41
  $region40: #{bilstm_classifier.1} parent=0 // pred_region
    _
  $region41: #{bilstm_classifier.1} parent=0 // pred_fallthru
    _

</llo_original>
